<compile_context>
chip_gen: v5e
topology: v5e:2x2
jax: 0.10.0
libtpu: 0.0.40
codegen_flags: <defaults>
</compile_context>

<pallas_src>
import functools

import jax
import jax.numpy as jnp
from jax.experimental import pallas as pl
from jax.experimental.pallas import tpu as pltpu

BN_EPS = 1e-5

# TPU-friendly padded sizes (lane dims -> multiple of 128, contraction dims -> multiple of 8).
C_PAD = 128          # conv Cout 10/15 -> 128, logits 27 -> 128
K1_PAD = 32          # conv1 K = 1*5*5   = 25  -> 32
K2_PAD = 256         # conv2 K = 10*5*5  = 250 -> 256
MLP_K_PAD = 768      # 7*7*15 = 735 -> 768
MLP_H_PAD = 384      # hidden 300 -> 384
N_CLASSES = 27
VMEM_LIMIT = 32 * 1024 * 1024


def _round_up(x, m):
    return (x + m - 1) // m * m


# ----------------------------------------------------------------------------
# Pallas kernels
# ----------------------------------------------------------------------------
def conv_block_kernel(p_ref, w_ref, b_ref, g_ref, be_ref, o_ref, *, mp, mp_pad):
    """Fused conv(one matmul) + BatchNorm2d(train) + ReLU + 2x2/2 MaxPool.

    p_ref : (4*mp_pad, K_pad)  im2col patches for the four positions of every 2x2
            pooling window, concatenated part-major along rows.  Rows
            [k*mp_pad, k*mp_pad + mp) are valid; the rest are zero padding.
    w_ref : (K_pad, C_PAD);  b/g/be : (1, C_PAD).   Output: (mp_pad, C_PAD).
    """
    w = w_ref[...]
    b = b_ref[...]

    # One big MXU matmul for all four pooling positions (amortizes push/drain).
    y = jnp.dot(p_ref[...], w, preferred_element_type=jnp.float32) + b

    # Row-validity mask so zero-padded rows do not bias the batch statistics.
    r = jax.lax.broadcasted_iota(jnp.int32, y.shape, 0)
    valid = r < mp
    for k in range(1, 4):
        valid = valid | ((r >= k * mp_pad) & (r < k * mp_pad + mp))
    ym = jnp.where(valid, y, 0.0)

    # One-pass BatchNorm2d training statistics (biased variance), per channel.
    n_valid = jnp.float32(4 * mp)
    s1 = jnp.sum(ym, axis=0, keepdims=True)
    s2 = jnp.sum(ym * ym, axis=0, keepdims=True)
    mean = s1 / n_valid
    var = s2 / n_valid - mean * mean
    inv_std = jax.lax.rsqrt(var + BN_EPS)

    a = jnp.maximum((y - mean) * (inv_std * g_ref[...]) + be_ref[...], 0.0)

    # MaxPool2d(kernel=2, stride=2): max over the four pooling-window positions.
    o_ref[...] = jnp.maximum(
        jnp.maximum(a[0:mp_pad], a[mp_pad:2 * mp_pad]),
        jnp.maximum(a[2 * mp_pad:3 * mp_pad], a[3 * mp_pad:4 * mp_pad]))


def mlp_kernel(x_ref, w1_ref, b1_ref, w2_ref, b2_ref, o_ref, *, n_classes):
    """Fused Linear -> ReLU -> Linear -> LogSoftmax over the first n_classes lanes."""
    h = jnp.dot(x_ref[...], w1_ref[...], preferred_element_type=jnp.float32) + b1_ref[...]
    h = jnp.maximum(h, 0.0)
    z = jnp.dot(h, w2_ref[...], preferred_element_type=jnp.float32) + b2_ref[...]

    col = jax.lax.broadcasted_iota(jnp.int32, z.shape, 1)
    in_range = col < n_classes
    z = jnp.where(in_range, z, jnp.float32(-1e30))      # padded lanes -> ~0 after exp
    z_max = jnp.max(z, axis=1, keepdims=True)
    zs = z - z_max
    lse = jnp.log(jnp.sum(jnp.exp(zs), axis=1, keepdims=True))
    o_ref[...] = jnp.where(in_range, zs - lse, 0.0)


# ----------------------------------------------------------------------------
# XLA glue (im2col / layout plumbing) + pallas_call wrappers
# ----------------------------------------------------------------------------
def _vmem_specs(n):
    return [pl.BlockSpec(memory_space=pltpu.MemorySpace.VMEM)] * n


def _im2col_pool_parts(x_nhwc, ksize, k_pad):
    """(N,H,W,Cin) NHWC -> (4*mp_pad, k_pad) patch matrix.

    Patch columns are flattened in (kh, kw, cin) order (matching the pre-packed
    weight rows); rows hold the four 2x2 pooling-window positions part-major,
    each part zero-padded to mp_pad (multiple of 8) rows.
    """
    n, h, w, cin = x_nhwc.shape
    oh, ow = h - ksize + 1, w - ksize + 1
    slabs = [x_nhwc[:, i:i + oh, j:j + ow, :]
             for i in range(ksize) for j in range(ksize)]
    patches = jnp.stack(slabs, axis=3).reshape(n, oh, ow, ksize * ksize * cin)

    ph, pw = oh // 2, ow // 2
    kk = ksize * ksize * cin
    mp = n * ph * pw
    mp_pad = _round_up(mp, 8)
    p6 = patches.reshape(n, ph, 2, pw, 2, kk)
    parts = []
    for a in range(2):
        for c in range(2):
            part = p6[:, :, a, :, c, :].reshape(mp, kk)
            parts.append(jnp.pad(part, ((0, mp_pad - mp), (0, k_pad - kk))))
    return jnp.concatenate(parts, axis=0), mp, mp_pad, ph, pw


def conv_block(x_nhwc, conv_params, *, ksize, k_pad):
    """One conv+BN+ReLU+maxpool block; returns pooled NHWC activations (N,PH,PW,C_PAD)."""
    w_mat, b_p, g_p, be_p = conv_params
    n = x_nhwc.shape[0]
    big, mp, mp_pad, ph, pw = _im2col_pool_parts(x_nhwc, ksize, k_pad)

    out = pl.pallas_call(
        functools.partial(conv_block_kernel, mp=mp, mp_pad=mp_pad),
        out_shape=jax.ShapeDtypeStruct((mp_pad, C_PAD), jnp.float32),
        in_specs=_vmem_specs(5),
        out_specs=pl.BlockSpec(memory_space=pltpu.MemorySpace.VMEM),
        compiler_params=pltpu.CompilerParams(vmem_limit_bytes=VMEM_LIMIT),
    )(big, w_mat, b_p, g_p, be_p)

    return out[:mp].reshape(n, ph, pw, C_PAD)


def mlp_head(x_flat_pad, mlp_params):
    """x_flat_pad: (N, MLP_K_PAD).  Returns (N, N_CLASSES) log-probabilities."""
    w1, b1, w2, b2 = mlp_params
    n = x_flat_pad.shape[0]
    out = pl.pallas_call(
        functools.partial(mlp_kernel, n_classes=N_CLASSES),
        out_shape=jax.ShapeDtypeStruct((n, C_PAD), jnp.float32),
        in_specs=_vmem_specs(5),
        out_specs=pl.BlockSpec(memory_space=pltpu.MemorySpace.VMEM),
        compiler_params=pltpu.CompilerParams(vmem_limit_bytes=VMEM_LIMIT),
    )(x_flat_pad, w1, b1, w2, b2)
    return out[:, :N_CLASSES]


@jax.jit
def the_recognizer_forward(x_nchw, prep):
    # NCHW (torch convention) -> NHWC for the conv blocks.
    x = jnp.transpose(x_nchw, (0, 2, 3, 1)).astype(jnp.float32)
    h1 = conv_block(x, prep["conv1"], ksize=5, k_pad=K1_PAD)[..., :10]    # (N,18,18,10)
    h2 = conv_block(h1, prep["conv2"], ksize=5, k_pad=K2_PAD)[..., :15]   # (N, 7, 7,15)
    # NHWC flatten; wf1's input dim was pre-permuted to (h,w,c) order so this matches
    # torch's x.view(-1, 7*7*15) on the NCHW tensor with the same weights.
    flat = h2.reshape(h2.shape[0], 7 * 7 * 15)
    flat = jnp.pad(flat, ((0, 0), (0, MLP_K_PAD - flat.shape[1])))
    return mlp_head(flat, prep["mlp"])


# ----------------------------------------------------------------------------
# One-time (outside-jit) weight repacking into kernel-ready padded layouts
# ----------------------------------------------------------------------------
def _pad2d(a, rows, cols):
    return jnp.pad(a, ((0, rows - a.shape[0]), (0, cols - a.shape[1])))


def _prep_conv(w, b, g, be, k_pad):
    cout, cin, kh, kw = w.shape
    # Rows in (kh, kw, cin) order to match the patch column order.
    w_mat = jnp.transpose(w, (2, 3, 1, 0)).reshape(kh * kw * cin, cout)
    return (_pad2d(w_mat, k_pad, C_PAD),
            jnp.pad(b, (0, C_PAD - cout)).reshape(1, C_PAD),
            jnp.pad(g, (0, C_PAD - cout)).reshape(1, C_PAD),    # gamma=0 on padded channels
            jnp.pad(be, (0, C_PAD - cout)).reshape(1, C_PAD))


def _prep_mlp(wf1, bf1, wf2, bf2):
    out1, k1 = wf1.shape            # (300, 735)
    out2 = wf2.shape[0]             # 27
    # Reorder wf1's input dim from torch NCHW flatten (c,h,w) to NHWC flatten (h,w,c).
    wf1_r = jnp.transpose(wf1.reshape(out1, 15, 7, 7), (0, 2, 3, 1)).reshape(out1, k1)
    return (_pad2d(wf1_r.T, MLP_K_PAD, MLP_H_PAD),
            jnp.pad(bf1, (0, MLP_H_PAD - out1)).reshape(1, MLP_H_PAD),
            _pad2d(wf2.T, MLP_H_PAD, C_PAD),
            jnp.pad(bf2, (0, C_PAD - out2)).reshape(1, C_PAD))


def prepare_params(params):
    return {
        "conv1": _prep_conv(params["w1"], params["b1"], params["g1"], params["be1"], K1_PAD),
        "conv2": _prep_conv(params["w2"], params["b2"], params["g2"], params["be2"], K2_PAD),
        "mlp": _prep_mlp(params["wf1"], params["bf1"], params["wf2"], params["bf2"]),
    }


# ----------------------------------------------------------------------------
# Deterministic parameter init (shapes from TheRecognizer.__init__)
# ----------------------------------------------------------------------------
def init_params(key):
    ks = jax.random.split(key, 8)
    return {
        "w1": jax.random.normal(ks[0], (10, 1, 5, 5), jnp.float32) * 0.1,   # Conv2d(1,10,5)
        "b1": jax.random.normal(ks[1], (10,), jnp.float32) * 0.1,
        "g1": jnp.ones((10,), jnp.float32),                                  # BatchNorm2d(10)
        "be1": jnp.zeros((10,), jnp.float32),
        "w2": jax.random.normal(ks[2], (15, 10, 5, 5), jnp.float32) * 0.1,  # Conv2d(10,15,5)
        "b2": jax.random.normal(ks[3], (15,), jnp.float32) * 0.1,
        "g2": jnp.ones((15,), jnp.float32),                                  # BatchNorm2d(15)
        "be2": jnp.zeros((15,), jnp.float32),
        "wf1": jax.random.normal(ks[4], (300, 735), jnp.float32) * 0.05,    # Linear(735,300)
        "bf1": jax.random.normal(ks[5], (300,), jnp.float32) * 0.05,
        "wf2": jax.random.normal(ks[6], (27, 300), jnp.float32) * 0.05,     # Linear(300,27)
        "bf2": jax.random.normal(ks[7], (27,), jnp.float32) * 0.05,
    }


# ----------------------------------------------------------------------------
# Pure-JAX reference (mirrors the torch module exactly) for correctness checking
# ----------------------------------------------------------------------------
def _reference_forward(x_nchw, params):
    hp = jax.lax.Precision.HIGHEST

    def block(x, w, b, g, be):
        y = jax.lax.conv_general_dilated(
            x, w, window_strides=(1, 1), padding="VALID",
            dimension_numbers=("NCHW", "OIHW", "NCHW"), precision=hp)
        y = y + b.reshape(1, -1, 1, 1)
        mean = jnp.mean(y, axis=(0, 2, 3), keepdims=True)
        var = jnp.mean(jnp.square(y - mean), axis=(0, 2, 3), keepdims=True)
        y = (y - mean) * jax.lax.rsqrt(var + BN_EPS) * g.reshape(1, -1, 1, 1) \
            + be.reshape(1, -1, 1, 1)
        y = jnp.maximum(y, 0.0)
        return jax.lax.reduce_window(y, -jnp.inf, jax.lax.max,
                                     (1, 1, 2, 2), (1, 1, 2, 2), "VALID")

    h = block(x_nchw, params["w1"], params["b1"], params["g1"], params["be1"])
    h = block(h, params["w2"], params["b2"], params["g2"], params["be2"])
    flat = h.reshape(h.shape[0], -1)                     # NCHW flatten, like torch .view
    z = jnp.maximum(jnp.dot(flat, params["wf1"].T, precision=hp) + params["bf1"], 0.0)
    z = jnp.dot(z, params["wf2"].T, precision=hp) + params["bf2"]
    return jax.nn.log_softmax(z, axis=1)


if __name__ == "__main__":
    key = jax.random.PRNGKey(0)
    k_params, k_x = jax.random.split(key)
    params = init_params(k_params)
    prep = prepare_params(params)

    # Input shape implied by the 7*7*15 flatten: (N, 1, 40, 40).  Use N=2.
    x = jax.random.normal(k_x, (2, 1, 40, 40), jnp.float32)

    out = jax.block_until_ready(the_recognizer_forward(x, prep))

    assert out.shape == (2, N_CLASSES), out.shape
    assert bool(jnp.all(jnp.isfinite(out)))
    # LogSoftmax rows should exponentiate-and-sum to 1.
    row_sums = jnp.sum(jnp.exp(out), axis=1)
    assert bool(jnp.all(jnp.abs(row_sums - 1.0) < 1e-4)), row_sums

    # Check against a faithful pure-JAX reference of the torch module.
    ref = jax.block_until_ready(jax.jit(_reference_forward)(x, params))
    max_err = float(jnp.max(jnp.abs(out - ref)))
    assert max_err < 5e-2, f"mismatch vs reference: max |diff| = {max_err}"

    print("KERNEL_OK")
</pallas_src>

<mosaic_0001>
module attributes {stable_mosaic.version = 11 : i64} {
  func.func @conv_block_kernel(%arg0: memref<2592x32xf32, #tpu.memory_space<vmem>>, %arg1: memref<32x128xf32, #tpu.memory_space<vmem>>, %arg2: memref<1x128xf32, #tpu.memory_space<vmem>>, %arg3: memref<1x128xf32, #tpu.memory_space<vmem>>, %arg4: memref<1x128xf32, #tpu.memory_space<vmem>>, %arg5: memref<648x128xf32, #tpu.memory_space<vmem>>) attributes {dimension_semantics = [], scalar_prefetch = 0 : i64, scratch_operands = 0 : i64, tpu.core_type = #tpu.core_type<tc>} {
    %c0 = arith.constant 0 : index
    %c0_0 = arith.constant 0 : index
    %0 = vector.load %arg1[%c0, %c0_0] : memref<32x128xf32, #tpu.memory_space<vmem>>, vector<32x128xf32>
    %c0_1 = arith.constant 0 : index
    %c0_2 = arith.constant 0 : index
    %1 = vector.load %arg2[%c0_1, %c0_2] : memref<1x128xf32, #tpu.memory_space<vmem>>, vector<1x128xf32>
    %c0_3 = arith.constant 0 : index
    %c0_4 = arith.constant 0 : index
    %2 = vector.load %arg0[%c0_3, %c0_4] : memref<2592x32xf32, #tpu.memory_space<vmem>>, vector<2592x32xf32>
    %cst = arith.constant dense<0.000000e+00> : vector<2592x128xf32>
    %3 = tpu.matmul %2, %0, %cst {dimension_numbers = #tpu.dot_dimension_numbers<[1], [0], [0], [1], [0, 0, 1, 1], [], []>} : vector<2592x32xf32>, vector<32x128xf32>, vector<2592x128xf32> -> vector<2592x128xf32>
    %4 = vector.broadcast %1 : vector<1x128xf32> to vector<2592x128xf32>
    %5 = arith.addf %3, %4 : vector<2592x128xf32>
    %6 = tpu.iota {dimensions = array<i32: 0>} : vector<2592x128xi32>
    %c648_i32 = arith.constant 648 : i32
    %7 = vector.broadcast %c648_i32 : i32 to vector<2592x128xi32>
    %8 = arith.cmpi slt, %6, %7 : vector<2592x128xi32>
    %c648_i32_5 = arith.constant 648 : i32
    %9 = vector.broadcast %c648_i32_5 : i32 to vector<2592x128xi32>
    %10 = arith.cmpi sge, %6, %9 : vector<2592x128xi32>
    %c1296_i32 = arith.constant 1296 : i32
    %11 = vector.broadcast %c1296_i32 : i32 to vector<2592x128xi32>
    %12 = arith.cmpi slt, %6, %11 : vector<2592x128xi32>
    %13 = arith.andi %10, %12 : vector<2592x128xi1>
    %14 = arith.ori %8, %13 : vector<2592x128xi1>
    %c1296_i32_6 = arith.constant 1296 : i32
    %15 = vector.broadcast %c1296_i32_6 : i32 to vector<2592x128xi32>
    %16 = arith.cmpi sge, %6, %15 : vector<2592x128xi32>
    %c1944_i32 = arith.constant 1944 : i32
    %17 = vector.broadcast %c1944_i32 : i32 to vector<2592x128xi32>
    %18 = arith.cmpi slt, %6, %17 : vector<2592x128xi32>
    %19 = arith.andi %16, %18 : vector<2592x128xi1>
    %20 = arith.ori %14, %19 : vector<2592x128xi1>
    %c1944_i32_7 = arith.constant 1944 : i32
    %21 = vector.broadcast %c1944_i32_7 : i32 to vector<2592x128xi32>
    %22 = arith.cmpi sge, %6, %21 : vector<2592x128xi32>
    %c2592_i32 = arith.constant 2592 : i32
    %23 = vector.broadcast %c2592_i32 : i32 to vector<2592x128xi32>
    %24 = arith.cmpi slt, %6, %23 : vector<2592x128xi32>
    %25 = arith.andi %22, %24 : vector<2592x128xi1>
    %26 = arith.ori %20, %25 : vector<2592x128xi1>
    %cst_8 = arith.constant 0.000000e+00 : f32
    %27 = vector.broadcast %cst_8 : f32 to vector<2592x128xf32>
    %28 = arith.select %26, %5, %27 : vector<2592x128xi1>, vector<2592x128xf32>
    %cst_9 = arith.constant dense<0.000000e+00> : vector<128xf32>
    %29 = vector.multi_reduction <add>, %28, %cst_9 [0] : vector<2592x128xf32> to vector<128xf32>
    %30 = vector.shape_cast %29 : vector<128xf32> to vector<1x128xf32>
    %31 = arith.mulf %28, %28 : vector<2592x128xf32>
    %cst_10 = arith.constant dense<0.000000e+00> : vector<128xf32>
    %32 = vector.multi_reduction <add>, %31, %cst_10 [0] : vector<2592x128xf32> to vector<128xf32>
    %33 = vector.shape_cast %32 : vector<128xf32> to vector<1x128xf32>
    %cst_11 = arith.constant 2.592000e+03 : f32
    %34 = vector.broadcast %cst_11 : f32 to vector<1x128xf32>
    %35 = arith.divf %30, %34 : vector<1x128xf32>
    %cst_12 = arith.constant 2.592000e+03 : f32
    %36 = vector.broadcast %cst_12 : f32 to vector<1x128xf32>
    %37 = arith.divf %33, %36 : vector<1x128xf32>
    %38 = arith.mulf %35, %35 : vector<1x128xf32>
    %39 = arith.subf %37, %38 : vector<1x128xf32>
    %cst_13 = arith.constant 9.99999974E-6 : f32
    %40 = vector.broadcast %cst_13 : f32 to vector<1x128xf32>
    %41 = arith.addf %39, %40 : vector<1x128xf32>
    %42 = math.rsqrt %41 : vector<1x128xf32>
    %43 = vector.broadcast %35 : vector<1x128xf32> to vector<2592x128xf32>
    %44 = arith.subf %5, %43 : vector<2592x128xf32>
    %c0_14 = arith.constant 0 : index
    %c0_15 = arith.constant 0 : index
    %45 = vector.load %arg3[%c0_14, %c0_15] : memref<1x128xf32, #tpu.memory_space<vmem>>, vector<1x128xf32>
    %46 = arith.mulf %42, %45 : vector<1x128xf32>
    %47 = vector.broadcast %46 : vector<1x128xf32> to vector<2592x128xf32>
    %48 = arith.mulf %44, %47 : vector<2592x128xf32>
    %c0_16 = arith.constant 0 : index
    %c0_17 = arith.constant 0 : index
    %49 = vector.load %arg4[%c0_16, %c0_17] : memref<1x128xf32, #tpu.memory_space<vmem>>, vector<1x128xf32>
    %50 = vector.broadcast %49 : vector<1x128xf32> to vector<2592x128xf32>
    %51 = arith.addf %48, %50 : vector<2592x128xf32>
    %cst_18 = arith.constant 0.000000e+00 : f32
    %52 = vector.broadcast %cst_18 : f32 to vector<2592x128xf32>
    %53 = arith.maximumf %51, %52 : vector<2592x128xf32>
    %54 = vector.extract_strided_slice %53 {offsets = [0, 0], sizes = [648, 128], strides = [1, 1]} : vector<2592x128xf32> to vector<648x128xf32>
    %55 = vector.extract_strided_slice %53 {offsets = [648, 0], sizes = [648, 128], strides = [1, 1]} : vector<2592x128xf32> to vector<648x128xf32>
    %56 = arith.maximumf %54, %55 : vector<648x128xf32>
    %57 = vector.extract_strided_slice %53 {offsets = [1296, 0], sizes = [648, 128], strides = [1, 1]} : vector<2592x128xf32> to vector<648x128xf32>
    %58 = vector.extract_strided_slice %53 {offsets = [1944, 0], sizes = [648, 128], strides = [1, 1]} : vector<2592x128xf32> to vector<648x128xf32>
    %59 = arith.maximumf %57, %58 : vector<648x128xf32>
    %60 = arith.maximumf %56, %59 : vector<648x128xf32>
    %c0_19 = arith.constant 0 : index
    %c0_20 = arith.constant 0 : index
    %61 = vector.load %arg5[%c0_19, %c0_20] : memref<648x128xf32, #tpu.memory_space<vmem>>, vector<648x128xf32>
    tpu.vector_store %arg5[%c0_19, %c0_20], %60 {strides = array<i32>} : memref<648x128xf32, #tpu.memory_space<vmem>>, vector<648x128xf32>,
    return
  }
}

module attributes {stable_mosaic.version = 11 : i64} {
  func.func @conv_block_kernel(%arg0: memref<416x256xf32, #tpu.memory_space<vmem>>, %arg1: memref<256x128xf32, #tpu.memory_space<vmem>>, %arg2: memref<1x128xf32, #tpu.memory_space<vmem>>, %arg3: memref<1x128xf32, #tpu.memory_space<vmem>>, %arg4: memref<1x128xf32, #tpu.memory_space<vmem>>, %arg5: memref<104x128xf32, #tpu.memory_space<vmem>>) attributes {dimension_semantics = [], scalar_prefetch = 0 : i64, scratch_operands = 0 : i64, tpu.core_type = #tpu.core_type<tc>} {
    %c0 = arith.constant 0 : index
    %c0_0 = arith.constant 0 : index
    %0 = vector.load %arg1[%c0, %c0_0] : memref<256x128xf32, #tpu.memory_space<vmem>>, vector<256x128xf32>
    %c0_1 = arith.constant 0 : index
    %c0_2 = arith.constant 0 : index
    %1 = vector.load %arg2[%c0_1, %c0_2] : memref<1x128xf32, #tpu.memory_space<vmem>>, vector<1x128xf32>
    %c0_3 = arith.constant 0 : index
    %c0_4 = arith.constant 0 : index
    %2 = vector.load %arg0[%c0_3, %c0_4] : memref<416x256xf32, #tpu.memory_space<vmem>>, vector<416x256xf32>
    %cst = arith.constant dense<0.000000e+00> : vector<416x128xf32>
    %3 = tpu.matmul %2, %0, %cst {dimension_numbers = #tpu.dot_dimension_numbers<[1], [0], [0], [1], [0, 0, 1, 1], [], []>} : vector<416x256xf32>, vector<256x128xf32>, vector<416x128xf32> -> vector<416x128xf32>
    %4 = vector.broadcast %1 : vector<1x128xf32> to vector<416x128xf32>
    %5 = arith.addf %3, %4 : vector<416x128xf32>
    %6 = tpu.iota {dimensions = array<i32: 0>} : vector<416x128xi32>
    %c98_i32 = arith.constant 98 : i32
    %7 = vector.broadcast %c98_i32 : i32 to vector<416x128xi32>
    %8 = arith.cmpi slt, %6, %7 : vector<416x128xi32>
    %c104_i32 = arith.constant 104 : i32
    %9 = vector.broadcast %c104_i32 : i32 to vector<416x128xi32>
    %10 = arith.cmpi sge, %6, %9 : vector<416x128xi32>
    %c202_i32 = arith.constant 202 : i32
    %11 = vector.broadcast %c202_i32 : i32 to vector<416x128xi32>
    %12 = arith.cmpi slt, %6, %11 : vector<416x128xi32>
    %13 = arith.andi %10, %12 : vector<416x128xi1>
    %14 = arith.ori %8, %13 : vector<416x128xi1>
    %c208_i32 = arith.constant 208 : i32
    %15 = vector.broadcast %c208_i32 : i32 to vector<416x128xi32>
    %16 = arith.cmpi sge, %6, %15 : vector<416x128xi32>
    %c306_i32 = arith.constant 306 : i32
    %17 = vector.broadcast %c306_i32 : i32 to vector<416x128xi32>
    %18 = arith.cmpi slt, %6, %17 : vector<416x128xi32>
    %19 = arith.andi %16, %18 : vector<416x128xi1>
    %20 = arith.ori %14, %19 : vector<416x128xi1>
    %c312_i32 = arith.constant 312 : i32
    %21 = vector.broadcast %c312_i32 : i32 to vector<416x128xi32>
    %22 = arith.cmpi sge, %6, %21 : vector<416x128xi32>
    %c410_i32 = arith.constant 410 : i32
    %23 = vector.broadcast %c410_i32 : i32 to vector<416x128xi32>
    %24 = arith.cmpi slt, %6, %23 : vector<416x128xi32>
    %25 = arith.andi %22, %24 : vector<416x128xi1>
    %26 = arith.ori %20, %25 : vector<416x128xi1>
    %cst_5 = arith.constant 0.000000e+00 : f32
    %27 = vector.broadcast %cst_5 : f32 to vector<416x128xf32>
    %28 = arith.select %26, %5, %27 : vector<416x128xi1>, vector<416x128xf32>
    %cst_6 = arith.constant dense<0.000000e+00> : vector<128xf32>
    %29 = vector.multi_reduction <add>, %28, %cst_6 [0] : vector<416x128xf32> to vector<128xf32>
    %30 = vector.shape_cast %29 : vector<128xf32> to vector<1x128xf32>
    %31 = arith.mulf %28, %28 : vector<416x128xf32>
    %cst_7 = arith.constant dense<0.000000e+00> : vector<128xf32>
    %32 = vector.multi_reduction <add>, %31, %cst_7 [0] : vector<416x128xf32> to vector<128xf32>
    %33 = vector.shape_cast %32 : vector<128xf32> to vector<1x128xf32>
    %cst_8 = arith.constant 3.920000e+02 : f32
    %34 = vector.broadcast %cst_8 : f32 to vector<1x128xf32>
    %35 = arith.divf %30, %34 : vector<1x128xf32>
    %cst_9 = arith.constant 3.920000e+02 : f32
    %36 = vector.broadcast %cst_9 : f32 to vector<1x128xf32>
    %37 = arith.divf %33, %36 : vector<1x128xf32>
    %38 = arith.mulf %35, %35 : vector<1x128xf32>
    %39 = arith.subf %37, %38 : vector<1x128xf32>
    %cst_10 = arith.constant 9.99999974E-6 : f32
    %40 = vector.broadcast %cst_10 : f32 to vector<1x128xf32>
    %41 = arith.addf %39, %40 : vector<1x128xf32>
    %42 = math.rsqrt %41 : vector<1x128xf32>
    %43 = vector.broadcast %35 : vector<1x128xf32> to vector<416x128xf32>
    %44 = arith.subf %5, %43 : vector<416x128xf32>
    %c0_11 = arith.constant 0 : index
    %c0_12 = arith.constant 0 : index
    %45 = vector.load %arg3[%c0_11, %c0_12] : memref<1x128xf32, #tpu.memory_space<vmem>>, vector<1x128xf32>
    %46 = arith.mulf %42, %45 : vector<1x128xf32>
    %47 = vector.broadcast %46 : vector<1x128xf32> to vector<416x128xf32>
    %48 = arith.mulf %44, %47 : vector<416x128xf32>
    %c0_13 = arith.constant 0 : index
    %c0_14 = arith.constant 0 : index
    %49 = vector.load %arg4[%c0_13, %c0_14] : memref<1x128xf32, #tpu.memory_space<vmem>>, vector<1x128xf32>
    %50 = vector.broadcast %49 : vector<1x128xf32> to vector<416x128xf32>
    %51 = arith.addf %48, %50 : vector<416x128xf32>
    %cst_15 = arith.constant 0.000000e+00 : f32
    %52 = vector.broadcast %cst_15 : f32 to vector<416x128xf32>
    %53 = arith.maximumf %51, %52 : vector<416x128xf32>
    %54 = vector.extract_strided_slice %53 {offsets = [0, 0], sizes = [104, 128], strides = [1, 1]} : vector<416x128xf32> to vector<104x128xf32>
    %55 = vector.extract_strided_slice %53 {offsets = [104, 0], sizes = [104, 128], strides = [1, 1]} : vector<416x128xf32> to vector<104x128xf32>
    %56 = arith.maximumf %54, %55 : vector<104x128xf32>
    %57 = vector.extract_strided_slice %53 {offsets = [208, 0], sizes = [104, 128], strides = [1, 1]} : vector<416x128xf32> to vector<104x128xf32>
    %58 = vector.extract_strided_slice %53 {offsets = [312, 0], sizes = [104, 128], strides = [1, 1]} : vector<416x128xf32> to vector<104x128xf32>
    %59 = arith.maximumf %57, %58 : vector<104x128xf32>
    %60 = arith.maximumf %56, %59 : vector<104x128xf32>
    %c0_16 = arith.constant 0 : index
    %c0_17 = arith.constant 0 : index
    %61 = vector.load %arg5[%c0_16, %c0_17] : memref<104x128xf32, #tpu.memory_space<vmem>>, vector<104x128xf32>
    tpu.vector_store %arg5[%c0_16, %c0_17], %60 {strides = array<i32>} : memref<104x128xf32, #tpu.memory_space<vmem>>, vector<104x128xf32>,
    return
  }
}

module attributes {stable_mosaic.version = 11 : i64} {
  func.func @mlp_kernel(%arg0: memref<2x768xf32, #tpu.memory_space<vmem>>, %arg1: memref<768x384xf32, #tpu.memory_space<vmem>>, %arg2: memref<1x384xf32, #tpu.memory_space<vmem>>, %arg3: memref<384x128xf32, #tpu.memory_space<vmem>>, %arg4: memref<1x128xf32, #tpu.memory_space<vmem>>, %arg5: memref<2x128xf32, #tpu.memory_space<vmem>>) attributes {dimension_semantics = [], scalar_prefetch = 0 : i64, scratch_operands = 0 : i64, tpu.core_type = #tpu.core_type<tc>} {
    %c0 = arith.constant 0 : index
    %c0_0 = arith.constant 0 : index
    %0 = vector.load %arg0[%c0, %c0_0] : memref<2x768xf32, #tpu.memory_space<vmem>>, vector<2x768xf32>
    %c0_1 = arith.constant 0 : index
    %c0_2 = arith.constant 0 : index
    %1 = vector.load %arg1[%c0_1, %c0_2] : memref<768x384xf32, #tpu.memory_space<vmem>>, vector<768x384xf32>
    %cst = arith.constant dense<0.000000e+00> : vector<2x384xf32>
    %2 = tpu.matmul %0, %1, %cst {dimension_numbers = #tpu.dot_dimension_numbers<[1], [0], [0], [1], [0, 0, 1, 1], [], []>} : vector<2x768xf32>, vector<768x384xf32>, vector<2x384xf32> -> vector<2x384xf32>
    %c0_3 = arith.constant 0 : index
    %c0_4 = arith.constant 0 : index
    %3 = vector.load %arg2[%c0_3, %c0_4] : memref<1x384xf32, #tpu.memory_space<vmem>>, vector<1x384xf32>
    %4 = vector.broadcast %3 : vector<1x384xf32> to vector<2x384xf32>
    %5 = arith.addf %2, %4 : vector<2x384xf32>
    %cst_5 = arith.constant 0.000000e+00 : f32
    %6 = vector.broadcast %cst_5 : f32 to vector<2x384xf32>
    %7 = arith.maximumf %5, %6 : vector<2x384xf32>
    %c0_6 = arith.constant 0 : index
    %c0_7 = arith.constant 0 : index
    %8 = vector.load %arg3[%c0_6, %c0_7] : memref<384x128xf32, #tpu.memory_space<vmem>>, vector<384x128xf32>
    %cst_8 = arith.constant dense<0.000000e+00> : vector<2x128xf32>
    %9 = tpu.matmul %7, %8, %cst_8 {dimension_numbers = #tpu.dot_dimension_numbers<[1], [0], [0], [1], [0, 0, 1, 1], [], []>} : vector<2x384xf32>, vector<384x128xf32>, vector<2x128xf32> -> vector<2x128xf32>
    %c0_9 = arith.constant 0 : index
    %c0_10 = arith.constant 0 : index
    %10 = vector.load %arg4[%c0_9, %c0_10] : memref<1x128xf32, #tpu.memory_space<vmem>>, vector<1x128xf32>
    %11 = vector.broadcast %10 : vector<1x128xf32> to vector<2x128xf32>
    %12 = arith.addf %9, %11 : vector<2x128xf32>
    %13 = tpu.iota {dimensions = array<i32: 1>} : vector<2x128xi32>
    %c27_i32 = arith.constant 27 : i32
    %14 = vector.broadcast %c27_i32 : i32 to vector<2x128xi32>
    %15 = arith.cmpi slt, %13, %14 : vector<2x128xi32>
    %cst_11 = arith.constant -1.000000e+30 : f32
    %16 = vector.broadcast %cst_11 : f32 to vector<2x128xf32>
    %17 = arith.select %15, %12, %16 : vector<2x128xi1>, vector<2x128xf32>
    %cst_12 = arith.constant dense<0xFF800000> : vector<2xf32>
    %18 = vector.multi_reduction <maximumf>, %17, %cst_12 [1] : vector<2x128xf32> to vector<2xf32>
    %19 = vector.shape_cast %18 : vector<2xf32> to vector<2x1xf32>
    %20 = vector.broadcast %19 : vector<2x1xf32> to vector<2x128xf32>
    %21 = arith.subf %17, %20 : vector<2x128xf32>
    %22 = math.exp %21 : vector<2x128xf32>
    %cst_13 = arith.constant dense<0.000000e+00> : vector<2xf32>
    %23 = vector.multi_reduction <add>, %22, %cst_13 [1] : vector<2x128xf32> to vector<2xf32>
    %24 = vector.shape_cast %23 : vector<2xf32> to vector<2x1xf32>
    %25 = math.log %24 : vector<2x1xf32>
    %26 = vector.broadcast %25 : vector<2x1xf32> to vector<2x128xf32>
    %27 = arith.subf %21, %26 : vector<2x128xf32>
    %cst_14 = arith.constant 0.000000e+00 : f32
    %28 = vector.broadcast %cst_14 : f32 to vector<2x128xf32>
    %29 = arith.select %15, %27, %28 : vector<2x128xi1>, vector<2x128xf32>
    %c0_15 = arith.constant 0 : index
    %c0_16 = arith.constant 0 : index
    %30 = vector.load %arg5[%c0_15, %c0_16] : memref<2x128xf32, #tpu.memory_space<vmem>>, vector<2x128xf32>
    tpu.vector_store %arg5[%c0_15, %c0_16], %29 {strides = array<i32>} : memref<2x128xf32, #tpu.memory_space<vmem>>, vector<2x128xf32>,
    return
  }
}

</mosaic_0001>

<llo_original>
// kernel: the_recognizer_forward.3
$region0: #{the_recognizer_forward.3}
  #allocation0 [shape = 'u32[]', space=smem, size = 0x4, offset = 0x4, fixed_abs, tag = 'smem constant byte address 0x4 - core index']
  #allocation1 [shape = 'u32[72,128]{1,0:T(1,128)}', space=vmem, size = 0x9000, scoped, tag = 'internal scratch']
  %s0 = inlined_call_operand.vmem [shape: f32[2592,32], index: 0, kind: input, shape index: {}]
  %s1 = inlined_call_operand.vmem [shape: f32[32,128], index: 1, kind: input, shape index: {}]
  %s2 = inlined_call_operand.vmem [shape: f32[1,128], index: 2, kind: input, shape index: {}]
  %s3 = inlined_call_operand.vmem [shape: f32[1,128], index: 3, kind: input, shape index: {}]
  %s4 = inlined_call_operand.vmem [shape: f32[1,128], index: 4, kind: input, shape index: {}]
  %s5 = inlined_call_operand.vmem [shape: f32[648,128], index: 5, kind: output, shape index: {}]
  %s6 = sld [smem:[#allocation0]]
  $region30: #{the_recognizer_forward.3} parent=0
    _
  %s8 = ssub.s32 1, %s6
  %s9 = scalar_select 0, %s8, %s6
  // Predicated region
  $region2: #{the_recognizer_forward.3} parent=0 // pred_check
    _
  $region3: #{the_recognizer_forward.3} parent=0 // pred_check_branch
    %11 = sbr.rel (0) target = $region5
  $region4: #{the_recognizer_forward.3} parent=0 // pred_region
    _
  $region5: #{the_recognizer_forward.3} parent=0 // pred_fallthru
    _
  // Predicated region
  $region6: #{the_recognizer_forward.3} parent=0 // pred_check
    _
  $region7: #{the_recognizer_forward.3} parent=0 // pred_check_branch
    %13 = sbr.rel (0) target = $region9
  $region8: #{the_recognizer_forward.3} parent=0 // pred_region
    _
  $region9: #{the_recognizer_forward.3} parent=0 // pred_fallthru
    _
  // Predicated region
  $region10: #{the_recognizer_forward.3} parent=0 // pred_check
    _
  $region11: #{the_recognizer_forward.3} parent=0 // pred_check_branch
    %15 = sbr.rel (0) target = $region13
  $region12: #{the_recognizer_forward.3} parent=0 // pred_region
    _
  $region13: #{the_recognizer_forward.3} parent=0 // pred_fallthru
    _
  // Predicated region
  $region14: #{the_recognizer_forward.3} parent=0 // pred_check
    _
  $region15: #{the_recognizer_forward.3} parent=0 // pred_check_branch
    %17 = sbr.rel (0) target = $region17
  $region16: #{the_recognizer_forward.3} parent=0 // pred_region
    _
  $region17: #{the_recognizer_forward.3} parent=0 // pred_fallthru
    _
  // Predicated region
  $region18: #{the_recognizer_forward.3} parent=0 // pred_check
    _
  $region19: #{the_recognizer_forward.3} parent=0 // pred_check_branch
    %19 = sbr.rel (0) target = $region21
  $region20: #{the_recognizer_forward.3} parent=0 // pred_region
    _
  $region21: #{the_recognizer_forward.3} parent=0 // pred_fallthru
    _
  %v20 = vld [vmem:[%s1] sm:$0xff]
  %v21 = vld [vmem:[%s1 + $0x8] sm:$0xff]
  %v22 = vld [vmem:[%s1 + $0x10] sm:$0xff]
  %v23 = vld [vmem:[%s1 + $0x18] sm:$0xff]
  %v24 = vld [vmem:[%s2] sm:$0x1]
  %v25 = vld [vmem:[%s0] sm:$0xff]
  %v26 = vld [vmem:[%s0 + $0x8] sm:$0xff]
  %v27 = vld [vmem:[%s0 + $0x10] sm:$0xff]
  %v28 = vld [vmem:[%s0 + $0x18] sm:$0xff]
  %v29 = vld [vmem:[%s0 + $0x20] sm:$0xff]
  %v30 = vld [vmem:[%s0 + $0x28] sm:$0xff]
  %v31 = vld [vmem:[%s0 + $0x30] sm:$0xff]
  %v32 = vld [vmem:[%s0 + $0x38] sm:$0xff]
  %v33 = vld [vmem:[%s0 + $0x40] sm:$0xff]
  %v34 = vld [vmem:[%s0 + $0x48] sm:$0xff]
  %v35 = vld [vmem:[%s0 + $0x50] sm:$0xff]
  %v36 = vld [vmem:[%s0 + $0x58] sm:$0xff]
  %v37 = vld [vmem:[%s0 + $0x60] sm:$0xff]
  %v38 = vld [vmem:[%s0 + $0x68] sm:$0xff]
  %v39 = vld [vmem:[%s0 + $0x70] sm:$0xff]
  %v40 = vld [vmem:[%s0 + $0x78] sm:$0xff]
  %v41 = vld [vmem:[%s0 + $0x80] sm:$0xff]
  %v42 = vld [vmem:[%s0 + $0x88] sm:$0xff]
  %v43 = vld [vmem:[%s0 + $0x90] sm:$0xff]
  %v44 = vld [vmem:[%s0 + $0x98] sm:$0xff]
  %v45 = vld [vmem:[%s0 + $0xa0] sm:$0xff]
  %v46 = vld [vmem:[%s0 + $0xa8] sm:$0xff]
  %v47 = vld [vmem:[%s0 + $0xb0] sm:$0xff]
  %v48 = vld [vmem:[%s0 + $0xb8] sm:$0xff]
  %v49 = vld [vmem:[%s0 + $0xc0] sm:$0xff]
  %v50 = vld [vmem:[%s0 + $0xc8] sm:$0xff]
  %v51 = vld [vmem:[%s0 + $0xd0] sm:$0xff]
  %v52 = vld [vmem:[%s0 + $0xd8] sm:$0xff]
  %v53 = vld [vmem:[%s0 + $0xe0] sm:$0xff]
  %v54 = vld [vmem:[%s0 + $0xe8] sm:$0xff]
  %v55 = vld [vmem:[%s0 + $0xf0] sm:$0xff]
  %v56 = vld [vmem:[%s0 + $0xf8] sm:$0xff]
  %v57 = vld [vmem:[%s0 + $0x100] sm:$0xff]
  %v58 = vld [vmem:[%s0 + $0x108] sm:$0xff]
  %v59 = vld [vmem:[%s0 + $0x110] sm:$0xff]
  %v60 = vld [vmem:[%s0 + $0x118] sm:$0xff]
  %v61 = vld [vmem:[%s0 + $0x120] sm:$0xff]
  %v62 = vld [vmem:[%s0 + $0x128] sm:$0xff]
  %v63 = vld [vmem:[%s0 + $0x130] sm:$0xff]
  %v64 = vld [vmem:[%s0 + $0x138] sm:$0xff]
  %v65 = vld [vmem:[%s0 + $0x140] sm:$0xff]
  %v66 = vld [vmem:[%s0 + $0x148] sm:$0xff]
  %v67 = vld [vmem:[%s0 + $0x150] sm:$0xff]
  %v68 = vld [vmem:[%s0 + $0x158] sm:$0xff]
  %v69 = vld [vmem:[%s0 + $0x160] sm:$0xff]
  %v70 = vld [vmem:[%s0 + $0x168] sm:$0xff]
  %v71 = vld [vmem:[%s0 + $0x170] sm:$0xff]
  %v72 = vld [vmem:[%s0 + $0x178] sm:$0xff]
  %v73 = vld [vmem:[%s0 + $0x180] sm:$0xff]
  %v74 = vld [vmem:[%s0 + $0x188] sm:$0xff]
  %v75 = vld [vmem:[%s0 + $0x190] sm:$0xff]
  %v76 = vld [vmem:[%s0 + $0x198] sm:$0xff]
  %v77 = vld [vmem:[%s0 + $0x1a0] sm:$0xff]
  %v78 = vld [vmem:[%s0 + $0x1a8] sm:$0xff]
  %v79 = vld [vmem:[%s0 + $0x1b0] sm:$0xff]
  %v80 = vld [vmem:[%s0 + $0x1b8] sm:$0xff]
  %v81 = vld [vmem:[%s0 + $0x1c0] sm:$0xff]
  %v82 = vld [vmem:[%s0 + $0x1c8] sm:$0xff]
  %v83 = vld [vmem:[%s0 + $0x1d0] sm:$0xff]
  %v84 = vld [vmem:[%s0 + $0x1d8] sm:$0xff]
  %v85 = vld [vmem:[%s0 + $0x1e0] sm:$0xff]
  %v86 = vld [vmem:[%s0 + $0x1e8] sm:$0xff]
  %v87 = vld [vmem:[%s0 + $0x1f0] sm:$0xff]
  %v88 = vld [vmem:[%s0 + $0x1f8] sm:$0xff]
  %v89 = vld [vmem:[%s0 + $0x200] sm:$0xff]
  %v90 = vld [vmem:[%s0 + $0x208] sm:$0xff]
  %v91 = vld [vmem:[%s0 + $0x210] sm:$0xff]
  %v92 = vld [vmem:[%s0 + $0x218] sm:$0xff]
  %v93 = vld [vmem:[%s0 + $0x220] sm:$0xff]
  %v94 = vld [vmem:[%s0 + $0x228] sm:$0xff]
  %v95 = vld [vmem:[%s0 + $0x230] sm:$0xff]
  %v96 = vld [vmem:[%s0 + $0x238] sm:$0xff]
  %v97 = vld [vmem:[%s0 + $0x240] sm:$0xff]
  %v98 = vld [vmem:[%s0 + $0x248] sm:$0xff]
  %v99 = vld [vmem:[%s0 + $0x250] sm:$0xff]
  %v100 = vld [vmem:[%s0 + $0x258] sm:$0xff]
  %v101 = vld [vmem:[%s0 + $0x260] sm:$0xff]
  %v102 = vld [vmem:[%s0 + $0x268] sm:$0xff]
  %v103 = vld [vmem:[%s0 + $0x270] sm:$0xff]
  %v104 = vld [vmem:[%s0 + $0x278] sm:$0xff]
  %v105 = vld [vmem:[%s0 + $0x280] sm:$0xff]
  %v106 = vld [vmem:[%s0 + $0x288] sm:$0xff]
  %v107 = vld [vmem:[%s0 + $0x290] sm:$0xff]
  %v108 = vld [vmem:[%s0 + $0x298] sm:$0xff]
  %v109 = vld [vmem:[%s0 + $0x2a0] sm:$0xff]
  %v110 = vld [vmem:[%s0 + $0x2a8] sm:$0xff]
  %v111 = vld [vmem:[%s0 + $0x2b0] sm:$0xff]
  %v112 = vld [vmem:[%s0 + $0x2b8] sm:$0xff]
  %v113 = vld [vmem:[%s0 + $0x2c0] sm:$0xff]
  %v114 = vld [vmem:[%s0 + $0x2c8] sm:$0xff]
  %v115 = vld [vmem:[%s0 + $0x2d0] sm:$0xff]
  %v116 = vld [vmem:[%s0 + $0x2d8] sm:$0xff]
  %v117 = vld [vmem:[%s0 + $0x2e0] sm:$0xff]
  %v118 = vld [vmem:[%s0 + $0x2e8] sm:$0xff]
  %v119 = vld [vmem:[%s0 + $0x2f0] sm:$0xff]
  %v120 = vld [vmem:[%s0 + $0x2f8] sm:$0xff]
  %v121 = vld [vmem:[%s0 + $0x300] sm:$0xff]
  %v122 = vld [vmem:[%s0 + $0x308] sm:$0xff]
  %v123 = vld [vmem:[%s0 + $0x310] sm:$0xff]
  %v124 = vld [vmem:[%s0 + $0x318] sm:$0xff]
  %v125 = vld [vmem:[%s0 + $0x320] sm:$0xff]
  %v126 = vld [vmem:[%s0 + $0x328] sm:$0xff]
  %v127 = vld [vmem:[%s0 + $0x330] sm:$0xff]
  %v128 = vld [vmem:[%s0 + $0x338] sm:$0xff]
  %v129 = vld [vmem:[%s0 + $0x340] sm:$0xff]
  %v130 = vld [vmem:[%s0 + $0x348] sm:$0xff]
  %v131 = vld [vmem:[%s0 + $0x350] sm:$0xff]
  %v132 = vld [vmem:[%s0 + $0x358] sm:$0xff]
  %v133 = vld [vmem:[%s0 + $0x360] sm:$0xff]
  %v134 = vld [vmem:[%s0 + $0x368] sm:$0xff]
  %v135 = vld [vmem:[%s0 + $0x370] sm:$0xff]
  %v136 = vld [vmem:[%s0 + $0x378] sm:$0xff]
  %v137 = vld [vmem:[%s0 + $0x380] sm:$0xff]
  %v138 = vld [vmem:[%s0 + $0x388] sm:$0xff]
  %v139 = vld [vmem:[%s0 + $0x390] sm:$0xff]
  %v140 = vld [vmem:[%s0 + $0x398] sm:$0xff]
  %v141 = vld [vmem:[%s0 + $0x3a0] sm:$0xff]
  %v142 = vld [vmem:[%s0 + $0x3a8] sm:$0xff]
  %v143 = vld [vmem:[%s0 + $0x3b0] sm:$0xff]
  %v144 = vld [vmem:[%s0 + $0x3b8] sm:$0xff]
  %v145 = vld [vmem:[%s0 + $0x3c0] sm:$0xff]
  %v146 = vld [vmem:[%s0 + $0x3c8] sm:$0xff]
  %v147 = vld [vmem:[%s0 + $0x3d0] sm:$0xff]
  %v148 = vld [vmem:[%s0 + $0x3d8] sm:$0xff]
  %v149 = vld [vmem:[%s0 + $0x3e0] sm:$0xff]
  %v150 = vld [vmem:[%s0 + $0x3e8] sm:$0xff]
  %v151 = vld [vmem:[%s0 + $0x3f0] sm:$0xff]
  %v152 = vld [vmem:[%s0 + $0x3f8] sm:$0xff]
  %v153 = vld [vmem:[%s0 + $0x400] sm:$0xff]
  %v154 = vld [vmem:[%s0 + $0x408] sm:$0xff]
  %v155 = vld [vmem:[%s0 + $0x410] sm:$0xff]
  %v156 = vld [vmem:[%s0 + $0x418] sm:$0xff]
  %v157 = vld [vmem:[%s0 + $0x420] sm:$0xff]
  %v158 = vld [vmem:[%s0 + $0x428] sm:$0xff]
  %v159 = vld [vmem:[%s0 + $0x430] sm:$0xff]
  %v160 = vld [vmem:[%s0 + $0x438] sm:$0xff]
  %v161 = vld [vmem:[%s0 + $0x440] sm:$0xff]
  %v162 = vld [vmem:[%s0 + $0x448] sm:$0xff]
  %v163 = vld [vmem:[%s0 + $0x450] sm:$0xff]
  %v164 = vld [vmem:[%s0 + $0x458] sm:$0xff]
  %v165 = vld [vmem:[%s0 + $0x460] sm:$0xff]
  %v166 = vld [vmem:[%s0 + $0x468] sm:$0xff]
  %v167 = vld [vmem:[%s0 + $0x470] sm:$0xff]
  %v168 = vld [vmem:[%s0 + $0x478] sm:$0xff]
  %v169 = vld [vmem:[%s0 + $0x480] sm:$0xff]
  %v170 = vld [vmem:[%s0 + $0x488] sm:$0xff]
  %v171 = vld [vmem:[%s0 + $0x490] sm:$0xff]
  %v172 = vld [vmem:[%s0 + $0x498] sm:$0xff]
  %v173 = vld [vmem:[%s0 + $0x4a0] sm:$0xff]
  %v174 = vld [vmem:[%s0 + $0x4a8] sm:$0xff]
  %v175 = vld [vmem:[%s0 + $0x4b0] sm:$0xff]
  %v176 = vld [vmem:[%s0 + $0x4b8] sm:$0xff]
  %v177 = vld [vmem:[%s0 + $0x4c0] sm:$0xff]
  %v178 = vld [vmem:[%s0 + $0x4c8] sm:$0xff]
  %v179 = vld [vmem:[%s0 + $0x4d0] sm:$0xff]
  %v180 = vld [vmem:[%s0 + $0x4d8] sm:$0xff]
  %v181 = vld [vmem:[%s0 + $0x4e0] sm:$0xff]
  %v182 = vld [vmem:[%s0 + $0x4e8] sm:$0xff]
  %v183 = vld [vmem:[%s0 + $0x4f0] sm:$0xff]
  %v184 = vld [vmem:[%s0 + $0x4f8] sm:$0xff]
  %v185 = vld [vmem:[%s0 + $0x500] sm:$0xff]
  %v186 = vld [vmem:[%s0 + $0x508] sm:$0xff]
  %v187 = vld [vmem:[%s0 + $0x510] sm:$0xff]
  %v188 = vld [vmem:[%s0 + $0x518] sm:$0xff]
  %v189 = vld [vmem:[%s0 + $0x520] sm:$0xff]
  %v190 = vld [vmem:[%s0 + $0x528] sm:$0xff]
  %v191 = vld [vmem:[%s0 + $0x530] sm:$0xff]
  %v192 = vld [vmem:[%s0 + $0x538] sm:$0xff]
  %v193 = vld [vmem:[%s0 + $0x540] sm:$0xff]
  %v194 = vld [vmem:[%s0 + $0x548] sm:$0xff]
  %v195 = vld [vmem:[%s0 + $0x550] sm:$0xff]
  %v196 = vld [vmem:[%s0 + $0x558] sm:$0xff]
  %v197 = vld [vmem:[%s0 + $0x560] sm:$0xff]
  %v198 = vld [vmem:[%s0 + $0x568] sm:$0xff]
  %v199 = vld [vmem:[%s0 + $0x570] sm:$0xff]
  %v200 = vld [vmem:[%s0 + $0x578] sm:$0xff]
  %v201 = vld [vmem:[%s0 + $0x580] sm:$0xff]
  %v202 = vld [vmem:[%s0 + $0x588] sm:$0xff]
  %v203 = vld [vmem:[%s0 + $0x590] sm:$0xff]
  %v204 = vld [vmem:[%s0 + $0x598] sm:$0xff]
  %v205 = vld [vmem:[%s0 + $0x5a0] sm:$0xff]
  %v206 = vld [vmem:[%s0 + $0x5a8] sm:$0xff]
  %v207 = vld [vmem:[%s0 + $0x5b0] sm:$0xff]
  %v208 = vld [vmem:[%s0 + $0x5b8] sm:$0xff]
  %v209 = vld [vmem:[%s0 + $0x5c0] sm:$0xff]
  %v210 = vld [vmem:[%s0 + $0x5c8] sm:$0xff]
  %v211 = vld [vmem:[%s0 + $0x5d0] sm:$0xff]
  %v212 = vld [vmem:[%s0 + $0x5d8] sm:$0xff]
  %v213 = vld [vmem:[%s0 + $0x5e0] sm:$0xff]
  %v214 = vld [vmem:[%s0 + $0x5e8] sm:$0xff]
  %v215 = vld [vmem:[%s0 + $0x5f0] sm:$0xff]
  %v216 = vld [vmem:[%s0 + $0x5f8] sm:$0xff]
  %v217 = vld [vmem:[%s0 + $0x600] sm:$0xff]
  %v218 = vld [vmem:[%s0 + $0x608] sm:$0xff]
  %v219 = vld [vmem:[%s0 + $0x610] sm:$0xff]
  %v220 = vld [vmem:[%s0 + $0x618] sm:$0xff]
  %v221 = vld [vmem:[%s0 + $0x620] sm:$0xff]
  %v222 = vld [vmem:[%s0 + $0x628] sm:$0xff]
  %v223 = vld [vmem:[%s0 + $0x630] sm:$0xff]
  %v224 = vld [vmem:[%s0 + $0x638] sm:$0xff]
  %v225 = vld [vmem:[%s0 + $0x640] sm:$0xff]
  %v226 = vld [vmem:[%s0 + $0x648] sm:$0xff]
  %v227 = vld [vmem:[%s0 + $0x650] sm:$0xff]
  %v228 = vld [vmem:[%s0 + $0x658] sm:$0xff]
  %v229 = vld [vmem:[%s0 + $0x660] sm:$0xff]
  %v230 = vld [vmem:[%s0 + $0x668] sm:$0xff]
  %v231 = vld [vmem:[%s0 + $0x670] sm:$0xff]
  %v232 = vld [vmem:[%s0 + $0x678] sm:$0xff]
  %v233 = vld [vmem:[%s0 + $0x680] sm:$0xff]
  %v234 = vld [vmem:[%s0 + $0x688] sm:$0xff]
  %v235 = vld [vmem:[%s0 + $0x690] sm:$0xff]
  %v236 = vld [vmem:[%s0 + $0x698] sm:$0xff]
  %v237 = vld [vmem:[%s0 + $0x6a0] sm:$0xff]
  %v238 = vld [vmem:[%s0 + $0x6a8] sm:$0xff]
  %v239 = vld [vmem:[%s0 + $0x6b0] sm:$0xff]
  %v240 = vld [vmem:[%s0 + $0x6b8] sm:$0xff]
  %v241 = vld [vmem:[%s0 + $0x6c0] sm:$0xff]
  %v242 = vld [vmem:[%s0 + $0x6c8] sm:$0xff]
  %v243 = vld [vmem:[%s0 + $0x6d0] sm:$0xff]
  %v244 = vld [vmem:[%s0 + $0x6d8] sm:$0xff]
  %v245 = vld [vmem:[%s0 + $0x6e0] sm:$0xff]
  %v246 = vld [vmem:[%s0 + $0x6e8] sm:$0xff]
  %v247 = vld [vmem:[%s0 + $0x6f0] sm:$0xff]
  %v248 = vld [vmem:[%s0 + $0x6f8] sm:$0xff]
  %v249 = vld [vmem:[%s0 + $0x700] sm:$0xff]
  %v250 = vld [vmem:[%s0 + $0x708] sm:$0xff]
  %v251 = vld [vmem:[%s0 + $0x710] sm:$0xff]
  %v252 = vld [vmem:[%s0 + $0x718] sm:$0xff]
  %v253 = vld [vmem:[%s0 + $0x720] sm:$0xff]
  %v254 = vld [vmem:[%s0 + $0x728] sm:$0xff]
  %v255 = vld [vmem:[%s0 + $0x730] sm:$0xff]
  %v256 = vld [vmem:[%s0 + $0x738] sm:$0xff]
  %v257 = vld [vmem:[%s0 + $0x740] sm:$0xff]
  %v258 = vld [vmem:[%s0 + $0x748] sm:$0xff]
  %v259 = vld [vmem:[%s0 + $0x750] sm:$0xff]
  %v260 = vld [vmem:[%s0 + $0x758] sm:$0xff]
  %v261 = vld [vmem:[%s0 + $0x760] sm:$0xff]
  %v262 = vld [vmem:[%s0 + $0x768] sm:$0xff]
  %v263 = vld [vmem:[%s0 + $0x770] sm:$0xff]
  %v264 = vld [vmem:[%s0 + $0x778] sm:$0xff]
  %v265 = vld [vmem:[%s0 + $0x780] sm:$0xff]
  %v266 = vld [vmem:[%s0 + $0x788] sm:$0xff]
  %v267 = vld [vmem:[%s0 + $0x790] sm:$0xff]
  %v268 = vld [vmem:[%s0 + $0x798] sm:$0xff]
  %v269 = vld [vmem:[%s0 + $0x7a0] sm:$0xff]
  %v270 = vld [vmem:[%s0 + $0x7a8] sm:$0xff]
  %v271 = vld [vmem:[%s0 + $0x7b0] sm:$0xff]
  %v272 = vld [vmem:[%s0 + $0x7b8] sm:$0xff]
  %v273 = vld [vmem:[%s0 + $0x7c0] sm:$0xff]
  %v274 = vld [vmem:[%s0 + $0x7c8] sm:$0xff]
  %v275 = vld [vmem:[%s0 + $0x7d0] sm:$0xff]
  %v276 = vld [vmem:[%s0 + $0x7d8] sm:$0xff]
  %v277 = vld [vmem:[%s0 + $0x7e0] sm:$0xff]
  %v278 = vld [vmem:[%s0 + $0x7e8] sm:$0xff]
  %v279 = vld [vmem:[%s0 + $0x7f0] sm:$0xff]
  %v280 = vld [vmem:[%s0 + $0x7f8] sm:$0xff]
  %v281 = vld [vmem:[%s0 + $0x800] sm:$0xff]
  %v282 = vld [vmem:[%s0 + $0x808] sm:$0xff]
  %v283 = vld [vmem:[%s0 + $0x810] sm:$0xff]
  %v284 = vld [vmem:[%s0 + $0x818] sm:$0xff]
  %v285 = vld [vmem:[%s0 + $0x820] sm:$0xff]
  %v286 = vld [vmem:[%s0 + $0x828] sm:$0xff]
  %v287 = vld [vmem:[%s0 + $0x830] sm:$0xff]
  %v288 = vld [vmem:[%s0 + $0x838] sm:$0xff]
  %v289 = vld [vmem:[%s0 + $0x840] sm:$0xff]
  %v290 = vld [vmem:[%s0 + $0x848] sm:$0xff]
  %v291 = vld [vmem:[%s0 + $0x850] sm:$0xff]
  %v292 = vld [vmem:[%s0 + $0x858] sm:$0xff]
  %v293 = vld [vmem:[%s0 + $0x860] sm:$0xff]
  %v294 = vld [vmem:[%s0 + $0x868] sm:$0xff]
  %v295 = vld [vmem:[%s0 + $0x870] sm:$0xff]
  %v296 = vld [vmem:[%s0 + $0x878] sm:$0xff]
  %v297 = vld [vmem:[%s0 + $0x880] sm:$0xff]
  %v298 = vld [vmem:[%s0 + $0x888] sm:$0xff]
  %v299 = vld [vmem:[%s0 + $0x890] sm:$0xff]
  %v300 = vld [vmem:[%s0 + $0x898] sm:$0xff]
  %v301 = vld [vmem:[%s0 + $0x8a0] sm:$0xff]
  %v302 = vld [vmem:[%s0 + $0x8a8] sm:$0xff]
  %v303 = vld [vmem:[%s0 + $0x8b0] sm:$0xff]
  %v304 = vld [vmem:[%s0 + $0x8b8] sm:$0xff]
  %v305 = vld [vmem:[%s0 + $0x8c0] sm:$0xff]
  %v306 = vld [vmem:[%s0 + $0x8c8] sm:$0xff]
  %v307 = vld [vmem:[%s0 + $0x8d0] sm:$0xff]
  %v308 = vld [vmem:[%s0 + $0x8d8] sm:$0xff]
  %v309 = vld [vmem:[%s0 + $0x8e0] sm:$0xff]
  %v310 = vld [vmem:[%s0 + $0x8e8] sm:$0xff]
  %v311 = vld [vmem:[%s0 + $0x8f0] sm:$0xff]
  %v312 = vld [vmem:[%s0 + $0x8f8] sm:$0xff]
  %v313 = vld [vmem:[%s0 + $0x900] sm:$0xff]
  %v314 = vld [vmem:[%s0 + $0x908] sm:$0xff]
  %v315 = vld [vmem:[%s0 + $0x910] sm:$0xff]
  %v316 = vld [vmem:[%s0 + $0x918] sm:$0xff]
  %v317 = vld [vmem:[%s0 + $0x920] sm:$0xff]
  %v318 = vld [vmem:[%s0 + $0x928] sm:$0xff]
  %v319 = vld [vmem:[%s0 + $0x930] sm:$0xff]
  %v320 = vld [vmem:[%s0 + $0x938] sm:$0xff]
  %v321 = vld [vmem:[%s0 + $0x940] sm:$0xff]
  %v322 = vld [vmem:[%s0 + $0x948] sm:$0xff]
  %v323 = vld [vmem:[%s0 + $0x950] sm:$0xff]
  %v324 = vld [vmem:[%s0 + $0x958] sm:$0xff]
  %v325 = vld [vmem:[%s0 + $0x960] sm:$0xff]
  %v326 = vld [vmem:[%s0 + $0x968] sm:$0xff]
  %v327 = vld [vmem:[%s0 + $0x970] sm:$0xff]
  %v328 = vld [vmem:[%s0 + $0x978] sm:$0xff]
  %v329 = vld [vmem:[%s0 + $0x980] sm:$0xff]
  %v330 = vld [vmem:[%s0 + $0x988] sm:$0xff]
  %v331 = vld [vmem:[%s0 + $0x990] sm:$0xff]
  %v332 = vld [vmem:[%s0 + $0x998] sm:$0xff]
  %v333 = vld [vmem:[%s0 + $0x9a0] sm:$0xff]
  %v334 = vld [vmem:[%s0 + $0x9a8] sm:$0xff]
  %v335 = vld [vmem:[%s0 + $0x9b0] sm:$0xff]
  %v336 = vld [vmem:[%s0 + $0x9b8] sm:$0xff]
  %v337 = vld [vmem:[%s0 + $0x9c0] sm:$0xff]
  %v338 = vld [vmem:[%s0 + $0x9c8] sm:$0xff]
  %v339 = vld [vmem:[%s0 + $0x9d0] sm:$0xff]
  %v340 = vld [vmem:[%s0 + $0x9d8] sm:$0xff]
  %v341 = vld [vmem:[%s0 + $0x9e0] sm:$0xff]
  %v342 = vld [vmem:[%s0 + $0x9e8] sm:$0xff]
  %v343 = vld [vmem:[%s0 + $0x9f0] sm:$0xff]
  %v344 = vld [vmem:[%s0 + $0x9f8] sm:$0xff]
  %v345 = vld [vmem:[%s0 + $0xa00] sm:$0xff]
  %v346 = vld [vmem:[%s0 + $0xa08] sm:$0xff]
  %v347 = vld [vmem:[%s0 + $0xa10] sm:$0xff]
  %v348 = vld [vmem:[%s0 + $0xa18] sm:$0xff]
  %v350 = vperm.slane %v24, 0
  %vm352 = vcmask 261120
  %v354 = vsel %vm352, %v25, 0
  %v357 = vsel %vm352, %v26, 0
  %v360 = vsel %vm352, %v27, 0
  %v363 = vsel %vm352, %v28, 0
  %v366 = vsel %vm352, %v29, 0
  %v369 = vsel %vm352, %v30, 0
  %v372 = vsel %vm352, %v31, 0
  %v375 = vsel %vm352, %v32, 0
  %v378 = vsel %vm352, %v33, 0
  %v381 = vsel %vm352, %v34, 0
  %v384 = vsel %vm352, %v35, 0
  %v387 = vsel %vm352, %v36, 0
  %v390 = vsel %vm352, %v37, 0
  %v393 = vsel %vm352, %v38, 0
  %v396 = vsel %vm352, %v39, 0
  %v399 = vsel %vm352, %v40, 0
  %v402 = vsel %vm352, %v41, 0
  %v405 = vsel %vm352, %v42, 0
  %v408 = vsel %vm352, %v43, 0
  %v411 = vsel %vm352, %v44, 0
  %v414 = vsel %vm352, %v45, 0
  %v417 = vsel %vm352, %v46, 0
  %v420 = vsel %vm352, %v47, 0
  %v423 = vsel %vm352, %v48, 0
  %v426 = vsel %vm352, %v49, 0
  %v429 = vsel %vm352, %v50, 0
  %v432 = vsel %vm352, %v51, 0
  %v435 = vsel %vm352, %v52, 0
  %v438 = vsel %vm352, %v53, 0
  %v441 = vsel %vm352, %v54, 0
  %v444 = vsel %vm352, %v55, 0
  %v447 = vsel %vm352, %v56, 0
  %v450 = vsel %vm352, %v57, 0
  %v453 = vsel %vm352, %v58, 0
  %v456 = vsel %vm352, %v59, 0
  %v459 = vsel %vm352, %v60, 0
  %v462 = vsel %vm352, %v61, 0
  %v465 = vsel %vm352, %v62, 0
  %v468 = vsel %vm352, %v63, 0
  %v471 = vsel %vm352, %v64, 0
  %v474 = vsel %vm352, %v65, 0
  %v477 = vsel %vm352, %v66, 0
  %v480 = vsel %vm352, %v67, 0
  %v483 = vsel %vm352, %v68, 0
  %v486 = vsel %vm352, %v69, 0
  %v489 = vsel %vm352, %v70, 0
  %v492 = vsel %vm352, %v71, 0
  %v495 = vsel %vm352, %v72, 0
  %v498 = vsel %vm352, %v73, 0
  %v501 = vsel %vm352, %v74, 0
  %v504 = vsel %vm352, %v75, 0
  %v507 = vsel %vm352, %v76, 0
  %v510 = vsel %vm352, %v77, 0
  %v513 = vsel %vm352, %v78, 0
  %v516 = vsel %vm352, %v79, 0
  %v519 = vsel %vm352, %v80, 0
  %v522 = vsel %vm352, %v81, 0
  %v525 = vsel %vm352, %v82, 0
  %v528 = vsel %vm352, %v83, 0
  %v531 = vsel %vm352, %v84, 0
  %v534 = vsel %vm352, %v85, 0
  %v537 = vsel %vm352, %v86, 0
  %v540 = vsel %vm352, %v87, 0
  %v543 = vsel %vm352, %v88, 0
  %v546 = vsel %vm352, %v89, 0
  %v549 = vsel %vm352, %v90, 0
  %v552 = vsel %vm352, %v91, 0
  %v555 = vsel %vm352, %v92, 0
  %v558 = vsel %vm352, %v93, 0
  %v561 = vsel %vm352, %v94, 0
  %v564 = vsel %vm352, %v95, 0
  %v567 = vsel %vm352, %v96, 0
  %v570 = vsel %vm352, %v97, 0
  %v573 = vsel %vm352, %v98, 0
  %v576 = vsel %vm352, %v99, 0
  %v579 = vsel %vm352, %v100, 0
  %v582 = vsel %vm352, %v101, 0
  %v585 = vsel %vm352, %v102, 0
  %v588 = vsel %vm352, %v103, 0
  %v591 = vsel %vm352, %v104, 0
  %v594 = vsel %vm352, %v105, 0
  %v597 = vsel %vm352, %v106, 0
  %v600 = vsel %vm352, %v107, 0
  %v603 = vsel %vm352, %v108, 0
  %v606 = vsel %vm352, %v109, 0
  %v609 = vsel %vm352, %v110, 0
  %v612 = vsel %vm352, %v111, 0
  %v615 = vsel %vm352, %v112, 0
  %v618 = vsel %vm352, %v113, 0
  %v621 = vsel %vm352, %v114, 0
  %v624 = vsel %vm352, %v115, 0
  %v627 = vsel %vm352, %v116, 0
  %v630 = vsel %vm352, %v117, 0
  %v633 = vsel %vm352, %v118, 0
  %v636 = vsel %vm352, %v119, 0
  %v639 = vsel %vm352, %v120, 0
  %v642 = vsel %vm352, %v121, 0
  %v645 = vsel %vm352, %v122, 0
  %v648 = vsel %vm352, %v123, 0
  %v651 = vsel %vm352, %v124, 0
  %v654 = vsel %vm352, %v125, 0
  %v657 = vsel %vm352, %v126, 0
  %v660 = vsel %vm352, %v127, 0
  %v663 = vsel %vm352, %v128, 0
  %v666 = vsel %vm352, %v129, 0
  %v669 = vsel %vm352, %v130, 0
  %v672 = vsel %vm352, %v131, 0
  %v675 = vsel %vm352, %v132, 0
  %v678 = vsel %vm352, %v133, 0
  %v681 = vsel %vm352, %v134, 0
  %v684 = vsel %vm352, %v135, 0
  %v687 = vsel %vm352, %v136, 0
  %v690 = vsel %vm352, %v137, 0
  %v693 = vsel %vm352, %v138, 0
  %v696 = vsel %vm352, %v139, 0
  %v699 = vsel %vm352, %v140, 0
  %v702 = vsel %vm352, %v141, 0
  %v705 = vsel %vm352, %v142, 0
  %v708 = vsel %vm352, %v143, 0
  %v711 = vsel %vm352, %v144, 0
  %v714 = vsel %vm352, %v145, 0
  %v717 = vsel %vm352, %v146, 0
  %v720 = vsel %vm352, %v147, 0
  %v723 = vsel %vm352, %v148, 0
  %v726 = vsel %vm352, %v149, 0
  %v729 = vsel %vm352, %v150, 0
  %v732 = vsel %vm352, %v151, 0
  %v735 = vsel %vm352, %v152, 0
  %v738 = vsel %vm352, %v153, 0
  %v741 = vsel %vm352, %v154, 0
  %v744 = vsel %vm352, %v155, 0
  %v747 = vsel %vm352, %v156, 0
  %v750 = vsel %vm352, %v157, 0
  %v753 = vsel %vm352, %v158, 0
  %v756 = vsel %vm352, %v159, 0
  %v759 = vsel %vm352, %v160, 0
  %v762 = vsel %vm352, %v161, 0
  %v765 = vsel %vm352, %v162, 0
  %v768 = vsel %vm352, %v163, 0
  %v771 = vsel %vm352, %v164, 0
  %v774 = vsel %vm352, %v165, 0
  %v777 = vsel %vm352, %v166, 0
  %v780 = vsel %vm352, %v167, 0
  %v783 = vsel %vm352, %v168, 0
  %v786 = vsel %vm352, %v169, 0
  %v789 = vsel %vm352, %v170, 0
  %v792 = vsel %vm352, %v171, 0
  %v795 = vsel %vm352, %v172, 0
  %v798 = vsel %vm352, %v173, 0
  %v801 = vsel %vm352, %v174, 0
  %v804 = vsel %vm352, %v175, 0
  %v807 = vsel %vm352, %v176, 0
  %v810 = vsel %vm352, %v177, 0
  %v813 = vsel %vm352, %v178, 0
  %v816 = vsel %vm352, %v179, 0
  %v819 = vsel %vm352, %v180, 0
  %v822 = vsel %vm352, %v181, 0
  %v825 = vsel %vm352, %v182, 0
  %v828 = vsel %vm352, %v183, 0
  %v831 = vsel %vm352, %v184, 0
  %v834 = vsel %vm352, %v185, 0
  %v837 = vsel %vm352, %v186, 0
  %v840 = vsel %vm352, %v187, 0
  %v843 = vsel %vm352, %v188, 0
  %v846 = vsel %vm352, %v189, 0
  %v849 = vsel %vm352, %v190, 0
  %v852 = vsel %vm352, %v191, 0
  %v855 = vsel %vm352, %v192, 0
  %v858 = vsel %vm352, %v193, 0
  %v861 = vsel %vm352, %v194, 0
  %v864 = vsel %vm352, %v195, 0
  %v867 = vsel %vm352, %v196, 0
  %v870 = vsel %vm352, %v197, 0
  %v873 = vsel %vm352, %v198, 0
  %v876 = vsel %vm352, %v199, 0
  %v879 = vsel %vm352, %v200, 0
  %v882 = vsel %vm352, %v201, 0
  %v885 = vsel %vm352, %v202, 0
  %v888 = vsel %vm352, %v203, 0
  %v891 = vsel %vm352, %v204, 0
  %v894 = vsel %vm352, %v205, 0
  %v897 = vsel %vm352, %v206, 0
  %v900 = vsel %vm352, %v207, 0
  %v903 = vsel %vm352, %v208, 0
  %v906 = vsel %vm352, %v209, 0
  %v909 = vsel %vm352, %v210, 0
  %v912 = vsel %vm352, %v211, 0
  %v915 = vsel %vm352, %v212, 0
  %v918 = vsel %vm352, %v213, 0
  %v921 = vsel %vm352, %v214, 0
  %v924 = vsel %vm352, %v215, 0
  %v927 = vsel %vm352, %v216, 0
  %v930 = vsel %vm352, %v217, 0
  %v933 = vsel %vm352, %v218, 0
  %v936 = vsel %vm352, %v219, 0
  %v939 = vsel %vm352, %v220, 0
  %v942 = vsel %vm352, %v221, 0
  %v945 = vsel %vm352, %v222, 0
  %v948 = vsel %vm352, %v223, 0
  %v951 = vsel %vm352, %v224, 0
  %v954 = vsel %vm352, %v225, 0
  %v957 = vsel %vm352, %v226, 0
  %v960 = vsel %vm352, %v227, 0
  %v963 = vsel %vm352, %v228, 0
  %v966 = vsel %vm352, %v229, 0
  %v969 = vsel %vm352, %v230, 0
  %v972 = vsel %vm352, %v231, 0
  %v975 = vsel %vm352, %v232, 0
  %v978 = vsel %vm352, %v233, 0
  %v981 = vsel %vm352, %v234, 0
  %v984 = vsel %vm352, %v235, 0
  %v987 = vsel %vm352, %v236, 0
  %v990 = vsel %vm352, %v237, 0
  %v993 = vsel %vm352, %v238, 0
  %v996 = vsel %vm352, %v239, 0
  %v999 = vsel %vm352, %v240, 0
  %v1002 = vsel %vm352, %v241, 0
  %v1005 = vsel %vm352, %v242, 0
  %v1008 = vsel %vm352, %v243, 0
  %v1011 = vsel %vm352, %v244, 0
  %v1014 = vsel %vm352, %v245, 0
  %v1017 = vsel %vm352, %v246, 0
  %v1020 = vsel %vm352, %v247, 0
  %v1023 = vsel %vm352, %v248, 0
  %v1026 = vsel %vm352, %v249, 0
  %v1029 = vsel %vm352, %v250, 0
  %v1032 = vsel %vm352, %v251, 0
  %v1035 = vsel %vm352, %v252, 0
  %v1038 = vsel %vm352, %v253, 0
  %v1041 = vsel %vm352, %v254, 0
  %v1044 = vsel %vm352, %v255, 0
  %v1047 = vsel %vm352, %v256, 0
  %v1050 = vsel %vm352, %v257, 0
  %v1053 = vsel %vm352, %v258, 0
  %v1056 = vsel %vm352, %v259, 0
  %v1059 = vsel %vm352, %v260, 0
  %v1062 = vsel %vm352, %v261, 0
  %v1065 = vsel %vm352, %v262, 0
  %v1068 = vsel %vm352, %v263, 0
  %v1071 = vsel %vm352, %v264, 0
  %v1074 = vsel %vm352, %v265, 0
  %v1077 = vsel %vm352, %v266, 0
  %v1080 = vsel %vm352, %v267, 0
  %v1083 = vsel %vm352, %v268, 0
  %v1086 = vsel %vm352, %v269, 0
  %v1089 = vsel %vm352, %v270, 0
  %v1092 = vsel %vm352, %v271, 0
  %v1095 = vsel %vm352, %v272, 0
  %v1098 = vsel %vm352, %v273, 0
  %v1101 = vsel %vm352, %v274, 0
  %v1104 = vsel %vm352, %v275, 0
  %v1107 = vsel %vm352, %v276, 0
  %v1110 = vsel %vm352, %v277, 0
  %v1113 = vsel %vm352, %v278, 0
  %v1116 = vsel %vm352, %v279, 0
  %v1119 = vsel %vm352, %v280, 0
  %v1122 = vsel %vm352, %v281, 0
  %v1125 = vsel %vm352, %v282, 0
  %v1128 = vsel %vm352, %v283, 0
  %v1131 = vsel %vm352, %v284, 0
  %v1134 = vsel %vm352, %v285, 0
  %v1137 = vsel %vm352, %v286, 0
  %v1140 = vsel %vm352, %v287, 0
  %v1143 = vsel %vm352, %v288, 0
  %v1146 = vsel %vm352, %v289, 0
  %v1149 = vsel %vm352, %v290, 0
  %v1152 = vsel %vm352, %v291, 0
  %v1155 = vsel %vm352, %v292, 0
  %v1158 = vsel %vm352, %v293, 0
  %v1161 = vsel %vm352, %v294, 0
  %v1164 = vsel %vm352, %v295, 0
  %v1167 = vsel %vm352, %v296, 0
  %v1170 = vsel %vm352, %v297, 0
  %v1173 = vsel %vm352, %v298, 0
  %v1176 = vsel %vm352, %v299, 0
  %v1179 = vsel %vm352, %v300, 0
  %v1182 = vsel %vm352, %v301, 0
  %v1185 = vsel %vm352, %v302, 0
  %v1188 = vsel %vm352, %v303, 0
  %v1191 = vsel %vm352, %v304, 0
  %v1194 = vsel %vm352, %v305, 0
  %v1197 = vsel %vm352, %v306, 0
  %v1200 = vsel %vm352, %v307, 0
  %v1203 = vsel %vm352, %v308, 0
  %v1206 = vsel %vm352, %v309, 0
  %v1209 = vsel %vm352, %v310, 0
  %v1212 = vsel %vm352, %v311, 0
  %v1215 = vsel %vm352, %v312, 0
  %v1218 = vsel %vm352, %v313, 0
  %v1221 = vsel %vm352, %v314, 0
  %v1224 = vsel %vm352, %v315, 0
  %v1227 = vsel %vm352, %v316, 0
  %v1230 = vsel %vm352, %v317, 0
  %v1233 = vsel %vm352, %v318, 0
  %v1236 = vsel %vm352, %v319, 0
  %v1239 = vsel %vm352, %v320, 0
  %v1242 = vsel %vm352, %v321, 0
  %v1245 = vsel %vm352, %v322, 0
  %v1248 = vsel %vm352, %v323, 0
  %v1251 = vsel %vm352, %v324, 0
  %v1254 = vsel %vm352, %v325, 0
  %v1257 = vsel %vm352, %v326, 0
  %v1260 = vsel %vm352, %v327, 0
  %v1263 = vsel %vm352, %v328, 0
  %v1266 = vsel %vm352, %v329, 0
  %v1269 = vsel %vm352, %v330, 0
  %v1272 = vsel %vm352, %v331, 0
  %v1275 = vsel %vm352, %v332, 0
  %v1278 = vsel %vm352, %v333, 0
  %v1281 = vsel %vm352, %v334, 0
  %v1284 = vsel %vm352, %v335, 0
  %v1287 = vsel %vm352, %v336, 0
  %v1290 = vsel %vm352, %v337, 0
  %v1293 = vsel %vm352, %v338, 0
  %v1296 = vsel %vm352, %v339, 0
  %v1299 = vsel %vm352, %v340, 0
  %v1302 = vsel %vm352, %v341, 0
  %v1305 = vsel %vm352, %v342, 0
  %v1308 = vsel %vm352, %v343, 0
  %v1311 = vsel %vm352, %v344, 0
  %v1314 = vsel %vm352, %v345, 0
  %v1317 = vsel %vm352, %v346, 0
  %v1320 = vsel %vm352, %v347, 0
  %v1323 = vsel %vm352, %v348, 0
  %1325 = vmatpush.msra.mxu0 0.0
  %1326 = vmatpush.msra.mxu0 0.0
  %1327 = vmatpush.msra.mxu0 0.0
  %1328 = vmatpush.msra.mxu0 0.0
  %1329 = vmatpush.msra.mxu0 0.0
  %1330 = vmatpush.msra.mxu0 0.0
  %1331 = vmatpush.msra.mxu0 0.0
  %1332 = vmatpush.msra.mxu0 0.0
  %1333 = vmatpush.msra.mxu0 0.0
  %1334 = vmatpush.msra.mxu0 0.0
  %1335 = vmatpush.msra.mxu0 0.0
  %1336 = vmatpush.msra.mxu0 0.0
  %1337 = vmatpush.msra.mxu0 %v23
  %1338 = vmatpush.msra.mxu0 %v22
  %1339 = vmatpush.msra.mxu0 %v21
  %1340 = vmatpush.msra.mxu0 %v20
  %1341 = vmatmul.f32.gmra.mxu0 %v354
  %v1342 = vpop.f32.mrf.mxu0
  %v1343 = vadd.f32 %v350, %v1342
  %1344 = vmatmul.f32.gmra.mxu0 %v357
  %v1345 = vpop.f32.mrf.mxu0
  %v1346 = vadd.f32 %v350, %v1345
  %1347 = vmatmul.f32.gmra.mxu0 %v360
  %v1348 = vpop.f32.mrf.mxu0
  %v1349 = vadd.f32 %v350, %v1348
  %1350 = vmatmul.f32.gmra.mxu0 %v363
  %v1351 = vpop.f32.mrf.mxu0
  %v1352 = vadd.f32 %v350, %v1351
  %1353 = vmatmul.f32.gmra.mxu0 %v366
  %v1354 = vpop.f32.mrf.mxu0
  %v1355 = vadd.f32 %v350, %v1354
  %1356 = vmatmul.f32.gmra.mxu0 %v369
  %v1357 = vpop.f32.mrf.mxu0
  %v1358 = vadd.f32 %v350, %v1357
  %1359 = vmatmul.f32.gmra.mxu0 %v372
  %v1360 = vpop.f32.mrf.mxu0
  %v1361 = vadd.f32 %v350, %v1360
  %1362 = vmatmul.f32.gmra.mxu0 %v375
  %v1363 = vpop.f32.mrf.mxu0
  %v1364 = vadd.f32 %v350, %v1363
  %1365 = vmatmul.f32.gmra.mxu0 %v378
  %v1366 = vpop.f32.mrf.mxu0
  %v1367 = vadd.f32 %v350, %v1366
  %1368 = vmatmul.f32.gmra.mxu0 %v381
  %v1369 = vpop.f32.mrf.mxu0
  %v1370 = vadd.f32 %v350, %v1369
  %1371 = vmatmul.f32.gmra.mxu0 %v384
  %v1372 = vpop.f32.mrf.mxu0
  %v1373 = vadd.f32 %v350, %v1372
  %1374 = vmatmul.f32.gmra.mxu0 %v387
  %v1375 = vpop.f32.mrf.mxu0
  %v1376 = vadd.f32 %v350, %v1375
  %1377 = vmatmul.f32.gmra.mxu0 %v390
  %v1378 = vpop.f32.mrf.mxu0
  %v1379 = vadd.f32 %v350, %v1378
  %1380 = vmatmul.f32.gmra.mxu0 %v393
  %v1381 = vpop.f32.mrf.mxu0
  %v1382 = vadd.f32 %v350, %v1381
  %1383 = vmatmul.f32.gmra.mxu0 %v396
  %v1384 = vpop.f32.mrf.mxu0
  %v1385 = vadd.f32 %v350, %v1384
  %1386 = vmatmul.f32.gmra.mxu0 %v399
  %v1387 = vpop.f32.mrf.mxu0
  %v1388 = vadd.f32 %v350, %v1387
  %1389 = vmatmul.f32.gmra.mxu0 %v402
  %v1390 = vpop.f32.mrf.mxu0
  %v1391 = vadd.f32 %v350, %v1390
  %1392 = vmatmul.f32.gmra.mxu0 %v405
  %v1393 = vpop.f32.mrf.mxu0
  %v1394 = vadd.f32 %v350, %v1393
  %1395 = vmatmul.f32.gmra.mxu0 %v408
  %v1396 = vpop.f32.mrf.mxu0
  %v1397 = vadd.f32 %v350, %v1396
  %1398 = vmatmul.f32.gmra.mxu0 %v411
  %v1399 = vpop.f32.mrf.mxu0
  %v1400 = vadd.f32 %v350, %v1399
  %1401 = vmatmul.f32.gmra.mxu0 %v414
  %v1402 = vpop.f32.mrf.mxu0
  %v1403 = vadd.f32 %v350, %v1402
  %1404 = vmatmul.f32.gmra.mxu0 %v417
  %v1405 = vpop.f32.mrf.mxu0
  %v1406 = vadd.f32 %v350, %v1405
  %1407 = vmatmul.f32.gmra.mxu0 %v420
  %v1408 = vpop.f32.mrf.mxu0
  %v1409 = vadd.f32 %v350, %v1408
  %1410 = vmatmul.f32.gmra.mxu0 %v423
  %v1411 = vpop.f32.mrf.mxu0
  %v1412 = vadd.f32 %v350, %v1411
  %1413 = vmatmul.f32.gmra.mxu0 %v426
  %v1414 = vpop.f32.mrf.mxu0
  %v1415 = vadd.f32 %v350, %v1414
  %1416 = vmatmul.f32.gmra.mxu0 %v429
  %v1417 = vpop.f32.mrf.mxu0
  %v1418 = vadd.f32 %v350, %v1417
  %1419 = vmatmul.f32.gmra.mxu0 %v432
  %v1420 = vpop.f32.mrf.mxu0
  %v1421 = vadd.f32 %v350, %v1420
  %1422 = vmatmul.f32.gmra.mxu0 %v435
  %v1423 = vpop.f32.mrf.mxu0
  %v1424 = vadd.f32 %v350, %v1423
  %1425 = vmatmul.f32.gmra.mxu0 %v438
  %v1426 = vpop.f32.mrf.mxu0
  %v1427 = vadd.f32 %v350, %v1426
  %1428 = vmatmul.f32.gmra.mxu0 %v441
  %v1429 = vpop.f32.mrf.mxu0
  %v1430 = vadd.f32 %v350, %v1429
  %1431 = vmatmul.f32.gmra.mxu0 %v444
  %v1432 = vpop.f32.mrf.mxu0
  %v1433 = vadd.f32 %v350, %v1432
  %1434 = vmatmul.f32.gmra.mxu0 %v447
  %v1435 = vpop.f32.mrf.mxu0
  %v1436 = vadd.f32 %v350, %v1435
  %1437 = vmatmul.f32.gmra.mxu0 %v450
  %v1438 = vpop.f32.mrf.mxu0
  %v1439 = vadd.f32 %v350, %v1438
  %1440 = vmatmul.f32.gmra.mxu0 %v453
  %v1441 = vpop.f32.mrf.mxu0
  %v1442 = vadd.f32 %v350, %v1441
  %1443 = vmatmul.f32.gmra.mxu0 %v456
  %v1444 = vpop.f32.mrf.mxu0
  %v1445 = vadd.f32 %v350, %v1444
  %1446 = vmatmul.f32.gmra.mxu0 %v459
  %v1447 = vpop.f32.mrf.mxu0
  %v1448 = vadd.f32 %v350, %v1447
  %1449 = vmatmul.f32.gmra.mxu0 %v462
  %v1450 = vpop.f32.mrf.mxu0
  %v1451 = vadd.f32 %v350, %v1450
  %1452 = vmatmul.f32.gmra.mxu0 %v465
  %v1453 = vpop.f32.mrf.mxu0
  %v1454 = vadd.f32 %v350, %v1453
  %1455 = vmatmul.f32.gmra.mxu0 %v468
  %v1456 = vpop.f32.mrf.mxu0
  %v1457 = vadd.f32 %v350, %v1456
  %1458 = vmatmul.f32.gmra.mxu0 %v471
  %v1459 = vpop.f32.mrf.mxu0
  %v1460 = vadd.f32 %v350, %v1459
  %1461 = vmatmul.f32.gmra.mxu0 %v474
  %v1462 = vpop.f32.mrf.mxu0
  %v1463 = vadd.f32 %v350, %v1462
  %1464 = vmatmul.f32.gmra.mxu0 %v477
  %v1465 = vpop.f32.mrf.mxu0
  %v1466 = vadd.f32 %v350, %v1465
  %1467 = vmatmul.f32.gmra.mxu0 %v480
  %v1468 = vpop.f32.mrf.mxu0
  %v1469 = vadd.f32 %v350, %v1468
  %1470 = vmatmul.f32.gmra.mxu0 %v483
  %v1471 = vpop.f32.mrf.mxu0
  %v1472 = vadd.f32 %v350, %v1471
  %1473 = vmatmul.f32.gmra.mxu0 %v486
  %v1474 = vpop.f32.mrf.mxu0
  %v1475 = vadd.f32 %v350, %v1474
  %1476 = vmatmul.f32.gmra.mxu0 %v489
  %v1477 = vpop.f32.mrf.mxu0
  %v1478 = vadd.f32 %v350, %v1477
  %1479 = vmatmul.f32.gmra.mxu0 %v492
  %v1480 = vpop.f32.mrf.mxu0
  %v1481 = vadd.f32 %v350, %v1480
  %1482 = vmatmul.f32.gmra.mxu0 %v495
  %v1483 = vpop.f32.mrf.mxu0
  %v1484 = vadd.f32 %v350, %v1483
  %1485 = vmatmul.f32.gmra.mxu0 %v498
  %v1486 = vpop.f32.mrf.mxu0
  %v1487 = vadd.f32 %v350, %v1486
  %1488 = vmatmul.f32.gmra.mxu0 %v501
  %v1489 = vpop.f32.mrf.mxu0
  %v1490 = vadd.f32 %v350, %v1489
  %1491 = vmatmul.f32.gmra.mxu0 %v504
  %v1492 = vpop.f32.mrf.mxu0
  %v1493 = vadd.f32 %v350, %v1492
  %1494 = vmatmul.f32.gmra.mxu0 %v507
  %v1495 = vpop.f32.mrf.mxu0
  %v1496 = vadd.f32 %v350, %v1495
  %1497 = vmatmul.f32.gmra.mxu0 %v510
  %v1498 = vpop.f32.mrf.mxu0
  %v1499 = vadd.f32 %v350, %v1498
  %1500 = vmatmul.f32.gmra.mxu0 %v513
  %v1501 = vpop.f32.mrf.mxu0
  %v1502 = vadd.f32 %v350, %v1501
  %1503 = vmatmul.f32.gmra.mxu0 %v516
  %v1504 = vpop.f32.mrf.mxu0
  %v1505 = vadd.f32 %v350, %v1504
  %1506 = vmatmul.f32.gmra.mxu0 %v519
  %v1507 = vpop.f32.mrf.mxu0
  %v1508 = vadd.f32 %v350, %v1507
  %1509 = vmatmul.f32.gmra.mxu0 %v522
  %v1510 = vpop.f32.mrf.mxu0
  %v1511 = vadd.f32 %v350, %v1510
  %1512 = vmatmul.f32.gmra.mxu0 %v525
  %v1513 = vpop.f32.mrf.mxu0
  %v1514 = vadd.f32 %v350, %v1513
  %1515 = vmatmul.f32.gmra.mxu0 %v528
  %v1516 = vpop.f32.mrf.mxu0
  %v1517 = vadd.f32 %v350, %v1516
  %1518 = vmatmul.f32.gmra.mxu0 %v531
  %v1519 = vpop.f32.mrf.mxu0
  %v1520 = vadd.f32 %v350, %v1519
  %1521 = vmatmul.f32.gmra.mxu0 %v534
  %v1522 = vpop.f32.mrf.mxu0
  %v1523 = vadd.f32 %v350, %v1522
  %1524 = vmatmul.f32.gmra.mxu0 %v537
  %v1525 = vpop.f32.mrf.mxu0
  %v1526 = vadd.f32 %v350, %v1525
  %1527 = vmatmul.f32.gmra.mxu0 %v540
  %v1528 = vpop.f32.mrf.mxu0
  %v1529 = vadd.f32 %v350, %v1528
  %1530 = vmatmul.f32.gmra.mxu0 %v543
  %v1531 = vpop.f32.mrf.mxu0
  %v1532 = vadd.f32 %v350, %v1531
  %1533 = vmatmul.f32.gmra.mxu0 %v546
  %v1534 = vpop.f32.mrf.mxu0
  %v1535 = vadd.f32 %v350, %v1534
  %1536 = vmatmul.f32.gmra.mxu0 %v549
  %v1537 = vpop.f32.mrf.mxu0
  %v1538 = vadd.f32 %v350, %v1537
  %1539 = vmatmul.f32.gmra.mxu0 %v552
  %v1540 = vpop.f32.mrf.mxu0
  %v1541 = vadd.f32 %v350, %v1540
  %1542 = vmatmul.f32.gmra.mxu0 %v555
  %v1543 = vpop.f32.mrf.mxu0
  %v1544 = vadd.f32 %v350, %v1543
  %1545 = vmatmul.f32.gmra.mxu0 %v558
  %v1546 = vpop.f32.mrf.mxu0
  %v1547 = vadd.f32 %v350, %v1546
  %1548 = vmatmul.f32.gmra.mxu0 %v561
  %v1549 = vpop.f32.mrf.mxu0
  %v1550 = vadd.f32 %v350, %v1549
  %1551 = vmatmul.f32.gmra.mxu0 %v564
  %v1552 = vpop.f32.mrf.mxu0
  %v1553 = vadd.f32 %v350, %v1552
  %1554 = vmatmul.f32.gmra.mxu0 %v567
  %v1555 = vpop.f32.mrf.mxu0
  %v1556 = vadd.f32 %v350, %v1555
  %1557 = vmatmul.f32.gmra.mxu0 %v570
  %v1558 = vpop.f32.mrf.mxu0
  %v1559 = vadd.f32 %v350, %v1558
  %1560 = vmatmul.f32.gmra.mxu0 %v573
  %v1561 = vpop.f32.mrf.mxu0
  %v1562 = vadd.f32 %v350, %v1561
  %1563 = vmatmul.f32.gmra.mxu0 %v576
  %v1564 = vpop.f32.mrf.mxu0
  %v1565 = vadd.f32 %v350, %v1564
  %1566 = vmatmul.f32.gmra.mxu0 %v579
  %v1567 = vpop.f32.mrf.mxu0
  %v1568 = vadd.f32 %v350, %v1567
  %1569 = vmatmul.f32.gmra.mxu0 %v582
  %v1570 = vpop.f32.mrf.mxu0
  %v1571 = vadd.f32 %v350, %v1570
  %1572 = vmatmul.f32.gmra.mxu0 %v585
  %v1573 = vpop.f32.mrf.mxu0
  %v1574 = vadd.f32 %v350, %v1573
  %1575 = vmatmul.f32.gmra.mxu0 %v588
  %v1576 = vpop.f32.mrf.mxu0
  %v1577 = vadd.f32 %v350, %v1576
  %1578 = vmatmul.f32.gmra.mxu0 %v591
  %v1579 = vpop.f32.mrf.mxu0
  %v1580 = vadd.f32 %v350, %v1579
  %1581 = vmatmul.f32.gmra.mxu0 %v594
  %v1582 = vpop.f32.mrf.mxu0
  %v1583 = vadd.f32 %v350, %v1582
  %1584 = vmatmul.f32.gmra.mxu0 %v597
  %v1585 = vpop.f32.mrf.mxu0
  %v1586 = vadd.f32 %v350, %v1585
  %1587 = vmatmul.f32.gmra.mxu0 %v600
  %v1588 = vpop.f32.mrf.mxu0
  %v1589 = vadd.f32 %v350, %v1588
  %1590 = vmatmul.f32.gmra.mxu0 %v603
  %v1591 = vpop.f32.mrf.mxu0
  %v1592 = vadd.f32 %v350, %v1591
  %1593 = vmatmul.f32.gmra.mxu0 %v606
  %v1594 = vpop.f32.mrf.mxu0
  %v1595 = vadd.f32 %v350, %v1594
  %1596 = vmatmul.f32.gmra.mxu0 %v609
  %v1597 = vpop.f32.mrf.mxu0
  %v1598 = vadd.f32 %v350, %v1597
  %1599 = vmatmul.f32.gmra.mxu0 %v612
  %v1600 = vpop.f32.mrf.mxu0
  %v1601 = vadd.f32 %v350, %v1600
  %1602 = vmatmul.f32.gmra.mxu0 %v615
  %v1603 = vpop.f32.mrf.mxu0
  %v1604 = vadd.f32 %v350, %v1603
  %1605 = vmatmul.f32.gmra.mxu0 %v618
  %v1606 = vpop.f32.mrf.mxu0
  %v1607 = vadd.f32 %v350, %v1606
  %1608 = vmatmul.f32.gmra.mxu0 %v621
  %v1609 = vpop.f32.mrf.mxu0
  %v1610 = vadd.f32 %v350, %v1609
  %1611 = vmatmul.f32.gmra.mxu0 %v624
  %v1612 = vpop.f32.mrf.mxu0
  %v1613 = vadd.f32 %v350, %v1612
  %1614 = vmatmul.f32.gmra.mxu0 %v627
  %v1615 = vpop.f32.mrf.mxu0
  %v1616 = vadd.f32 %v350, %v1615
  %1617 = vmatmul.f32.gmra.mxu0 %v630
  %v1618 = vpop.f32.mrf.mxu0
  %v1619 = vadd.f32 %v350, %v1618
  %1620 = vmatmul.f32.gmra.mxu0 %v633
  %v1621 = vpop.f32.mrf.mxu0
  %v1622 = vadd.f32 %v350, %v1621
  %1623 = vmatmul.f32.gmra.mxu0 %v636
  %v1624 = vpop.f32.mrf.mxu0
  %v1625 = vadd.f32 %v350, %v1624
  %1626 = vmatmul.f32.gmra.mxu0 %v639
  %v1627 = vpop.f32.mrf.mxu0
  %v1628 = vadd.f32 %v350, %v1627
  %1629 = vmatmul.f32.gmra.mxu0 %v642
  %v1630 = vpop.f32.mrf.mxu0
  %v1631 = vadd.f32 %v350, %v1630
  %1632 = vmatmul.f32.gmra.mxu0 %v645
  %v1633 = vpop.f32.mrf.mxu0
  %v1634 = vadd.f32 %v350, %v1633
  %1635 = vmatmul.f32.gmra.mxu0 %v648
  %v1636 = vpop.f32.mrf.mxu0
  %v1637 = vadd.f32 %v350, %v1636
  %1638 = vmatmul.f32.gmra.mxu0 %v651
  %v1639 = vpop.f32.mrf.mxu0
  %v1640 = vadd.f32 %v350, %v1639
  %1641 = vmatmul.f32.gmra.mxu0 %v654
  %v1642 = vpop.f32.mrf.mxu0
  %v1643 = vadd.f32 %v350, %v1642
  %1644 = vmatmul.f32.gmra.mxu0 %v657
  %v1645 = vpop.f32.mrf.mxu0
  %v1646 = vadd.f32 %v350, %v1645
  %1647 = vmatmul.f32.gmra.mxu0 %v660
  %v1648 = vpop.f32.mrf.mxu0
  %v1649 = vadd.f32 %v350, %v1648
  %1650 = vmatmul.f32.gmra.mxu0 %v663
  %v1651 = vpop.f32.mrf.mxu0
  %v1652 = vadd.f32 %v350, %v1651
  %1653 = vmatmul.f32.gmra.mxu0 %v666
  %v1654 = vpop.f32.mrf.mxu0
  %v1655 = vadd.f32 %v350, %v1654
  %1656 = vmatmul.f32.gmra.mxu0 %v669
  %v1657 = vpop.f32.mrf.mxu0
  %v1658 = vadd.f32 %v350, %v1657
  %1659 = vmatmul.f32.gmra.mxu0 %v672
  %v1660 = vpop.f32.mrf.mxu0
  %v1661 = vadd.f32 %v350, %v1660
  %1662 = vmatmul.f32.gmra.mxu0 %v675
  %v1663 = vpop.f32.mrf.mxu0
  %v1664 = vadd.f32 %v350, %v1663
  %1665 = vmatmul.f32.gmra.mxu0 %v678
  %v1666 = vpop.f32.mrf.mxu0
  %v1667 = vadd.f32 %v350, %v1666
  %1668 = vmatmul.f32.gmra.mxu0 %v681
  %v1669 = vpop.f32.mrf.mxu0
  %v1670 = vadd.f32 %v350, %v1669
  %1671 = vmatmul.f32.gmra.mxu0 %v684
  %v1672 = vpop.f32.mrf.mxu0
  %v1673 = vadd.f32 %v350, %v1672
  %1674 = vmatmul.f32.gmra.mxu0 %v687
  %v1675 = vpop.f32.mrf.mxu0
  %v1676 = vadd.f32 %v350, %v1675
  %1677 = vmatmul.f32.gmra.mxu0 %v690
  %v1678 = vpop.f32.mrf.mxu0
  %v1679 = vadd.f32 %v350, %v1678
  %1680 = vmatmul.f32.gmra.mxu0 %v693
  %v1681 = vpop.f32.mrf.mxu0
  %v1682 = vadd.f32 %v350, %v1681
  %1683 = vmatmul.f32.gmra.mxu0 %v696
  %v1684 = vpop.f32.mrf.mxu0
  %v1685 = vadd.f32 %v350, %v1684
  %1686 = vmatmul.f32.gmra.mxu0 %v699
  %v1687 = vpop.f32.mrf.mxu0
  %v1688 = vadd.f32 %v350, %v1687
  %1689 = vmatmul.f32.gmra.mxu0 %v702
  %v1690 = vpop.f32.mrf.mxu0
  %v1691 = vadd.f32 %v350, %v1690
  %1692 = vmatmul.f32.gmra.mxu0 %v705
  %v1693 = vpop.f32.mrf.mxu0
  %v1694 = vadd.f32 %v350, %v1693
  %1695 = vmatmul.f32.gmra.mxu0 %v708
  %v1696 = vpop.f32.mrf.mxu0
  %v1697 = vadd.f32 %v350, %v1696
  %1698 = vmatmul.f32.gmra.mxu0 %v711
  %v1699 = vpop.f32.mrf.mxu0
  %v1700 = vadd.f32 %v350, %v1699
  %1701 = vmatmul.f32.gmra.mxu0 %v714
  %v1702 = vpop.f32.mrf.mxu0
  %v1703 = vadd.f32 %v350, %v1702
  %1704 = vmatmul.f32.gmra.mxu0 %v717
  %v1705 = vpop.f32.mrf.mxu0
  %v1706 = vadd.f32 %v350, %v1705
  %1707 = vmatmul.f32.gmra.mxu0 %v720
  %v1708 = vpop.f32.mrf.mxu0
  %v1709 = vadd.f32 %v350, %v1708
  %1710 = vmatmul.f32.gmra.mxu0 %v723
  %v1711 = vpop.f32.mrf.mxu0
  %v1712 = vadd.f32 %v350, %v1711
  %1713 = vmatmul.f32.gmra.mxu0 %v726
  %v1714 = vpop.f32.mrf.mxu0
  %v1715 = vadd.f32 %v350, %v1714
  %1716 = vmatmul.f32.gmra.mxu0 %v729
  %v1717 = vpop.f32.mrf.mxu0
  %v1718 = vadd.f32 %v350, %v1717
  %1719 = vmatmul.f32.gmra.mxu0 %v732
  %v1720 = vpop.f32.mrf.mxu0
  %v1721 = vadd.f32 %v350, %v1720
  %1722 = vmatmul.f32.gmra.mxu0 %v735
  %v1723 = vpop.f32.mrf.mxu0
  %v1724 = vadd.f32 %v350, %v1723
  %1725 = vmatmul.f32.gmra.mxu0 %v738
  %v1726 = vpop.f32.mrf.mxu0
  %v1727 = vadd.f32 %v350, %v1726
  %1728 = vmatmul.f32.gmra.mxu0 %v741
  %v1729 = vpop.f32.mrf.mxu0
  %v1730 = vadd.f32 %v350, %v1729
  %1731 = vmatmul.f32.gmra.mxu0 %v744
  %v1732 = vpop.f32.mrf.mxu0
  %v1733 = vadd.f32 %v350, %v1732
  %1734 = vmatmul.f32.gmra.mxu0 %v747
  %v1735 = vpop.f32.mrf.mxu0
  %v1736 = vadd.f32 %v350, %v1735
  %1737 = vmatmul.f32.gmra.mxu0 %v750
  %v1738 = vpop.f32.mrf.mxu0
  %v1739 = vadd.f32 %v350, %v1738
  %1740 = vmatmul.f32.gmra.mxu0 %v753
  %v1741 = vpop.f32.mrf.mxu0
  %v1742 = vadd.f32 %v350, %v1741
  %1743 = vmatmul.f32.gmra.mxu0 %v756
  %v1744 = vpop.f32.mrf.mxu0
  %v1745 = vadd.f32 %v350, %v1744
  %1746 = vmatmul.f32.gmra.mxu0 %v759
  %v1747 = vpop.f32.mrf.mxu0
  %v1748 = vadd.f32 %v350, %v1747
  %1749 = vmatmul.f32.gmra.mxu0 %v762
  %v1750 = vpop.f32.mrf.mxu0
  %v1751 = vadd.f32 %v350, %v1750
  %1752 = vmatmul.f32.gmra.mxu0 %v765
  %v1753 = vpop.f32.mrf.mxu0
  %v1754 = vadd.f32 %v350, %v1753
  %1755 = vmatmul.f32.gmra.mxu0 %v768
  %v1756 = vpop.f32.mrf.mxu0
  %v1757 = vadd.f32 %v350, %v1756
  %1758 = vmatmul.f32.gmra.mxu0 %v771
  %v1759 = vpop.f32.mrf.mxu0
  %v1760 = vadd.f32 %v350, %v1759
  %1761 = vmatmul.f32.gmra.mxu0 %v774
  %v1762 = vpop.f32.mrf.mxu0
  %v1763 = vadd.f32 %v350, %v1762
  %1764 = vmatmul.f32.gmra.mxu0 %v777
  %v1765 = vpop.f32.mrf.mxu0
  %v1766 = vadd.f32 %v350, %v1765
  %1767 = vmatmul.f32.gmra.mxu0 %v780
  %v1768 = vpop.f32.mrf.mxu0
  %v1769 = vadd.f32 %v350, %v1768
  %1770 = vmatmul.f32.gmra.mxu0 %v783
  %v1771 = vpop.f32.mrf.mxu0
  %v1772 = vadd.f32 %v350, %v1771
  %1773 = vmatmul.f32.gmra.mxu0 %v786
  %v1774 = vpop.f32.mrf.mxu0
  %v1775 = vadd.f32 %v350, %v1774
  %1776 = vmatmul.f32.gmra.mxu0 %v789
  %v1777 = vpop.f32.mrf.mxu0
  %v1778 = vadd.f32 %v350, %v1777
  %1779 = vmatmul.f32.gmra.mxu0 %v792
  %v1780 = vpop.f32.mrf.mxu0
  %v1781 = vadd.f32 %v350, %v1780
  %1782 = vmatmul.f32.gmra.mxu0 %v795
  %v1783 = vpop.f32.mrf.mxu0
  %v1784 = vadd.f32 %v350, %v1783
  %1785 = vmatmul.f32.gmra.mxu0 %v798
  %v1786 = vpop.f32.mrf.mxu0
  %v1787 = vadd.f32 %v350, %v1786
  %1788 = vmatmul.f32.gmra.mxu0 %v801
  %v1789 = vpop.f32.mrf.mxu0
  %v1790 = vadd.f32 %v350, %v1789
  %1791 = vmatmul.f32.gmra.mxu0 %v804
  %v1792 = vpop.f32.mrf.mxu0
  %v1793 = vadd.f32 %v350, %v1792
  %1794 = vmatmul.f32.gmra.mxu0 %v807
  %v1795 = vpop.f32.mrf.mxu0
  %v1796 = vadd.f32 %v350, %v1795
  %1797 = vmatmul.f32.gmra.mxu0 %v810
  %v1798 = vpop.f32.mrf.mxu0
  %v1799 = vadd.f32 %v350, %v1798
  %1800 = vmatmul.f32.gmra.mxu0 %v813
  %v1801 = vpop.f32.mrf.mxu0
  %v1802 = vadd.f32 %v350, %v1801
  %1803 = vmatmul.f32.gmra.mxu0 %v816
  %v1804 = vpop.f32.mrf.mxu0
  %v1805 = vadd.f32 %v350, %v1804
  %1806 = vmatmul.f32.gmra.mxu0 %v819
  %v1807 = vpop.f32.mrf.mxu0
  %v1808 = vadd.f32 %v350, %v1807
  %1809 = vmatmul.f32.gmra.mxu0 %v822
  %v1810 = vpop.f32.mrf.mxu0
  %v1811 = vadd.f32 %v350, %v1810
  %1812 = vmatmul.f32.gmra.mxu0 %v825
  %v1813 = vpop.f32.mrf.mxu0
  %v1814 = vadd.f32 %v350, %v1813
  %1815 = vmatmul.f32.gmra.mxu0 %v828
  %v1816 = vpop.f32.mrf.mxu0
  %v1817 = vadd.f32 %v350, %v1816
  %1818 = vmatmul.f32.gmra.mxu0 %v831
  %v1819 = vpop.f32.mrf.mxu0
  %v1820 = vadd.f32 %v350, %v1819
  %1821 = vmatmul.f32.gmra.mxu0 %v834
  %v1822 = vpop.f32.mrf.mxu0
  %v1823 = vadd.f32 %v350, %v1822
  %1824 = vmatmul.f32.gmra.mxu0 %v837
  %v1825 = vpop.f32.mrf.mxu0
  %v1826 = vadd.f32 %v350, %v1825
  %1827 = vmatmul.f32.gmra.mxu0 %v840
  %v1828 = vpop.f32.mrf.mxu0
  %v1829 = vadd.f32 %v350, %v1828
  %1830 = vmatmul.f32.gmra.mxu0 %v843
  %v1831 = vpop.f32.mrf.mxu0
  %v1832 = vadd.f32 %v350, %v1831
  %1833 = vmatmul.f32.gmra.mxu0 %v846
  %v1834 = vpop.f32.mrf.mxu0
  %v1835 = vadd.f32 %v350, %v1834
  %1836 = vmatmul.f32.gmra.mxu0 %v849
  %v1837 = vpop.f32.mrf.mxu0
  %v1838 = vadd.f32 %v350, %v1837
  %1839 = vmatmul.f32.gmra.mxu0 %v852
  %v1840 = vpop.f32.mrf.mxu0
  %v1841 = vadd.f32 %v350, %v1840
  %1842 = vmatmul.f32.gmra.mxu0 %v855
  %v1843 = vpop.f32.mrf.mxu0
  %v1844 = vadd.f32 %v350, %v1843
  %1845 = vmatmul.f32.gmra.mxu0 %v858
  %v1846 = vpop.f32.mrf.mxu0
  %v1847 = vadd.f32 %v350, %v1846
  %1848 = vmatmul.f32.gmra.mxu0 %v861
  %v1849 = vpop.f32.mrf.mxu0
  %v1850 = vadd.f32 %v350, %v1849
  %1851 = vmatmul.f32.gmra.mxu0 %v864
  %v1852 = vpop.f32.mrf.mxu0
  %v1853 = vadd.f32 %v350, %v1852
  %1854 = vmatmul.f32.gmra.mxu0 %v867
  %v1855 = vpop.f32.mrf.mxu0
  %v1856 = vadd.f32 %v350, %v1855
  %1857 = vmatmul.f32.gmra.mxu0 %v870
  %v1858 = vpop.f32.mrf.mxu0
  %v1859 = vadd.f32 %v350, %v1858
  %1860 = vmatmul.f32.gmra.mxu0 %v873
  %v1861 = vpop.f32.mrf.mxu0
  %v1862 = vadd.f32 %v350, %v1861
  %1863 = vmatmul.f32.gmra.mxu0 %v876
  %v1864 = vpop.f32.mrf.mxu0
  %v1865 = vadd.f32 %v350, %v1864
  %1866 = vmatmul.f32.gmra.mxu0 %v879
  %v1867 = vpop.f32.mrf.mxu0
  %v1868 = vadd.f32 %v350, %v1867
  %1869 = vmatmul.f32.gmra.mxu0 %v882
  %v1870 = vpop.f32.mrf.mxu0
  %v1871 = vadd.f32 %v350, %v1870
  %1872 = vmatmul.f32.gmra.mxu0 %v885
  %v1873 = vpop.f32.mrf.mxu0
  %v1874 = vadd.f32 %v350, %v1873
  %1875 = vmatmul.f32.gmra.mxu0 %v888
  %v1876 = vpop.f32.mrf.mxu0
  %v1877 = vadd.f32 %v350, %v1876
  %1878 = vmatmul.f32.gmra.mxu0 %v891
  %v1879 = vpop.f32.mrf.mxu0
  %v1880 = vadd.f32 %v350, %v1879
  %1881 = vmatmul.f32.gmra.mxu0 %v894
  %v1882 = vpop.f32.mrf.mxu0
  %v1883 = vadd.f32 %v350, %v1882
  %1884 = vmatmul.f32.gmra.mxu0 %v897
  %v1885 = vpop.f32.mrf.mxu0
  %v1886 = vadd.f32 %v350, %v1885
  %1887 = vmatmul.f32.gmra.mxu0 %v900
  %v1888 = vpop.f32.mrf.mxu0
  %v1889 = vadd.f32 %v350, %v1888
  %1890 = vmatmul.f32.gmra.mxu0 %v903
  %v1891 = vpop.f32.mrf.mxu0
  %v1892 = vadd.f32 %v350, %v1891
  %1893 = vmatmul.f32.gmra.mxu0 %v906
  %v1894 = vpop.f32.mrf.mxu0
  %v1895 = vadd.f32 %v350, %v1894
  %1896 = vmatmul.f32.gmra.mxu0 %v909
  %v1897 = vpop.f32.mrf.mxu0
  %v1898 = vadd.f32 %v350, %v1897
  %1899 = vmatmul.f32.gmra.mxu0 %v912
  %v1900 = vpop.f32.mrf.mxu0
  %v1901 = vadd.f32 %v350, %v1900
  %1902 = vmatmul.f32.gmra.mxu0 %v915
  %v1903 = vpop.f32.mrf.mxu0
  %v1904 = vadd.f32 %v350, %v1903
  %1905 = vmatmul.f32.gmra.mxu0 %v918
  %v1906 = vpop.f32.mrf.mxu0
  %v1907 = vadd.f32 %v350, %v1906
  %1908 = vmatmul.f32.gmra.mxu0 %v921
  %v1909 = vpop.f32.mrf.mxu0
  %v1910 = vadd.f32 %v350, %v1909
  %1911 = vmatmul.f32.gmra.mxu0 %v924
  %v1912 = vpop.f32.mrf.mxu0
  %v1913 = vadd.f32 %v350, %v1912
  %1914 = vmatmul.f32.gmra.mxu0 %v927
  %v1915 = vpop.f32.mrf.mxu0
  %v1916 = vadd.f32 %v350, %v1915
  %1917 = vmatmul.f32.gmra.mxu0 %v930
  %v1918 = vpop.f32.mrf.mxu0
  %v1919 = vadd.f32 %v350, %v1918
  %1920 = vmatmul.f32.gmra.mxu0 %v933
  %v1921 = vpop.f32.mrf.mxu0
  %v1922 = vadd.f32 %v350, %v1921
  %1923 = vmatmul.f32.gmra.mxu0 %v936
  %v1924 = vpop.f32.mrf.mxu0
  %v1925 = vadd.f32 %v350, %v1924
  %1926 = vmatmul.f32.gmra.mxu0 %v939
  %v1927 = vpop.f32.mrf.mxu0
  %v1928 = vadd.f32 %v350, %v1927
  %1929 = vmatmul.f32.gmra.mxu0 %v942
  %v1930 = vpop.f32.mrf.mxu0
  %v1931 = vadd.f32 %v350, %v1930
  %1932 = vmatmul.f32.gmra.mxu0 %v945
  %v1933 = vpop.f32.mrf.mxu0
  %v1934 = vadd.f32 %v350, %v1933
  %1935 = vmatmul.f32.gmra.mxu0 %v948
  %v1936 = vpop.f32.mrf.mxu0
  %v1937 = vadd.f32 %v350, %v1936
  %1938 = vmatmul.f32.gmra.mxu0 %v951
  %v1939 = vpop.f32.mrf.mxu0
  %v1940 = vadd.f32 %v350, %v1939
  %1941 = vmatmul.f32.gmra.mxu0 %v954
  %v1942 = vpop.f32.mrf.mxu0
  %v1943 = vadd.f32 %v350, %v1942
  %1944 = vmatmul.f32.gmra.mxu0 %v957
  %v1945 = vpop.f32.mrf.mxu0
  %v1946 = vadd.f32 %v350, %v1945
  %1947 = vmatmul.f32.gmra.mxu0 %v960
  %v1948 = vpop.f32.mrf.mxu0
  %v1949 = vadd.f32 %v350, %v1948
  %1950 = vmatmul.f32.gmra.mxu0 %v963
  %v1951 = vpop.f32.mrf.mxu0
  %v1952 = vadd.f32 %v350, %v1951
  %1953 = vmatmul.f32.gmra.mxu0 %v966
  %v1954 = vpop.f32.mrf.mxu0
  %v1955 = vadd.f32 %v350, %v1954
  %1956 = vmatmul.f32.gmra.mxu0 %v969
  %v1957 = vpop.f32.mrf.mxu0
  %v1958 = vadd.f32 %v350, %v1957
  %1959 = vmatmul.f32.gmra.mxu0 %v972
  %v1960 = vpop.f32.mrf.mxu0
  %v1961 = vadd.f32 %v350, %v1960
  %1962 = vmatmul.f32.gmra.mxu0 %v975
  %v1963 = vpop.f32.mrf.mxu0
  %v1964 = vadd.f32 %v350, %v1963
  %1965 = vmatmul.f32.gmra.mxu0 %v978
  %v1966 = vpop.f32.mrf.mxu0
  %v1967 = vadd.f32 %v350, %v1966
  %1968 = vmatmul.f32.gmra.mxu0 %v981
  %v1969 = vpop.f32.mrf.mxu0
  %v1970 = vadd.f32 %v350, %v1969
  %1971 = vmatmul.f32.gmra.mxu0 %v984
  %v1972 = vpop.f32.mrf.mxu0
  %v1973 = vadd.f32 %v350, %v1972
  %1974 = vmatmul.f32.gmra.mxu0 %v987
  %v1975 = vpop.f32.mrf.mxu0
  %v1976 = vadd.f32 %v350, %v1975
  %1977 = vmatmul.f32.gmra.mxu0 %v990
  %v1978 = vpop.f32.mrf.mxu0
  %v1979 = vadd.f32 %v350, %v1978
  %1980 = vmatmul.f32.gmra.mxu0 %v993
  %v1981 = vpop.f32.mrf.mxu0
  %v1982 = vadd.f32 %v350, %v1981
  %1983 = vmatmul.f32.gmra.mxu0 %v996
  %v1984 = vpop.f32.mrf.mxu0
  %v1985 = vadd.f32 %v350, %v1984
  %1986 = vmatmul.f32.gmra.mxu0 %v999
  %v1987 = vpop.f32.mrf.mxu0
  %v1988 = vadd.f32 %v350, %v1987
  %1989 = vmatmul.f32.gmra.mxu0 %v1002
  %v1990 = vpop.f32.mrf.mxu0
  %v1991 = vadd.f32 %v350, %v1990
  %1992 = vmatmul.f32.gmra.mxu0 %v1005
  %v1993 = vpop.f32.mrf.mxu0
  %v1994 = vadd.f32 %v350, %v1993
  %1995 = vmatmul.f32.gmra.mxu0 %v1008
  %v1996 = vpop.f32.mrf.mxu0
  %v1997 = vadd.f32 %v350, %v1996
  %1998 = vmatmul.f32.gmra.mxu0 %v1011
  %v1999 = vpop.f32.mrf.mxu0
  %v2000 = vadd.f32 %v350, %v1999
  %2001 = vmatmul.f32.gmra.mxu0 %v1014
  %v2002 = vpop.f32.mrf.mxu0
  %v2003 = vadd.f32 %v350, %v2002
  %2004 = vmatmul.f32.gmra.mxu0 %v1017
  %v2005 = vpop.f32.mrf.mxu0
  %v2006 = vadd.f32 %v350, %v2005
  %2007 = vmatmul.f32.gmra.mxu0 %v1020
  %v2008 = vpop.f32.mrf.mxu0
  %v2009 = vadd.f32 %v350, %v2008
  %2010 = vmatmul.f32.gmra.mxu0 %v1023
  %v2011 = vpop.f32.mrf.mxu0
  %v2012 = vadd.f32 %v350, %v2011
  %2013 = vmatmul.f32.gmra.mxu0 %v1026
  %v2014 = vpop.f32.mrf.mxu0
  %v2015 = vadd.f32 %v350, %v2014
  %2016 = vmatmul.f32.gmra.mxu0 %v1029
  %v2017 = vpop.f32.mrf.mxu0
  %v2018 = vadd.f32 %v350, %v2017
  %2019 = vmatmul.f32.gmra.mxu0 %v1032
  %v2020 = vpop.f32.mrf.mxu0
  %v2021 = vadd.f32 %v350, %v2020
  %2022 = vmatmul.f32.gmra.mxu0 %v1035
  %v2023 = vpop.f32.mrf.mxu0
  %v2024 = vadd.f32 %v350, %v2023
  %2025 = vmatmul.f32.gmra.mxu0 %v1038
  %v2026 = vpop.f32.mrf.mxu0
  %v2027 = vadd.f32 %v350, %v2026
  %2028 = vmatmul.f32.gmra.mxu0 %v1041
  %v2029 = vpop.f32.mrf.mxu0
  %v2030 = vadd.f32 %v350, %v2029
  %2031 = vmatmul.f32.gmra.mxu0 %v1044
  %v2032 = vpop.f32.mrf.mxu0
  %v2033 = vadd.f32 %v350, %v2032
  %2034 = vmatmul.f32.gmra.mxu0 %v1047
  %v2035 = vpop.f32.mrf.mxu0
  %v2036 = vadd.f32 %v350, %v2035
  %2037 = vmatmul.f32.gmra.mxu0 %v1050
  %v2038 = vpop.f32.mrf.mxu0
  %v2039 = vadd.f32 %v350, %v2038
  %2040 = vmatmul.f32.gmra.mxu0 %v1053
  %v2041 = vpop.f32.mrf.mxu0
  %v2042 = vadd.f32 %v350, %v2041
  %2043 = vmatmul.f32.gmra.mxu0 %v1056
  %v2044 = vpop.f32.mrf.mxu0
  %v2045 = vadd.f32 %v350, %v2044
  %2046 = vmatmul.f32.gmra.mxu0 %v1059
  %v2047 = vpop.f32.mrf.mxu0
  %v2048 = vadd.f32 %v350, %v2047
  %2049 = vmatmul.f32.gmra.mxu0 %v1062
  %v2050 = vpop.f32.mrf.mxu0
  %v2051 = vadd.f32 %v350, %v2050
  %2052 = vmatmul.f32.gmra.mxu0 %v1065
  %v2053 = vpop.f32.mrf.mxu0
  %v2054 = vadd.f32 %v350, %v2053
  %2055 = vmatmul.f32.gmra.mxu0 %v1068
  %v2056 = vpop.f32.mrf.mxu0
  %v2057 = vadd.f32 %v350, %v2056
  %2058 = vmatmul.f32.gmra.mxu0 %v1071
  %v2059 = vpop.f32.mrf.mxu0
  %v2060 = vadd.f32 %v350, %v2059
  %2061 = vmatmul.f32.gmra.mxu0 %v1074
  %v2062 = vpop.f32.mrf.mxu0
  %v2063 = vadd.f32 %v350, %v2062
  %2064 = vmatmul.f32.gmra.mxu0 %v1077
  %v2065 = vpop.f32.mrf.mxu0
  %v2066 = vadd.f32 %v350, %v2065
  %2067 = vmatmul.f32.gmra.mxu0 %v1080
  %v2068 = vpop.f32.mrf.mxu0
  %v2069 = vadd.f32 %v350, %v2068
  %2070 = vmatmul.f32.gmra.mxu0 %v1083
  %v2071 = vpop.f32.mrf.mxu0
  %v2072 = vadd.f32 %v350, %v2071
  %2073 = vmatmul.f32.gmra.mxu0 %v1086
  %v2074 = vpop.f32.mrf.mxu0
  %v2075 = vadd.f32 %v350, %v2074
  %2076 = vmatmul.f32.gmra.mxu0 %v1089
  %v2077 = vpop.f32.mrf.mxu0
  %v2078 = vadd.f32 %v350, %v2077
  %2079 = vmatmul.f32.gmra.mxu0 %v1092
  %v2080 = vpop.f32.mrf.mxu0
  %v2081 = vadd.f32 %v350, %v2080
  %2082 = vmatmul.f32.gmra.mxu0 %v1095
  %v2083 = vpop.f32.mrf.mxu0
  %v2084 = vadd.f32 %v350, %v2083
  %2085 = vmatmul.f32.gmra.mxu0 %v1098
  %v2086 = vpop.f32.mrf.mxu0
  %v2087 = vadd.f32 %v350, %v2086
  %2088 = vmatmul.f32.gmra.mxu0 %v1101
  %v2089 = vpop.f32.mrf.mxu0
  %v2090 = vadd.f32 %v350, %v2089
  %2091 = vmatmul.f32.gmra.mxu0 %v1104
  %v2092 = vpop.f32.mrf.mxu0
  %v2093 = vadd.f32 %v350, %v2092
  %2094 = vmatmul.f32.gmra.mxu0 %v1107
  %v2095 = vpop.f32.mrf.mxu0
  %v2096 = vadd.f32 %v350, %v2095
  %2097 = vmatmul.f32.gmra.mxu0 %v1110
  %v2098 = vpop.f32.mrf.mxu0
  %v2099 = vadd.f32 %v350, %v2098
  %2100 = vmatmul.f32.gmra.mxu0 %v1113
  %v2101 = vpop.f32.mrf.mxu0
  %v2102 = vadd.f32 %v350, %v2101
  %2103 = vmatmul.f32.gmra.mxu0 %v1116
  %v2104 = vpop.f32.mrf.mxu0
  %v2105 = vadd.f32 %v350, %v2104
  %2106 = vmatmul.f32.gmra.mxu0 %v1119
  %v2107 = vpop.f32.mrf.mxu0
  %v2108 = vadd.f32 %v350, %v2107
  %2109 = vmatmul.f32.gmra.mxu0 %v1122
  %v2110 = vpop.f32.mrf.mxu0
  %v2111 = vadd.f32 %v350, %v2110
  %2112 = vmatmul.f32.gmra.mxu0 %v1125
  %v2113 = vpop.f32.mrf.mxu0
  %v2114 = vadd.f32 %v350, %v2113
  %2115 = vmatmul.f32.gmra.mxu0 %v1128
  %v2116 = vpop.f32.mrf.mxu0
  %v2117 = vadd.f32 %v350, %v2116
  %2118 = vmatmul.f32.gmra.mxu0 %v1131
  %v2119 = vpop.f32.mrf.mxu0
  %v2120 = vadd.f32 %v350, %v2119
  %2121 = vmatmul.f32.gmra.mxu0 %v1134
  %v2122 = vpop.f32.mrf.mxu0
  %v2123 = vadd.f32 %v350, %v2122
  %2124 = vmatmul.f32.gmra.mxu0 %v1137
  %v2125 = vpop.f32.mrf.mxu0
  %v2126 = vadd.f32 %v350, %v2125
  %2127 = vmatmul.f32.gmra.mxu0 %v1140
  %v2128 = vpop.f32.mrf.mxu0
  %v2129 = vadd.f32 %v350, %v2128
  %2130 = vmatmul.f32.gmra.mxu0 %v1143
  %v2131 = vpop.f32.mrf.mxu0
  %v2132 = vadd.f32 %v350, %v2131
  %2133 = vmatmul.f32.gmra.mxu0 %v1146
  %v2134 = vpop.f32.mrf.mxu0
  %v2135 = vadd.f32 %v350, %v2134
  %2136 = vmatmul.f32.gmra.mxu0 %v1149
  %v2137 = vpop.f32.mrf.mxu0
  %v2138 = vadd.f32 %v350, %v2137
  %2139 = vmatmul.f32.gmra.mxu0 %v1152
  %v2140 = vpop.f32.mrf.mxu0
  %v2141 = vadd.f32 %v350, %v2140
  %2142 = vmatmul.f32.gmra.mxu0 %v1155
  %v2143 = vpop.f32.mrf.mxu0
  %v2144 = vadd.f32 %v350, %v2143
  %2145 = vmatmul.f32.gmra.mxu0 %v1158
  %v2146 = vpop.f32.mrf.mxu0
  %v2147 = vadd.f32 %v350, %v2146
  %2148 = vmatmul.f32.gmra.mxu0 %v1161
  %v2149 = vpop.f32.mrf.mxu0
  %v2150 = vadd.f32 %v350, %v2149
  %2151 = vmatmul.f32.gmra.mxu0 %v1164
  %v2152 = vpop.f32.mrf.mxu0
  %v2153 = vadd.f32 %v350, %v2152
  %2154 = vmatmul.f32.gmra.mxu0 %v1167
  %v2155 = vpop.f32.mrf.mxu0
  %v2156 = vadd.f32 %v350, %v2155
  %2157 = vmatmul.f32.gmra.mxu0 %v1170
  %v2158 = vpop.f32.mrf.mxu0
  %v2159 = vadd.f32 %v350, %v2158
  %2160 = vmatmul.f32.gmra.mxu0 %v1173
  %v2161 = vpop.f32.mrf.mxu0
  %v2162 = vadd.f32 %v350, %v2161
  %2163 = vmatmul.f32.gmra.mxu0 %v1176
  %v2164 = vpop.f32.mrf.mxu0
  %v2165 = vadd.f32 %v350, %v2164
  %2166 = vmatmul.f32.gmra.mxu0 %v1179
  %v2167 = vpop.f32.mrf.mxu0
  %v2168 = vadd.f32 %v350, %v2167
  %2169 = vmatmul.f32.gmra.mxu0 %v1182
  %v2170 = vpop.f32.mrf.mxu0
  %v2171 = vadd.f32 %v350, %v2170
  %2172 = vmatmul.f32.gmra.mxu0 %v1185
  %v2173 = vpop.f32.mrf.mxu0
  %v2174 = vadd.f32 %v350, %v2173
  %2175 = vmatmul.f32.gmra.mxu0 %v1188
  %v2176 = vpop.f32.mrf.mxu0
  %v2177 = vadd.f32 %v350, %v2176
  %2178 = vmatmul.f32.gmra.mxu0 %v1191
  %v2179 = vpop.f32.mrf.mxu0
  %v2180 = vadd.f32 %v350, %v2179
  %2181 = vmatmul.f32.gmra.mxu0 %v1194
  %v2182 = vpop.f32.mrf.mxu0
  %v2183 = vadd.f32 %v350, %v2182
  %2184 = vmatmul.f32.gmra.mxu0 %v1197
  %v2185 = vpop.f32.mrf.mxu0
  %v2186 = vadd.f32 %v350, %v2185
  %2187 = vmatmul.f32.gmra.mxu0 %v1200
  %v2188 = vpop.f32.mrf.mxu0
  %v2189 = vadd.f32 %v350, %v2188
  %2190 = vmatmul.f32.gmra.mxu0 %v1203
  %v2191 = vpop.f32.mrf.mxu0
  %v2192 = vadd.f32 %v350, %v2191
  %2193 = vmatmul.f32.gmra.mxu0 %v1206
  %v2194 = vpop.f32.mrf.mxu0
  %v2195 = vadd.f32 %v350, %v2194
  %2196 = vmatmul.f32.gmra.mxu0 %v1209
  %v2197 = vpop.f32.mrf.mxu0
  %v2198 = vadd.f32 %v350, %v2197
  %2199 = vmatmul.f32.gmra.mxu0 %v1212
  %v2200 = vpop.f32.mrf.mxu0
  %v2201 = vadd.f32 %v350, %v2200
  %2202 = vmatmul.f32.gmra.mxu0 %v1215
  %v2203 = vpop.f32.mrf.mxu0
  %v2204 = vadd.f32 %v350, %v2203
  %2205 = vmatmul.f32.gmra.mxu0 %v1218
  %v2206 = vpop.f32.mrf.mxu0
  %v2207 = vadd.f32 %v350, %v2206
  %2208 = vmatmul.f32.gmra.mxu0 %v1221
  %v2209 = vpop.f32.mrf.mxu0
  %v2210 = vadd.f32 %v350, %v2209
  %2211 = vmatmul.f32.gmra.mxu0 %v1224
  %v2212 = vpop.f32.mrf.mxu0
  %v2213 = vadd.f32 %v350, %v2212
  %2214 = vmatmul.f32.gmra.mxu0 %v1227
  %v2215 = vpop.f32.mrf.mxu0
  %v2216 = vadd.f32 %v350, %v2215
  %2217 = vmatmul.f32.gmra.mxu0 %v1230
  %v2218 = vpop.f32.mrf.mxu0
  %v2219 = vadd.f32 %v350, %v2218
  %2220 = vmatmul.f32.gmra.mxu0 %v1233
  %v2221 = vpop.f32.mrf.mxu0
  %v2222 = vadd.f32 %v350, %v2221
  %2223 = vmatmul.f32.gmra.mxu0 %v1236
  %v2224 = vpop.f32.mrf.mxu0
  %v2225 = vadd.f32 %v350, %v2224
  %2226 = vmatmul.f32.gmra.mxu0 %v1239
  %v2227 = vpop.f32.mrf.mxu0
  %v2228 = vadd.f32 %v350, %v2227
  %2229 = vmatmul.f32.gmra.mxu0 %v1242
  %v2230 = vpop.f32.mrf.mxu0
  %v2231 = vadd.f32 %v350, %v2230
  %2232 = vmatmul.f32.gmra.mxu0 %v1245
  %v2233 = vpop.f32.mrf.mxu0
  %v2234 = vadd.f32 %v350, %v2233
  %2235 = vmatmul.f32.gmra.mxu0 %v1248
  %v2236 = vpop.f32.mrf.mxu0
  %v2237 = vadd.f32 %v350, %v2236
  %2238 = vmatmul.f32.gmra.mxu0 %v1251
  %v2239 = vpop.f32.mrf.mxu0
  %v2240 = vadd.f32 %v350, %v2239
  %2241 = vmatmul.f32.gmra.mxu0 %v1254
  %v2242 = vpop.f32.mrf.mxu0
  %v2243 = vadd.f32 %v350, %v2242
  %2244 = vmatmul.f32.gmra.mxu0 %v1257
  %v2245 = vpop.f32.mrf.mxu0
  %v2246 = vadd.f32 %v350, %v2245
  %2247 = vmatmul.f32.gmra.mxu0 %v1260
  %v2248 = vpop.f32.mrf.mxu0
  %v2249 = vadd.f32 %v350, %v2248
  %2250 = vmatmul.f32.gmra.mxu0 %v1263
  %v2251 = vpop.f32.mrf.mxu0
  %v2252 = vadd.f32 %v350, %v2251
  %2253 = vmatmul.f32.gmra.mxu0 %v1266
  %v2254 = vpop.f32.mrf.mxu0
  %v2255 = vadd.f32 %v350, %v2254
  %2256 = vmatmul.f32.gmra.mxu0 %v1269
  %v2257 = vpop.f32.mrf.mxu0
  %v2258 = vadd.f32 %v350, %v2257
  %2259 = vmatmul.f32.gmra.mxu0 %v1272
  %v2260 = vpop.f32.mrf.mxu0
  %v2261 = vadd.f32 %v350, %v2260
  %2262 = vmatmul.f32.gmra.mxu0 %v1275
  %v2263 = vpop.f32.mrf.mxu0
  %v2264 = vadd.f32 %v350, %v2263
  %2265 = vmatmul.f32.gmra.mxu0 %v1278
  %v2266 = vpop.f32.mrf.mxu0
  %v2267 = vadd.f32 %v350, %v2266
  %2268 = vmatmul.f32.gmra.mxu0 %v1281
  %v2269 = vpop.f32.mrf.mxu0
  %v2270 = vadd.f32 %v350, %v2269
  %2271 = vmatmul.f32.gmra.mxu0 %v1284
  %v2272 = vpop.f32.mrf.mxu0
  %v2273 = vadd.f32 %v350, %v2272
  %2274 = vmatmul.f32.gmra.mxu0 %v1287
  %v2275 = vpop.f32.mrf.mxu0
  %v2276 = vadd.f32 %v350, %v2275
  %2277 = vmatmul.f32.gmra.mxu0 %v1290
  %v2278 = vpop.f32.mrf.mxu0
  %v2279 = vadd.f32 %v350, %v2278
  %2280 = vmatmul.f32.gmra.mxu0 %v1293
  %v2281 = vpop.f32.mrf.mxu0
  %v2282 = vadd.f32 %v350, %v2281
  %2283 = vmatmul.f32.gmra.mxu0 %v1296
  %v2284 = vpop.f32.mrf.mxu0
  %v2285 = vadd.f32 %v350, %v2284
  %2286 = vmatmul.f32.gmra.mxu0 %v1299
  %v2287 = vpop.f32.mrf.mxu0
  %v2288 = vadd.f32 %v350, %v2287
  %2289 = vmatmul.f32.gmra.mxu0 %v1302
  %v2290 = vpop.f32.mrf.mxu0
  %v2291 = vadd.f32 %v350, %v2290
  %2292 = vmatmul.f32.gmra.mxu0 %v1305
  %v2293 = vpop.f32.mrf.mxu0
  %v2294 = vadd.f32 %v350, %v2293
  %2295 = vmatmul.f32.gmra.mxu0 %v1308
  %v2296 = vpop.f32.mrf.mxu0
  %v2297 = vadd.f32 %v350, %v2296
  %2298 = vmatmul.f32.gmra.mxu0 %v1311
  %v2299 = vpop.f32.mrf.mxu0
  %v2300 = vadd.f32 %v350, %v2299
  %2301 = vmatmul.f32.gmra.mxu0 %v1314
  %v2302 = vpop.f32.mrf.mxu0
  %v2303 = vadd.f32 %v350, %v2302
  %2304 = vmatmul.f32.gmra.mxu0 %v1317
  %v2305 = vpop.f32.mrf.mxu0
  %v2306 = vadd.f32 %v350, %v2305
  %2307 = vmatmul.f32.gmra.mxu0 %v1320
  %v2308 = vpop.f32.mrf.mxu0
  %v2309 = vadd.f32 %v350, %v2308
  %2310 = vmatmul.f32.gmra.mxu0 %v1323
  %v2311 = vpop.f32.mrf.mxu0
  %v2312 = vadd.f32 %v350, %v2311
  %2313 = vdwg.mxu0
  %v2314 = vlaneseq
  %v2315 = vshrl.u32 %v2314, 7
  %v2316 = vadd.s32 %v2315, 8
  %v2317 = vadd.s32 %v2315, 16
  %v2318 = vadd.s32 %v2315, 24
  %v2319 = vadd.s32 %v2315, 32
  %v2320 = vadd.s32 %v2315, 40
  %v2321 = vadd.s32 %v2315, 48
  %v2322 = vadd.s32 %v2315, 56
  %v2323 = vadd.s32 %v2315, 64
  %v2324 = vadd.s32 %v2315, 72
  %v2325 = vadd.s32 %v2315, 80
  %v2326 = vadd.s32 %v2315, 88
  %v2327 = vadd.s32 %v2315, 96
  %v2328 = vadd.s32 %v2315, 104
  %v2329 = vadd.s32 %v2315, 112
  %v2330 = vadd.s32 %v2315, 120
  %v2331 = vadd.s32 %v2315, 128
  %v2332 = vadd.s32 %v2315, 136
  %v2333 = vadd.s32 %v2315, 144
  %v2334 = vadd.s32 %v2315, 152
  %v2335 = vadd.s32 %v2315, 160
  %v2336 = vadd.s32 %v2315, 168
  %v2337 = vadd.s32 %v2315, 176
  %v2338 = vadd.s32 %v2315, 184
  %v2339 = vadd.s32 %v2315, 192
  %v2340 = vadd.s32 %v2315, 200
  %v2341 = vadd.s32 %v2315, 208
  %v2342 = vadd.s32 %v2315, 216
  %v2343 = vadd.s32 %v2315, 224
  %v2344 = vadd.s32 %v2315, 232
  %v2345 = vadd.s32 %v2315, 240
  %v2346 = vadd.s32 %v2315, 248
  %v2347 = vadd.s32 %v2315, 256
  %v2348 = vadd.s32 %v2315, 264
  %v2349 = vadd.s32 %v2315, 272
  %v2350 = vadd.s32 %v2315, 280
  %v2351 = vadd.s32 %v2315, 288
  %v2352 = vadd.s32 %v2315, 296
  %v2353 = vadd.s32 %v2315, 304
  %v2354 = vadd.s32 %v2315, 312
  %v2355 = vadd.s32 %v2315, 320
  %v2356 = vadd.s32 %v2315, 328
  %v2357 = vadd.s32 %v2315, 336
  %v2358 = vadd.s32 %v2315, 344
  %v2359 = vadd.s32 %v2315, 352
  %v2360 = vadd.s32 %v2315, 360
  %v2361 = vadd.s32 %v2315, 368
  %v2362 = vadd.s32 %v2315, 376
  %v2363 = vadd.s32 %v2315, 384
  %v2364 = vadd.s32 %v2315, 392
  %v2365 = vadd.s32 %v2315, 400
  %v2366 = vadd.s32 %v2315, 408
  %v2367 = vadd.s32 %v2315, 416
  %v2368 = vadd.s32 %v2315, 424
  %v2369 = vadd.s32 %v2315, 432
  %v2370 = vadd.s32 %v2315, 440
  %v2371 = vadd.s32 %v2315, 448
  %v2372 = vadd.s32 %v2315, 456
  %v2373 = vadd.s32 %v2315, 464
  %v2374 = vadd.s32 %v2315, 472
  %v2375 = vadd.s32 %v2315, 480
  %v2376 = vadd.s32 %v2315, 488
  %v2377 = vadd.s32 %v2315, 496
  %v2378 = vadd.s32 %v2315, 504
  %v2379 = vadd.s32 %v2315, 512
  %v2380 = vadd.s32 %v2315, 520
  %v2381 = vadd.s32 %v2315, 528
  %v2382 = vadd.s32 %v2315, 536
  %v2383 = vadd.s32 %v2315, 544
  %v2384 = vadd.s32 %v2315, 552
  %v2385 = vadd.s32 %v2315, 560
  %v2386 = vadd.s32 %v2315, 568
  %v2387 = vadd.s32 %v2315, 576
  %v2388 = vadd.s32 %v2315, 584
  %v2389 = vadd.s32 %v2315, 592
  %v2390 = vadd.s32 %v2315, 600
  %v2391 = vadd.s32 %v2315, 608
  %v2392 = vadd.s32 %v2315, 616
  %v2393 = vadd.s32 %v2315, 624
  %v2394 = vadd.s32 %v2315, 632
  %v2395 = vadd.s32 %v2315, 640
  %v2396 = vadd.s32 %v2315, 648
  %v2397 = vadd.s32 %v2315, 656
  %v2398 = vadd.s32 %v2315, 664
  %v2399 = vadd.s32 %v2315, 672
  %v2400 = vadd.s32 %v2315, 680
  %v2401 = vadd.s32 %v2315, 688
  %v2402 = vadd.s32 %v2315, 696
  %v2403 = vadd.s32 %v2315, 704
  %v2404 = vadd.s32 %v2315, 712
  %v2405 = vadd.s32 %v2315, 720
  %v2406 = vadd.s32 %v2315, 728
  %v2407 = vadd.s32 %v2315, 736
  %v2408 = vadd.s32 %v2315, 744
  %v2409 = vadd.s32 %v2315, 752
  %v2410 = vadd.s32 %v2315, 760
  %v2411 = vadd.s32 %v2315, 768
  %v2412 = vadd.s32 %v2315, 776
  %v2413 = vadd.s32 %v2315, 784
  %v2414 = vadd.s32 %v2315, 792
  %v2415 = vadd.s32 %v2315, 800
  %v2416 = vadd.s32 %v2315, 808
  %v2417 = vadd.s32 %v2315, 816
  %v2418 = vadd.s32 %v2315, 824
  %v2419 = vadd.s32 %v2315, 832
  %v2420 = vadd.s32 %v2315, 840
  %v2421 = vadd.s32 %v2315, 848
  %v2422 = vadd.s32 %v2315, 856
  %v2423 = vadd.s32 %v2315, 864
  %v2424 = vadd.s32 %v2315, 872
  %v2425 = vadd.s32 %v2315, 880
  %v2426 = vadd.s32 %v2315, 888
  %v2427 = vadd.s32 %v2315, 896
  %v2428 = vadd.s32 %v2315, 904
  %v2429 = vadd.s32 %v2315, 912
  %v2430 = vadd.s32 %v2315, 920
  %v2431 = vadd.s32 %v2315, 928
  %v2432 = vadd.s32 %v2315, 936
  %v2433 = vadd.s32 %v2315, 944
  %v2434 = vadd.s32 %v2315, 952
  %v2435 = vadd.s32 %v2315, 960
  %v2436 = vadd.s32 %v2315, 968
  %v2437 = vadd.s32 %v2315, 976
  %v2438 = vadd.s32 %v2315, 984
  %v2439 = vadd.s32 %v2315, 992
  %v2440 = vadd.s32 %v2315, 1000
  %v2441 = vadd.s32 %v2315, 1008
  %v2442 = vadd.s32 %v2315, 1016
  %v2443 = vadd.s32 %v2315, 1024
  %v2444 = vadd.s32 %v2315, 1032
  %v2445 = vadd.s32 %v2315, 1040
  %v2446 = vadd.s32 %v2315, 1048
  %v2447 = vadd.s32 %v2315, 1056
  %v2448 = vadd.s32 %v2315, 1064
  %v2449 = vadd.s32 %v2315, 1072
  %v2450 = vadd.s32 %v2315, 1080
  %v2451 = vadd.s32 %v2315, 1088
  %v2452 = vadd.s32 %v2315, 1096
  %v2453 = vadd.s32 %v2315, 1104
  %v2454 = vadd.s32 %v2315, 1112
  %v2455 = vadd.s32 %v2315, 1120
  %v2456 = vadd.s32 %v2315, 1128
  %v2457 = vadd.s32 %v2315, 1136
  %v2458 = vadd.s32 %v2315, 1144
  %v2459 = vadd.s32 %v2315, 1152
  %v2460 = vadd.s32 %v2315, 1160
  %v2461 = vadd.s32 %v2315, 1168
  %v2462 = vadd.s32 %v2315, 1176
  %v2463 = vadd.s32 %v2315, 1184
  %v2464 = vadd.s32 %v2315, 1192
  %v2465 = vadd.s32 %v2315, 1200
  %v2466 = vadd.s32 %v2315, 1208
  %v2467 = vadd.s32 %v2315, 1216
  %v2468 = vadd.s32 %v2315, 1224
  %v2469 = vadd.s32 %v2315, 1232
  %v2470 = vadd.s32 %v2315, 1240
  %v2471 = vadd.s32 %v2315, 1248
  %v2472 = vadd.s32 %v2315, 1256
  %v2473 = vadd.s32 %v2315, 1264
  %v2474 = vadd.s32 %v2315, 1272
  %v2475 = vadd.s32 %v2315, 1280
  %v2476 = vadd.s32 %v2315, 1288
  %v2477 = vadd.s32 %v2315, 1296
  %v2478 = vadd.s32 %v2315, 1304
  %v2479 = vadd.s32 %v2315, 1312
  %v2480 = vadd.s32 %v2315, 1320
  %v2481 = vadd.s32 %v2315, 1328
  %v2482 = vadd.s32 %v2315, 1336
  %v2483 = vadd.s32 %v2315, 1344
  %v2484 = vadd.s32 %v2315, 1352
  %v2485 = vadd.s32 %v2315, 1360
  %v2486 = vadd.s32 %v2315, 1368
  %v2487 = vadd.s32 %v2315, 1376
  %v2488 = vadd.s32 %v2315, 1384
  %v2489 = vadd.s32 %v2315, 1392
  %v2490 = vadd.s32 %v2315, 1400
  %v2491 = vadd.s32 %v2315, 1408
  %v2492 = vadd.s32 %v2315, 1416
  %v2493 = vadd.s32 %v2315, 1424
  %v2494 = vadd.s32 %v2315, 1432
  %v2495 = vadd.s32 %v2315, 1440
  %v2496 = vadd.s32 %v2315, 1448
  %v2497 = vadd.s32 %v2315, 1456
  %v2498 = vadd.s32 %v2315, 1464
  %v2499 = vadd.s32 %v2315, 1472
  %v2500 = vadd.s32 %v2315, 1480
  %v2501 = vadd.s32 %v2315, 1488
  %v2502 = vadd.s32 %v2315, 1496
  %v2503 = vadd.s32 %v2315, 1504
  %v2504 = vadd.s32 %v2315, 1512
  %v2505 = vadd.s32 %v2315, 1520
  %v2506 = vadd.s32 %v2315, 1528
  %v2507 = vadd.s32 %v2315, 1536
  %v2508 = vadd.s32 %v2315, 1544
  %v2509 = vadd.s32 %v2315, 1552
  %v2510 = vadd.s32 %v2315, 1560
  %v2511 = vadd.s32 %v2315, 1568
  %v2512 = vadd.s32 %v2315, 1576
  %v2513 = vadd.s32 %v2315, 1584
  %v2514 = vadd.s32 %v2315, 1592
  %v2515 = vadd.s32 %v2315, 1600
  %v2516 = vadd.s32 %v2315, 1608
  %v2517 = vadd.s32 %v2315, 1616
  %v2518 = vadd.s32 %v2315, 1624
  %v2519 = vadd.s32 %v2315, 1632
  %v2520 = vadd.s32 %v2315, 1640
  %v2521 = vadd.s32 %v2315, 1648
  %v2522 = vadd.s32 %v2315, 1656
  %v2523 = vadd.s32 %v2315, 1664
  %v2524 = vadd.s32 %v2315, 1672
  %v2525 = vadd.s32 %v2315, 1680
  %v2526 = vadd.s32 %v2315, 1688
  %v2527 = vadd.s32 %v2315, 1696
  %v2528 = vadd.s32 %v2315, 1704
  %v2529 = vadd.s32 %v2315, 1712
  %v2530 = vadd.s32 %v2315, 1720
  %v2531 = vadd.s32 %v2315, 1728
  %v2532 = vadd.s32 %v2315, 1736
  %v2533 = vadd.s32 %v2315, 1744
  %v2534 = vadd.s32 %v2315, 1752
  %v2535 = vadd.s32 %v2315, 1760
  %v2536 = vadd.s32 %v2315, 1768
  %v2537 = vadd.s32 %v2315, 1776
  %v2538 = vadd.s32 %v2315, 1784
  %v2539 = vadd.s32 %v2315, 1792
  %v2540 = vadd.s32 %v2315, 1800
  %v2541 = vadd.s32 %v2315, 1808
  %v2542 = vadd.s32 %v2315, 1816
  %v2543 = vadd.s32 %v2315, 1824
  %v2544 = vadd.s32 %v2315, 1832
  %v2545 = vadd.s32 %v2315, 1840
  %v2546 = vadd.s32 %v2315, 1848
  %v2547 = vadd.s32 %v2315, 1856
  %v2548 = vadd.s32 %v2315, 1864
  %v2549 = vadd.s32 %v2315, 1872
  %v2550 = vadd.s32 %v2315, 1880
  %v2551 = vadd.s32 %v2315, 1888
  %v2552 = vadd.s32 %v2315, 1896
  %v2553 = vadd.s32 %v2315, 1904
  %v2554 = vadd.s32 %v2315, 1912
  %v2555 = vadd.s32 %v2315, 1920
  %v2556 = vadd.s32 %v2315, 1928
  %v2557 = vadd.s32 %v2315, 1936
  %v2558 = vadd.s32 %v2315, 1944
  %v2559 = vadd.s32 %v2315, 1952
  %v2560 = vadd.s32 %v2315, 1960
  %v2561 = vadd.s32 %v2315, 1968
  %v2562 = vadd.s32 %v2315, 1976
  %v2563 = vadd.s32 %v2315, 1984
  %v2564 = vadd.s32 %v2315, 1992
  %v2565 = vadd.s32 %v2315, 2000
  %v2566 = vadd.s32 %v2315, 2008
  %v2567 = vadd.s32 %v2315, 2016
  %v2568 = vadd.s32 %v2315, 2024
  %v2569 = vadd.s32 %v2315, 2032
  %v2570 = vadd.s32 %v2315, 2040
  %v2571 = vadd.s32 %v2315, 2048
  %v2572 = vadd.s32 %v2315, 2056
  %v2573 = vadd.s32 %v2315, 2064
  %v2574 = vadd.s32 %v2315, 2072
  %v2575 = vadd.s32 %v2315, 2080
  %v2576 = vadd.s32 %v2315, 2088
  %v2577 = vadd.s32 %v2315, 2096
  %v2578 = vadd.s32 %v2315, 2104
  %v2579 = vadd.s32 %v2315, 2112
  %v2580 = vadd.s32 %v2315, 2120
  %v2581 = vadd.s32 %v2315, 2128
  %v2582 = vadd.s32 %v2315, 2136
  %v2583 = vadd.s32 %v2315, 2144
  %v2584 = vadd.s32 %v2315, 2152
  %v2585 = vadd.s32 %v2315, 2160
  %v2586 = vadd.s32 %v2315, 2168
  %v2587 = vadd.s32 %v2315, 2176
  %v2588 = vadd.s32 %v2315, 2184
  %v2589 = vadd.s32 %v2315, 2192
  %v2590 = vadd.s32 %v2315, 2200
  %v2591 = vadd.s32 %v2315, 2208
  %v2592 = vadd.s32 %v2315, 2216
  %v2593 = vadd.s32 %v2315, 2224
  %v2594 = vadd.s32 %v2315, 2232
  %v2595 = vadd.s32 %v2315, 2240
  %v2596 = vadd.s32 %v2315, 2248
  %v2597 = vadd.s32 %v2315, 2256
  %v2598 = vadd.s32 %v2315, 2264
  %v2599 = vadd.s32 %v2315, 2272
  %v2600 = vadd.s32 %v2315, 2280
  %v2601 = vadd.s32 %v2315, 2288
  %v2602 = vadd.s32 %v2315, 2296
  %v2603 = vadd.s32 %v2315, 2304
  %v2604 = vadd.s32 %v2315, 2312
  %v2605 = vadd.s32 %v2315, 2320
  %v2606 = vadd.s32 %v2315, 2328
  %v2607 = vadd.s32 %v2315, 2336
  %v2608 = vadd.s32 %v2315, 2344
  %v2609 = vadd.s32 %v2315, 2352
  %v2610 = vadd.s32 %v2315, 2360
  %v2611 = vadd.s32 %v2315, 2368
  %v2612 = vadd.s32 %v2315, 2376
  %v2613 = vadd.s32 %v2315, 2384
  %v2614 = vadd.s32 %v2315, 2392
  %v2615 = vadd.s32 %v2315, 2400
  %v2616 = vadd.s32 %v2315, 2408
  %v2617 = vadd.s32 %v2315, 2416
  %v2618 = vadd.s32 %v2315, 2424
  %v2619 = vadd.s32 %v2315, 2432
  %v2620 = vadd.s32 %v2315, 2440
  %v2621 = vadd.s32 %v2315, 2448
  %v2622 = vadd.s32 %v2315, 2456
  %v2623 = vadd.s32 %v2315, 2464
  %v2624 = vadd.s32 %v2315, 2472
  %v2625 = vadd.s32 %v2315, 2480
  %v2626 = vadd.s32 %v2315, 2488
  %v2627 = vadd.s32 %v2315, 2496
  %v2628 = vadd.s32 %v2315, 2504
  %v2629 = vadd.s32 %v2315, 2512
  %v2630 = vadd.s32 %v2315, 2520
  %v2631 = vadd.s32 %v2315, 2528
  %v2632 = vadd.s32 %v2315, 2536
  %v2633 = vadd.s32 %v2315, 2544
  %v2634 = vadd.s32 %v2315, 2552
  %v2635 = vadd.s32 %v2315, 2560
  %v2636 = vadd.s32 %v2315, 2568
  %v2637 = vadd.s32 %v2315, 2576
  %v2638 = vadd.s32 %v2315, 2584
  %vm2639 = vcmp.lt.s32.totalorder %v2315, 648
  %vm2640 = vcmp.lt.s32.totalorder %v2316, 648
  %vm2641 = vcmp.lt.s32.totalorder %v2317, 648
  %vm2642 = vcmp.lt.s32.totalorder %v2318, 648
  %vm2643 = vcmp.lt.s32.totalorder %v2319, 648
  %vm2644 = vcmp.lt.s32.totalorder %v2320, 648
  %vm2645 = vcmp.lt.s32.totalorder %v2321, 648
  %vm2646 = vcmp.lt.s32.totalorder %v2322, 648
  %vm2647 = vcmp.lt.s32.totalorder %v2323, 648
  %vm2648 = vcmp.lt.s32.totalorder %v2324, 648
  %vm2649 = vcmp.lt.s32.totalorder %v2325, 648
  %vm2650 = vcmp.lt.s32.totalorder %v2326, 648
  %vm2651 = vcmp.lt.s32.totalorder %v2327, 648
  %vm2652 = vcmp.lt.s32.totalorder %v2328, 648
  %vm2653 = vcmp.lt.s32.totalorder %v2329, 648
  %vm2654 = vcmp.lt.s32.totalorder %v2330, 648
  %vm2655 = vcmp.lt.s32.totalorder %v2331, 648
  %vm2656 = vcmp.lt.s32.totalorder %v2332, 648
  %vm2657 = vcmp.lt.s32.totalorder %v2333, 648
  %vm2658 = vcmp.lt.s32.totalorder %v2334, 648
  %vm2659 = vcmp.lt.s32.totalorder %v2335, 648
  %vm2660 = vcmp.lt.s32.totalorder %v2336, 648
  %vm2661 = vcmp.lt.s32.totalorder %v2337, 648
  %vm2662 = vcmp.lt.s32.totalorder %v2338, 648
  %vm2663 = vcmp.lt.s32.totalorder %v2339, 648
  %vm2664 = vcmp.lt.s32.totalorder %v2340, 648
  %vm2665 = vcmp.lt.s32.totalorder %v2341, 648
  %vm2666 = vcmp.lt.s32.totalorder %v2342, 648
  %vm2667 = vcmp.lt.s32.totalorder %v2343, 648
  %vm2668 = vcmp.lt.s32.totalorder %v2344, 648
  %vm2669 = vcmp.lt.s32.totalorder %v2345, 648
  %vm2670 = vcmp.lt.s32.totalorder %v2346, 648
  %vm2671 = vcmp.lt.s32.totalorder %v2347, 648
  %vm2672 = vcmp.lt.s32.totalorder %v2348, 648
  %vm2673 = vcmp.lt.s32.totalorder %v2349, 648
  %vm2674 = vcmp.lt.s32.totalorder %v2350, 648
  %vm2675 = vcmp.lt.s32.totalorder %v2351, 648
  %vm2676 = vcmp.lt.s32.totalorder %v2352, 648
  %vm2677 = vcmp.lt.s32.totalorder %v2353, 648
  %vm2678 = vcmp.lt.s32.totalorder %v2354, 648
  %vm2679 = vcmp.lt.s32.totalorder %v2355, 648
  %vm2680 = vcmp.lt.s32.totalorder %v2356, 648
  %vm2681 = vcmp.lt.s32.totalorder %v2357, 648
  %vm2682 = vcmp.lt.s32.totalorder %v2358, 648
  %vm2683 = vcmp.lt.s32.totalorder %v2359, 648
  %vm2684 = vcmp.lt.s32.totalorder %v2360, 648
  %vm2685 = vcmp.lt.s32.totalorder %v2361, 648
  %vm2686 = vcmp.lt.s32.totalorder %v2362, 648
  %vm2687 = vcmp.lt.s32.totalorder %v2363, 648
  %vm2688 = vcmp.lt.s32.totalorder %v2364, 648
  %vm2689 = vcmp.lt.s32.totalorder %v2365, 648
  %vm2690 = vcmp.lt.s32.totalorder %v2366, 648
  %vm2691 = vcmp.lt.s32.totalorder %v2367, 648
  %vm2692 = vcmp.lt.s32.totalorder %v2368, 648
  %vm2693 = vcmp.lt.s32.totalorder %v2369, 648
  %vm2694 = vcmp.lt.s32.totalorder %v2370, 648
  %vm2695 = vcmp.lt.s32.totalorder %v2371, 648
  %vm2696 = vcmp.lt.s32.totalorder %v2372, 648
  %vm2697 = vcmp.lt.s32.totalorder %v2373, 648
  %vm2698 = vcmp.lt.s32.totalorder %v2374, 648
  %vm2699 = vcmp.lt.s32.totalorder %v2375, 648
  %vm2700 = vcmp.lt.s32.totalorder %v2376, 648
  %vm2701 = vcmp.lt.s32.totalorder %v2377, 648
  %vm2702 = vcmp.lt.s32.totalorder %v2378, 648
  %vm2703 = vcmp.lt.s32.totalorder %v2379, 648
  %vm2704 = vcmp.lt.s32.totalorder %v2380, 648
  %vm2705 = vcmp.lt.s32.totalorder %v2381, 648
  %vm2706 = vcmp.lt.s32.totalorder %v2382, 648
  %vm2707 = vcmp.lt.s32.totalorder %v2383, 648
  %vm2708 = vcmp.lt.s32.totalorder %v2384, 648
  %vm2709 = vcmp.lt.s32.totalorder %v2385, 648
  %vm2710 = vcmp.lt.s32.totalorder %v2386, 648
  %vm2711 = vcmp.lt.s32.totalorder %v2387, 648
  %vm2712 = vcmp.lt.s32.totalorder %v2388, 648
  %vm2713 = vcmp.lt.s32.totalorder %v2389, 648
  %vm2714 = vcmp.lt.s32.totalorder %v2390, 648
  %vm2715 = vcmp.lt.s32.totalorder %v2391, 648
  %vm2716 = vcmp.lt.s32.totalorder %v2392, 648
  %vm2717 = vcmp.lt.s32.totalorder %v2393, 648
  %vm2718 = vcmp.lt.s32.totalorder %v2394, 648
  %vm2719 = vcmp.lt.s32.totalorder %v2395, 648
  %vm2720 = vcmp.lt.s32.totalorder %v2396, 648
  %vm2721 = vcmp.lt.s32.totalorder %v2397, 648
  %vm2722 = vcmp.lt.s32.totalorder %v2398, 648
  %vm2723 = vcmp.lt.s32.totalorder %v2399, 648
  %vm2724 = vcmp.lt.s32.totalorder %v2400, 648
  %vm2725 = vcmp.lt.s32.totalorder %v2401, 648
  %vm2726 = vcmp.lt.s32.totalorder %v2402, 648
  %vm2727 = vcmp.lt.s32.totalorder %v2403, 648
  %vm2728 = vcmp.lt.s32.totalorder %v2404, 648
  %vm2729 = vcmp.lt.s32.totalorder %v2405, 648
  %vm2730 = vcmp.lt.s32.totalorder %v2406, 648
  %vm2731 = vcmp.lt.s32.totalorder %v2407, 648
  %vm2732 = vcmp.lt.s32.totalorder %v2408, 648
  %vm2733 = vcmp.lt.s32.totalorder %v2409, 648
  %vm2734 = vcmp.lt.s32.totalorder %v2410, 648
  %vm2735 = vcmp.lt.s32.totalorder %v2411, 648
  %vm2736 = vcmp.lt.s32.totalorder %v2412, 648
  %vm2737 = vcmp.lt.s32.totalorder %v2413, 648
  %vm2738 = vcmp.lt.s32.totalorder %v2414, 648
  %vm2739 = vcmp.lt.s32.totalorder %v2415, 648
  %vm2740 = vcmp.lt.s32.totalorder %v2416, 648
  %vm2741 = vcmp.lt.s32.totalorder %v2417, 648
  %vm2742 = vcmp.lt.s32.totalorder %v2418, 648
  %vm2743 = vcmp.lt.s32.totalorder %v2419, 648
  %vm2744 = vcmp.lt.s32.totalorder %v2420, 648
  %vm2745 = vcmp.lt.s32.totalorder %v2421, 648
  %vm2746 = vcmp.lt.s32.totalorder %v2422, 648
  %vm2747 = vcmp.lt.s32.totalorder %v2423, 648
  %vm2748 = vcmp.lt.s32.totalorder %v2424, 648
  %vm2749 = vcmp.lt.s32.totalorder %v2425, 648
  %vm2750 = vcmp.lt.s32.totalorder %v2426, 648
  %vm2751 = vcmp.lt.s32.totalorder %v2427, 648
  %vm2752 = vcmp.lt.s32.totalorder %v2428, 648
  %vm2753 = vcmp.lt.s32.totalorder %v2429, 648
  %vm2754 = vcmp.lt.s32.totalorder %v2430, 648
  %vm2755 = vcmp.lt.s32.totalorder %v2431, 648
  %vm2756 = vcmp.lt.s32.totalorder %v2432, 648
  %vm2757 = vcmp.lt.s32.totalorder %v2433, 648
  %vm2758 = vcmp.lt.s32.totalorder %v2434, 648
  %vm2759 = vcmp.lt.s32.totalorder %v2435, 648
  %vm2760 = vcmp.lt.s32.totalorder %v2436, 648
  %vm2761 = vcmp.lt.s32.totalorder %v2437, 648
  %vm2762 = vcmp.lt.s32.totalorder %v2438, 648
  %vm2763 = vcmp.lt.s32.totalorder %v2439, 648
  %vm2764 = vcmp.lt.s32.totalorder %v2440, 648
  %vm2765 = vcmp.lt.s32.totalorder %v2441, 648
  %vm2766 = vcmp.lt.s32.totalorder %v2442, 648
  %vm2767 = vcmp.lt.s32.totalorder %v2443, 648
  %vm2768 = vcmp.lt.s32.totalorder %v2444, 648
  %vm2769 = vcmp.lt.s32.totalorder %v2445, 648
  %vm2770 = vcmp.lt.s32.totalorder %v2446, 648
  %vm2771 = vcmp.lt.s32.totalorder %v2447, 648
  %vm2772 = vcmp.lt.s32.totalorder %v2448, 648
  %vm2773 = vcmp.lt.s32.totalorder %v2449, 648
  %vm2774 = vcmp.lt.s32.totalorder %v2450, 648
  %vm2775 = vcmp.lt.s32.totalorder %v2451, 648
  %vm2776 = vcmp.lt.s32.totalorder %v2452, 648
  %vm2777 = vcmp.lt.s32.totalorder %v2453, 648
  %vm2778 = vcmp.lt.s32.totalorder %v2454, 648
  %vm2779 = vcmp.lt.s32.totalorder %v2455, 648
  %vm2780 = vcmp.lt.s32.totalorder %v2456, 648
  %vm2781 = vcmp.lt.s32.totalorder %v2457, 648
  %vm2782 = vcmp.lt.s32.totalorder %v2458, 648
  %vm2783 = vcmp.lt.s32.totalorder %v2459, 648
  %vm2784 = vcmp.lt.s32.totalorder %v2460, 648
  %vm2785 = vcmp.lt.s32.totalorder %v2461, 648
  %vm2786 = vcmp.lt.s32.totalorder %v2462, 648
  %vm2787 = vcmp.lt.s32.totalorder %v2463, 648
  %vm2788 = vcmp.lt.s32.totalorder %v2464, 648
  %vm2789 = vcmp.lt.s32.totalorder %v2465, 648
  %vm2790 = vcmp.lt.s32.totalorder %v2466, 648
  %vm2791 = vcmp.lt.s32.totalorder %v2467, 648
  %vm2792 = vcmp.lt.s32.totalorder %v2468, 648
  %vm2793 = vcmp.lt.s32.totalorder %v2469, 648
  %vm2794 = vcmp.lt.s32.totalorder %v2470, 648
  %vm2795 = vcmp.lt.s32.totalorder %v2471, 648
  %vm2796 = vcmp.lt.s32.totalorder %v2472, 648
  %vm2797 = vcmp.lt.s32.totalorder %v2473, 648
  %vm2798 = vcmp.lt.s32.totalorder %v2474, 648
  %vm2799 = vcmp.lt.s32.totalorder %v2475, 648
  %vm2800 = vcmp.lt.s32.totalorder %v2476, 648
  %vm2801 = vcmp.lt.s32.totalorder %v2477, 648
  %vm2802 = vcmp.lt.s32.totalorder %v2478, 648
  %vm2803 = vcmp.lt.s32.totalorder %v2479, 648
  %vm2804 = vcmp.lt.s32.totalorder %v2480, 648
  %vm2805 = vcmp.lt.s32.totalorder %v2481, 648
  %vm2806 = vcmp.lt.s32.totalorder %v2482, 648
  %vm2807 = vcmp.lt.s32.totalorder %v2483, 648
  %vm2808 = vcmp.lt.s32.totalorder %v2484, 648
  %vm2809 = vcmp.lt.s32.totalorder %v2485, 648
  %vm2810 = vcmp.lt.s32.totalorder %v2486, 648
  %vm2811 = vcmp.lt.s32.totalorder %v2487, 648
  %vm2812 = vcmp.lt.s32.totalorder %v2488, 648
  %vm2813 = vcmp.lt.s32.totalorder %v2489, 648
  %vm2814 = vcmp.lt.s32.totalorder %v2490, 648
  %vm2815 = vcmp.lt.s32.totalorder %v2491, 648
  %vm2816 = vcmp.lt.s32.totalorder %v2492, 648
  %vm2817 = vcmp.lt.s32.totalorder %v2493, 648
  %vm2818 = vcmp.lt.s32.totalorder %v2494, 648
  %vm2819 = vcmp.lt.s32.totalorder %v2495, 648
  %vm2820 = vcmp.lt.s32.totalorder %v2496, 648
  %vm2821 = vcmp.lt.s32.totalorder %v2497, 648
  %vm2822 = vcmp.lt.s32.totalorder %v2498, 648
  %vm2823 = vcmp.lt.s32.totalorder %v2499, 648
  %vm2824 = vcmp.lt.s32.totalorder %v2500, 648
  %vm2825 = vcmp.lt.s32.totalorder %v2501, 648
  %vm2826 = vcmp.lt.s32.totalorder %v2502, 648
  %vm2827 = vcmp.lt.s32.totalorder %v2503, 648
  %vm2828 = vcmp.lt.s32.totalorder %v2504, 648
  %vm2829 = vcmp.lt.s32.totalorder %v2505, 648
  %vm2830 = vcmp.lt.s32.totalorder %v2506, 648
  %vm2831 = vcmp.lt.s32.totalorder %v2507, 648
  %vm2832 = vcmp.lt.s32.totalorder %v2508, 648
  %vm2833 = vcmp.lt.s32.totalorder %v2509, 648
  %vm2834 = vcmp.lt.s32.totalorder %v2510, 648
  %vm2835 = vcmp.lt.s32.totalorder %v2511, 648
  %vm2836 = vcmp.lt.s32.totalorder %v2512, 648
  %vm2837 = vcmp.lt.s32.totalorder %v2513, 648
  %vm2838 = vcmp.lt.s32.totalorder %v2514, 648
  %vm2839 = vcmp.lt.s32.totalorder %v2515, 648
  %vm2840 = vcmp.lt.s32.totalorder %v2516, 648
  %vm2841 = vcmp.lt.s32.totalorder %v2517, 648
  %vm2842 = vcmp.lt.s32.totalorder %v2518, 648
  %vm2843 = vcmp.lt.s32.totalorder %v2519, 648
  %vm2844 = vcmp.lt.s32.totalorder %v2520, 648
  %vm2845 = vcmp.lt.s32.totalorder %v2521, 648
  %vm2846 = vcmp.lt.s32.totalorder %v2522, 648
  %vm2847 = vcmp.lt.s32.totalorder %v2523, 648
  %vm2848 = vcmp.lt.s32.totalorder %v2524, 648
  %vm2849 = vcmp.lt.s32.totalorder %v2525, 648
  %vm2850 = vcmp.lt.s32.totalorder %v2526, 648
  %vm2851 = vcmp.lt.s32.totalorder %v2527, 648
  %vm2852 = vcmp.lt.s32.totalorder %v2528, 648
  %vm2853 = vcmp.lt.s32.totalorder %v2529, 648
  %vm2854 = vcmp.lt.s32.totalorder %v2530, 648
  %vm2855 = vcmp.lt.s32.totalorder %v2531, 648
  %vm2856 = vcmp.lt.s32.totalorder %v2532, 648
  %vm2857 = vcmp.lt.s32.totalorder %v2533, 648
  %vm2858 = vcmp.lt.s32.totalorder %v2534, 648
  %vm2859 = vcmp.lt.s32.totalorder %v2535, 648
  %vm2860 = vcmp.lt.s32.totalorder %v2536, 648
  %vm2861 = vcmp.lt.s32.totalorder %v2537, 648
  %vm2862 = vcmp.lt.s32.totalorder %v2538, 648
  %vm2863 = vcmp.lt.s32.totalorder %v2539, 648
  %vm2864 = vcmp.lt.s32.totalorder %v2540, 648
  %vm2865 = vcmp.lt.s32.totalorder %v2541, 648
  %vm2866 = vcmp.lt.s32.totalorder %v2542, 648
  %vm2867 = vcmp.lt.s32.totalorder %v2543, 648
  %vm2868 = vcmp.lt.s32.totalorder %v2544, 648
  %vm2869 = vcmp.lt.s32.totalorder %v2545, 648
  %vm2870 = vcmp.lt.s32.totalorder %v2546, 648
  %vm2871 = vcmp.lt.s32.totalorder %v2547, 648
  %vm2872 = vcmp.lt.s32.totalorder %v2548, 648
  %vm2873 = vcmp.lt.s32.totalorder %v2549, 648
  %vm2874 = vcmp.lt.s32.totalorder %v2550, 648
  %vm2875 = vcmp.lt.s32.totalorder %v2551, 648
  %vm2876 = vcmp.lt.s32.totalorder %v2552, 648
  %vm2877 = vcmp.lt.s32.totalorder %v2553, 648
  %vm2878 = vcmp.lt.s32.totalorder %v2554, 648
  %vm2879 = vcmp.lt.s32.totalorder %v2555, 648
  %vm2880 = vcmp.lt.s32.totalorder %v2556, 648
  %vm2881 = vcmp.lt.s32.totalorder %v2557, 648
  %vm2882 = vcmp.lt.s32.totalorder %v2558, 648
  %vm2883 = vcmp.lt.s32.totalorder %v2559, 648
  %vm2884 = vcmp.lt.s32.totalorder %v2560, 648
  %vm2885 = vcmp.lt.s32.totalorder %v2561, 648
  %vm2886 = vcmp.lt.s32.totalorder %v2562, 648
  %vm2887 = vcmp.lt.s32.totalorder %v2563, 648
  %vm2888 = vcmp.lt.s32.totalorder %v2564, 648
  %vm2889 = vcmp.lt.s32.totalorder %v2565, 648
  %vm2890 = vcmp.lt.s32.totalorder %v2566, 648
  %vm2891 = vcmp.lt.s32.totalorder %v2567, 648
  %vm2892 = vcmp.lt.s32.totalorder %v2568, 648
  %vm2893 = vcmp.lt.s32.totalorder %v2569, 648
  %vm2894 = vcmp.lt.s32.totalorder %v2570, 648
  %vm2895 = vcmp.lt.s32.totalorder %v2571, 648
  %vm2896 = vcmp.lt.s32.totalorder %v2572, 648
  %vm2897 = vcmp.lt.s32.totalorder %v2573, 648
  %vm2898 = vcmp.lt.s32.totalorder %v2574, 648
  %vm2899 = vcmp.lt.s32.totalorder %v2575, 648
  %vm2900 = vcmp.lt.s32.totalorder %v2576, 648
  %vm2901 = vcmp.lt.s32.totalorder %v2577, 648
  %vm2902 = vcmp.lt.s32.totalorder %v2578, 648
  %vm2903 = vcmp.lt.s32.totalorder %v2579, 648
  %vm2904 = vcmp.lt.s32.totalorder %v2580, 648
  %vm2905 = vcmp.lt.s32.totalorder %v2581, 648
  %vm2906 = vcmp.lt.s32.totalorder %v2582, 648
  %vm2907 = vcmp.lt.s32.totalorder %v2583, 648
  %vm2908 = vcmp.lt.s32.totalorder %v2584, 648
  %vm2909 = vcmp.lt.s32.totalorder %v2585, 648
  %vm2910 = vcmp.lt.s32.totalorder %v2586, 648
  %vm2911 = vcmp.lt.s32.totalorder %v2587, 648
  %vm2912 = vcmp.lt.s32.totalorder %v2588, 648
  %vm2913 = vcmp.lt.s32.totalorder %v2589, 648
  %vm2914 = vcmp.lt.s32.totalorder %v2590, 648
  %vm2915 = vcmp.lt.s32.totalorder %v2591, 648
  %vm2916 = vcmp.lt.s32.totalorder %v2592, 648
  %vm2917 = vcmp.lt.s32.totalorder %v2593, 648
  %vm2918 = vcmp.lt.s32.totalorder %v2594, 648
  %vm2919 = vcmp.lt.s32.totalorder %v2595, 648
  %vm2920 = vcmp.lt.s32.totalorder %v2596, 648
  %vm2921 = vcmp.lt.s32.totalorder %v2597, 648
  %vm2922 = vcmp.lt.s32.totalorder %v2598, 648
  %vm2923 = vcmp.lt.s32.totalorder %v2599, 648
  %vm2924 = vcmp.lt.s32.totalorder %v2600, 648
  %vm2925 = vcmp.lt.s32.totalorder %v2601, 648
  %vm2926 = vcmp.lt.s32.totalorder %v2602, 648
  %vm2927 = vcmp.lt.s32.totalorder %v2603, 648
  %vm2928 = vcmp.lt.s32.totalorder %v2604, 648
  %vm2929 = vcmp.lt.s32.totalorder %v2605, 648
  %vm2930 = vcmp.lt.s32.totalorder %v2606, 648
  %vm2931 = vcmp.lt.s32.totalorder %v2607, 648
  %vm2932 = vcmp.lt.s32.totalorder %v2608, 648
  %vm2933 = vcmp.lt.s32.totalorder %v2609, 648
  %vm2934 = vcmp.lt.s32.totalorder %v2610, 648
  %vm2935 = vcmp.lt.s32.totalorder %v2611, 648
  %vm2936 = vcmp.lt.s32.totalorder %v2612, 648
  %vm2937 = vcmp.lt.s32.totalorder %v2613, 648
  %vm2938 = vcmp.lt.s32.totalorder %v2614, 648
  %vm2939 = vcmp.lt.s32.totalorder %v2615, 648
  %vm2940 = vcmp.lt.s32.totalorder %v2616, 648
  %vm2941 = vcmp.lt.s32.totalorder %v2617, 648
  %vm2942 = vcmp.lt.s32.totalorder %v2618, 648
  %vm2943 = vcmp.lt.s32.totalorder %v2619, 648
  %vm2944 = vcmp.lt.s32.totalorder %v2620, 648
  %vm2945 = vcmp.lt.s32.totalorder %v2621, 648
  %vm2946 = vcmp.lt.s32.totalorder %v2622, 648
  %vm2947 = vcmp.lt.s32.totalorder %v2623, 648
  %vm2948 = vcmp.lt.s32.totalorder %v2624, 648
  %vm2949 = vcmp.lt.s32.totalorder %v2625, 648
  %vm2950 = vcmp.lt.s32.totalorder %v2626, 648
  %vm2951 = vcmp.lt.s32.totalorder %v2627, 648
  %vm2952 = vcmp.lt.s32.totalorder %v2628, 648
  %vm2953 = vcmp.lt.s32.totalorder %v2629, 648
  %vm2954 = vcmp.lt.s32.totalorder %v2630, 648
  %vm2955 = vcmp.lt.s32.totalorder %v2631, 648
  %vm2956 = vcmp.lt.s32.totalorder %v2632, 648
  %vm2957 = vcmp.lt.s32.totalorder %v2633, 648
  %vm2958 = vcmp.lt.s32.totalorder %v2634, 648
  %vm2959 = vcmp.lt.s32.totalorder %v2635, 648
  %vm2960 = vcmp.lt.s32.totalorder %v2636, 648
  %vm2961 = vcmp.lt.s32.totalorder %v2637, 648
  %vm2962 = vcmp.lt.s32.totalorder %v2638, 648
  %vm2963 = vcmp.ge.s32.totalorder %v2315, 648
  %vm2964 = vcmp.ge.s32.totalorder %v2316, 648
  %vm2965 = vcmp.ge.s32.totalorder %v2317, 648
  %vm2966 = vcmp.ge.s32.totalorder %v2318, 648
  %vm2967 = vcmp.ge.s32.totalorder %v2319, 648
  %vm2968 = vcmp.ge.s32.totalorder %v2320, 648
  %vm2969 = vcmp.ge.s32.totalorder %v2321, 648
  %vm2970 = vcmp.ge.s32.totalorder %v2322, 648
  %vm2971 = vcmp.ge.s32.totalorder %v2323, 648
  %vm2972 = vcmp.ge.s32.totalorder %v2324, 648
  %vm2973 = vcmp.ge.s32.totalorder %v2325, 648
  %vm2974 = vcmp.ge.s32.totalorder %v2326, 648
  %vm2975 = vcmp.ge.s32.totalorder %v2327, 648
  %vm2976 = vcmp.ge.s32.totalorder %v2328, 648
  %vm2977 = vcmp.ge.s32.totalorder %v2329, 648
  %vm2978 = vcmp.ge.s32.totalorder %v2330, 648
  %vm2979 = vcmp.ge.s32.totalorder %v2331, 648
  %vm2980 = vcmp.ge.s32.totalorder %v2332, 648
  %vm2981 = vcmp.ge.s32.totalorder %v2333, 648
  %vm2982 = vcmp.ge.s32.totalorder %v2334, 648
  %vm2983 = vcmp.ge.s32.totalorder %v2335, 648
  %vm2984 = vcmp.ge.s32.totalorder %v2336, 648
  %vm2985 = vcmp.ge.s32.totalorder %v2337, 648
  %vm2986 = vcmp.ge.s32.totalorder %v2338, 648
  %vm2987 = vcmp.ge.s32.totalorder %v2339, 648
  %vm2988 = vcmp.ge.s32.totalorder %v2340, 648
  %vm2989 = vcmp.ge.s32.totalorder %v2341, 648
  %vm2990 = vcmp.ge.s32.totalorder %v2342, 648
  %vm2991 = vcmp.ge.s32.totalorder %v2343, 648
  %vm2992 = vcmp.ge.s32.totalorder %v2344, 648
  %vm2993 = vcmp.ge.s32.totalorder %v2345, 648
  %vm2994 = vcmp.ge.s32.totalorder %v2346, 648
  %vm2995 = vcmp.ge.s32.totalorder %v2347, 648
  %vm2996 = vcmp.ge.s32.totalorder %v2348, 648
  %vm2997 = vcmp.ge.s32.totalorder %v2349, 648
  %vm2998 = vcmp.ge.s32.totalorder %v2350, 648
  %vm2999 = vcmp.ge.s32.totalorder %v2351, 648
  %vm3000 = vcmp.ge.s32.totalorder %v2352, 648
  %vm3001 = vcmp.ge.s32.totalorder %v2353, 648
  %vm3002 = vcmp.ge.s32.totalorder %v2354, 648
  %vm3003 = vcmp.ge.s32.totalorder %v2355, 648
  %vm3004 = vcmp.ge.s32.totalorder %v2356, 648
  %vm3005 = vcmp.ge.s32.totalorder %v2357, 648
  %vm3006 = vcmp.ge.s32.totalorder %v2358, 648
  %vm3007 = vcmp.ge.s32.totalorder %v2359, 648
  %vm3008 = vcmp.ge.s32.totalorder %v2360, 648
  %vm3009 = vcmp.ge.s32.totalorder %v2361, 648
  %vm3010 = vcmp.ge.s32.totalorder %v2362, 648
  %vm3011 = vcmp.ge.s32.totalorder %v2363, 648
  %vm3012 = vcmp.ge.s32.totalorder %v2364, 648
  %vm3013 = vcmp.ge.s32.totalorder %v2365, 648
  %vm3014 = vcmp.ge.s32.totalorder %v2366, 648
  %vm3015 = vcmp.ge.s32.totalorder %v2367, 648
  %vm3016 = vcmp.ge.s32.totalorder %v2368, 648
  %vm3017 = vcmp.ge.s32.totalorder %v2369, 648
  %vm3018 = vcmp.ge.s32.totalorder %v2370, 648
  %vm3019 = vcmp.ge.s32.totalorder %v2371, 648
  %vm3020 = vcmp.ge.s32.totalorder %v2372, 648
  %vm3021 = vcmp.ge.s32.totalorder %v2373, 648
  %vm3022 = vcmp.ge.s32.totalorder %v2374, 648
  %vm3023 = vcmp.ge.s32.totalorder %v2375, 648
  %vm3024 = vcmp.ge.s32.totalorder %v2376, 648
  %vm3025 = vcmp.ge.s32.totalorder %v2377, 648
  %vm3026 = vcmp.ge.s32.totalorder %v2378, 648
  %vm3027 = vcmp.ge.s32.totalorder %v2379, 648
  %vm3028 = vcmp.ge.s32.totalorder %v2380, 648
  %vm3029 = vcmp.ge.s32.totalorder %v2381, 648
  %vm3030 = vcmp.ge.s32.totalorder %v2382, 648
  %vm3031 = vcmp.ge.s32.totalorder %v2383, 648
  %vm3032 = vcmp.ge.s32.totalorder %v2384, 648
  %vm3033 = vcmp.ge.s32.totalorder %v2385, 648
  %vm3034 = vcmp.ge.s32.totalorder %v2386, 648
  %vm3035 = vcmp.ge.s32.totalorder %v2387, 648
  %vm3036 = vcmp.ge.s32.totalorder %v2388, 648
  %vm3037 = vcmp.ge.s32.totalorder %v2389, 648
  %vm3038 = vcmp.ge.s32.totalorder %v2390, 648
  %vm3039 = vcmp.ge.s32.totalorder %v2391, 648
  %vm3040 = vcmp.ge.s32.totalorder %v2392, 648
  %vm3041 = vcmp.ge.s32.totalorder %v2393, 648
  %vm3042 = vcmp.ge.s32.totalorder %v2394, 648
  %vm3043 = vcmp.ge.s32.totalorder %v2395, 648
  %vm3044 = vcmp.ge.s32.totalorder %v2396, 648
  %vm3045 = vcmp.ge.s32.totalorder %v2397, 648
  %vm3046 = vcmp.ge.s32.totalorder %v2398, 648
  %vm3047 = vcmp.ge.s32.totalorder %v2399, 648
  %vm3048 = vcmp.ge.s32.totalorder %v2400, 648
  %vm3049 = vcmp.ge.s32.totalorder %v2401, 648
  %vm3050 = vcmp.ge.s32.totalorder %v2402, 648
  %vm3051 = vcmp.ge.s32.totalorder %v2403, 648
  %vm3052 = vcmp.ge.s32.totalorder %v2404, 648
  %vm3053 = vcmp.ge.s32.totalorder %v2405, 648
  %vm3054 = vcmp.ge.s32.totalorder %v2406, 648
  %vm3055 = vcmp.ge.s32.totalorder %v2407, 648
  %vm3056 = vcmp.ge.s32.totalorder %v2408, 648
  %vm3057 = vcmp.ge.s32.totalorder %v2409, 648
  %vm3058 = vcmp.ge.s32.totalorder %v2410, 648
  %vm3059 = vcmp.ge.s32.totalorder %v2411, 648
  %vm3060 = vcmp.ge.s32.totalorder %v2412, 648
  %vm3061 = vcmp.ge.s32.totalorder %v2413, 648
  %vm3062 = vcmp.ge.s32.totalorder %v2414, 648
  %vm3063 = vcmp.ge.s32.totalorder %v2415, 648
  %vm3064 = vcmp.ge.s32.totalorder %v2416, 648
  %vm3065 = vcmp.ge.s32.totalorder %v2417, 648
  %vm3066 = vcmp.ge.s32.totalorder %v2418, 648
  %vm3067 = vcmp.ge.s32.totalorder %v2419, 648
  %vm3068 = vcmp.ge.s32.totalorder %v2420, 648
  %vm3069 = vcmp.ge.s32.totalorder %v2421, 648
  %vm3070 = vcmp.ge.s32.totalorder %v2422, 648
  %vm3071 = vcmp.ge.s32.totalorder %v2423, 648
  %vm3072 = vcmp.ge.s32.totalorder %v2424, 648
  %vm3073 = vcmp.ge.s32.totalorder %v2425, 648
  %vm3074 = vcmp.ge.s32.totalorder %v2426, 648
  %vm3075 = vcmp.ge.s32.totalorder %v2427, 648
  %vm3076 = vcmp.ge.s32.totalorder %v2428, 648
  %vm3077 = vcmp.ge.s32.totalorder %v2429, 648
  %vm3078 = vcmp.ge.s32.totalorder %v2430, 648
  %vm3079 = vcmp.ge.s32.totalorder %v2431, 648
  %vm3080 = vcmp.ge.s32.totalorder %v2432, 648
  %vm3081 = vcmp.ge.s32.totalorder %v2433, 648
  %vm3082 = vcmp.ge.s32.totalorder %v2434, 648
  %vm3083 = vcmp.ge.s32.totalorder %v2435, 648
  %vm3084 = vcmp.ge.s32.totalorder %v2436, 648
  %vm3085 = vcmp.ge.s32.totalorder %v2437, 648
  %vm3086 = vcmp.ge.s32.totalorder %v2438, 648
  %vm3087 = vcmp.ge.s32.totalorder %v2439, 648
  %vm3088 = vcmp.ge.s32.totalorder %v2440, 648
  %vm3089 = vcmp.ge.s32.totalorder %v2441, 648
  %vm3090 = vcmp.ge.s32.totalorder %v2442, 648
  %vm3091 = vcmp.ge.s32.totalorder %v2443, 648
  %vm3092 = vcmp.ge.s32.totalorder %v2444, 648
  %vm3093 = vcmp.ge.s32.totalorder %v2445, 648
  %vm3094 = vcmp.ge.s32.totalorder %v2446, 648
  %vm3095 = vcmp.ge.s32.totalorder %v2447, 648
  %vm3096 = vcmp.ge.s32.totalorder %v2448, 648
  %vm3097 = vcmp.ge.s32.totalorder %v2449, 648
  %vm3098 = vcmp.ge.s32.totalorder %v2450, 648
  %vm3099 = vcmp.ge.s32.totalorder %v2451, 648
  %vm3100 = vcmp.ge.s32.totalorder %v2452, 648
  %vm3101 = vcmp.ge.s32.totalorder %v2453, 648
  %vm3102 = vcmp.ge.s32.totalorder %v2454, 648
  %vm3103 = vcmp.ge.s32.totalorder %v2455, 648
  %vm3104 = vcmp.ge.s32.totalorder %v2456, 648
  %vm3105 = vcmp.ge.s32.totalorder %v2457, 648
  %vm3106 = vcmp.ge.s32.totalorder %v2458, 648
  %vm3107 = vcmp.ge.s32.totalorder %v2459, 648
  %vm3108 = vcmp.ge.s32.totalorder %v2460, 648
  %vm3109 = vcmp.ge.s32.totalorder %v2461, 648
  %vm3110 = vcmp.ge.s32.totalorder %v2462, 648
  %vm3111 = vcmp.ge.s32.totalorder %v2463, 648
  %vm3112 = vcmp.ge.s32.totalorder %v2464, 648
  %vm3113 = vcmp.ge.s32.totalorder %v2465, 648
  %vm3114 = vcmp.ge.s32.totalorder %v2466, 648
  %vm3115 = vcmp.ge.s32.totalorder %v2467, 648
  %vm3116 = vcmp.ge.s32.totalorder %v2468, 648
  %vm3117 = vcmp.ge.s32.totalorder %v2469, 648
  %vm3118 = vcmp.ge.s32.totalorder %v2470, 648
  %vm3119 = vcmp.ge.s32.totalorder %v2471, 648
  %vm3120 = vcmp.ge.s32.totalorder %v2472, 648
  %vm3121 = vcmp.ge.s32.totalorder %v2473, 648
  %vm3122 = vcmp.ge.s32.totalorder %v2474, 648
  %vm3123 = vcmp.ge.s32.totalorder %v2475, 648
  %vm3124 = vcmp.ge.s32.totalorder %v2476, 648
  %vm3125 = vcmp.ge.s32.totalorder %v2477, 648
  %vm3126 = vcmp.ge.s32.totalorder %v2478, 648
  %vm3127 = vcmp.ge.s32.totalorder %v2479, 648
  %vm3128 = vcmp.ge.s32.totalorder %v2480, 648
  %vm3129 = vcmp.ge.s32.totalorder %v2481, 648
  %vm3130 = vcmp.ge.s32.totalorder %v2482, 648
  %vm3131 = vcmp.ge.s32.totalorder %v2483, 648
  %vm3132 = vcmp.ge.s32.totalorder %v2484, 648
  %vm3133 = vcmp.ge.s32.totalorder %v2485, 648
  %vm3134 = vcmp.ge.s32.totalorder %v2486, 648
  %vm3135 = vcmp.ge.s32.totalorder %v2487, 648
  %vm3136 = vcmp.ge.s32.totalorder %v2488, 648
  %vm3137 = vcmp.ge.s32.totalorder %v2489, 648
  %vm3138 = vcmp.ge.s32.totalorder %v2490, 648
  %vm3139 = vcmp.ge.s32.totalorder %v2491, 648
  %vm3140 = vcmp.ge.s32.totalorder %v2492, 648
  %vm3141 = vcmp.ge.s32.totalorder %v2493, 648
  %vm3142 = vcmp.ge.s32.totalorder %v2494, 648
  %vm3143 = vcmp.ge.s32.totalorder %v2495, 648
  %vm3144 = vcmp.ge.s32.totalorder %v2496, 648
  %vm3145 = vcmp.ge.s32.totalorder %v2497, 648
  %vm3146 = vcmp.ge.s32.totalorder %v2498, 648
  %vm3147 = vcmp.ge.s32.totalorder %v2499, 648
  %vm3148 = vcmp.ge.s32.totalorder %v2500, 648
  %vm3149 = vcmp.ge.s32.totalorder %v2501, 648
  %vm3150 = vcmp.ge.s32.totalorder %v2502, 648
  %vm3151 = vcmp.ge.s32.totalorder %v2503, 648
  %vm3152 = vcmp.ge.s32.totalorder %v2504, 648
  %vm3153 = vcmp.ge.s32.totalorder %v2505, 648
  %vm3154 = vcmp.ge.s32.totalorder %v2506, 648
  %vm3155 = vcmp.ge.s32.totalorder %v2507, 648
  %vm3156 = vcmp.ge.s32.totalorder %v2508, 648
  %vm3157 = vcmp.ge.s32.totalorder %v2509, 648
  %vm3158 = vcmp.ge.s32.totalorder %v2510, 648
  %vm3159 = vcmp.ge.s32.totalorder %v2511, 648
  %vm3160 = vcmp.ge.s32.totalorder %v2512, 648
  %vm3161 = vcmp.ge.s32.totalorder %v2513, 648
  %vm3162 = vcmp.ge.s32.totalorder %v2514, 648
  %vm3163 = vcmp.ge.s32.totalorder %v2515, 648
  %vm3164 = vcmp.ge.s32.totalorder %v2516, 648
  %vm3165 = vcmp.ge.s32.totalorder %v2517, 648
  %vm3166 = vcmp.ge.s32.totalorder %v2518, 648
  %vm3167 = vcmp.ge.s32.totalorder %v2519, 648
  %vm3168 = vcmp.ge.s32.totalorder %v2520, 648
  %vm3169 = vcmp.ge.s32.totalorder %v2521, 648
  %vm3170 = vcmp.ge.s32.totalorder %v2522, 648
  %vm3171 = vcmp.ge.s32.totalorder %v2523, 648
  %vm3172 = vcmp.ge.s32.totalorder %v2524, 648
  %vm3173 = vcmp.ge.s32.totalorder %v2525, 648
  %vm3174 = vcmp.ge.s32.totalorder %v2526, 648
  %vm3175 = vcmp.ge.s32.totalorder %v2527, 648
  %vm3176 = vcmp.ge.s32.totalorder %v2528, 648
  %vm3177 = vcmp.ge.s32.totalorder %v2529, 648
  %vm3178 = vcmp.ge.s32.totalorder %v2530, 648
  %vm3179 = vcmp.ge.s32.totalorder %v2531, 648
  %vm3180 = vcmp.ge.s32.totalorder %v2532, 648
  %vm3181 = vcmp.ge.s32.totalorder %v2533, 648
  %vm3182 = vcmp.ge.s32.totalorder %v2534, 648
  %vm3183 = vcmp.ge.s32.totalorder %v2535, 648
  %vm3184 = vcmp.ge.s32.totalorder %v2536, 648
  %vm3185 = vcmp.ge.s32.totalorder %v2537, 648
  %vm3186 = vcmp.ge.s32.totalorder %v2538, 648
  %vm3187 = vcmp.ge.s32.totalorder %v2539, 648
  %vm3188 = vcmp.ge.s32.totalorder %v2540, 648
  %vm3189 = vcmp.ge.s32.totalorder %v2541, 648
  %vm3190 = vcmp.ge.s32.totalorder %v2542, 648
  %vm3191 = vcmp.ge.s32.totalorder %v2543, 648
  %vm3192 = vcmp.ge.s32.totalorder %v2544, 648
  %vm3193 = vcmp.ge.s32.totalorder %v2545, 648
  %vm3194 = vcmp.ge.s32.totalorder %v2546, 648
  %vm3195 = vcmp.ge.s32.totalorder %v2547, 648
  %vm3196 = vcmp.ge.s32.totalorder %v2548, 648
  %vm3197 = vcmp.ge.s32.totalorder %v2549, 648
  %vm3198 = vcmp.ge.s32.totalorder %v2550, 648
  %vm3199 = vcmp.ge.s32.totalorder %v2551, 648
  %vm3200 = vcmp.ge.s32.totalorder %v2552, 648
  %vm3201 = vcmp.ge.s32.totalorder %v2553, 648
  %vm3202 = vcmp.ge.s32.totalorder %v2554, 648
  %vm3203 = vcmp.ge.s32.totalorder %v2555, 648
  %vm3204 = vcmp.ge.s32.totalorder %v2556, 648
  %vm3205 = vcmp.ge.s32.totalorder %v2557, 648
  %vm3206 = vcmp.ge.s32.totalorder %v2558, 648
  %vm3207 = vcmp.ge.s32.totalorder %v2559, 648
  %vm3208 = vcmp.ge.s32.totalorder %v2560, 648
  %vm3209 = vcmp.ge.s32.totalorder %v2561, 648
  %vm3210 = vcmp.ge.s32.totalorder %v2562, 648
  %vm3211 = vcmp.ge.s32.totalorder %v2563, 648
  %vm3212 = vcmp.ge.s32.totalorder %v2564, 648
  %vm3213 = vcmp.ge.s32.totalorder %v2565, 648
  %vm3214 = vcmp.ge.s32.totalorder %v2566, 648
  %vm3215 = vcmp.ge.s32.totalorder %v2567, 648
  %vm3216 = vcmp.ge.s32.totalorder %v2568, 648
  %vm3217 = vcmp.ge.s32.totalorder %v2569, 648
  %vm3218 = vcmp.ge.s32.totalorder %v2570, 648
  %vm3219 = vcmp.ge.s32.totalorder %v2571, 648
  %vm3220 = vcmp.ge.s32.totalorder %v2572, 648
  %vm3221 = vcmp.ge.s32.totalorder %v2573, 648
  %vm3222 = vcmp.ge.s32.totalorder %v2574, 648
  %vm3223 = vcmp.ge.s32.totalorder %v2575, 648
  %vm3224 = vcmp.ge.s32.totalorder %v2576, 648
  %vm3225 = vcmp.ge.s32.totalorder %v2577, 648
  %vm3226 = vcmp.ge.s32.totalorder %v2578, 648
  %vm3227 = vcmp.ge.s32.totalorder %v2579, 648
  %vm3228 = vcmp.ge.s32.totalorder %v2580, 648
  %vm3229 = vcmp.ge.s32.totalorder %v2581, 648
  %vm3230 = vcmp.ge.s32.totalorder %v2582, 648
  %vm3231 = vcmp.ge.s32.totalorder %v2583, 648
  %vm3232 = vcmp.ge.s32.totalorder %v2584, 648
  %vm3233 = vcmp.ge.s32.totalorder %v2585, 648
  %vm3234 = vcmp.ge.s32.totalorder %v2586, 648
  %vm3235 = vcmp.ge.s32.totalorder %v2587, 648
  %vm3236 = vcmp.ge.s32.totalorder %v2588, 648
  %vm3237 = vcmp.ge.s32.totalorder %v2589, 648
  %vm3238 = vcmp.ge.s32.totalorder %v2590, 648
  %vm3239 = vcmp.ge.s32.totalorder %v2591, 648
  %vm3240 = vcmp.ge.s32.totalorder %v2592, 648
  %vm3241 = vcmp.ge.s32.totalorder %v2593, 648
  %vm3242 = vcmp.ge.s32.totalorder %v2594, 648
  %vm3243 = vcmp.ge.s32.totalorder %v2595, 648
  %vm3244 = vcmp.ge.s32.totalorder %v2596, 648
  %vm3245 = vcmp.ge.s32.totalorder %v2597, 648
  %vm3246 = vcmp.ge.s32.totalorder %v2598, 648
  %vm3247 = vcmp.ge.s32.totalorder %v2599, 648
  %vm3248 = vcmp.ge.s32.totalorder %v2600, 648
  %vm3249 = vcmp.ge.s32.totalorder %v2601, 648
  %vm3250 = vcmp.ge.s32.totalorder %v2602, 648
  %vm3251 = vcmp.ge.s32.totalorder %v2603, 648
  %vm3252 = vcmp.ge.s32.totalorder %v2604, 648
  %vm3253 = vcmp.ge.s32.totalorder %v2605, 648
  %vm3254 = vcmp.ge.s32.totalorder %v2606, 648
  %vm3255 = vcmp.ge.s32.totalorder %v2607, 648
  %vm3256 = vcmp.ge.s32.totalorder %v2608, 648
  %vm3257 = vcmp.ge.s32.totalorder %v2609, 648
  %vm3258 = vcmp.ge.s32.totalorder %v2610, 648
  %vm3259 = vcmp.ge.s32.totalorder %v2611, 648
  %vm3260 = vcmp.ge.s32.totalorder %v2612, 648
  %vm3261 = vcmp.ge.s32.totalorder %v2613, 648
  %vm3262 = vcmp.ge.s32.totalorder %v2614, 648
  %vm3263 = vcmp.ge.s32.totalorder %v2615, 648
  %vm3264 = vcmp.ge.s32.totalorder %v2616, 648
  %vm3265 = vcmp.ge.s32.totalorder %v2617, 648
  %vm3266 = vcmp.ge.s32.totalorder %v2618, 648
  %vm3267 = vcmp.ge.s32.totalorder %v2619, 648
  %vm3268 = vcmp.ge.s32.totalorder %v2620, 648
  %vm3269 = vcmp.ge.s32.totalorder %v2621, 648
  %vm3270 = vcmp.ge.s32.totalorder %v2622, 648
  %vm3271 = vcmp.ge.s32.totalorder %v2623, 648
  %vm3272 = vcmp.ge.s32.totalorder %v2624, 648
  %vm3273 = vcmp.ge.s32.totalorder %v2625, 648
  %vm3274 = vcmp.ge.s32.totalorder %v2626, 648
  %vm3275 = vcmp.ge.s32.totalorder %v2627, 648
  %vm3276 = vcmp.ge.s32.totalorder %v2628, 648
  %vm3277 = vcmp.ge.s32.totalorder %v2629, 648
  %vm3278 = vcmp.ge.s32.totalorder %v2630, 648
  %vm3279 = vcmp.ge.s32.totalorder %v2631, 648
  %vm3280 = vcmp.ge.s32.totalorder %v2632, 648
  %vm3281 = vcmp.ge.s32.totalorder %v2633, 648
  %vm3282 = vcmp.ge.s32.totalorder %v2634, 648
  %vm3283 = vcmp.ge.s32.totalorder %v2635, 648
  %vm3284 = vcmp.ge.s32.totalorder %v2636, 648
  %vm3285 = vcmp.ge.s32.totalorder %v2637, 648
  %vm3286 = vcmp.ge.s32.totalorder %v2638, 648
  %vm3287 = vcmp.lt.s32.totalorder %v2315, 1296
  %vm3288 = vcmp.lt.s32.totalorder %v2316, 1296
  %vm3289 = vcmp.lt.s32.totalorder %v2317, 1296
  %vm3290 = vcmp.lt.s32.totalorder %v2318, 1296
  %vm3291 = vcmp.lt.s32.totalorder %v2319, 1296
  %vm3292 = vcmp.lt.s32.totalorder %v2320, 1296
  %vm3293 = vcmp.lt.s32.totalorder %v2321, 1296
  %vm3294 = vcmp.lt.s32.totalorder %v2322, 1296
  %vm3295 = vcmp.lt.s32.totalorder %v2323, 1296
  %vm3296 = vcmp.lt.s32.totalorder %v2324, 1296
  %vm3297 = vcmp.lt.s32.totalorder %v2325, 1296
  %vm3298 = vcmp.lt.s32.totalorder %v2326, 1296
  %vm3299 = vcmp.lt.s32.totalorder %v2327, 1296
  %vm3300 = vcmp.lt.s32.totalorder %v2328, 1296
  %vm3301 = vcmp.lt.s32.totalorder %v2329, 1296
  %vm3302 = vcmp.lt.s32.totalorder %v2330, 1296
  %vm3303 = vcmp.lt.s32.totalorder %v2331, 1296
  %vm3304 = vcmp.lt.s32.totalorder %v2332, 1296
  %vm3305 = vcmp.lt.s32.totalorder %v2333, 1296
  %vm3306 = vcmp.lt.s32.totalorder %v2334, 1296
  %vm3307 = vcmp.lt.s32.totalorder %v2335, 1296
  %vm3308 = vcmp.lt.s32.totalorder %v2336, 1296
  %vm3309 = vcmp.lt.s32.totalorder %v2337, 1296
  %vm3310 = vcmp.lt.s32.totalorder %v2338, 1296
  %vm3311 = vcmp.lt.s32.totalorder %v2339, 1296
  %vm3312 = vcmp.lt.s32.totalorder %v2340, 1296
  %vm3313 = vcmp.lt.s32.totalorder %v2341, 1296
  %vm3314 = vcmp.lt.s32.totalorder %v2342, 1296
  %vm3315 = vcmp.lt.s32.totalorder %v2343, 1296
  %vm3316 = vcmp.lt.s32.totalorder %v2344, 1296
  %vm3317 = vcmp.lt.s32.totalorder %v2345, 1296
  %vm3318 = vcmp.lt.s32.totalorder %v2346, 1296
  %vm3319 = vcmp.lt.s32.totalorder %v2347, 1296
  %vm3320 = vcmp.lt.s32.totalorder %v2348, 1296
  %vm3321 = vcmp.lt.s32.totalorder %v2349, 1296
  %vm3322 = vcmp.lt.s32.totalorder %v2350, 1296
  %vm3323 = vcmp.lt.s32.totalorder %v2351, 1296
  %vm3324 = vcmp.lt.s32.totalorder %v2352, 1296
  %vm3325 = vcmp.lt.s32.totalorder %v2353, 1296
  %vm3326 = vcmp.lt.s32.totalorder %v2354, 1296
  %vm3327 = vcmp.lt.s32.totalorder %v2355, 1296
  %vm3328 = vcmp.lt.s32.totalorder %v2356, 1296
  %vm3329 = vcmp.lt.s32.totalorder %v2357, 1296
  %vm3330 = vcmp.lt.s32.totalorder %v2358, 1296
  %vm3331 = vcmp.lt.s32.totalorder %v2359, 1296
  %vm3332 = vcmp.lt.s32.totalorder %v2360, 1296
  %vm3333 = vcmp.lt.s32.totalorder %v2361, 1296
  %vm3334 = vcmp.lt.s32.totalorder %v2362, 1296
  %vm3335 = vcmp.lt.s32.totalorder %v2363, 1296
  %vm3336 = vcmp.lt.s32.totalorder %v2364, 1296
  %vm3337 = vcmp.lt.s32.totalorder %v2365, 1296
  %vm3338 = vcmp.lt.s32.totalorder %v2366, 1296
  %vm3339 = vcmp.lt.s32.totalorder %v2367, 1296
  %vm3340 = vcmp.lt.s32.totalorder %v2368, 1296
  %vm3341 = vcmp.lt.s32.totalorder %v2369, 1296
  %vm3342 = vcmp.lt.s32.totalorder %v2370, 1296
  %vm3343 = vcmp.lt.s32.totalorder %v2371, 1296
  %vm3344 = vcmp.lt.s32.totalorder %v2372, 1296
  %vm3345 = vcmp.lt.s32.totalorder %v2373, 1296
  %vm3346 = vcmp.lt.s32.totalorder %v2374, 1296
  %vm3347 = vcmp.lt.s32.totalorder %v2375, 1296
  %vm3348 = vcmp.lt.s32.totalorder %v2376, 1296
  %vm3349 = vcmp.lt.s32.totalorder %v2377, 1296
  %vm3350 = vcmp.lt.s32.totalorder %v2378, 1296
  %vm3351 = vcmp.lt.s32.totalorder %v2379, 1296
  %vm3352 = vcmp.lt.s32.totalorder %v2380, 1296
  %vm3353 = vcmp.lt.s32.totalorder %v2381, 1296
  %vm3354 = vcmp.lt.s32.totalorder %v2382, 1296
  %vm3355 = vcmp.lt.s32.totalorder %v2383, 1296
  %vm3356 = vcmp.lt.s32.totalorder %v2384, 1296
  %vm3357 = vcmp.lt.s32.totalorder %v2385, 1296
  %vm3358 = vcmp.lt.s32.totalorder %v2386, 1296
  %vm3359 = vcmp.lt.s32.totalorder %v2387, 1296
  %vm3360 = vcmp.lt.s32.totalorder %v2388, 1296
  %vm3361 = vcmp.lt.s32.totalorder %v2389, 1296
  %vm3362 = vcmp.lt.s32.totalorder %v2390, 1296
  %vm3363 = vcmp.lt.s32.totalorder %v2391, 1296
  %vm3364 = vcmp.lt.s32.totalorder %v2392, 1296
  %vm3365 = vcmp.lt.s32.totalorder %v2393, 1296
  %vm3366 = vcmp.lt.s32.totalorder %v2394, 1296
  %vm3367 = vcmp.lt.s32.totalorder %v2395, 1296
  %vm3368 = vcmp.lt.s32.totalorder %v2396, 1296
  %vm3369 = vcmp.lt.s32.totalorder %v2397, 1296
  %vm3370 = vcmp.lt.s32.totalorder %v2398, 1296
  %vm3371 = vcmp.lt.s32.totalorder %v2399, 1296
  %vm3372 = vcmp.lt.s32.totalorder %v2400, 1296
  %vm3373 = vcmp.lt.s32.totalorder %v2401, 1296
  %vm3374 = vcmp.lt.s32.totalorder %v2402, 1296
  %vm3375 = vcmp.lt.s32.totalorder %v2403, 1296
  %vm3376 = vcmp.lt.s32.totalorder %v2404, 1296
  %vm3377 = vcmp.lt.s32.totalorder %v2405, 1296
  %vm3378 = vcmp.lt.s32.totalorder %v2406, 1296
  %vm3379 = vcmp.lt.s32.totalorder %v2407, 1296
  %vm3380 = vcmp.lt.s32.totalorder %v2408, 1296
  %vm3381 = vcmp.lt.s32.totalorder %v2409, 1296
  %vm3382 = vcmp.lt.s32.totalorder %v2410, 1296
  %vm3383 = vcmp.lt.s32.totalorder %v2411, 1296
  %vm3384 = vcmp.lt.s32.totalorder %v2412, 1296
  %vm3385 = vcmp.lt.s32.totalorder %v2413, 1296
  %vm3386 = vcmp.lt.s32.totalorder %v2414, 1296
  %vm3387 = vcmp.lt.s32.totalorder %v2415, 1296
  %vm3388 = vcmp.lt.s32.totalorder %v2416, 1296
  %vm3389 = vcmp.lt.s32.totalorder %v2417, 1296
  %vm3390 = vcmp.lt.s32.totalorder %v2418, 1296
  %vm3391 = vcmp.lt.s32.totalorder %v2419, 1296
  %vm3392 = vcmp.lt.s32.totalorder %v2420, 1296
  %vm3393 = vcmp.lt.s32.totalorder %v2421, 1296
  %vm3394 = vcmp.lt.s32.totalorder %v2422, 1296
  %vm3395 = vcmp.lt.s32.totalorder %v2423, 1296
  %vm3396 = vcmp.lt.s32.totalorder %v2424, 1296
  %vm3397 = vcmp.lt.s32.totalorder %v2425, 1296
  %vm3398 = vcmp.lt.s32.totalorder %v2426, 1296
  %vm3399 = vcmp.lt.s32.totalorder %v2427, 1296
  %vm3400 = vcmp.lt.s32.totalorder %v2428, 1296
  %vm3401 = vcmp.lt.s32.totalorder %v2429, 1296
  %vm3402 = vcmp.lt.s32.totalorder %v2430, 1296
  %vm3403 = vcmp.lt.s32.totalorder %v2431, 1296
  %vm3404 = vcmp.lt.s32.totalorder %v2432, 1296
  %vm3405 = vcmp.lt.s32.totalorder %v2433, 1296
  %vm3406 = vcmp.lt.s32.totalorder %v2434, 1296
  %vm3407 = vcmp.lt.s32.totalorder %v2435, 1296
  %vm3408 = vcmp.lt.s32.totalorder %v2436, 1296
  %vm3409 = vcmp.lt.s32.totalorder %v2437, 1296
  %vm3410 = vcmp.lt.s32.totalorder %v2438, 1296
  %vm3411 = vcmp.lt.s32.totalorder %v2439, 1296
  %vm3412 = vcmp.lt.s32.totalorder %v2440, 1296
  %vm3413 = vcmp.lt.s32.totalorder %v2441, 1296
  %vm3414 = vcmp.lt.s32.totalorder %v2442, 1296
  %vm3415 = vcmp.lt.s32.totalorder %v2443, 1296
  %vm3416 = vcmp.lt.s32.totalorder %v2444, 1296
  %vm3417 = vcmp.lt.s32.totalorder %v2445, 1296
  %vm3418 = vcmp.lt.s32.totalorder %v2446, 1296
  %vm3419 = vcmp.lt.s32.totalorder %v2447, 1296
  %vm3420 = vcmp.lt.s32.totalorder %v2448, 1296
  %vm3421 = vcmp.lt.s32.totalorder %v2449, 1296
  %vm3422 = vcmp.lt.s32.totalorder %v2450, 1296
  %vm3423 = vcmp.lt.s32.totalorder %v2451, 1296
  %vm3424 = vcmp.lt.s32.totalorder %v2452, 1296
  %vm3425 = vcmp.lt.s32.totalorder %v2453, 1296
  %vm3426 = vcmp.lt.s32.totalorder %v2454, 1296
  %vm3427 = vcmp.lt.s32.totalorder %v2455, 1296
  %vm3428 = vcmp.lt.s32.totalorder %v2456, 1296
  %vm3429 = vcmp.lt.s32.totalorder %v2457, 1296
  %vm3430 = vcmp.lt.s32.totalorder %v2458, 1296
  %vm3431 = vcmp.lt.s32.totalorder %v2459, 1296
  %vm3432 = vcmp.lt.s32.totalorder %v2460, 1296
  %vm3433 = vcmp.lt.s32.totalorder %v2461, 1296
  %vm3434 = vcmp.lt.s32.totalorder %v2462, 1296
  %vm3435 = vcmp.lt.s32.totalorder %v2463, 1296
  %vm3436 = vcmp.lt.s32.totalorder %v2464, 1296
  %vm3437 = vcmp.lt.s32.totalorder %v2465, 1296
  %vm3438 = vcmp.lt.s32.totalorder %v2466, 1296
  %vm3439 = vcmp.lt.s32.totalorder %v2467, 1296
  %vm3440 = vcmp.lt.s32.totalorder %v2468, 1296
  %vm3441 = vcmp.lt.s32.totalorder %v2469, 1296
  %vm3442 = vcmp.lt.s32.totalorder %v2470, 1296
  %vm3443 = vcmp.lt.s32.totalorder %v2471, 1296
  %vm3444 = vcmp.lt.s32.totalorder %v2472, 1296
  %vm3445 = vcmp.lt.s32.totalorder %v2473, 1296
  %vm3446 = vcmp.lt.s32.totalorder %v2474, 1296
  %vm3447 = vcmp.lt.s32.totalorder %v2475, 1296
  %vm3448 = vcmp.lt.s32.totalorder %v2476, 1296
  %vm3449 = vcmp.lt.s32.totalorder %v2477, 1296
  %vm3450 = vcmp.lt.s32.totalorder %v2478, 1296
  %vm3451 = vcmp.lt.s32.totalorder %v2479, 1296
  %vm3452 = vcmp.lt.s32.totalorder %v2480, 1296
  %vm3453 = vcmp.lt.s32.totalorder %v2481, 1296
  %vm3454 = vcmp.lt.s32.totalorder %v2482, 1296
  %vm3455 = vcmp.lt.s32.totalorder %v2483, 1296
  %vm3456 = vcmp.lt.s32.totalorder %v2484, 1296
  %vm3457 = vcmp.lt.s32.totalorder %v2485, 1296
  %vm3458 = vcmp.lt.s32.totalorder %v2486, 1296
  %vm3459 = vcmp.lt.s32.totalorder %v2487, 1296
  %vm3460 = vcmp.lt.s32.totalorder %v2488, 1296
  %vm3461 = vcmp.lt.s32.totalorder %v2489, 1296
  %vm3462 = vcmp.lt.s32.totalorder %v2490, 1296
  %vm3463 = vcmp.lt.s32.totalorder %v2491, 1296
  %vm3464 = vcmp.lt.s32.totalorder %v2492, 1296
  %vm3465 = vcmp.lt.s32.totalorder %v2493, 1296
  %vm3466 = vcmp.lt.s32.totalorder %v2494, 1296
  %vm3467 = vcmp.lt.s32.totalorder %v2495, 1296
  %vm3468 = vcmp.lt.s32.totalorder %v2496, 1296
  %vm3469 = vcmp.lt.s32.totalorder %v2497, 1296
  %vm3470 = vcmp.lt.s32.totalorder %v2498, 1296
  %vm3471 = vcmp.lt.s32.totalorder %v2499, 1296
  %vm3472 = vcmp.lt.s32.totalorder %v2500, 1296
  %vm3473 = vcmp.lt.s32.totalorder %v2501, 1296
  %vm3474 = vcmp.lt.s32.totalorder %v2502, 1296
  %vm3475 = vcmp.lt.s32.totalorder %v2503, 1296
  %vm3476 = vcmp.lt.s32.totalorder %v2504, 1296
  %vm3477 = vcmp.lt.s32.totalorder %v2505, 1296
  %vm3478 = vcmp.lt.s32.totalorder %v2506, 1296
  %vm3479 = vcmp.lt.s32.totalorder %v2507, 1296
  %vm3480 = vcmp.lt.s32.totalorder %v2508, 1296
  %vm3481 = vcmp.lt.s32.totalorder %v2509, 1296
  %vm3482 = vcmp.lt.s32.totalorder %v2510, 1296
  %vm3483 = vcmp.lt.s32.totalorder %v2511, 1296
  %vm3484 = vcmp.lt.s32.totalorder %v2512, 1296
  %vm3485 = vcmp.lt.s32.totalorder %v2513, 1296
  %vm3486 = vcmp.lt.s32.totalorder %v2514, 1296
  %vm3487 = vcmp.lt.s32.totalorder %v2515, 1296
  %vm3488 = vcmp.lt.s32.totalorder %v2516, 1296
  %vm3489 = vcmp.lt.s32.totalorder %v2517, 1296
  %vm3490 = vcmp.lt.s32.totalorder %v2518, 1296
  %vm3491 = vcmp.lt.s32.totalorder %v2519, 1296
  %vm3492 = vcmp.lt.s32.totalorder %v2520, 1296
  %vm3493 = vcmp.lt.s32.totalorder %v2521, 1296
  %vm3494 = vcmp.lt.s32.totalorder %v2522, 1296
  %vm3495 = vcmp.lt.s32.totalorder %v2523, 1296
  %vm3496 = vcmp.lt.s32.totalorder %v2524, 1296
  %vm3497 = vcmp.lt.s32.totalorder %v2525, 1296
  %vm3498 = vcmp.lt.s32.totalorder %v2526, 1296
  %vm3499 = vcmp.lt.s32.totalorder %v2527, 1296
  %vm3500 = vcmp.lt.s32.totalorder %v2528, 1296
  %vm3501 = vcmp.lt.s32.totalorder %v2529, 1296
  %vm3502 = vcmp.lt.s32.totalorder %v2530, 1296
  %vm3503 = vcmp.lt.s32.totalorder %v2531, 1296
  %vm3504 = vcmp.lt.s32.totalorder %v2532, 1296
  %vm3505 = vcmp.lt.s32.totalorder %v2533, 1296
  %vm3506 = vcmp.lt.s32.totalorder %v2534, 1296
  %vm3507 = vcmp.lt.s32.totalorder %v2535, 1296
  %vm3508 = vcmp.lt.s32.totalorder %v2536, 1296
  %vm3509 = vcmp.lt.s32.totalorder %v2537, 1296
  %vm3510 = vcmp.lt.s32.totalorder %v2538, 1296
  %vm3511 = vcmp.lt.s32.totalorder %v2539, 1296
  %vm3512 = vcmp.lt.s32.totalorder %v2540, 1296
  %vm3513 = vcmp.lt.s32.totalorder %v2541, 1296
  %vm3514 = vcmp.lt.s32.totalorder %v2542, 1296
  %vm3515 = vcmp.lt.s32.totalorder %v2543, 1296
  %vm3516 = vcmp.lt.s32.totalorder %v2544, 1296
  %vm3517 = vcmp.lt.s32.totalorder %v2545, 1296
  %vm3518 = vcmp.lt.s32.totalorder %v2546, 1296
  %vm3519 = vcmp.lt.s32.totalorder %v2547, 1296
  %vm3520 = vcmp.lt.s32.totalorder %v2548, 1296
  %vm3521 = vcmp.lt.s32.totalorder %v2549, 1296
  %vm3522 = vcmp.lt.s32.totalorder %v2550, 1296
  %vm3523 = vcmp.lt.s32.totalorder %v2551, 1296
  %vm3524 = vcmp.lt.s32.totalorder %v2552, 1296
  %vm3525 = vcmp.lt.s32.totalorder %v2553, 1296
  %vm3526 = vcmp.lt.s32.totalorder %v2554, 1296
  %vm3527 = vcmp.lt.s32.totalorder %v2555, 1296
  %vm3528 = vcmp.lt.s32.totalorder %v2556, 1296
  %vm3529 = vcmp.lt.s32.totalorder %v2557, 1296
  %vm3530 = vcmp.lt.s32.totalorder %v2558, 1296
  %vm3531 = vcmp.lt.s32.totalorder %v2559, 1296
  %vm3532 = vcmp.lt.s32.totalorder %v2560, 1296
  %vm3533 = vcmp.lt.s32.totalorder %v2561, 1296
  %vm3534 = vcmp.lt.s32.totalorder %v2562, 1296
  %vm3535 = vcmp.lt.s32.totalorder %v2563, 1296
  %vm3536 = vcmp.lt.s32.totalorder %v2564, 1296
  %vm3537 = vcmp.lt.s32.totalorder %v2565, 1296
  %vm3538 = vcmp.lt.s32.totalorder %v2566, 1296
  %vm3539 = vcmp.lt.s32.totalorder %v2567, 1296
  %vm3540 = vcmp.lt.s32.totalorder %v2568, 1296
  %vm3541 = vcmp.lt.s32.totalorder %v2569, 1296
  %vm3542 = vcmp.lt.s32.totalorder %v2570, 1296
  %vm3543 = vcmp.lt.s32.totalorder %v2571, 1296
  %vm3544 = vcmp.lt.s32.totalorder %v2572, 1296
  %vm3545 = vcmp.lt.s32.totalorder %v2573, 1296
  %vm3546 = vcmp.lt.s32.totalorder %v2574, 1296
  %vm3547 = vcmp.lt.s32.totalorder %v2575, 1296
  %vm3548 = vcmp.lt.s32.totalorder %v2576, 1296
  %vm3549 = vcmp.lt.s32.totalorder %v2577, 1296
  %vm3550 = vcmp.lt.s32.totalorder %v2578, 1296
  %vm3551 = vcmp.lt.s32.totalorder %v2579, 1296
  %vm3552 = vcmp.lt.s32.totalorder %v2580, 1296
  %vm3553 = vcmp.lt.s32.totalorder %v2581, 1296
  %vm3554 = vcmp.lt.s32.totalorder %v2582, 1296
  %vm3555 = vcmp.lt.s32.totalorder %v2583, 1296
  %vm3556 = vcmp.lt.s32.totalorder %v2584, 1296
  %vm3557 = vcmp.lt.s32.totalorder %v2585, 1296
  %vm3558 = vcmp.lt.s32.totalorder %v2586, 1296
  %vm3559 = vcmp.lt.s32.totalorder %v2587, 1296
  %vm3560 = vcmp.lt.s32.totalorder %v2588, 1296
  %vm3561 = vcmp.lt.s32.totalorder %v2589, 1296
  %vm3562 = vcmp.lt.s32.totalorder %v2590, 1296
  %vm3563 = vcmp.lt.s32.totalorder %v2591, 1296
  %vm3564 = vcmp.lt.s32.totalorder %v2592, 1296
  %vm3565 = vcmp.lt.s32.totalorder %v2593, 1296
  %vm3566 = vcmp.lt.s32.totalorder %v2594, 1296
  %vm3567 = vcmp.lt.s32.totalorder %v2595, 1296
  %vm3568 = vcmp.lt.s32.totalorder %v2596, 1296
  %vm3569 = vcmp.lt.s32.totalorder %v2597, 1296
  %vm3570 = vcmp.lt.s32.totalorder %v2598, 1296
  %vm3571 = vcmp.lt.s32.totalorder %v2599, 1296
  %vm3572 = vcmp.lt.s32.totalorder %v2600, 1296
  %vm3573 = vcmp.lt.s32.totalorder %v2601, 1296
  %vm3574 = vcmp.lt.s32.totalorder %v2602, 1296
  %vm3575 = vcmp.lt.s32.totalorder %v2603, 1296
  %vm3576 = vcmp.lt.s32.totalorder %v2604, 1296
  %vm3577 = vcmp.lt.s32.totalorder %v2605, 1296
  %vm3578 = vcmp.lt.s32.totalorder %v2606, 1296
  %vm3579 = vcmp.lt.s32.totalorder %v2607, 1296
  %vm3580 = vcmp.lt.s32.totalorder %v2608, 1296
  %vm3581 = vcmp.lt.s32.totalorder %v2609, 1296
  %vm3582 = vcmp.lt.s32.totalorder %v2610, 1296
  %vm3583 = vcmp.lt.s32.totalorder %v2611, 1296
  %vm3584 = vcmp.lt.s32.totalorder %v2612, 1296
  %vm3585 = vcmp.lt.s32.totalorder %v2613, 1296
  %vm3586 = vcmp.lt.s32.totalorder %v2614, 1296
  %vm3587 = vcmp.lt.s32.totalorder %v2615, 1296
  %vm3588 = vcmp.lt.s32.totalorder %v2616, 1296
  %vm3589 = vcmp.lt.s32.totalorder %v2617, 1296
  %vm3590 = vcmp.lt.s32.totalorder %v2618, 1296
  %vm3591 = vcmp.lt.s32.totalorder %v2619, 1296
  %vm3592 = vcmp.lt.s32.totalorder %v2620, 1296
  %vm3593 = vcmp.lt.s32.totalorder %v2621, 1296
  %vm3594 = vcmp.lt.s32.totalorder %v2622, 1296
  %vm3595 = vcmp.lt.s32.totalorder %v2623, 1296
  %vm3596 = vcmp.lt.s32.totalorder %v2624, 1296
  %vm3597 = vcmp.lt.s32.totalorder %v2625, 1296
  %vm3598 = vcmp.lt.s32.totalorder %v2626, 1296
  %vm3599 = vcmp.lt.s32.totalorder %v2627, 1296
  %vm3600 = vcmp.lt.s32.totalorder %v2628, 1296
  %vm3601 = vcmp.lt.s32.totalorder %v2629, 1296
  %vm3602 = vcmp.lt.s32.totalorder %v2630, 1296
  %vm3603 = vcmp.lt.s32.totalorder %v2631, 1296
  %vm3604 = vcmp.lt.s32.totalorder %v2632, 1296
  %vm3605 = vcmp.lt.s32.totalorder %v2633, 1296
  %vm3606 = vcmp.lt.s32.totalorder %v2634, 1296
  %vm3607 = vcmp.lt.s32.totalorder %v2635, 1296
  %vm3608 = vcmp.lt.s32.totalorder %v2636, 1296
  %vm3609 = vcmp.lt.s32.totalorder %v2637, 1296
  %vm3610 = vcmp.lt.s32.totalorder %v2638, 1296
  %vm3611 = vmand %vm2963, %vm3287
  %vm3612 = vmand %vm2964, %vm3288
  %vm3613 = vmand %vm2965, %vm3289
  %vm3614 = vmand %vm2966, %vm3290
  %vm3615 = vmand %vm2967, %vm3291
  %vm3616 = vmand %vm2968, %vm3292
  %vm3617 = vmand %vm2969, %vm3293
  %vm3618 = vmand %vm2970, %vm3294
  %vm3619 = vmand %vm2971, %vm3295
  %vm3620 = vmand %vm2972, %vm3296
  %vm3621 = vmand %vm2973, %vm3297
  %vm3622 = vmand %vm2974, %vm3298
  %vm3623 = vmand %vm2975, %vm3299
  %vm3624 = vmand %vm2976, %vm3300
  %vm3625 = vmand %vm2977, %vm3301
  %vm3626 = vmand %vm2978, %vm3302
  %vm3627 = vmand %vm2979, %vm3303
  %vm3628 = vmand %vm2980, %vm3304
  %vm3629 = vmand %vm2981, %vm3305
  %vm3630 = vmand %vm2982, %vm3306
  %vm3631 = vmand %vm2983, %vm3307
  %vm3632 = vmand %vm2984, %vm3308
  %vm3633 = vmand %vm2985, %vm3309
  %vm3634 = vmand %vm2986, %vm3310
  %vm3635 = vmand %vm2987, %vm3311
  %vm3636 = vmand %vm2988, %vm3312
  %vm3637 = vmand %vm2989, %vm3313
  %vm3638 = vmand %vm2990, %vm3314
  %vm3639 = vmand %vm2991, %vm3315
  %vm3640 = vmand %vm2992, %vm3316
  %vm3641 = vmand %vm2993, %vm3317
  %vm3642 = vmand %vm2994, %vm3318
  %vm3643 = vmand %vm2995, %vm3319
  %vm3644 = vmand %vm2996, %vm3320
  %vm3645 = vmand %vm2997, %vm3321
  %vm3646 = vmand %vm2998, %vm3322
  %vm3647 = vmand %vm2999, %vm3323
  %vm3648 = vmand %vm3000, %vm3324
  %vm3649 = vmand %vm3001, %vm3325
  %vm3650 = vmand %vm3002, %vm3326
  %vm3651 = vmand %vm3003, %vm3327
  %vm3652 = vmand %vm3004, %vm3328
  %vm3653 = vmand %vm3005, %vm3329
  %vm3654 = vmand %vm3006, %vm3330
  %vm3655 = vmand %vm3007, %vm3331
  %vm3656 = vmand %vm3008, %vm3332
  %vm3657 = vmand %vm3009, %vm3333
  %vm3658 = vmand %vm3010, %vm3334
  %vm3659 = vmand %vm3011, %vm3335
  %vm3660 = vmand %vm3012, %vm3336
  %vm3661 = vmand %vm3013, %vm3337
  %vm3662 = vmand %vm3014, %vm3338
  %vm3663 = vmand %vm3015, %vm3339
  %vm3664 = vmand %vm3016, %vm3340
  %vm3665 = vmand %vm3017, %vm3341
  %vm3666 = vmand %vm3018, %vm3342
  %vm3667 = vmand %vm3019, %vm3343
  %vm3668 = vmand %vm3020, %vm3344
  %vm3669 = vmand %vm3021, %vm3345
  %vm3670 = vmand %vm3022, %vm3346
  %vm3671 = vmand %vm3023, %vm3347
  %vm3672 = vmand %vm3024, %vm3348
  %vm3673 = vmand %vm3025, %vm3349
  %vm3674 = vmand %vm3026, %vm3350
  %vm3675 = vmand %vm3027, %vm3351
  %vm3676 = vmand %vm3028, %vm3352
  %vm3677 = vmand %vm3029, %vm3353
  %vm3678 = vmand %vm3030, %vm3354
  %vm3679 = vmand %vm3031, %vm3355
  %vm3680 = vmand %vm3032, %vm3356
  %vm3681 = vmand %vm3033, %vm3357
  %vm3682 = vmand %vm3034, %vm3358
  %vm3683 = vmand %vm3035, %vm3359
  %vm3684 = vmand %vm3036, %vm3360
  %vm3685 = vmand %vm3037, %vm3361
  %vm3686 = vmand %vm3038, %vm3362
  %vm3687 = vmand %vm3039, %vm3363
  %vm3688 = vmand %vm3040, %vm3364
  %vm3689 = vmand %vm3041, %vm3365
  %vm3690 = vmand %vm3042, %vm3366
  %vm3691 = vmand %vm3043, %vm3367
  %vm3692 = vmand %vm3044, %vm3368
  %vm3693 = vmand %vm3045, %vm3369
  %vm3694 = vmand %vm3046, %vm3370
  %vm3695 = vmand %vm3047, %vm3371
  %vm3696 = vmand %vm3048, %vm3372
  %vm3697 = vmand %vm3049, %vm3373
  %vm3698 = vmand %vm3050, %vm3374
  %vm3699 = vmand %vm3051, %vm3375
  %vm3700 = vmand %vm3052, %vm3376
  %vm3701 = vmand %vm3053, %vm3377
  %vm3702 = vmand %vm3054, %vm3378
  %vm3703 = vmand %vm3055, %vm3379
  %vm3704 = vmand %vm3056, %vm3380
  %vm3705 = vmand %vm3057, %vm3381
  %vm3706 = vmand %vm3058, %vm3382
  %vm3707 = vmand %vm3059, %vm3383
  %vm3708 = vmand %vm3060, %vm3384
  %vm3709 = vmand %vm3061, %vm3385
  %vm3710 = vmand %vm3062, %vm3386
  %vm3711 = vmand %vm3063, %vm3387
  %vm3712 = vmand %vm3064, %vm3388
  %vm3713 = vmand %vm3065, %vm3389
  %vm3714 = vmand %vm3066, %vm3390
  %vm3715 = vmand %vm3067, %vm3391
  %vm3716 = vmand %vm3068, %vm3392
  %vm3717 = vmand %vm3069, %vm3393
  %vm3718 = vmand %vm3070, %vm3394
  %vm3719 = vmand %vm3071, %vm3395
  %vm3720 = vmand %vm3072, %vm3396
  %vm3721 = vmand %vm3073, %vm3397
  %vm3722 = vmand %vm3074, %vm3398
  %vm3723 = vmand %vm3075, %vm3399
  %vm3724 = vmand %vm3076, %vm3400
  %vm3725 = vmand %vm3077, %vm3401
  %vm3726 = vmand %vm3078, %vm3402
  %vm3727 = vmand %vm3079, %vm3403
  %vm3728 = vmand %vm3080, %vm3404
  %vm3729 = vmand %vm3081, %vm3405
  %vm3730 = vmand %vm3082, %vm3406
  %vm3731 = vmand %vm3083, %vm3407
  %vm3732 = vmand %vm3084, %vm3408
  %vm3733 = vmand %vm3085, %vm3409
  %vm3734 = vmand %vm3086, %vm3410
  %vm3735 = vmand %vm3087, %vm3411
  %vm3736 = vmand %vm3088, %vm3412
  %vm3737 = vmand %vm3089, %vm3413
  %vm3738 = vmand %vm3090, %vm3414
  %vm3739 = vmand %vm3091, %vm3415
  %vm3740 = vmand %vm3092, %vm3416
  %vm3741 = vmand %vm3093, %vm3417
  %vm3742 = vmand %vm3094, %vm3418
  %vm3743 = vmand %vm3095, %vm3419
  %vm3744 = vmand %vm3096, %vm3420
  %vm3745 = vmand %vm3097, %vm3421
  %vm3746 = vmand %vm3098, %vm3422
  %vm3747 = vmand %vm3099, %vm3423
  %vm3748 = vmand %vm3100, %vm3424
  %vm3749 = vmand %vm3101, %vm3425
  %vm3750 = vmand %vm3102, %vm3426
  %vm3751 = vmand %vm3103, %vm3427
  %vm3752 = vmand %vm3104, %vm3428
  %vm3753 = vmand %vm3105, %vm3429
  %vm3754 = vmand %vm3106, %vm3430
  %vm3755 = vmand %vm3107, %vm3431
  %vm3756 = vmand %vm3108, %vm3432
  %vm3757 = vmand %vm3109, %vm3433
  %vm3758 = vmand %vm3110, %vm3434
  %vm3759 = vmand %vm3111, %vm3435
  %vm3760 = vmand %vm3112, %vm3436
  %vm3761 = vmand %vm3113, %vm3437
  %vm3762 = vmand %vm3114, %vm3438
  %vm3763 = vmand %vm3115, %vm3439
  %vm3764 = vmand %vm3116, %vm3440
  %vm3765 = vmand %vm3117, %vm3441
  %vm3766 = vmand %vm3118, %vm3442
  %vm3767 = vmand %vm3119, %vm3443
  %vm3768 = vmand %vm3120, %vm3444
  %vm3769 = vmand %vm3121, %vm3445
  %vm3770 = vmand %vm3122, %vm3446
  %vm3771 = vmand %vm3123, %vm3447
  %vm3772 = vmand %vm3124, %vm3448
  %vm3773 = vmand %vm3125, %vm3449
  %vm3774 = vmand %vm3126, %vm3450
  %vm3775 = vmand %vm3127, %vm3451
  %vm3776 = vmand %vm3128, %vm3452
  %vm3777 = vmand %vm3129, %vm3453
  %vm3778 = vmand %vm3130, %vm3454
  %vm3779 = vmand %vm3131, %vm3455
  %vm3780 = vmand %vm3132, %vm3456
  %vm3781 = vmand %vm3133, %vm3457
  %vm3782 = vmand %vm3134, %vm3458
  %vm3783 = vmand %vm3135, %vm3459
  %vm3784 = vmand %vm3136, %vm3460
  %vm3785 = vmand %vm3137, %vm3461
  %vm3786 = vmand %vm3138, %vm3462
  %vm3787 = vmand %vm3139, %vm3463
  %vm3788 = vmand %vm3140, %vm3464
  %vm3789 = vmand %vm3141, %vm3465
  %vm3790 = vmand %vm3142, %vm3466
  %vm3791 = vmand %vm3143, %vm3467
  %vm3792 = vmand %vm3144, %vm3468
  %vm3793 = vmand %vm3145, %vm3469
  %vm3794 = vmand %vm3146, %vm3470
  %vm3795 = vmand %vm3147, %vm3471
  %vm3796 = vmand %vm3148, %vm3472
  %vm3797 = vmand %vm3149, %vm3473
  %vm3798 = vmand %vm3150, %vm3474
  %vm3799 = vmand %vm3151, %vm3475
  %vm3800 = vmand %vm3152, %vm3476
  %vm3801 = vmand %vm3153, %vm3477
  %vm3802 = vmand %vm3154, %vm3478
  %vm3803 = vmand %vm3155, %vm3479
  %vm3804 = vmand %vm3156, %vm3480
  %vm3805 = vmand %vm3157, %vm3481
  %vm3806 = vmand %vm3158, %vm3482
  %vm3807 = vmand %vm3159, %vm3483
  %vm3808 = vmand %vm3160, %vm3484
  %vm3809 = vmand %vm3161, %vm3485
  %vm3810 = vmand %vm3162, %vm3486
  %vm3811 = vmand %vm3163, %vm3487
  %vm3812 = vmand %vm3164, %vm3488
  %vm3813 = vmand %vm3165, %vm3489
  %vm3814 = vmand %vm3166, %vm3490
  %vm3815 = vmand %vm3167, %vm3491
  %vm3816 = vmand %vm3168, %vm3492
  %vm3817 = vmand %vm3169, %vm3493
  %vm3818 = vmand %vm3170, %vm3494
  %vm3819 = vmand %vm3171, %vm3495
  %vm3820 = vmand %vm3172, %vm3496
  %vm3821 = vmand %vm3173, %vm3497
  %vm3822 = vmand %vm3174, %vm3498
  %vm3823 = vmand %vm3175, %vm3499
  %vm3824 = vmand %vm3176, %vm3500
  %vm3825 = vmand %vm3177, %vm3501
  %vm3826 = vmand %vm3178, %vm3502
  %vm3827 = vmand %vm3179, %vm3503
  %vm3828 = vmand %vm3180, %vm3504
  %vm3829 = vmand %vm3181, %vm3505
  %vm3830 = vmand %vm3182, %vm3506
  %vm3831 = vmand %vm3183, %vm3507
  %vm3832 = vmand %vm3184, %vm3508
  %vm3833 = vmand %vm3185, %vm3509
  %vm3834 = vmand %vm3186, %vm3510
  %vm3835 = vmand %vm3187, %vm3511
  %vm3836 = vmand %vm3188, %vm3512
  %vm3837 = vmand %vm3189, %vm3513
  %vm3838 = vmand %vm3190, %vm3514
  %vm3839 = vmand %vm3191, %vm3515
  %vm3840 = vmand %vm3192, %vm3516
  %vm3841 = vmand %vm3193, %vm3517
  %vm3842 = vmand %vm3194, %vm3518
  %vm3843 = vmand %vm3195, %vm3519
  %vm3844 = vmand %vm3196, %vm3520
  %vm3845 = vmand %vm3197, %vm3521
  %vm3846 = vmand %vm3198, %vm3522
  %vm3847 = vmand %vm3199, %vm3523
  %vm3848 = vmand %vm3200, %vm3524
  %vm3849 = vmand %vm3201, %vm3525
  %vm3850 = vmand %vm3202, %vm3526
  %vm3851 = vmand %vm3203, %vm3527
  %vm3852 = vmand %vm3204, %vm3528
  %vm3853 = vmand %vm3205, %vm3529
  %vm3854 = vmand %vm3206, %vm3530
  %vm3855 = vmand %vm3207, %vm3531
  %vm3856 = vmand %vm3208, %vm3532
  %vm3857 = vmand %vm3209, %vm3533
  %vm3858 = vmand %vm3210, %vm3534
  %vm3859 = vmand %vm3211, %vm3535
  %vm3860 = vmand %vm3212, %vm3536
  %vm3861 = vmand %vm3213, %vm3537
  %vm3862 = vmand %vm3214, %vm3538
  %vm3863 = vmand %vm3215, %vm3539
  %vm3864 = vmand %vm3216, %vm3540
  %vm3865 = vmand %vm3217, %vm3541
  %vm3866 = vmand %vm3218, %vm3542
  %vm3867 = vmand %vm3219, %vm3543
  %vm3868 = vmand %vm3220, %vm3544
  %vm3869 = vmand %vm3221, %vm3545
  %vm3870 = vmand %vm3222, %vm3546
  %vm3871 = vmand %vm3223, %vm3547
  %vm3872 = vmand %vm3224, %vm3548
  %vm3873 = vmand %vm3225, %vm3549
  %vm3874 = vmand %vm3226, %vm3550
  %vm3875 = vmand %vm3227, %vm3551
  %vm3876 = vmand %vm3228, %vm3552
  %vm3877 = vmand %vm3229, %vm3553
  %vm3878 = vmand %vm3230, %vm3554
  %vm3879 = vmand %vm3231, %vm3555
  %vm3880 = vmand %vm3232, %vm3556
  %vm3881 = vmand %vm3233, %vm3557
  %vm3882 = vmand %vm3234, %vm3558
  %vm3883 = vmand %vm3235, %vm3559
  %vm3884 = vmand %vm3236, %vm3560
  %vm3885 = vmand %vm3237, %vm3561
  %vm3886 = vmand %vm3238, %vm3562
  %vm3887 = vmand %vm3239, %vm3563
  %vm3888 = vmand %vm3240, %vm3564
  %vm3889 = vmand %vm3241, %vm3565
  %vm3890 = vmand %vm3242, %vm3566
  %vm3891 = vmand %vm3243, %vm3567
  %vm3892 = vmand %vm3244, %vm3568
  %vm3893 = vmand %vm3245, %vm3569
  %vm3894 = vmand %vm3246, %vm3570
  %vm3895 = vmand %vm3247, %vm3571
  %vm3896 = vmand %vm3248, %vm3572
  %vm3897 = vmand %vm3249, %vm3573
  %vm3898 = vmand %vm3250, %vm3574
  %vm3899 = vmand %vm3251, %vm3575
  %vm3900 = vmand %vm3252, %vm3576
  %vm3901 = vmand %vm3253, %vm3577
  %vm3902 = vmand %vm3254, %vm3578
  %vm3903 = vmand %vm3255, %vm3579
  %vm3904 = vmand %vm3256, %vm3580
  %vm3905 = vmand %vm3257, %vm3581
  %vm3906 = vmand %vm3258, %vm3582
  %vm3907 = vmand %vm3259, %vm3583
  %vm3908 = vmand %vm3260, %vm3584
  %vm3909 = vmand %vm3261, %vm3585
  %vm3910 = vmand %vm3262, %vm3586
  %vm3911 = vmand %vm3263, %vm3587
  %vm3912 = vmand %vm3264, %vm3588
  %vm3913 = vmand %vm3265, %vm3589
  %vm3914 = vmand %vm3266, %vm3590
  %vm3915 = vmand %vm3267, %vm3591
  %vm3916 = vmand %vm3268, %vm3592
  %vm3917 = vmand %vm3269, %vm3593
  %vm3918 = vmand %vm3270, %vm3594
  %vm3919 = vmand %vm3271, %vm3595
  %vm3920 = vmand %vm3272, %vm3596
  %vm3921 = vmand %vm3273, %vm3597
  %vm3922 = vmand %vm3274, %vm3598
  %vm3923 = vmand %vm3275, %vm3599
  %vm3924 = vmand %vm3276, %vm3600
  %vm3925 = vmand %vm3277, %vm3601
  %vm3926 = vmand %vm3278, %vm3602
  %vm3927 = vmand %vm3279, %vm3603
  %vm3928 = vmand %vm3280, %vm3604
  %vm3929 = vmand %vm3281, %vm3605
  %vm3930 = vmand %vm3282, %vm3606
  %vm3931 = vmand %vm3283, %vm3607
  %vm3932 = vmand %vm3284, %vm3608
  %vm3933 = vmand %vm3285, %vm3609
  %vm3934 = vmand %vm3286, %vm3610
  %vm3935 = vmor %vm2639, %vm3611
  %vm3936 = vmor %vm2640, %vm3612
  %vm3937 = vmor %vm2641, %vm3613
  %vm3938 = vmor %vm2642, %vm3614
  %vm3939 = vmor %vm2643, %vm3615
  %vm3940 = vmor %vm2644, %vm3616
  %vm3941 = vmor %vm2645, %vm3617
  %vm3942 = vmor %vm2646, %vm3618
  %vm3943 = vmor %vm2647, %vm3619
  %vm3944 = vmor %vm2648, %vm3620
  %vm3945 = vmor %vm2649, %vm3621
  %vm3946 = vmor %vm2650, %vm3622
  %vm3947 = vmor %vm2651, %vm3623
  %vm3948 = vmor %vm2652, %vm3624
  %vm3949 = vmor %vm2653, %vm3625
  %vm3950 = vmor %vm2654, %vm3626
  %vm3951 = vmor %vm2655, %vm3627
  %vm3952 = vmor %vm2656, %vm3628
  %vm3953 = vmor %vm2657, %vm3629
  %vm3954 = vmor %vm2658, %vm3630
  %vm3955 = vmor %vm2659, %vm3631
  %vm3956 = vmor %vm2660, %vm3632
  %vm3957 = vmor %vm2661, %vm3633
  %vm3958 = vmor %vm2662, %vm3634
  %vm3959 = vmor %vm2663, %vm3635
  %vm3960 = vmor %vm2664, %vm3636
  %vm3961 = vmor %vm2665, %vm3637
  %vm3962 = vmor %vm2666, %vm3638
  %vm3963 = vmor %vm2667, %vm3639
  %vm3964 = vmor %vm2668, %vm3640
  %vm3965 = vmor %vm2669, %vm3641
  %vm3966 = vmor %vm2670, %vm3642
  %vm3967 = vmor %vm2671, %vm3643
  %vm3968 = vmor %vm2672, %vm3644
  %vm3969 = vmor %vm2673, %vm3645
  %vm3970 = vmor %vm2674, %vm3646
  %vm3971 = vmor %vm2675, %vm3647
  %vm3972 = vmor %vm2676, %vm3648
  %vm3973 = vmor %vm2677, %vm3649
  %vm3974 = vmor %vm2678, %vm3650
  %vm3975 = vmor %vm2679, %vm3651
  %vm3976 = vmor %vm2680, %vm3652
  %vm3977 = vmor %vm2681, %vm3653
  %vm3978 = vmor %vm2682, %vm3654
  %vm3979 = vmor %vm2683, %vm3655
  %vm3980 = vmor %vm2684, %vm3656
  %vm3981 = vmor %vm2685, %vm3657
  %vm3982 = vmor %vm2686, %vm3658
  %vm3983 = vmor %vm2687, %vm3659
  %vm3984 = vmor %vm2688, %vm3660
  %vm3985 = vmor %vm2689, %vm3661
  %vm3986 = vmor %vm2690, %vm3662
  %vm3987 = vmor %vm2691, %vm3663
  %vm3988 = vmor %vm2692, %vm3664
  %vm3989 = vmor %vm2693, %vm3665
  %vm3990 = vmor %vm2694, %vm3666
  %vm3991 = vmor %vm2695, %vm3667
  %vm3992 = vmor %vm2696, %vm3668
  %vm3993 = vmor %vm2697, %vm3669
  %vm3994 = vmor %vm2698, %vm3670
  %vm3995 = vmor %vm2699, %vm3671
  %vm3996 = vmor %vm2700, %vm3672
  %vm3997 = vmor %vm2701, %vm3673
  %vm3998 = vmor %vm2702, %vm3674
  %vm3999 = vmor %vm2703, %vm3675
  %vm4000 = vmor %vm2704, %vm3676
  %vm4001 = vmor %vm2705, %vm3677
  %vm4002 = vmor %vm2706, %vm3678
  %vm4003 = vmor %vm2707, %vm3679
  %vm4004 = vmor %vm2708, %vm3680
  %vm4005 = vmor %vm2709, %vm3681
  %vm4006 = vmor %vm2710, %vm3682
  %vm4007 = vmor %vm2711, %vm3683
  %vm4008 = vmor %vm2712, %vm3684
  %vm4009 = vmor %vm2713, %vm3685
  %vm4010 = vmor %vm2714, %vm3686
  %vm4011 = vmor %vm2715, %vm3687
  %vm4012 = vmor %vm2716, %vm3688
  %vm4013 = vmor %vm2717, %vm3689
  %vm4014 = vmor %vm2718, %vm3690
  %vm4015 = vmor %vm2719, %vm3691
  %vm4016 = vmor %vm2720, %vm3692
  %vm4017 = vmor %vm2721, %vm3693
  %vm4018 = vmor %vm2722, %vm3694
  %vm4019 = vmor %vm2723, %vm3695
  %vm4020 = vmor %vm2724, %vm3696
  %vm4021 = vmor %vm2725, %vm3697
  %vm4022 = vmor %vm2726, %vm3698
  %vm4023 = vmor %vm2727, %vm3699
  %vm4024 = vmor %vm2728, %vm3700
  %vm4025 = vmor %vm2729, %vm3701
  %vm4026 = vmor %vm2730, %vm3702
  %vm4027 = vmor %vm2731, %vm3703
  %vm4028 = vmor %vm2732, %vm3704
  %vm4029 = vmor %vm2733, %vm3705
  %vm4030 = vmor %vm2734, %vm3706
  %vm4031 = vmor %vm2735, %vm3707
  %vm4032 = vmor %vm2736, %vm3708
  %vm4033 = vmor %vm2737, %vm3709
  %vm4034 = vmor %vm2738, %vm3710
  %vm4035 = vmor %vm2739, %vm3711
  %vm4036 = vmor %vm2740, %vm3712
  %vm4037 = vmor %vm2741, %vm3713
  %vm4038 = vmor %vm2742, %vm3714
  %vm4039 = vmor %vm2743, %vm3715
  %vm4040 = vmor %vm2744, %vm3716
  %vm4041 = vmor %vm2745, %vm3717
  %vm4042 = vmor %vm2746, %vm3718
  %vm4043 = vmor %vm2747, %vm3719
  %vm4044 = vmor %vm2748, %vm3720
  %vm4045 = vmor %vm2749, %vm3721
  %vm4046 = vmor %vm2750, %vm3722
  %vm4047 = vmor %vm2751, %vm3723
  %vm4048 = vmor %vm2752, %vm3724
  %vm4049 = vmor %vm2753, %vm3725
  %vm4050 = vmor %vm2754, %vm3726
  %vm4051 = vmor %vm2755, %vm3727
  %vm4052 = vmor %vm2756, %vm3728
  %vm4053 = vmor %vm2757, %vm3729
  %vm4054 = vmor %vm2758, %vm3730
  %vm4055 = vmor %vm2759, %vm3731
  %vm4056 = vmor %vm2760, %vm3732
  %vm4057 = vmor %vm2761, %vm3733
  %vm4058 = vmor %vm2762, %vm3734
  %vm4059 = vmor %vm2763, %vm3735
  %vm4060 = vmor %vm2764, %vm3736
  %vm4061 = vmor %vm2765, %vm3737
  %vm4062 = vmor %vm2766, %vm3738
  %vm4063 = vmor %vm2767, %vm3739
  %vm4064 = vmor %vm2768, %vm3740
  %vm4065 = vmor %vm2769, %vm3741
  %vm4066 = vmor %vm2770, %vm3742
  %vm4067 = vmor %vm2771, %vm3743
  %vm4068 = vmor %vm2772, %vm3744
  %vm4069 = vmor %vm2773, %vm3745
  %vm4070 = vmor %vm2774, %vm3746
  %vm4071 = vmor %vm2775, %vm3747
  %vm4072 = vmor %vm2776, %vm3748
  %vm4073 = vmor %vm2777, %vm3749
  %vm4074 = vmor %vm2778, %vm3750
  %vm4075 = vmor %vm2779, %vm3751
  %vm4076 = vmor %vm2780, %vm3752
  %vm4077 = vmor %vm2781, %vm3753
  %vm4078 = vmor %vm2782, %vm3754
  %vm4079 = vmor %vm2783, %vm3755
  %vm4080 = vmor %vm2784, %vm3756
  %vm4081 = vmor %vm2785, %vm3757
  %vm4082 = vmor %vm2786, %vm3758
  %vm4083 = vmor %vm2787, %vm3759
  %vm4084 = vmor %vm2788, %vm3760
  %vm4085 = vmor %vm2789, %vm3761
  %vm4086 = vmor %vm2790, %vm3762
  %vm4087 = vmor %vm2791, %vm3763
  %vm4088 = vmor %vm2792, %vm3764
  %vm4089 = vmor %vm2793, %vm3765
  %vm4090 = vmor %vm2794, %vm3766
  %vm4091 = vmor %vm2795, %vm3767
  %vm4092 = vmor %vm2796, %vm3768
  %vm4093 = vmor %vm2797, %vm3769
  %vm4094 = vmor %vm2798, %vm3770
  %vm4095 = vmor %vm2799, %vm3771
  %vm4096 = vmor %vm2800, %vm3772
  %vm4097 = vmor %vm2801, %vm3773
  %vm4098 = vmor %vm2802, %vm3774
  %vm4099 = vmor %vm2803, %vm3775
  %vm4100 = vmor %vm2804, %vm3776
  %vm4101 = vmor %vm2805, %vm3777
  %vm4102 = vmor %vm2806, %vm3778
  %vm4103 = vmor %vm2807, %vm3779
  %vm4104 = vmor %vm2808, %vm3780
  %vm4105 = vmor %vm2809, %vm3781
  %vm4106 = vmor %vm2810, %vm3782
  %vm4107 = vmor %vm2811, %vm3783
  %vm4108 = vmor %vm2812, %vm3784
  %vm4109 = vmor %vm2813, %vm3785
  %vm4110 = vmor %vm2814, %vm3786
  %vm4111 = vmor %vm2815, %vm3787
  %vm4112 = vmor %vm2816, %vm3788
  %vm4113 = vmor %vm2817, %vm3789
  %vm4114 = vmor %vm2818, %vm3790
  %vm4115 = vmor %vm2819, %vm3791
  %vm4116 = vmor %vm2820, %vm3792
  %vm4117 = vmor %vm2821, %vm3793
  %vm4118 = vmor %vm2822, %vm3794
  %vm4119 = vmor %vm2823, %vm3795
  %vm4120 = vmor %vm2824, %vm3796
  %vm4121 = vmor %vm2825, %vm3797
  %vm4122 = vmor %vm2826, %vm3798
  %vm4123 = vmor %vm2827, %vm3799
  %vm4124 = vmor %vm2828, %vm3800
  %vm4125 = vmor %vm2829, %vm3801
  %vm4126 = vmor %vm2830, %vm3802
  %vm4127 = vmor %vm2831, %vm3803
  %vm4128 = vmor %vm2832, %vm3804
  %vm4129 = vmor %vm2833, %vm3805
  %vm4130 = vmor %vm2834, %vm3806
  %vm4131 = vmor %vm2835, %vm3807
  %vm4132 = vmor %vm2836, %vm3808
  %vm4133 = vmor %vm2837, %vm3809
  %vm4134 = vmor %vm2838, %vm3810
  %vm4135 = vmor %vm2839, %vm3811
  %vm4136 = vmor %vm2840, %vm3812
  %vm4137 = vmor %vm2841, %vm3813
  %vm4138 = vmor %vm2842, %vm3814
  %vm4139 = vmor %vm2843, %vm3815
  %vm4140 = vmor %vm2844, %vm3816
  %vm4141 = vmor %vm2845, %vm3817
  %vm4142 = vmor %vm2846, %vm3818
  %vm4143 = vmor %vm2847, %vm3819
  %vm4144 = vmor %vm2848, %vm3820
  %vm4145 = vmor %vm2849, %vm3821
  %vm4146 = vmor %vm2850, %vm3822
  %vm4147 = vmor %vm2851, %vm3823
  %vm4148 = vmor %vm2852, %vm3824
  %vm4149 = vmor %vm2853, %vm3825
  %vm4150 = vmor %vm2854, %vm3826
  %vm4151 = vmor %vm2855, %vm3827
  %vm4152 = vmor %vm2856, %vm3828
  %vm4153 = vmor %vm2857, %vm3829
  %vm4154 = vmor %vm2858, %vm3830
  %vm4155 = vmor %vm2859, %vm3831
  %vm4156 = vmor %vm2860, %vm3832
  %vm4157 = vmor %vm2861, %vm3833
  %vm4158 = vmor %vm2862, %vm3834
  %vm4159 = vmor %vm2863, %vm3835
  %vm4160 = vmor %vm2864, %vm3836
  %vm4161 = vmor %vm2865, %vm3837
  %vm4162 = vmor %vm2866, %vm3838
  %vm4163 = vmor %vm2867, %vm3839
  %vm4164 = vmor %vm2868, %vm3840
  %vm4165 = vmor %vm2869, %vm3841
  %vm4166 = vmor %vm2870, %vm3842
  %vm4167 = vmor %vm2871, %vm3843
  %vm4168 = vmor %vm2872, %vm3844
  %vm4169 = vmor %vm2873, %vm3845
  %vm4170 = vmor %vm2874, %vm3846
  %vm4171 = vmor %vm2875, %vm3847
  %vm4172 = vmor %vm2876, %vm3848
  %vm4173 = vmor %vm2877, %vm3849
  %vm4174 = vmor %vm2878, %vm3850
  %vm4175 = vmor %vm2879, %vm3851
  %vm4176 = vmor %vm2880, %vm3852
  %vm4177 = vmor %vm2881, %vm3853
  %vm4178 = vmor %vm2882, %vm3854
  %vm4179 = vmor %vm2883, %vm3855
  %vm4180 = vmor %vm2884, %vm3856
  %vm4181 = vmor %vm2885, %vm3857
  %vm4182 = vmor %vm2886, %vm3858
  %vm4183 = vmor %vm2887, %vm3859
  %vm4184 = vmor %vm2888, %vm3860
  %vm4185 = vmor %vm2889, %vm3861
  %vm4186 = vmor %vm2890, %vm3862
  %vm4187 = vmor %vm2891, %vm3863
  %vm4188 = vmor %vm2892, %vm3864
  %vm4189 = vmor %vm2893, %vm3865
  %vm4190 = vmor %vm2894, %vm3866
  %vm4191 = vmor %vm2895, %vm3867
  %vm4192 = vmor %vm2896, %vm3868
  %vm4193 = vmor %vm2897, %vm3869
  %vm4194 = vmor %vm2898, %vm3870
  %vm4195 = vmor %vm2899, %vm3871
  %vm4196 = vmor %vm2900, %vm3872
  %vm4197 = vmor %vm2901, %vm3873
  %vm4198 = vmor %vm2902, %vm3874
  %vm4199 = vmor %vm2903, %vm3875
  %vm4200 = vmor %vm2904, %vm3876
  %vm4201 = vmor %vm2905, %vm3877
  %vm4202 = vmor %vm2906, %vm3878
  %vm4203 = vmor %vm2907, %vm3879
  %vm4204 = vmor %vm2908, %vm3880
  %vm4205 = vmor %vm2909, %vm3881
  %vm4206 = vmor %vm2910, %vm3882
  %vm4207 = vmor %vm2911, %vm3883
  %vm4208 = vmor %vm2912, %vm3884
  %vm4209 = vmor %vm2913, %vm3885
  %vm4210 = vmor %vm2914, %vm3886
  %vm4211 = vmor %vm2915, %vm3887
  %vm4212 = vmor %vm2916, %vm3888
  %vm4213 = vmor %vm2917, %vm3889
  %vm4214 = vmor %vm2918, %vm3890
  %vm4215 = vmor %vm2919, %vm3891
  %vm4216 = vmor %vm2920, %vm3892
  %vm4217 = vmor %vm2921, %vm3893
  %vm4218 = vmor %vm2922, %vm3894
  %vm4219 = vmor %vm2923, %vm3895
  %vm4220 = vmor %vm2924, %vm3896
  %vm4221 = vmor %vm2925, %vm3897
  %vm4222 = vmor %vm2926, %vm3898
  %vm4223 = vmor %vm2927, %vm3899
  %vm4224 = vmor %vm2928, %vm3900
  %vm4225 = vmor %vm2929, %vm3901
  %vm4226 = vmor %vm2930, %vm3902
  %vm4227 = vmor %vm2931, %vm3903
  %vm4228 = vmor %vm2932, %vm3904
  %vm4229 = vmor %vm2933, %vm3905
  %vm4230 = vmor %vm2934, %vm3906
  %vm4231 = vmor %vm2935, %vm3907
  %vm4232 = vmor %vm2936, %vm3908
  %vm4233 = vmor %vm2937, %vm3909
  %vm4234 = vmor %vm2938, %vm3910
  %vm4235 = vmor %vm2939, %vm3911
  %vm4236 = vmor %vm2940, %vm3912
  %vm4237 = vmor %vm2941, %vm3913
  %vm4238 = vmor %vm2942, %vm3914
  %vm4239 = vmor %vm2943, %vm3915
  %vm4240 = vmor %vm2944, %vm3916
  %vm4241 = vmor %vm2945, %vm3917
  %vm4242 = vmor %vm2946, %vm3918
  %vm4243 = vmor %vm2947, %vm3919
  %vm4244 = vmor %vm2948, %vm3920
  %vm4245 = vmor %vm2949, %vm3921
  %vm4246 = vmor %vm2950, %vm3922
  %vm4247 = vmor %vm2951, %vm3923
  %vm4248 = vmor %vm2952, %vm3924
  %vm4249 = vmor %vm2953, %vm3925
  %vm4250 = vmor %vm2954, %vm3926
  %vm4251 = vmor %vm2955, %vm3927
  %vm4252 = vmor %vm2956, %vm3928
  %vm4253 = vmor %vm2957, %vm3929
  %vm4254 = vmor %vm2958, %vm3930
  %vm4255 = vmor %vm2959, %vm3931
  %vm4256 = vmor %vm2960, %vm3932
  %vm4257 = vmor %vm2961, %vm3933
  %vm4258 = vmor %vm2962, %vm3934
  %vm4259 = vcmp.ge.s32.totalorder %v2315, 1296
  %vm4260 = vcmp.ge.s32.totalorder %v2316, 1296
  %vm4261 = vcmp.ge.s32.totalorder %v2317, 1296
  %vm4262 = vcmp.ge.s32.totalorder %v2318, 1296
  %vm4263 = vcmp.ge.s32.totalorder %v2319, 1296
  %vm4264 = vcmp.ge.s32.totalorder %v2320, 1296
  %vm4265 = vcmp.ge.s32.totalorder %v2321, 1296
  %vm4266 = vcmp.ge.s32.totalorder %v2322, 1296
  %vm4267 = vcmp.ge.s32.totalorder %v2323, 1296
  %vm4268 = vcmp.ge.s32.totalorder %v2324, 1296
  %vm4269 = vcmp.ge.s32.totalorder %v2325, 1296
  %vm4270 = vcmp.ge.s32.totalorder %v2326, 1296
  %vm4271 = vcmp.ge.s32.totalorder %v2327, 1296
  %vm4272 = vcmp.ge.s32.totalorder %v2328, 1296
  %vm4273 = vcmp.ge.s32.totalorder %v2329, 1296
  %vm4274 = vcmp.ge.s32.totalorder %v2330, 1296
  %vm4275 = vcmp.ge.s32.totalorder %v2331, 1296
  %vm4276 = vcmp.ge.s32.totalorder %v2332, 1296
  %vm4277 = vcmp.ge.s32.totalorder %v2333, 1296
  %vm4278 = vcmp.ge.s32.totalorder %v2334, 1296
  %vm4279 = vcmp.ge.s32.totalorder %v2335, 1296
  %vm4280 = vcmp.ge.s32.totalorder %v2336, 1296
  %vm4281 = vcmp.ge.s32.totalorder %v2337, 1296
  %vm4282 = vcmp.ge.s32.totalorder %v2338, 1296
  %vm4283 = vcmp.ge.s32.totalorder %v2339, 1296
  %vm4284 = vcmp.ge.s32.totalorder %v2340, 1296
  %vm4285 = vcmp.ge.s32.totalorder %v2341, 1296
  %vm4286 = vcmp.ge.s32.totalorder %v2342, 1296
  %vm4287 = vcmp.ge.s32.totalorder %v2343, 1296
  %vm4288 = vcmp.ge.s32.totalorder %v2344, 1296
  %vm4289 = vcmp.ge.s32.totalorder %v2345, 1296
  %vm4290 = vcmp.ge.s32.totalorder %v2346, 1296
  %vm4291 = vcmp.ge.s32.totalorder %v2347, 1296
  %vm4292 = vcmp.ge.s32.totalorder %v2348, 1296
  %vm4293 = vcmp.ge.s32.totalorder %v2349, 1296
  %vm4294 = vcmp.ge.s32.totalorder %v2350, 1296
  %vm4295 = vcmp.ge.s32.totalorder %v2351, 1296
  %vm4296 = vcmp.ge.s32.totalorder %v2352, 1296
  %vm4297 = vcmp.ge.s32.totalorder %v2353, 1296
  %vm4298 = vcmp.ge.s32.totalorder %v2354, 1296
  %vm4299 = vcmp.ge.s32.totalorder %v2355, 1296
  %vm4300 = vcmp.ge.s32.totalorder %v2356, 1296
  %vm4301 = vcmp.ge.s32.totalorder %v2357, 1296
  %vm4302 = vcmp.ge.s32.totalorder %v2358, 1296
  %vm4303 = vcmp.ge.s32.totalorder %v2359, 1296
  %vm4304 = vcmp.ge.s32.totalorder %v2360, 1296
  %vm4305 = vcmp.ge.s32.totalorder %v2361, 1296
  %vm4306 = vcmp.ge.s32.totalorder %v2362, 1296
  %vm4307 = vcmp.ge.s32.totalorder %v2363, 1296
  %vm4308 = vcmp.ge.s32.totalorder %v2364, 1296
  %vm4309 = vcmp.ge.s32.totalorder %v2365, 1296
  %vm4310 = vcmp.ge.s32.totalorder %v2366, 1296
  %vm4311 = vcmp.ge.s32.totalorder %v2367, 1296
  %vm4312 = vcmp.ge.s32.totalorder %v2368, 1296
  %vm4313 = vcmp.ge.s32.totalorder %v2369, 1296
  %vm4314 = vcmp.ge.s32.totalorder %v2370, 1296
  %vm4315 = vcmp.ge.s32.totalorder %v2371, 1296
  %vm4316 = vcmp.ge.s32.totalorder %v2372, 1296
  %vm4317 = vcmp.ge.s32.totalorder %v2373, 1296
  %vm4318 = vcmp.ge.s32.totalorder %v2374, 1296
  %vm4319 = vcmp.ge.s32.totalorder %v2375, 1296
  %vm4320 = vcmp.ge.s32.totalorder %v2376, 1296
  %vm4321 = vcmp.ge.s32.totalorder %v2377, 1296
  %vm4322 = vcmp.ge.s32.totalorder %v2378, 1296
  %vm4323 = vcmp.ge.s32.totalorder %v2379, 1296
  %vm4324 = vcmp.ge.s32.totalorder %v2380, 1296
  %vm4325 = vcmp.ge.s32.totalorder %v2381, 1296
  %vm4326 = vcmp.ge.s32.totalorder %v2382, 1296
  %vm4327 = vcmp.ge.s32.totalorder %v2383, 1296
  %vm4328 = vcmp.ge.s32.totalorder %v2384, 1296
  %vm4329 = vcmp.ge.s32.totalorder %v2385, 1296
  %vm4330 = vcmp.ge.s32.totalorder %v2386, 1296
  %vm4331 = vcmp.ge.s32.totalorder %v2387, 1296
  %vm4332 = vcmp.ge.s32.totalorder %v2388, 1296
  %vm4333 = vcmp.ge.s32.totalorder %v2389, 1296
  %vm4334 = vcmp.ge.s32.totalorder %v2390, 1296
  %vm4335 = vcmp.ge.s32.totalorder %v2391, 1296
  %vm4336 = vcmp.ge.s32.totalorder %v2392, 1296
  %vm4337 = vcmp.ge.s32.totalorder %v2393, 1296
  %vm4338 = vcmp.ge.s32.totalorder %v2394, 1296
  %vm4339 = vcmp.ge.s32.totalorder %v2395, 1296
  %vm4340 = vcmp.ge.s32.totalorder %v2396, 1296
  %vm4341 = vcmp.ge.s32.totalorder %v2397, 1296
  %vm4342 = vcmp.ge.s32.totalorder %v2398, 1296
  %vm4343 = vcmp.ge.s32.totalorder %v2399, 1296
  %vm4344 = vcmp.ge.s32.totalorder %v2400, 1296
  %vm4345 = vcmp.ge.s32.totalorder %v2401, 1296
  %vm4346 = vcmp.ge.s32.totalorder %v2402, 1296
  %vm4347 = vcmp.ge.s32.totalorder %v2403, 1296
  %vm4348 = vcmp.ge.s32.totalorder %v2404, 1296
  %vm4349 = vcmp.ge.s32.totalorder %v2405, 1296
  %vm4350 = vcmp.ge.s32.totalorder %v2406, 1296
  %vm4351 = vcmp.ge.s32.totalorder %v2407, 1296
  %vm4352 = vcmp.ge.s32.totalorder %v2408, 1296
  %vm4353 = vcmp.ge.s32.totalorder %v2409, 1296
  %vm4354 = vcmp.ge.s32.totalorder %v2410, 1296
  %vm4355 = vcmp.ge.s32.totalorder %v2411, 1296
  %vm4356 = vcmp.ge.s32.totalorder %v2412, 1296
  %vm4357 = vcmp.ge.s32.totalorder %v2413, 1296
  %vm4358 = vcmp.ge.s32.totalorder %v2414, 1296
  %vm4359 = vcmp.ge.s32.totalorder %v2415, 1296
  %vm4360 = vcmp.ge.s32.totalorder %v2416, 1296
  %vm4361 = vcmp.ge.s32.totalorder %v2417, 1296
  %vm4362 = vcmp.ge.s32.totalorder %v2418, 1296
  %vm4363 = vcmp.ge.s32.totalorder %v2419, 1296
  %vm4364 = vcmp.ge.s32.totalorder %v2420, 1296
  %vm4365 = vcmp.ge.s32.totalorder %v2421, 1296
  %vm4366 = vcmp.ge.s32.totalorder %v2422, 1296
  %vm4367 = vcmp.ge.s32.totalorder %v2423, 1296
  %vm4368 = vcmp.ge.s32.totalorder %v2424, 1296
  %vm4369 = vcmp.ge.s32.totalorder %v2425, 1296
  %vm4370 = vcmp.ge.s32.totalorder %v2426, 1296
  %vm4371 = vcmp.ge.s32.totalorder %v2427, 1296
  %vm4372 = vcmp.ge.s32.totalorder %v2428, 1296
  %vm4373 = vcmp.ge.s32.totalorder %v2429, 1296
  %vm4374 = vcmp.ge.s32.totalorder %v2430, 1296
  %vm4375 = vcmp.ge.s32.totalorder %v2431, 1296
  %vm4376 = vcmp.ge.s32.totalorder %v2432, 1296
  %vm4377 = vcmp.ge.s32.totalorder %v2433, 1296
  %vm4378 = vcmp.ge.s32.totalorder %v2434, 1296
  %vm4379 = vcmp.ge.s32.totalorder %v2435, 1296
  %vm4380 = vcmp.ge.s32.totalorder %v2436, 1296
  %vm4381 = vcmp.ge.s32.totalorder %v2437, 1296
  %vm4382 = vcmp.ge.s32.totalorder %v2438, 1296
  %vm4383 = vcmp.ge.s32.totalorder %v2439, 1296
  %vm4384 = vcmp.ge.s32.totalorder %v2440, 1296
  %vm4385 = vcmp.ge.s32.totalorder %v2441, 1296
  %vm4386 = vcmp.ge.s32.totalorder %v2442, 1296
  %vm4387 = vcmp.ge.s32.totalorder %v2443, 1296
  %vm4388 = vcmp.ge.s32.totalorder %v2444, 1296
  %vm4389 = vcmp.ge.s32.totalorder %v2445, 1296
  %vm4390 = vcmp.ge.s32.totalorder %v2446, 1296
  %vm4391 = vcmp.ge.s32.totalorder %v2447, 1296
  %vm4392 = vcmp.ge.s32.totalorder %v2448, 1296
  %vm4393 = vcmp.ge.s32.totalorder %v2449, 1296
  %vm4394 = vcmp.ge.s32.totalorder %v2450, 1296
  %vm4395 = vcmp.ge.s32.totalorder %v2451, 1296
  %vm4396 = vcmp.ge.s32.totalorder %v2452, 1296
  %vm4397 = vcmp.ge.s32.totalorder %v2453, 1296
  %vm4398 = vcmp.ge.s32.totalorder %v2454, 1296
  %vm4399 = vcmp.ge.s32.totalorder %v2455, 1296
  %vm4400 = vcmp.ge.s32.totalorder %v2456, 1296
  %vm4401 = vcmp.ge.s32.totalorder %v2457, 1296
  %vm4402 = vcmp.ge.s32.totalorder %v2458, 1296
  %vm4403 = vcmp.ge.s32.totalorder %v2459, 1296
  %vm4404 = vcmp.ge.s32.totalorder %v2460, 1296
  %vm4405 = vcmp.ge.s32.totalorder %v2461, 1296
  %vm4406 = vcmp.ge.s32.totalorder %v2462, 1296
  %vm4407 = vcmp.ge.s32.totalorder %v2463, 1296
  %vm4408 = vcmp.ge.s32.totalorder %v2464, 1296
  %vm4409 = vcmp.ge.s32.totalorder %v2465, 1296
  %vm4410 = vcmp.ge.s32.totalorder %v2466, 1296
  %vm4411 = vcmp.ge.s32.totalorder %v2467, 1296
  %vm4412 = vcmp.ge.s32.totalorder %v2468, 1296
  %vm4413 = vcmp.ge.s32.totalorder %v2469, 1296
  %vm4414 = vcmp.ge.s32.totalorder %v2470, 1296
  %vm4415 = vcmp.ge.s32.totalorder %v2471, 1296
  %vm4416 = vcmp.ge.s32.totalorder %v2472, 1296
  %vm4417 = vcmp.ge.s32.totalorder %v2473, 1296
  %vm4418 = vcmp.ge.s32.totalorder %v2474, 1296
  %vm4419 = vcmp.ge.s32.totalorder %v2475, 1296
  %vm4420 = vcmp.ge.s32.totalorder %v2476, 1296
  %vm4421 = vcmp.ge.s32.totalorder %v2477, 1296
  %vm4422 = vcmp.ge.s32.totalorder %v2478, 1296
  %vm4423 = vcmp.ge.s32.totalorder %v2479, 1296
  %vm4424 = vcmp.ge.s32.totalorder %v2480, 1296
  %vm4425 = vcmp.ge.s32.totalorder %v2481, 1296
  %vm4426 = vcmp.ge.s32.totalorder %v2482, 1296
  %vm4427 = vcmp.ge.s32.totalorder %v2483, 1296
  %vm4428 = vcmp.ge.s32.totalorder %v2484, 1296
  %vm4429 = vcmp.ge.s32.totalorder %v2485, 1296
  %vm4430 = vcmp.ge.s32.totalorder %v2486, 1296
  %vm4431 = vcmp.ge.s32.totalorder %v2487, 1296
  %vm4432 = vcmp.ge.s32.totalorder %v2488, 1296
  %vm4433 = vcmp.ge.s32.totalorder %v2489, 1296
  %vm4434 = vcmp.ge.s32.totalorder %v2490, 1296
  %vm4435 = vcmp.ge.s32.totalorder %v2491, 1296
  %vm4436 = vcmp.ge.s32.totalorder %v2492, 1296
  %vm4437 = vcmp.ge.s32.totalorder %v2493, 1296
  %vm4438 = vcmp.ge.s32.totalorder %v2494, 1296
  %vm4439 = vcmp.ge.s32.totalorder %v2495, 1296
  %vm4440 = vcmp.ge.s32.totalorder %v2496, 1296
  %vm4441 = vcmp.ge.s32.totalorder %v2497, 1296
  %vm4442 = vcmp.ge.s32.totalorder %v2498, 1296
  %vm4443 = vcmp.ge.s32.totalorder %v2499, 1296
  %vm4444 = vcmp.ge.s32.totalorder %v2500, 1296
  %vm4445 = vcmp.ge.s32.totalorder %v2501, 1296
  %vm4446 = vcmp.ge.s32.totalorder %v2502, 1296
  %vm4447 = vcmp.ge.s32.totalorder %v2503, 1296
  %vm4448 = vcmp.ge.s32.totalorder %v2504, 1296
  %vm4449 = vcmp.ge.s32.totalorder %v2505, 1296
  %vm4450 = vcmp.ge.s32.totalorder %v2506, 1296
  %vm4451 = vcmp.ge.s32.totalorder %v2507, 1296
  %vm4452 = vcmp.ge.s32.totalorder %v2508, 1296
  %vm4453 = vcmp.ge.s32.totalorder %v2509, 1296
  %vm4454 = vcmp.ge.s32.totalorder %v2510, 1296
  %vm4455 = vcmp.ge.s32.totalorder %v2511, 1296
  %vm4456 = vcmp.ge.s32.totalorder %v2512, 1296
  %vm4457 = vcmp.ge.s32.totalorder %v2513, 1296
  %vm4458 = vcmp.ge.s32.totalorder %v2514, 1296
  %vm4459 = vcmp.ge.s32.totalorder %v2515, 1296
  %vm4460 = vcmp.ge.s32.totalorder %v2516, 1296
  %vm4461 = vcmp.ge.s32.totalorder %v2517, 1296
  %vm4462 = vcmp.ge.s32.totalorder %v2518, 1296
  %vm4463 = vcmp.ge.s32.totalorder %v2519, 1296
  %vm4464 = vcmp.ge.s32.totalorder %v2520, 1296
  %vm4465 = vcmp.ge.s32.totalorder %v2521, 1296
  %vm4466 = vcmp.ge.s32.totalorder %v2522, 1296
  %vm4467 = vcmp.ge.s32.totalorder %v2523, 1296
  %vm4468 = vcmp.ge.s32.totalorder %v2524, 1296
  %vm4469 = vcmp.ge.s32.totalorder %v2525, 1296
  %vm4470 = vcmp.ge.s32.totalorder %v2526, 1296
  %vm4471 = vcmp.ge.s32.totalorder %v2527, 1296
  %vm4472 = vcmp.ge.s32.totalorder %v2528, 1296
  %vm4473 = vcmp.ge.s32.totalorder %v2529, 1296
  %vm4474 = vcmp.ge.s32.totalorder %v2530, 1296
  %vm4475 = vcmp.ge.s32.totalorder %v2531, 1296
  %vm4476 = vcmp.ge.s32.totalorder %v2532, 1296
  %vm4477 = vcmp.ge.s32.totalorder %v2533, 1296
  %vm4478 = vcmp.ge.s32.totalorder %v2534, 1296
  %vm4479 = vcmp.ge.s32.totalorder %v2535, 1296
  %vm4480 = vcmp.ge.s32.totalorder %v2536, 1296
  %vm4481 = vcmp.ge.s32.totalorder %v2537, 1296
  %vm4482 = vcmp.ge.s32.totalorder %v2538, 1296
  %vm4483 = vcmp.ge.s32.totalorder %v2539, 1296
  %vm4484 = vcmp.ge.s32.totalorder %v2540, 1296
  %vm4485 = vcmp.ge.s32.totalorder %v2541, 1296
  %vm4486 = vcmp.ge.s32.totalorder %v2542, 1296
  %vm4487 = vcmp.ge.s32.totalorder %v2543, 1296
  %vm4488 = vcmp.ge.s32.totalorder %v2544, 1296
  %vm4489 = vcmp.ge.s32.totalorder %v2545, 1296
  %vm4490 = vcmp.ge.s32.totalorder %v2546, 1296
  %vm4491 = vcmp.ge.s32.totalorder %v2547, 1296
  %vm4492 = vcmp.ge.s32.totalorder %v2548, 1296
  %vm4493 = vcmp.ge.s32.totalorder %v2549, 1296
  %vm4494 = vcmp.ge.s32.totalorder %v2550, 1296
  %vm4495 = vcmp.ge.s32.totalorder %v2551, 1296
  %vm4496 = vcmp.ge.s32.totalorder %v2552, 1296
  %vm4497 = vcmp.ge.s32.totalorder %v2553, 1296
  %vm4498 = vcmp.ge.s32.totalorder %v2554, 1296
  %vm4499 = vcmp.ge.s32.totalorder %v2555, 1296
  %vm4500 = vcmp.ge.s32.totalorder %v2556, 1296
  %vm4501 = vcmp.ge.s32.totalorder %v2557, 1296
  %vm4502 = vcmp.ge.s32.totalorder %v2558, 1296
  %vm4503 = vcmp.ge.s32.totalorder %v2559, 1296
  %vm4504 = vcmp.ge.s32.totalorder %v2560, 1296
  %vm4505 = vcmp.ge.s32.totalorder %v2561, 1296
  %vm4506 = vcmp.ge.s32.totalorder %v2562, 1296
  %vm4507 = vcmp.ge.s32.totalorder %v2563, 1296
  %vm4508 = vcmp.ge.s32.totalorder %v2564, 1296
  %vm4509 = vcmp.ge.s32.totalorder %v2565, 1296
  %vm4510 = vcmp.ge.s32.totalorder %v2566, 1296
  %vm4511 = vcmp.ge.s32.totalorder %v2567, 1296
  %vm4512 = vcmp.ge.s32.totalorder %v2568, 1296
  %vm4513 = vcmp.ge.s32.totalorder %v2569, 1296
  %vm4514 = vcmp.ge.s32.totalorder %v2570, 1296
  %vm4515 = vcmp.ge.s32.totalorder %v2571, 1296
  %vm4516 = vcmp.ge.s32.totalorder %v2572, 1296
  %vm4517 = vcmp.ge.s32.totalorder %v2573, 1296
  %vm4518 = vcmp.ge.s32.totalorder %v2574, 1296
  %vm4519 = vcmp.ge.s32.totalorder %v2575, 1296
  %vm4520 = vcmp.ge.s32.totalorder %v2576, 1296
  %vm4521 = vcmp.ge.s32.totalorder %v2577, 1296
  %vm4522 = vcmp.ge.s32.totalorder %v2578, 1296
  %vm4523 = vcmp.ge.s32.totalorder %v2579, 1296
  %vm4524 = vcmp.ge.s32.totalorder %v2580, 1296
  %vm4525 = vcmp.ge.s32.totalorder %v2581, 1296
  %vm4526 = vcmp.ge.s32.totalorder %v2582, 1296
  %vm4527 = vcmp.ge.s32.totalorder %v2583, 1296
  %vm4528 = vcmp.ge.s32.totalorder %v2584, 1296
  %vm4529 = vcmp.ge.s32.totalorder %v2585, 1296
  %vm4530 = vcmp.ge.s32.totalorder %v2586, 1296
  %vm4531 = vcmp.ge.s32.totalorder %v2587, 1296
  %vm4532 = vcmp.ge.s32.totalorder %v2588, 1296
  %vm4533 = vcmp.ge.s32.totalorder %v2589, 1296
  %vm4534 = vcmp.ge.s32.totalorder %v2590, 1296
  %vm4535 = vcmp.ge.s32.totalorder %v2591, 1296
  %vm4536 = vcmp.ge.s32.totalorder %v2592, 1296
  %vm4537 = vcmp.ge.s32.totalorder %v2593, 1296
  %vm4538 = vcmp.ge.s32.totalorder %v2594, 1296
  %vm4539 = vcmp.ge.s32.totalorder %v2595, 1296
  %vm4540 = vcmp.ge.s32.totalorder %v2596, 1296
  %vm4541 = vcmp.ge.s32.totalorder %v2597, 1296
  %vm4542 = vcmp.ge.s32.totalorder %v2598, 1296
  %vm4543 = vcmp.ge.s32.totalorder %v2599, 1296
  %vm4544 = vcmp.ge.s32.totalorder %v2600, 1296
  %vm4545 = vcmp.ge.s32.totalorder %v2601, 1296
  %vm4546 = vcmp.ge.s32.totalorder %v2602, 1296
  %vm4547 = vcmp.ge.s32.totalorder %v2603, 1296
  %vm4548 = vcmp.ge.s32.totalorder %v2604, 1296
  %vm4549 = vcmp.ge.s32.totalorder %v2605, 1296
  %vm4550 = vcmp.ge.s32.totalorder %v2606, 1296
  %vm4551 = vcmp.ge.s32.totalorder %v2607, 1296
  %vm4552 = vcmp.ge.s32.totalorder %v2608, 1296
  %vm4553 = vcmp.ge.s32.totalorder %v2609, 1296
  %vm4554 = vcmp.ge.s32.totalorder %v2610, 1296
  %vm4555 = vcmp.ge.s32.totalorder %v2611, 1296
  %vm4556 = vcmp.ge.s32.totalorder %v2612, 1296
  %vm4557 = vcmp.ge.s32.totalorder %v2613, 1296
  %vm4558 = vcmp.ge.s32.totalorder %v2614, 1296
  %vm4559 = vcmp.ge.s32.totalorder %v2615, 1296
  %vm4560 = vcmp.ge.s32.totalorder %v2616, 1296
  %vm4561 = vcmp.ge.s32.totalorder %v2617, 1296
  %vm4562 = vcmp.ge.s32.totalorder %v2618, 1296
  %vm4563 = vcmp.ge.s32.totalorder %v2619, 1296
  %vm4564 = vcmp.ge.s32.totalorder %v2620, 1296
  %vm4565 = vcmp.ge.s32.totalorder %v2621, 1296
  %vm4566 = vcmp.ge.s32.totalorder %v2622, 1296
  %vm4567 = vcmp.ge.s32.totalorder %v2623, 1296
  %vm4568 = vcmp.ge.s32.totalorder %v2624, 1296
  %vm4569 = vcmp.ge.s32.totalorder %v2625, 1296
  %vm4570 = vcmp.ge.s32.totalorder %v2626, 1296
  %vm4571 = vcmp.ge.s32.totalorder %v2627, 1296
  %vm4572 = vcmp.ge.s32.totalorder %v2628, 1296
  %vm4573 = vcmp.ge.s32.totalorder %v2629, 1296
  %vm4574 = vcmp.ge.s32.totalorder %v2630, 1296
  %vm4575 = vcmp.ge.s32.totalorder %v2631, 1296
  %vm4576 = vcmp.ge.s32.totalorder %v2632, 1296
  %vm4577 = vcmp.ge.s32.totalorder %v2633, 1296
  %vm4578 = vcmp.ge.s32.totalorder %v2634, 1296
  %vm4579 = vcmp.ge.s32.totalorder %v2635, 1296
  %vm4580 = vcmp.ge.s32.totalorder %v2636, 1296
  %vm4581 = vcmp.ge.s32.totalorder %v2637, 1296
  %vm4582 = vcmp.ge.s32.totalorder %v2638, 1296
  %vm4583 = vcmp.lt.s32.totalorder %v2315, 1944
  %vm4584 = vcmp.lt.s32.totalorder %v2316, 1944
  %vm4585 = vcmp.lt.s32.totalorder %v2317, 1944
  %vm4586 = vcmp.lt.s32.totalorder %v2318, 1944
  %vm4587 = vcmp.lt.s32.totalorder %v2319, 1944
  %vm4588 = vcmp.lt.s32.totalorder %v2320, 1944
  %vm4589 = vcmp.lt.s32.totalorder %v2321, 1944
  %vm4590 = vcmp.lt.s32.totalorder %v2322, 1944
  %vm4591 = vcmp.lt.s32.totalorder %v2323, 1944
  %vm4592 = vcmp.lt.s32.totalorder %v2324, 1944
  %vm4593 = vcmp.lt.s32.totalorder %v2325, 1944
  %vm4594 = vcmp.lt.s32.totalorder %v2326, 1944
  %vm4595 = vcmp.lt.s32.totalorder %v2327, 1944
  %vm4596 = vcmp.lt.s32.totalorder %v2328, 1944
  %vm4597 = vcmp.lt.s32.totalorder %v2329, 1944
  %vm4598 = vcmp.lt.s32.totalorder %v2330, 1944
  %vm4599 = vcmp.lt.s32.totalorder %v2331, 1944
  %vm4600 = vcmp.lt.s32.totalorder %v2332, 1944
  %vm4601 = vcmp.lt.s32.totalorder %v2333, 1944
  %vm4602 = vcmp.lt.s32.totalorder %v2334, 1944
  %vm4603 = vcmp.lt.s32.totalorder %v2335, 1944
  %vm4604 = vcmp.lt.s32.totalorder %v2336, 1944
  %vm4605 = vcmp.lt.s32.totalorder %v2337, 1944
  %vm4606 = vcmp.lt.s32.totalorder %v2338, 1944
  %vm4607 = vcmp.lt.s32.totalorder %v2339, 1944
  %vm4608 = vcmp.lt.s32.totalorder %v2340, 1944
  %vm4609 = vcmp.lt.s32.totalorder %v2341, 1944
  %vm4610 = vcmp.lt.s32.totalorder %v2342, 1944
  %vm4611 = vcmp.lt.s32.totalorder %v2343, 1944
  %vm4612 = vcmp.lt.s32.totalorder %v2344, 1944
  %vm4613 = vcmp.lt.s32.totalorder %v2345, 1944
  %vm4614 = vcmp.lt.s32.totalorder %v2346, 1944
  %vm4615 = vcmp.lt.s32.totalorder %v2347, 1944
  %vm4616 = vcmp.lt.s32.totalorder %v2348, 1944
  %vm4617 = vcmp.lt.s32.totalorder %v2349, 1944
  %vm4618 = vcmp.lt.s32.totalorder %v2350, 1944
  %vm4619 = vcmp.lt.s32.totalorder %v2351, 1944
  %vm4620 = vcmp.lt.s32.totalorder %v2352, 1944
  %vm4621 = vcmp.lt.s32.totalorder %v2353, 1944
  %vm4622 = vcmp.lt.s32.totalorder %v2354, 1944
  %vm4623 = vcmp.lt.s32.totalorder %v2355, 1944
  %vm4624 = vcmp.lt.s32.totalorder %v2356, 1944
  %vm4625 = vcmp.lt.s32.totalorder %v2357, 1944
  %vm4626 = vcmp.lt.s32.totalorder %v2358, 1944
  %vm4627 = vcmp.lt.s32.totalorder %v2359, 1944
  %vm4628 = vcmp.lt.s32.totalorder %v2360, 1944
  %vm4629 = vcmp.lt.s32.totalorder %v2361, 1944
  %vm4630 = vcmp.lt.s32.totalorder %v2362, 1944
  %vm4631 = vcmp.lt.s32.totalorder %v2363, 1944
  %vm4632 = vcmp.lt.s32.totalorder %v2364, 1944
  %vm4633 = vcmp.lt.s32.totalorder %v2365, 1944
  %vm4634 = vcmp.lt.s32.totalorder %v2366, 1944
  %vm4635 = vcmp.lt.s32.totalorder %v2367, 1944
  %vm4636 = vcmp.lt.s32.totalorder %v2368, 1944
  %vm4637 = vcmp.lt.s32.totalorder %v2369, 1944
  %vm4638 = vcmp.lt.s32.totalorder %v2370, 1944
  %vm4639 = vcmp.lt.s32.totalorder %v2371, 1944
  %vm4640 = vcmp.lt.s32.totalorder %v2372, 1944
  %vm4641 = vcmp.lt.s32.totalorder %v2373, 1944
  %vm4642 = vcmp.lt.s32.totalorder %v2374, 1944
  %vm4643 = vcmp.lt.s32.totalorder %v2375, 1944
  %vm4644 = vcmp.lt.s32.totalorder %v2376, 1944
  %vm4645 = vcmp.lt.s32.totalorder %v2377, 1944
  %vm4646 = vcmp.lt.s32.totalorder %v2378, 1944
  %vm4647 = vcmp.lt.s32.totalorder %v2379, 1944
  %vm4648 = vcmp.lt.s32.totalorder %v2380, 1944
  %vm4649 = vcmp.lt.s32.totalorder %v2381, 1944
  %vm4650 = vcmp.lt.s32.totalorder %v2382, 1944
  %vm4651 = vcmp.lt.s32.totalorder %v2383, 1944
  %vm4652 = vcmp.lt.s32.totalorder %v2384, 1944
  %vm4653 = vcmp.lt.s32.totalorder %v2385, 1944
  %vm4654 = vcmp.lt.s32.totalorder %v2386, 1944
  %vm4655 = vcmp.lt.s32.totalorder %v2387, 1944
  %vm4656 = vcmp.lt.s32.totalorder %v2388, 1944
  %vm4657 = vcmp.lt.s32.totalorder %v2389, 1944
  %vm4658 = vcmp.lt.s32.totalorder %v2390, 1944
  %vm4659 = vcmp.lt.s32.totalorder %v2391, 1944
  %vm4660 = vcmp.lt.s32.totalorder %v2392, 1944
  %vm4661 = vcmp.lt.s32.totalorder %v2393, 1944
  %vm4662 = vcmp.lt.s32.totalorder %v2394, 1944
  %vm4663 = vcmp.lt.s32.totalorder %v2395, 1944
  %vm4664 = vcmp.lt.s32.totalorder %v2396, 1944
  %vm4665 = vcmp.lt.s32.totalorder %v2397, 1944
  %vm4666 = vcmp.lt.s32.totalorder %v2398, 1944
  %vm4667 = vcmp.lt.s32.totalorder %v2399, 1944
  %vm4668 = vcmp.lt.s32.totalorder %v2400, 1944
  %vm4669 = vcmp.lt.s32.totalorder %v2401, 1944
  %vm4670 = vcmp.lt.s32.totalorder %v2402, 1944
  %vm4671 = vcmp.lt.s32.totalorder %v2403, 1944
  %vm4672 = vcmp.lt.s32.totalorder %v2404, 1944
  %vm4673 = vcmp.lt.s32.totalorder %v2405, 1944
  %vm4674 = vcmp.lt.s32.totalorder %v2406, 1944
  %vm4675 = vcmp.lt.s32.totalorder %v2407, 1944
  %vm4676 = vcmp.lt.s32.totalorder %v2408, 1944
  %vm4677 = vcmp.lt.s32.totalorder %v2409, 1944
  %vm4678 = vcmp.lt.s32.totalorder %v2410, 1944
  %vm4679 = vcmp.lt.s32.totalorder %v2411, 1944
  %vm4680 = vcmp.lt.s32.totalorder %v2412, 1944
  %vm4681 = vcmp.lt.s32.totalorder %v2413, 1944
  %vm4682 = vcmp.lt.s32.totalorder %v2414, 1944
  %vm4683 = vcmp.lt.s32.totalorder %v2415, 1944
  %vm4684 = vcmp.lt.s32.totalorder %v2416, 1944
  %vm4685 = vcmp.lt.s32.totalorder %v2417, 1944
  %vm4686 = vcmp.lt.s32.totalorder %v2418, 1944
  %vm4687 = vcmp.lt.s32.totalorder %v2419, 1944
  %vm4688 = vcmp.lt.s32.totalorder %v2420, 1944
  %vm4689 = vcmp.lt.s32.totalorder %v2421, 1944
  %vm4690 = vcmp.lt.s32.totalorder %v2422, 1944
  %vm4691 = vcmp.lt.s32.totalorder %v2423, 1944
  %vm4692 = vcmp.lt.s32.totalorder %v2424, 1944
  %vm4693 = vcmp.lt.s32.totalorder %v2425, 1944
  %vm4694 = vcmp.lt.s32.totalorder %v2426, 1944
  %vm4695 = vcmp.lt.s32.totalorder %v2427, 1944
  %vm4696 = vcmp.lt.s32.totalorder %v2428, 1944
  %vm4697 = vcmp.lt.s32.totalorder %v2429, 1944
  %vm4698 = vcmp.lt.s32.totalorder %v2430, 1944
  %vm4699 = vcmp.lt.s32.totalorder %v2431, 1944
  %vm4700 = vcmp.lt.s32.totalorder %v2432, 1944
  %vm4701 = vcmp.lt.s32.totalorder %v2433, 1944
  %vm4702 = vcmp.lt.s32.totalorder %v2434, 1944
  %vm4703 = vcmp.lt.s32.totalorder %v2435, 1944
  %vm4704 = vcmp.lt.s32.totalorder %v2436, 1944
  %vm4705 = vcmp.lt.s32.totalorder %v2437, 1944
  %vm4706 = vcmp.lt.s32.totalorder %v2438, 1944
  %vm4707 = vcmp.lt.s32.totalorder %v2439, 1944
  %vm4708 = vcmp.lt.s32.totalorder %v2440, 1944
  %vm4709 = vcmp.lt.s32.totalorder %v2441, 1944
  %vm4710 = vcmp.lt.s32.totalorder %v2442, 1944
  %vm4711 = vcmp.lt.s32.totalorder %v2443, 1944
  %vm4712 = vcmp.lt.s32.totalorder %v2444, 1944
  %vm4713 = vcmp.lt.s32.totalorder %v2445, 1944
  %vm4714 = vcmp.lt.s32.totalorder %v2446, 1944
  %vm4715 = vcmp.lt.s32.totalorder %v2447, 1944
  %vm4716 = vcmp.lt.s32.totalorder %v2448, 1944
  %vm4717 = vcmp.lt.s32.totalorder %v2449, 1944
  %vm4718 = vcmp.lt.s32.totalorder %v2450, 1944
  %vm4719 = vcmp.lt.s32.totalorder %v2451, 1944
  %vm4720 = vcmp.lt.s32.totalorder %v2452, 1944
  %vm4721 = vcmp.lt.s32.totalorder %v2453, 1944
  %vm4722 = vcmp.lt.s32.totalorder %v2454, 1944
  %vm4723 = vcmp.lt.s32.totalorder %v2455, 1944
  %vm4724 = vcmp.lt.s32.totalorder %v2456, 1944
  %vm4725 = vcmp.lt.s32.totalorder %v2457, 1944
  %vm4726 = vcmp.lt.s32.totalorder %v2458, 1944
  %vm4727 = vcmp.lt.s32.totalorder %v2459, 1944
  %vm4728 = vcmp.lt.s32.totalorder %v2460, 1944
  %vm4729 = vcmp.lt.s32.totalorder %v2461, 1944
  %vm4730 = vcmp.lt.s32.totalorder %v2462, 1944
  %vm4731 = vcmp.lt.s32.totalorder %v2463, 1944
  %vm4732 = vcmp.lt.s32.totalorder %v2464, 1944
  %vm4733 = vcmp.lt.s32.totalorder %v2465, 1944
  %vm4734 = vcmp.lt.s32.totalorder %v2466, 1944
  %vm4735 = vcmp.lt.s32.totalorder %v2467, 1944
  %vm4736 = vcmp.lt.s32.totalorder %v2468, 1944
  %vm4737 = vcmp.lt.s32.totalorder %v2469, 1944
  %vm4738 = vcmp.lt.s32.totalorder %v2470, 1944
  %vm4739 = vcmp.lt.s32.totalorder %v2471, 1944
  %vm4740 = vcmp.lt.s32.totalorder %v2472, 1944
  %vm4741 = vcmp.lt.s32.totalorder %v2473, 1944
  %vm4742 = vcmp.lt.s32.totalorder %v2474, 1944
  %vm4743 = vcmp.lt.s32.totalorder %v2475, 1944
  %vm4744 = vcmp.lt.s32.totalorder %v2476, 1944
  %vm4745 = vcmp.lt.s32.totalorder %v2477, 1944
  %vm4746 = vcmp.lt.s32.totalorder %v2478, 1944
  %vm4747 = vcmp.lt.s32.totalorder %v2479, 1944
  %vm4748 = vcmp.lt.s32.totalorder %v2480, 1944
  %vm4749 = vcmp.lt.s32.totalorder %v2481, 1944
  %vm4750 = vcmp.lt.s32.totalorder %v2482, 1944
  %vm4751 = vcmp.lt.s32.totalorder %v2483, 1944
  %vm4752 = vcmp.lt.s32.totalorder %v2484, 1944
  %vm4753 = vcmp.lt.s32.totalorder %v2485, 1944
  %vm4754 = vcmp.lt.s32.totalorder %v2486, 1944
  %vm4755 = vcmp.lt.s32.totalorder %v2487, 1944
  %vm4756 = vcmp.lt.s32.totalorder %v2488, 1944
  %vm4757 = vcmp.lt.s32.totalorder %v2489, 1944
  %vm4758 = vcmp.lt.s32.totalorder %v2490, 1944
  %vm4759 = vcmp.lt.s32.totalorder %v2491, 1944
  %vm4760 = vcmp.lt.s32.totalorder %v2492, 1944
  %vm4761 = vcmp.lt.s32.totalorder %v2493, 1944
  %vm4762 = vcmp.lt.s32.totalorder %v2494, 1944
  %vm4763 = vcmp.lt.s32.totalorder %v2495, 1944
  %vm4764 = vcmp.lt.s32.totalorder %v2496, 1944
  %vm4765 = vcmp.lt.s32.totalorder %v2497, 1944
  %vm4766 = vcmp.lt.s32.totalorder %v2498, 1944
  %vm4767 = vcmp.lt.s32.totalorder %v2499, 1944
  %vm4768 = vcmp.lt.s32.totalorder %v2500, 1944
  %vm4769 = vcmp.lt.s32.totalorder %v2501, 1944
  %vm4770 = vcmp.lt.s32.totalorder %v2502, 1944
  %vm4771 = vcmp.lt.s32.totalorder %v2503, 1944
  %vm4772 = vcmp.lt.s32.totalorder %v2504, 1944
  %vm4773 = vcmp.lt.s32.totalorder %v2505, 1944
  %vm4774 = vcmp.lt.s32.totalorder %v2506, 1944
  %vm4775 = vcmp.lt.s32.totalorder %v2507, 1944
  %vm4776 = vcmp.lt.s32.totalorder %v2508, 1944
  %vm4777 = vcmp.lt.s32.totalorder %v2509, 1944
  %vm4778 = vcmp.lt.s32.totalorder %v2510, 1944
  %vm4779 = vcmp.lt.s32.totalorder %v2511, 1944
  %vm4780 = vcmp.lt.s32.totalorder %v2512, 1944
  %vm4781 = vcmp.lt.s32.totalorder %v2513, 1944
  %vm4782 = vcmp.lt.s32.totalorder %v2514, 1944
  %vm4783 = vcmp.lt.s32.totalorder %v2515, 1944
  %vm4784 = vcmp.lt.s32.totalorder %v2516, 1944
  %vm4785 = vcmp.lt.s32.totalorder %v2517, 1944
  %vm4786 = vcmp.lt.s32.totalorder %v2518, 1944
  %vm4787 = vcmp.lt.s32.totalorder %v2519, 1944
  %vm4788 = vcmp.lt.s32.totalorder %v2520, 1944
  %vm4789 = vcmp.lt.s32.totalorder %v2521, 1944
  %vm4790 = vcmp.lt.s32.totalorder %v2522, 1944
  %vm4791 = vcmp.lt.s32.totalorder %v2523, 1944
  %vm4792 = vcmp.lt.s32.totalorder %v2524, 1944
  %vm4793 = vcmp.lt.s32.totalorder %v2525, 1944
  %vm4794 = vcmp.lt.s32.totalorder %v2526, 1944
  %vm4795 = vcmp.lt.s32.totalorder %v2527, 1944
  %vm4796 = vcmp.lt.s32.totalorder %v2528, 1944
  %vm4797 = vcmp.lt.s32.totalorder %v2529, 1944
  %vm4798 = vcmp.lt.s32.totalorder %v2530, 1944
  %vm4799 = vcmp.lt.s32.totalorder %v2531, 1944
  %vm4800 = vcmp.lt.s32.totalorder %v2532, 1944
  %vm4801 = vcmp.lt.s32.totalorder %v2533, 1944
  %vm4802 = vcmp.lt.s32.totalorder %v2534, 1944
  %vm4803 = vcmp.lt.s32.totalorder %v2535, 1944
  %vm4804 = vcmp.lt.s32.totalorder %v2536, 1944
  %vm4805 = vcmp.lt.s32.totalorder %v2537, 1944
  %vm4806 = vcmp.lt.s32.totalorder %v2538, 1944
  %vm4807 = vcmp.lt.s32.totalorder %v2539, 1944
  %vm4808 = vcmp.lt.s32.totalorder %v2540, 1944
  %vm4809 = vcmp.lt.s32.totalorder %v2541, 1944
  %vm4810 = vcmp.lt.s32.totalorder %v2542, 1944
  %vm4811 = vcmp.lt.s32.totalorder %v2543, 1944
  %vm4812 = vcmp.lt.s32.totalorder %v2544, 1944
  %vm4813 = vcmp.lt.s32.totalorder %v2545, 1944
  %vm4814 = vcmp.lt.s32.totalorder %v2546, 1944
  %vm4815 = vcmp.lt.s32.totalorder %v2547, 1944
  %vm4816 = vcmp.lt.s32.totalorder %v2548, 1944
  %vm4817 = vcmp.lt.s32.totalorder %v2549, 1944
  %vm4818 = vcmp.lt.s32.totalorder %v2550, 1944
  %vm4819 = vcmp.lt.s32.totalorder %v2551, 1944
  %vm4820 = vcmp.lt.s32.totalorder %v2552, 1944
  %vm4821 = vcmp.lt.s32.totalorder %v2553, 1944
  %vm4822 = vcmp.lt.s32.totalorder %v2554, 1944
  %vm4823 = vcmp.lt.s32.totalorder %v2555, 1944
  %vm4824 = vcmp.lt.s32.totalorder %v2556, 1944
  %vm4825 = vcmp.lt.s32.totalorder %v2557, 1944
  %vm4826 = vcmp.lt.s32.totalorder %v2558, 1944
  %vm4827 = vcmp.lt.s32.totalorder %v2559, 1944
  %vm4828 = vcmp.lt.s32.totalorder %v2560, 1944
  %vm4829 = vcmp.lt.s32.totalorder %v2561, 1944
  %vm4830 = vcmp.lt.s32.totalorder %v2562, 1944
  %vm4831 = vcmp.lt.s32.totalorder %v2563, 1944
  %vm4832 = vcmp.lt.s32.totalorder %v2564, 1944
  %vm4833 = vcmp.lt.s32.totalorder %v2565, 1944
  %vm4834 = vcmp.lt.s32.totalorder %v2566, 1944
  %vm4835 = vcmp.lt.s32.totalorder %v2567, 1944
  %vm4836 = vcmp.lt.s32.totalorder %v2568, 1944
  %vm4837 = vcmp.lt.s32.totalorder %v2569, 1944
  %vm4838 = vcmp.lt.s32.totalorder %v2570, 1944
  %vm4839 = vcmp.lt.s32.totalorder %v2571, 1944
  %vm4840 = vcmp.lt.s32.totalorder %v2572, 1944
  %vm4841 = vcmp.lt.s32.totalorder %v2573, 1944
  %vm4842 = vcmp.lt.s32.totalorder %v2574, 1944
  %vm4843 = vcmp.lt.s32.totalorder %v2575, 1944
  %vm4844 = vcmp.lt.s32.totalorder %v2576, 1944
  %vm4845 = vcmp.lt.s32.totalorder %v2577, 1944
  %vm4846 = vcmp.lt.s32.totalorder %v2578, 1944
  %vm4847 = vcmp.lt.s32.totalorder %v2579, 1944
  %vm4848 = vcmp.lt.s32.totalorder %v2580, 1944
  %vm4849 = vcmp.lt.s32.totalorder %v2581, 1944
  %vm4850 = vcmp.lt.s32.totalorder %v2582, 1944
  %vm4851 = vcmp.lt.s32.totalorder %v2583, 1944
  %vm4852 = vcmp.lt.s32.totalorder %v2584, 1944
  %vm4853 = vcmp.lt.s32.totalorder %v2585, 1944
  %vm4854 = vcmp.lt.s32.totalorder %v2586, 1944
  %vm4855 = vcmp.lt.s32.totalorder %v2587, 1944
  %vm4856 = vcmp.lt.s32.totalorder %v2588, 1944
  %vm4857 = vcmp.lt.s32.totalorder %v2589, 1944
  %vm4858 = vcmp.lt.s32.totalorder %v2590, 1944
  %vm4859 = vcmp.lt.s32.totalorder %v2591, 1944
  %vm4860 = vcmp.lt.s32.totalorder %v2592, 1944
  %vm4861 = vcmp.lt.s32.totalorder %v2593, 1944
  %vm4862 = vcmp.lt.s32.totalorder %v2594, 1944
  %vm4863 = vcmp.lt.s32.totalorder %v2595, 1944
  %vm4864 = vcmp.lt.s32.totalorder %v2596, 1944
  %vm4865 = vcmp.lt.s32.totalorder %v2597, 1944
  %vm4866 = vcmp.lt.s32.totalorder %v2598, 1944
  %vm4867 = vcmp.lt.s32.totalorder %v2599, 1944
  %vm4868 = vcmp.lt.s32.totalorder %v2600, 1944
  %vm4869 = vcmp.lt.s32.totalorder %v2601, 1944
  %vm4870 = vcmp.lt.s32.totalorder %v2602, 1944
  %vm4871 = vcmp.lt.s32.totalorder %v2603, 1944
  %vm4872 = vcmp.lt.s32.totalorder %v2604, 1944
  %vm4873 = vcmp.lt.s32.totalorder %v2605, 1944
  %vm4874 = vcmp.lt.s32.totalorder %v2606, 1944
  %vm4875 = vcmp.lt.s32.totalorder %v2607, 1944
  %vm4876 = vcmp.lt.s32.totalorder %v2608, 1944
  %vm4877 = vcmp.lt.s32.totalorder %v2609, 1944
  %vm4878 = vcmp.lt.s32.totalorder %v2610, 1944
  %vm4879 = vcmp.lt.s32.totalorder %v2611, 1944
  %vm4880 = vcmp.lt.s32.totalorder %v2612, 1944
  %vm4881 = vcmp.lt.s32.totalorder %v2613, 1944
  %vm4882 = vcmp.lt.s32.totalorder %v2614, 1944
  %vm4883 = vcmp.lt.s32.totalorder %v2615, 1944
  %vm4884 = vcmp.lt.s32.totalorder %v2616, 1944
  %vm4885 = vcmp.lt.s32.totalorder %v2617, 1944
  %vm4886 = vcmp.lt.s32.totalorder %v2618, 1944
  %vm4887 = vcmp.lt.s32.totalorder %v2619, 1944
  %vm4888 = vcmp.lt.s32.totalorder %v2620, 1944
  %vm4889 = vcmp.lt.s32.totalorder %v2621, 1944
  %vm4890 = vcmp.lt.s32.totalorder %v2622, 1944
  %vm4891 = vcmp.lt.s32.totalorder %v2623, 1944
  %vm4892 = vcmp.lt.s32.totalorder %v2624, 1944
  %vm4893 = vcmp.lt.s32.totalorder %v2625, 1944
  %vm4894 = vcmp.lt.s32.totalorder %v2626, 1944
  %vm4895 = vcmp.lt.s32.totalorder %v2627, 1944
  %vm4896 = vcmp.lt.s32.totalorder %v2628, 1944
  %vm4897 = vcmp.lt.s32.totalorder %v2629, 1944
  %vm4898 = vcmp.lt.s32.totalorder %v2630, 1944
  %vm4899 = vcmp.lt.s32.totalorder %v2631, 1944
  %vm4900 = vcmp.lt.s32.totalorder %v2632, 1944
  %vm4901 = vcmp.lt.s32.totalorder %v2633, 1944
  %vm4902 = vcmp.lt.s32.totalorder %v2634, 1944
  %vm4903 = vcmp.lt.s32.totalorder %v2635, 1944
  %vm4904 = vcmp.lt.s32.totalorder %v2636, 1944
  %vm4905 = vcmp.lt.s32.totalorder %v2637, 1944
  %vm4906 = vcmp.lt.s32.totalorder %v2638, 1944
  %vm4907 = vmand %vm4259, %vm4583
  %vm4908 = vmand %vm4260, %vm4584
  %vm4909 = vmand %vm4261, %vm4585
  %vm4910 = vmand %vm4262, %vm4586
  %vm4911 = vmand %vm4263, %vm4587
  %vm4912 = vmand %vm4264, %vm4588
  %vm4913 = vmand %vm4265, %vm4589
  %vm4914 = vmand %vm4266, %vm4590
  %vm4915 = vmand %vm4267, %vm4591
  %vm4916 = vmand %vm4268, %vm4592
  %vm4917 = vmand %vm4269, %vm4593
  %vm4918 = vmand %vm4270, %vm4594
  %vm4919 = vmand %vm4271, %vm4595
  %vm4920 = vmand %vm4272, %vm4596
  %vm4921 = vmand %vm4273, %vm4597
  %vm4922 = vmand %vm4274, %vm4598
  %vm4923 = vmand %vm4275, %vm4599
  %vm4924 = vmand %vm4276, %vm4600
  %vm4925 = vmand %vm4277, %vm4601
  %vm4926 = vmand %vm4278, %vm4602
  %vm4927 = vmand %vm4279, %vm4603
  %vm4928 = vmand %vm4280, %vm4604
  %vm4929 = vmand %vm4281, %vm4605
  %vm4930 = vmand %vm4282, %vm4606
  %vm4931 = vmand %vm4283, %vm4607
  %vm4932 = vmand %vm4284, %vm4608
  %vm4933 = vmand %vm4285, %vm4609
  %vm4934 = vmand %vm4286, %vm4610
  %vm4935 = vmand %vm4287, %vm4611
  %vm4936 = vmand %vm4288, %vm4612
  %vm4937 = vmand %vm4289, %vm4613
  %vm4938 = vmand %vm4290, %vm4614
  %vm4939 = vmand %vm4291, %vm4615
  %vm4940 = vmand %vm4292, %vm4616
  %vm4941 = vmand %vm4293, %vm4617
  %vm4942 = vmand %vm4294, %vm4618
  %vm4943 = vmand %vm4295, %vm4619
  %vm4944 = vmand %vm4296, %vm4620
  %vm4945 = vmand %vm4297, %vm4621
  %vm4946 = vmand %vm4298, %vm4622
  %vm4947 = vmand %vm4299, %vm4623
  %vm4948 = vmand %vm4300, %vm4624
  %vm4949 = vmand %vm4301, %vm4625
  %vm4950 = vmand %vm4302, %vm4626
  %vm4951 = vmand %vm4303, %vm4627
  %vm4952 = vmand %vm4304, %vm4628
  %vm4953 = vmand %vm4305, %vm4629
  %vm4954 = vmand %vm4306, %vm4630
  %vm4955 = vmand %vm4307, %vm4631
  %vm4956 = vmand %vm4308, %vm4632
  %vm4957 = vmand %vm4309, %vm4633
  %vm4958 = vmand %vm4310, %vm4634
  %vm4959 = vmand %vm4311, %vm4635
  %vm4960 = vmand %vm4312, %vm4636
  %vm4961 = vmand %vm4313, %vm4637
  %vm4962 = vmand %vm4314, %vm4638
  %vm4963 = vmand %vm4315, %vm4639
  %vm4964 = vmand %vm4316, %vm4640
  %vm4965 = vmand %vm4317, %vm4641
  %vm4966 = vmand %vm4318, %vm4642
  %vm4967 = vmand %vm4319, %vm4643
  %vm4968 = vmand %vm4320, %vm4644
  %vm4969 = vmand %vm4321, %vm4645
  %vm4970 = vmand %vm4322, %vm4646
  %vm4971 = vmand %vm4323, %vm4647
  %vm4972 = vmand %vm4324, %vm4648
  %vm4973 = vmand %vm4325, %vm4649
  %vm4974 = vmand %vm4326, %vm4650
  %vm4975 = vmand %vm4327, %vm4651
  %vm4976 = vmand %vm4328, %vm4652
  %vm4977 = vmand %vm4329, %vm4653
  %vm4978 = vmand %vm4330, %vm4654
  %vm4979 = vmand %vm4331, %vm4655
  %vm4980 = vmand %vm4332, %vm4656
  %vm4981 = vmand %vm4333, %vm4657
  %vm4982 = vmand %vm4334, %vm4658
  %vm4983 = vmand %vm4335, %vm4659
  %vm4984 = vmand %vm4336, %vm4660
  %vm4985 = vmand %vm4337, %vm4661
  %vm4986 = vmand %vm4338, %vm4662
  %vm4987 = vmand %vm4339, %vm4663
  %vm4988 = vmand %vm4340, %vm4664
  %vm4989 = vmand %vm4341, %vm4665
  %vm4990 = vmand %vm4342, %vm4666
  %vm4991 = vmand %vm4343, %vm4667
  %vm4992 = vmand %vm4344, %vm4668
  %vm4993 = vmand %vm4345, %vm4669
  %vm4994 = vmand %vm4346, %vm4670
  %vm4995 = vmand %vm4347, %vm4671
  %vm4996 = vmand %vm4348, %vm4672
  %vm4997 = vmand %vm4349, %vm4673
  %vm4998 = vmand %vm4350, %vm4674
  %vm4999 = vmand %vm4351, %vm4675
  %vm5000 = vmand %vm4352, %vm4676
  %vm5001 = vmand %vm4353, %vm4677
  %vm5002 = vmand %vm4354, %vm4678
  %vm5003 = vmand %vm4355, %vm4679
  %vm5004 = vmand %vm4356, %vm4680
  %vm5005 = vmand %vm4357, %vm4681
  %vm5006 = vmand %vm4358, %vm4682
  %vm5007 = vmand %vm4359, %vm4683
  %vm5008 = vmand %vm4360, %vm4684
  %vm5009 = vmand %vm4361, %vm4685
  %vm5010 = vmand %vm4362, %vm4686
  %vm5011 = vmand %vm4363, %vm4687
  %vm5012 = vmand %vm4364, %vm4688
  %vm5013 = vmand %vm4365, %vm4689
  %vm5014 = vmand %vm4366, %vm4690
  %vm5015 = vmand %vm4367, %vm4691
  %vm5016 = vmand %vm4368, %vm4692
  %vm5017 = vmand %vm4369, %vm4693
  %vm5018 = vmand %vm4370, %vm4694
  %vm5019 = vmand %vm4371, %vm4695
  %vm5020 = vmand %vm4372, %vm4696
  %vm5021 = vmand %vm4373, %vm4697
  %vm5022 = vmand %vm4374, %vm4698
  %vm5023 = vmand %vm4375, %vm4699
  %vm5024 = vmand %vm4376, %vm4700
  %vm5025 = vmand %vm4377, %vm4701
  %vm5026 = vmand %vm4378, %vm4702
  %vm5027 = vmand %vm4379, %vm4703
  %vm5028 = vmand %vm4380, %vm4704
  %vm5029 = vmand %vm4381, %vm4705
  %vm5030 = vmand %vm4382, %vm4706
  %vm5031 = vmand %vm4383, %vm4707
  %vm5032 = vmand %vm4384, %vm4708
  %vm5033 = vmand %vm4385, %vm4709
  %vm5034 = vmand %vm4386, %vm4710
  %vm5035 = vmand %vm4387, %vm4711
  %vm5036 = vmand %vm4388, %vm4712
  %vm5037 = vmand %vm4389, %vm4713
  %vm5038 = vmand %vm4390, %vm4714
  %vm5039 = vmand %vm4391, %vm4715
  %vm5040 = vmand %vm4392, %vm4716
  %vm5041 = vmand %vm4393, %vm4717
  %vm5042 = vmand %vm4394, %vm4718
  %vm5043 = vmand %vm4395, %vm4719
  %vm5044 = vmand %vm4396, %vm4720
  %vm5045 = vmand %vm4397, %vm4721
  %vm5046 = vmand %vm4398, %vm4722
  %vm5047 = vmand %vm4399, %vm4723
  %vm5048 = vmand %vm4400, %vm4724
  %vm5049 = vmand %vm4401, %vm4725
  %vm5050 = vmand %vm4402, %vm4726
  %vm5051 = vmand %vm4403, %vm4727
  %vm5052 = vmand %vm4404, %vm4728
  %vm5053 = vmand %vm4405, %vm4729
  %vm5054 = vmand %vm4406, %vm4730
  %vm5055 = vmand %vm4407, %vm4731
  %vm5056 = vmand %vm4408, %vm4732
  %vm5057 = vmand %vm4409, %vm4733
  %vm5058 = vmand %vm4410, %vm4734
  %vm5059 = vmand %vm4411, %vm4735
  %vm5060 = vmand %vm4412, %vm4736
  %vm5061 = vmand %vm4413, %vm4737
  %vm5062 = vmand %vm4414, %vm4738
  %vm5063 = vmand %vm4415, %vm4739
  %vm5064 = vmand %vm4416, %vm4740
  %vm5065 = vmand %vm4417, %vm4741
  %vm5066 = vmand %vm4418, %vm4742
  %vm5067 = vmand %vm4419, %vm4743
  %vm5068 = vmand %vm4420, %vm4744
  %vm5069 = vmand %vm4421, %vm4745
  %vm5070 = vmand %vm4422, %vm4746
  %vm5071 = vmand %vm4423, %vm4747
  %vm5072 = vmand %vm4424, %vm4748
  %vm5073 = vmand %vm4425, %vm4749
  %vm5074 = vmand %vm4426, %vm4750
  %vm5075 = vmand %vm4427, %vm4751
  %vm5076 = vmand %vm4428, %vm4752
  %vm5077 = vmand %vm4429, %vm4753
  %vm5078 = vmand %vm4430, %vm4754
  %vm5079 = vmand %vm4431, %vm4755
  %vm5080 = vmand %vm4432, %vm4756
  %vm5081 = vmand %vm4433, %vm4757
  %vm5082 = vmand %vm4434, %vm4758
  %vm5083 = vmand %vm4435, %vm4759
  %vm5084 = vmand %vm4436, %vm4760
  %vm5085 = vmand %vm4437, %vm4761
  %vm5086 = vmand %vm4438, %vm4762
  %vm5087 = vmand %vm4439, %vm4763
  %vm5088 = vmand %vm4440, %vm4764
  %vm5089 = vmand %vm4441, %vm4765
  %vm5090 = vmand %vm4442, %vm4766
  %vm5091 = vmand %vm4443, %vm4767
  %vm5092 = vmand %vm4444, %vm4768
  %vm5093 = vmand %vm4445, %vm4769
  %vm5094 = vmand %vm4446, %vm4770
  %vm5095 = vmand %vm4447, %vm4771
  %vm5096 = vmand %vm4448, %vm4772
  %vm5097 = vmand %vm4449, %vm4773
  %vm5098 = vmand %vm4450, %vm4774
  %vm5099 = vmand %vm4451, %vm4775
  %vm5100 = vmand %vm4452, %vm4776
  %vm5101 = vmand %vm4453, %vm4777
  %vm5102 = vmand %vm4454, %vm4778
  %vm5103 = vmand %vm4455, %vm4779
  %vm5104 = vmand %vm4456, %vm4780
  %vm5105 = vmand %vm4457, %vm4781
  %vm5106 = vmand %vm4458, %vm4782
  %vm5107 = vmand %vm4459, %vm4783
  %vm5108 = vmand %vm4460, %vm4784
  %vm5109 = vmand %vm4461, %vm4785
  %vm5110 = vmand %vm4462, %vm4786
  %vm5111 = vmand %vm4463, %vm4787
  %vm5112 = vmand %vm4464, %vm4788
  %vm5113 = vmand %vm4465, %vm4789
  %vm5114 = vmand %vm4466, %vm4790
  %vm5115 = vmand %vm4467, %vm4791
  %vm5116 = vmand %vm4468, %vm4792
  %vm5117 = vmand %vm4469, %vm4793
  %vm5118 = vmand %vm4470, %vm4794
  %vm5119 = vmand %vm4471, %vm4795
  %vm5120 = vmand %vm4472, %vm4796
  %vm5121 = vmand %vm4473, %vm4797
  %vm5122 = vmand %vm4474, %vm4798
  %vm5123 = vmand %vm4475, %vm4799
  %vm5124 = vmand %vm4476, %vm4800
  %vm5125 = vmand %vm4477, %vm4801
  %vm5126 = vmand %vm4478, %vm4802
  %vm5127 = vmand %vm4479, %vm4803
  %vm5128 = vmand %vm4480, %vm4804
  %vm5129 = vmand %vm4481, %vm4805
  %vm5130 = vmand %vm4482, %vm4806
  %vm5131 = vmand %vm4483, %vm4807
  %vm5132 = vmand %vm4484, %vm4808
  %vm5133 = vmand %vm4485, %vm4809
  %vm5134 = vmand %vm4486, %vm4810
  %vm5135 = vmand %vm4487, %vm4811
  %vm5136 = vmand %vm4488, %vm4812
  %vm5137 = vmand %vm4489, %vm4813
  %vm5138 = vmand %vm4490, %vm4814
  %vm5139 = vmand %vm4491, %vm4815
  %vm5140 = vmand %vm4492, %vm4816
  %vm5141 = vmand %vm4493, %vm4817
  %vm5142 = vmand %vm4494, %vm4818
  %vm5143 = vmand %vm4495, %vm4819
  %vm5144 = vmand %vm4496, %vm4820
  %vm5145 = vmand %vm4497, %vm4821
  %vm5146 = vmand %vm4498, %vm4822
  %vm5147 = vmand %vm4499, %vm4823
  %vm5148 = vmand %vm4500, %vm4824
  %vm5149 = vmand %vm4501, %vm4825
  %vm5150 = vmand %vm4502, %vm4826
  %vm5151 = vmand %vm4503, %vm4827
  %vm5152 = vmand %vm4504, %vm4828
  %vm5153 = vmand %vm4505, %vm4829
  %vm5154 = vmand %vm4506, %vm4830
  %vm5155 = vmand %vm4507, %vm4831
  %vm5156 = vmand %vm4508, %vm4832
  %vm5157 = vmand %vm4509, %vm4833
  %vm5158 = vmand %vm4510, %vm4834
  %vm5159 = vmand %vm4511, %vm4835
  %vm5160 = vmand %vm4512, %vm4836
  %vm5161 = vmand %vm4513, %vm4837
  %vm5162 = vmand %vm4514, %vm4838
  %vm5163 = vmand %vm4515, %vm4839
  %vm5164 = vmand %vm4516, %vm4840
  %vm5165 = vmand %vm4517, %vm4841
  %vm5166 = vmand %vm4518, %vm4842
  %vm5167 = vmand %vm4519, %vm4843
  %vm5168 = vmand %vm4520, %vm4844
  %vm5169 = vmand %vm4521, %vm4845
  %vm5170 = vmand %vm4522, %vm4846
  %vm5171 = vmand %vm4523, %vm4847
  %vm5172 = vmand %vm4524, %vm4848
  %vm5173 = vmand %vm4525, %vm4849
  %vm5174 = vmand %vm4526, %vm4850
  %vm5175 = vmand %vm4527, %vm4851
  %vm5176 = vmand %vm4528, %vm4852
  %vm5177 = vmand %vm4529, %vm4853
  %vm5178 = vmand %vm4530, %vm4854
  %vm5179 = vmand %vm4531, %vm4855
  %vm5180 = vmand %vm4532, %vm4856
  %vm5181 = vmand %vm4533, %vm4857
  %vm5182 = vmand %vm4534, %vm4858
  %vm5183 = vmand %vm4535, %vm4859
  %vm5184 = vmand %vm4536, %vm4860
  %vm5185 = vmand %vm4537, %vm4861
  %vm5186 = vmand %vm4538, %vm4862
  %vm5187 = vmand %vm4539, %vm4863
  %vm5188 = vmand %vm4540, %vm4864
  %vm5189 = vmand %vm4541, %vm4865
  %vm5190 = vmand %vm4542, %vm4866
  %vm5191 = vmand %vm4543, %vm4867
  %vm5192 = vmand %vm4544, %vm4868
  %vm5193 = vmand %vm4545, %vm4869
  %vm5194 = vmand %vm4546, %vm4870
  %vm5195 = vmand %vm4547, %vm4871
  %vm5196 = vmand %vm4548, %vm4872
  %vm5197 = vmand %vm4549, %vm4873
  %vm5198 = vmand %vm4550, %vm4874
  %vm5199 = vmand %vm4551, %vm4875
  %vm5200 = vmand %vm4552, %vm4876
  %vm5201 = vmand %vm4553, %vm4877
  %vm5202 = vmand %vm4554, %vm4878
  %vm5203 = vmand %vm4555, %vm4879
  %vm5204 = vmand %vm4556, %vm4880
  %vm5205 = vmand %vm4557, %vm4881
  %vm5206 = vmand %vm4558, %vm4882
  %vm5207 = vmand %vm4559, %vm4883
  %vm5208 = vmand %vm4560, %vm4884
  %vm5209 = vmand %vm4561, %vm4885
  %vm5210 = vmand %vm4562, %vm4886
  %vm5211 = vmand %vm4563, %vm4887
  %vm5212 = vmand %vm4564, %vm4888
  %vm5213 = vmand %vm4565, %vm4889
  %vm5214 = vmand %vm4566, %vm4890
  %vm5215 = vmand %vm4567, %vm4891
  %vm5216 = vmand %vm4568, %vm4892
  %vm5217 = vmand %vm4569, %vm4893
  %vm5218 = vmand %vm4570, %vm4894
  %vm5219 = vmand %vm4571, %vm4895
  %vm5220 = vmand %vm4572, %vm4896
  %vm5221 = vmand %vm4573, %vm4897
  %vm5222 = vmand %vm4574, %vm4898
  %vm5223 = vmand %vm4575, %vm4899
  %vm5224 = vmand %vm4576, %vm4900
  %vm5225 = vmand %vm4577, %vm4901
  %vm5226 = vmand %vm4578, %vm4902
  %vm5227 = vmand %vm4579, %vm4903
  %vm5228 = vmand %vm4580, %vm4904
  %vm5229 = vmand %vm4581, %vm4905
  %vm5230 = vmand %vm4582, %vm4906
  %vm5231 = vmor %vm3935, %vm4907
  %vm5232 = vmor %vm3936, %vm4908
  %vm5233 = vmor %vm3937, %vm4909
  %vm5234 = vmor %vm3938, %vm4910
  %vm5235 = vmor %vm3939, %vm4911
  %vm5236 = vmor %vm3940, %vm4912
  %vm5237 = vmor %vm3941, %vm4913
  %vm5238 = vmor %vm3942, %vm4914
  %vm5239 = vmor %vm3943, %vm4915
  %vm5240 = vmor %vm3944, %vm4916
  %vm5241 = vmor %vm3945, %vm4917
  %vm5242 = vmor %vm3946, %vm4918
  %vm5243 = vmor %vm3947, %vm4919
  %vm5244 = vmor %vm3948, %vm4920
  %vm5245 = vmor %vm3949, %vm4921
  %vm5246 = vmor %vm3950, %vm4922
  %vm5247 = vmor %vm3951, %vm4923
  %vm5248 = vmor %vm3952, %vm4924
  %vm5249 = vmor %vm3953, %vm4925
  %vm5250 = vmor %vm3954, %vm4926
  %vm5251 = vmor %vm3955, %vm4927
  %vm5252 = vmor %vm3956, %vm4928
  %vm5253 = vmor %vm3957, %vm4929
  %vm5254 = vmor %vm3958, %vm4930
  %vm5255 = vmor %vm3959, %vm4931
  %vm5256 = vmor %vm3960, %vm4932
  %vm5257 = vmor %vm3961, %vm4933
  %vm5258 = vmor %vm3962, %vm4934
  %vm5259 = vmor %vm3963, %vm4935
  %vm5260 = vmor %vm3964, %vm4936
  %vm5261 = vmor %vm3965, %vm4937
  %vm5262 = vmor %vm3966, %vm4938
  %vm5263 = vmor %vm3967, %vm4939
  %vm5264 = vmor %vm3968, %vm4940
  %vm5265 = vmor %vm3969, %vm4941
  %vm5266 = vmor %vm3970, %vm4942
  %vm5267 = vmor %vm3971, %vm4943
  %vm5268 = vmor %vm3972, %vm4944
  %vm5269 = vmor %vm3973, %vm4945
  %vm5270 = vmor %vm3974, %vm4946
  %vm5271 = vmor %vm3975, %vm4947
  %vm5272 = vmor %vm3976, %vm4948
  %vm5273 = vmor %vm3977, %vm4949
  %vm5274 = vmor %vm3978, %vm4950
  %vm5275 = vmor %vm3979, %vm4951
  %vm5276 = vmor %vm3980, %vm4952
  %vm5277 = vmor %vm3981, %vm4953
  %vm5278 = vmor %vm3982, %vm4954
  %vm5279 = vmor %vm3983, %vm4955
  %vm5280 = vmor %vm3984, %vm4956
  %vm5281 = vmor %vm3985, %vm4957
  %vm5282 = vmor %vm3986, %vm4958
  %vm5283 = vmor %vm3987, %vm4959
  %vm5284 = vmor %vm3988, %vm4960
  %vm5285 = vmor %vm3989, %vm4961
  %vm5286 = vmor %vm3990, %vm4962
  %vm5287 = vmor %vm3991, %vm4963
  %vm5288 = vmor %vm3992, %vm4964
  %vm5289 = vmor %vm3993, %vm4965
  %vm5290 = vmor %vm3994, %vm4966
  %vm5291 = vmor %vm3995, %vm4967
  %vm5292 = vmor %vm3996, %vm4968
  %vm5293 = vmor %vm3997, %vm4969
  %vm5294 = vmor %vm3998, %vm4970
  %vm5295 = vmor %vm3999, %vm4971
  %vm5296 = vmor %vm4000, %vm4972
  %vm5297 = vmor %vm4001, %vm4973
  %vm5298 = vmor %vm4002, %vm4974
  %vm5299 = vmor %vm4003, %vm4975
  %vm5300 = vmor %vm4004, %vm4976
  %vm5301 = vmor %vm4005, %vm4977
  %vm5302 = vmor %vm4006, %vm4978
  %vm5303 = vmor %vm4007, %vm4979
  %vm5304 = vmor %vm4008, %vm4980
  %vm5305 = vmor %vm4009, %vm4981
  %vm5306 = vmor %vm4010, %vm4982
  %vm5307 = vmor %vm4011, %vm4983
  %vm5308 = vmor %vm4012, %vm4984
  %vm5309 = vmor %vm4013, %vm4985
  %vm5310 = vmor %vm4014, %vm4986
  %vm5311 = vmor %vm4015, %vm4987
  %vm5312 = vmor %vm4016, %vm4988
  %vm5313 = vmor %vm4017, %vm4989
  %vm5314 = vmor %vm4018, %vm4990
  %vm5315 = vmor %vm4019, %vm4991
  %vm5316 = vmor %vm4020, %vm4992
  %vm5317 = vmor %vm4021, %vm4993
  %vm5318 = vmor %vm4022, %vm4994
  %vm5319 = vmor %vm4023, %vm4995
  %vm5320 = vmor %vm4024, %vm4996
  %vm5321 = vmor %vm4025, %vm4997
  %vm5322 = vmor %vm4026, %vm4998
  %vm5323 = vmor %vm4027, %vm4999
  %vm5324 = vmor %vm4028, %vm5000
  %vm5325 = vmor %vm4029, %vm5001
  %vm5326 = vmor %vm4030, %vm5002
  %vm5327 = vmor %vm4031, %vm5003
  %vm5328 = vmor %vm4032, %vm5004
  %vm5329 = vmor %vm4033, %vm5005
  %vm5330 = vmor %vm4034, %vm5006
  %vm5331 = vmor %vm4035, %vm5007
  %vm5332 = vmor %vm4036, %vm5008
  %vm5333 = vmor %vm4037, %vm5009
  %vm5334 = vmor %vm4038, %vm5010
  %vm5335 = vmor %vm4039, %vm5011
  %vm5336 = vmor %vm4040, %vm5012
  %vm5337 = vmor %vm4041, %vm5013
  %vm5338 = vmor %vm4042, %vm5014
  %vm5339 = vmor %vm4043, %vm5015
  %vm5340 = vmor %vm4044, %vm5016
  %vm5341 = vmor %vm4045, %vm5017
  %vm5342 = vmor %vm4046, %vm5018
  %vm5343 = vmor %vm4047, %vm5019
  %vm5344 = vmor %vm4048, %vm5020
  %vm5345 = vmor %vm4049, %vm5021
  %vm5346 = vmor %vm4050, %vm5022
  %vm5347 = vmor %vm4051, %vm5023
  %vm5348 = vmor %vm4052, %vm5024
  %vm5349 = vmor %vm4053, %vm5025
  %vm5350 = vmor %vm4054, %vm5026
  %vm5351 = vmor %vm4055, %vm5027
  %vm5352 = vmor %vm4056, %vm5028
  %vm5353 = vmor %vm4057, %vm5029
  %vm5354 = vmor %vm4058, %vm5030
  %vm5355 = vmor %vm4059, %vm5031
  %vm5356 = vmor %vm4060, %vm5032
  %vm5357 = vmor %vm4061, %vm5033
  %vm5358 = vmor %vm4062, %vm5034
  %vm5359 = vmor %vm4063, %vm5035
  %vm5360 = vmor %vm4064, %vm5036
  %vm5361 = vmor %vm4065, %vm5037
  %vm5362 = vmor %vm4066, %vm5038
  %vm5363 = vmor %vm4067, %vm5039
  %vm5364 = vmor %vm4068, %vm5040
  %vm5365 = vmor %vm4069, %vm5041
  %vm5366 = vmor %vm4070, %vm5042
  %vm5367 = vmor %vm4071, %vm5043
  %vm5368 = vmor %vm4072, %vm5044
  %vm5369 = vmor %vm4073, %vm5045
  %vm5370 = vmor %vm4074, %vm5046
  %vm5371 = vmor %vm4075, %vm5047
  %vm5372 = vmor %vm4076, %vm5048
  %vm5373 = vmor %vm4077, %vm5049
  %vm5374 = vmor %vm4078, %vm5050
  %vm5375 = vmor %vm4079, %vm5051
  %vm5376 = vmor %vm4080, %vm5052
  %vm5377 = vmor %vm4081, %vm5053
  %vm5378 = vmor %vm4082, %vm5054
  %vm5379 = vmor %vm4083, %vm5055
  %vm5380 = vmor %vm4084, %vm5056
  %vm5381 = vmor %vm4085, %vm5057
  %vm5382 = vmor %vm4086, %vm5058
  %vm5383 = vmor %vm4087, %vm5059
  %vm5384 = vmor %vm4088, %vm5060
  %vm5385 = vmor %vm4089, %vm5061
  %vm5386 = vmor %vm4090, %vm5062
  %vm5387 = vmor %vm4091, %vm5063
  %vm5388 = vmor %vm4092, %vm5064
  %vm5389 = vmor %vm4093, %vm5065
  %vm5390 = vmor %vm4094, %vm5066
  %vm5391 = vmor %vm4095, %vm5067
  %vm5392 = vmor %vm4096, %vm5068
  %vm5393 = vmor %vm4097, %vm5069
  %vm5394 = vmor %vm4098, %vm5070
  %vm5395 = vmor %vm4099, %vm5071
  %vm5396 = vmor %vm4100, %vm5072
  %vm5397 = vmor %vm4101, %vm5073
  %vm5398 = vmor %vm4102, %vm5074
  %vm5399 = vmor %vm4103, %vm5075
  %vm5400 = vmor %vm4104, %vm5076
  %vm5401 = vmor %vm4105, %vm5077
  %vm5402 = vmor %vm4106, %vm5078
  %vm5403 = vmor %vm4107, %vm5079
  %vm5404 = vmor %vm4108, %vm5080
  %vm5405 = vmor %vm4109, %vm5081
  %vm5406 = vmor %vm4110, %vm5082
  %vm5407 = vmor %vm4111, %vm5083
  %vm5408 = vmor %vm4112, %vm5084
  %vm5409 = vmor %vm4113, %vm5085
  %vm5410 = vmor %vm4114, %vm5086
  %vm5411 = vmor %vm4115, %vm5087
  %vm5412 = vmor %vm4116, %vm5088
  %vm5413 = vmor %vm4117, %vm5089
  %vm5414 = vmor %vm4118, %vm5090
  %vm5415 = vmor %vm4119, %vm5091
  %vm5416 = vmor %vm4120, %vm5092
  %vm5417 = vmor %vm4121, %vm5093
  %vm5418 = vmor %vm4122, %vm5094
  %vm5419 = vmor %vm4123, %vm5095
  %vm5420 = vmor %vm4124, %vm5096
  %vm5421 = vmor %vm4125, %vm5097
  %vm5422 = vmor %vm4126, %vm5098
  %vm5423 = vmor %vm4127, %vm5099
  %vm5424 = vmor %vm4128, %vm5100
  %vm5425 = vmor %vm4129, %vm5101
  %vm5426 = vmor %vm4130, %vm5102
  %vm5427 = vmor %vm4131, %vm5103
  %vm5428 = vmor %vm4132, %vm5104
  %vm5429 = vmor %vm4133, %vm5105
  %vm5430 = vmor %vm4134, %vm5106
  %vm5431 = vmor %vm4135, %vm5107
  %vm5432 = vmor %vm4136, %vm5108
  %vm5433 = vmor %vm4137, %vm5109
  %vm5434 = vmor %vm4138, %vm5110
  %vm5435 = vmor %vm4139, %vm5111
  %vm5436 = vmor %vm4140, %vm5112
  %vm5437 = vmor %vm4141, %vm5113
  %vm5438 = vmor %vm4142, %vm5114
  %vm5439 = vmor %vm4143, %vm5115
  %vm5440 = vmor %vm4144, %vm5116
  %vm5441 = vmor %vm4145, %vm5117
  %vm5442 = vmor %vm4146, %vm5118
  %vm5443 = vmor %vm4147, %vm5119
  %vm5444 = vmor %vm4148, %vm5120
  %vm5445 = vmor %vm4149, %vm5121
  %vm5446 = vmor %vm4150, %vm5122
  %vm5447 = vmor %vm4151, %vm5123
  %vm5448 = vmor %vm4152, %vm5124
  %vm5449 = vmor %vm4153, %vm5125
  %vm5450 = vmor %vm4154, %vm5126
  %vm5451 = vmor %vm4155, %vm5127
  %vm5452 = vmor %vm4156, %vm5128
  %vm5453 = vmor %vm4157, %vm5129
  %vm5454 = vmor %vm4158, %vm5130
  %vm5455 = vmor %vm4159, %vm5131
  %vm5456 = vmor %vm4160, %vm5132
  %vm5457 = vmor %vm4161, %vm5133
  %vm5458 = vmor %vm4162, %vm5134
  %vm5459 = vmor %vm4163, %vm5135
  %vm5460 = vmor %vm4164, %vm5136
  %vm5461 = vmor %vm4165, %vm5137
  %vm5462 = vmor %vm4166, %vm5138
  %vm5463 = vmor %vm4167, %vm5139
  %vm5464 = vmor %vm4168, %vm5140
  %vm5465 = vmor %vm4169, %vm5141
  %vm5466 = vmor %vm4170, %vm5142
  %vm5467 = vmor %vm4171, %vm5143
  %vm5468 = vmor %vm4172, %vm5144
  %vm5469 = vmor %vm4173, %vm5145
  %vm5470 = vmor %vm4174, %vm5146
  %vm5471 = vmor %vm4175, %vm5147
  %vm5472 = vmor %vm4176, %vm5148
  %vm5473 = vmor %vm4177, %vm5149
  %vm5474 = vmor %vm4178, %vm5150
  %vm5475 = vmor %vm4179, %vm5151
  %vm5476 = vmor %vm4180, %vm5152
  %vm5477 = vmor %vm4181, %vm5153
  %vm5478 = vmor %vm4182, %vm5154
  %vm5479 = vmor %vm4183, %vm5155
  %vm5480 = vmor %vm4184, %vm5156
  %vm5481 = vmor %vm4185, %vm5157
  %vm5482 = vmor %vm4186, %vm5158
  %vm5483 = vmor %vm4187, %vm5159
  %vm5484 = vmor %vm4188, %vm5160
  %vm5485 = vmor %vm4189, %vm5161
  %vm5486 = vmor %vm4190, %vm5162
  %vm5487 = vmor %vm4191, %vm5163
  %vm5488 = vmor %vm4192, %vm5164
  %vm5489 = vmor %vm4193, %vm5165
  %vm5490 = vmor %vm4194, %vm5166
  %vm5491 = vmor %vm4195, %vm5167
  %vm5492 = vmor %vm4196, %vm5168
  %vm5493 = vmor %vm4197, %vm5169
  %vm5494 = vmor %vm4198, %vm5170
  %vm5495 = vmor %vm4199, %vm5171
  %vm5496 = vmor %vm4200, %vm5172
  %vm5497 = vmor %vm4201, %vm5173
  %vm5498 = vmor %vm4202, %vm5174
  %vm5499 = vmor %vm4203, %vm5175
  %vm5500 = vmor %vm4204, %vm5176
  %vm5501 = vmor %vm4205, %vm5177
  %vm5502 = vmor %vm4206, %vm5178
  %vm5503 = vmor %vm4207, %vm5179
  %vm5504 = vmor %vm4208, %vm5180
  %vm5505 = vmor %vm4209, %vm5181
  %vm5506 = vmor %vm4210, %vm5182
  %vm5507 = vmor %vm4211, %vm5183
  %vm5508 = vmor %vm4212, %vm5184
  %vm5509 = vmor %vm4213, %vm5185
  %vm5510 = vmor %vm4214, %vm5186
  %vm5511 = vmor %vm4215, %vm5187
  %vm5512 = vmor %vm4216, %vm5188
  %vm5513 = vmor %vm4217, %vm5189
  %vm5514 = vmor %vm4218, %vm5190
  %vm5515 = vmor %vm4219, %vm5191
  %vm5516 = vmor %vm4220, %vm5192
  %vm5517 = vmor %vm4221, %vm5193
  %vm5518 = vmor %vm4222, %vm5194
  %vm5519 = vmor %vm4223, %vm5195
  %vm5520 = vmor %vm4224, %vm5196
  %vm5521 = vmor %vm4225, %vm5197
  %vm5522 = vmor %vm4226, %vm5198
  %vm5523 = vmor %vm4227, %vm5199
  %vm5524 = vmor %vm4228, %vm5200
  %vm5525 = vmor %vm4229, %vm5201
  %vm5526 = vmor %vm4230, %vm5202
  %vm5527 = vmor %vm4231, %vm5203
  %vm5528 = vmor %vm4232, %vm5204
  %vm5529 = vmor %vm4233, %vm5205
  %vm5530 = vmor %vm4234, %vm5206
  %vm5531 = vmor %vm4235, %vm5207
  %vm5532 = vmor %vm4236, %vm5208
  %vm5533 = vmor %vm4237, %vm5209
  %vm5534 = vmor %vm4238, %vm5210
  %vm5535 = vmor %vm4239, %vm5211
  %vm5536 = vmor %vm4240, %vm5212
  %vm5537 = vmor %vm4241, %vm5213
  %vm5538 = vmor %vm4242, %vm5214
  %vm5539 = vmor %vm4243, %vm5215
  %vm5540 = vmor %vm4244, %vm5216
  %vm5541 = vmor %vm4245, %vm5217
  %vm5542 = vmor %vm4246, %vm5218
  %vm5543 = vmor %vm4247, %vm5219
  %vm5544 = vmor %vm4248, %vm5220
  %vm5545 = vmor %vm4249, %vm5221
  %vm5546 = vmor %vm4250, %vm5222
  %vm5547 = vmor %vm4251, %vm5223
  %vm5548 = vmor %vm4252, %vm5224
  %vm5549 = vmor %vm4253, %vm5225
  %vm5550 = vmor %vm4254, %vm5226
  %vm5551 = vmor %vm4255, %vm5227
  %vm5552 = vmor %vm4256, %vm5228
  %vm5553 = vmor %vm4257, %vm5229
  %vm5554 = vmor %vm4258, %vm5230
  %vm5555 = vcmp.ge.s32.totalorder %v2315, 1944
  %vm5556 = vcmp.ge.s32.totalorder %v2316, 1944
  %vm5557 = vcmp.ge.s32.totalorder %v2317, 1944
  %vm5558 = vcmp.ge.s32.totalorder %v2318, 1944
  %vm5559 = vcmp.ge.s32.totalorder %v2319, 1944
  %vm5560 = vcmp.ge.s32.totalorder %v2320, 1944
  %vm5561 = vcmp.ge.s32.totalorder %v2321, 1944
  %vm5562 = vcmp.ge.s32.totalorder %v2322, 1944
  %vm5563 = vcmp.ge.s32.totalorder %v2323, 1944
  %vm5564 = vcmp.ge.s32.totalorder %v2324, 1944
  %vm5565 = vcmp.ge.s32.totalorder %v2325, 1944
  %vm5566 = vcmp.ge.s32.totalorder %v2326, 1944
  %vm5567 = vcmp.ge.s32.totalorder %v2327, 1944
  %vm5568 = vcmp.ge.s32.totalorder %v2328, 1944
  %vm5569 = vcmp.ge.s32.totalorder %v2329, 1944
  %vm5570 = vcmp.ge.s32.totalorder %v2330, 1944
  %vm5571 = vcmp.ge.s32.totalorder %v2331, 1944
  %vm5572 = vcmp.ge.s32.totalorder %v2332, 1944
  %vm5573 = vcmp.ge.s32.totalorder %v2333, 1944
  %vm5574 = vcmp.ge.s32.totalorder %v2334, 1944
  %vm5575 = vcmp.ge.s32.totalorder %v2335, 1944
  %vm5576 = vcmp.ge.s32.totalorder %v2336, 1944
  %vm5577 = vcmp.ge.s32.totalorder %v2337, 1944
  %vm5578 = vcmp.ge.s32.totalorder %v2338, 1944
  %vm5579 = vcmp.ge.s32.totalorder %v2339, 1944
  %vm5580 = vcmp.ge.s32.totalorder %v2340, 1944
  %vm5581 = vcmp.ge.s32.totalorder %v2341, 1944
  %vm5582 = vcmp.ge.s32.totalorder %v2342, 1944
  %vm5583 = vcmp.ge.s32.totalorder %v2343, 1944
  %vm5584 = vcmp.ge.s32.totalorder %v2344, 1944
  %vm5585 = vcmp.ge.s32.totalorder %v2345, 1944
  %vm5586 = vcmp.ge.s32.totalorder %v2346, 1944
  %vm5587 = vcmp.ge.s32.totalorder %v2347, 1944
  %vm5588 = vcmp.ge.s32.totalorder %v2348, 1944
  %vm5589 = vcmp.ge.s32.totalorder %v2349, 1944
  %vm5590 = vcmp.ge.s32.totalorder %v2350, 1944
  %vm5591 = vcmp.ge.s32.totalorder %v2351, 1944
  %vm5592 = vcmp.ge.s32.totalorder %v2352, 1944
  %vm5593 = vcmp.ge.s32.totalorder %v2353, 1944
  %vm5594 = vcmp.ge.s32.totalorder %v2354, 1944
  %vm5595 = vcmp.ge.s32.totalorder %v2355, 1944
  %vm5596 = vcmp.ge.s32.totalorder %v2356, 1944
  %vm5597 = vcmp.ge.s32.totalorder %v2357, 1944
  %vm5598 = vcmp.ge.s32.totalorder %v2358, 1944
  %vm5599 = vcmp.ge.s32.totalorder %v2359, 1944
  %vm5600 = vcmp.ge.s32.totalorder %v2360, 1944
  %vm5601 = vcmp.ge.s32.totalorder %v2361, 1944
  %vm5602 = vcmp.ge.s32.totalorder %v2362, 1944
  %vm5603 = vcmp.ge.s32.totalorder %v2363, 1944
  %vm5604 = vcmp.ge.s32.totalorder %v2364, 1944
  %vm5605 = vcmp.ge.s32.totalorder %v2365, 1944
  %vm5606 = vcmp.ge.s32.totalorder %v2366, 1944
  %vm5607 = vcmp.ge.s32.totalorder %v2367, 1944
  %vm5608 = vcmp.ge.s32.totalorder %v2368, 1944
  %vm5609 = vcmp.ge.s32.totalorder %v2369, 1944
  %vm5610 = vcmp.ge.s32.totalorder %v2370, 1944
  %vm5611 = vcmp.ge.s32.totalorder %v2371, 1944
  %vm5612 = vcmp.ge.s32.totalorder %v2372, 1944
  %vm5613 = vcmp.ge.s32.totalorder %v2373, 1944
  %vm5614 = vcmp.ge.s32.totalorder %v2374, 1944
  %vm5615 = vcmp.ge.s32.totalorder %v2375, 1944
  %vm5616 = vcmp.ge.s32.totalorder %v2376, 1944
  %vm5617 = vcmp.ge.s32.totalorder %v2377, 1944
  %vm5618 = vcmp.ge.s32.totalorder %v2378, 1944
  %vm5619 = vcmp.ge.s32.totalorder %v2379, 1944
  %vm5620 = vcmp.ge.s32.totalorder %v2380, 1944
  %vm5621 = vcmp.ge.s32.totalorder %v2381, 1944
  %vm5622 = vcmp.ge.s32.totalorder %v2382, 1944
  %vm5623 = vcmp.ge.s32.totalorder %v2383, 1944
  %vm5624 = vcmp.ge.s32.totalorder %v2384, 1944
  %vm5625 = vcmp.ge.s32.totalorder %v2385, 1944
  %vm5626 = vcmp.ge.s32.totalorder %v2386, 1944
  %vm5627 = vcmp.ge.s32.totalorder %v2387, 1944
  %vm5628 = vcmp.ge.s32.totalorder %v2388, 1944
  %vm5629 = vcmp.ge.s32.totalorder %v2389, 1944
  %vm5630 = vcmp.ge.s32.totalorder %v2390, 1944
  %vm5631 = vcmp.ge.s32.totalorder %v2391, 1944
  %vm5632 = vcmp.ge.s32.totalorder %v2392, 1944
  %vm5633 = vcmp.ge.s32.totalorder %v2393, 1944
  %vm5634 = vcmp.ge.s32.totalorder %v2394, 1944
  %vm5635 = vcmp.ge.s32.totalorder %v2395, 1944
  %vm5636 = vcmp.ge.s32.totalorder %v2396, 1944
  %vm5637 = vcmp.ge.s32.totalorder %v2397, 1944
  %vm5638 = vcmp.ge.s32.totalorder %v2398, 1944
  %vm5639 = vcmp.ge.s32.totalorder %v2399, 1944
  %vm5640 = vcmp.ge.s32.totalorder %v2400, 1944
  %vm5641 = vcmp.ge.s32.totalorder %v2401, 1944
  %vm5642 = vcmp.ge.s32.totalorder %v2402, 1944
  %vm5643 = vcmp.ge.s32.totalorder %v2403, 1944
  %vm5644 = vcmp.ge.s32.totalorder %v2404, 1944
  %vm5645 = vcmp.ge.s32.totalorder %v2405, 1944
  %vm5646 = vcmp.ge.s32.totalorder %v2406, 1944
  %vm5647 = vcmp.ge.s32.totalorder %v2407, 1944
  %vm5648 = vcmp.ge.s32.totalorder %v2408, 1944
  %vm5649 = vcmp.ge.s32.totalorder %v2409, 1944
  %vm5650 = vcmp.ge.s32.totalorder %v2410, 1944
  %vm5651 = vcmp.ge.s32.totalorder %v2411, 1944
  %vm5652 = vcmp.ge.s32.totalorder %v2412, 1944
  %vm5653 = vcmp.ge.s32.totalorder %v2413, 1944
  %vm5654 = vcmp.ge.s32.totalorder %v2414, 1944
  %vm5655 = vcmp.ge.s32.totalorder %v2415, 1944
  %vm5656 = vcmp.ge.s32.totalorder %v2416, 1944
  %vm5657 = vcmp.ge.s32.totalorder %v2417, 1944
  %vm5658 = vcmp.ge.s32.totalorder %v2418, 1944
  %vm5659 = vcmp.ge.s32.totalorder %v2419, 1944
  %vm5660 = vcmp.ge.s32.totalorder %v2420, 1944
  %vm5661 = vcmp.ge.s32.totalorder %v2421, 1944
  %vm5662 = vcmp.ge.s32.totalorder %v2422, 1944
  %vm5663 = vcmp.ge.s32.totalorder %v2423, 1944
  %vm5664 = vcmp.ge.s32.totalorder %v2424, 1944
  %vm5665 = vcmp.ge.s32.totalorder %v2425, 1944
  %vm5666 = vcmp.ge.s32.totalorder %v2426, 1944
  %vm5667 = vcmp.ge.s32.totalorder %v2427, 1944
  %vm5668 = vcmp.ge.s32.totalorder %v2428, 1944
  %vm5669 = vcmp.ge.s32.totalorder %v2429, 1944
  %vm5670 = vcmp.ge.s32.totalorder %v2430, 1944
  %vm5671 = vcmp.ge.s32.totalorder %v2431, 1944
  %vm5672 = vcmp.ge.s32.totalorder %v2432, 1944
  %vm5673 = vcmp.ge.s32.totalorder %v2433, 1944
  %vm5674 = vcmp.ge.s32.totalorder %v2434, 1944
  %vm5675 = vcmp.ge.s32.totalorder %v2435, 1944
  %vm5676 = vcmp.ge.s32.totalorder %v2436, 1944
  %vm5677 = vcmp.ge.s32.totalorder %v2437, 1944
  %vm5678 = vcmp.ge.s32.totalorder %v2438, 1944
  %vm5679 = vcmp.ge.s32.totalorder %v2439, 1944
  %vm5680 = vcmp.ge.s32.totalorder %v2440, 1944
  %vm5681 = vcmp.ge.s32.totalorder %v2441, 1944
  %vm5682 = vcmp.ge.s32.totalorder %v2442, 1944
  %vm5683 = vcmp.ge.s32.totalorder %v2443, 1944
  %vm5684 = vcmp.ge.s32.totalorder %v2444, 1944
  %vm5685 = vcmp.ge.s32.totalorder %v2445, 1944
  %vm5686 = vcmp.ge.s32.totalorder %v2446, 1944
  %vm5687 = vcmp.ge.s32.totalorder %v2447, 1944
  %vm5688 = vcmp.ge.s32.totalorder %v2448, 1944
  %vm5689 = vcmp.ge.s32.totalorder %v2449, 1944
  %vm5690 = vcmp.ge.s32.totalorder %v2450, 1944
  %vm5691 = vcmp.ge.s32.totalorder %v2451, 1944
  %vm5692 = vcmp.ge.s32.totalorder %v2452, 1944
  %vm5693 = vcmp.ge.s32.totalorder %v2453, 1944
  %vm5694 = vcmp.ge.s32.totalorder %v2454, 1944
  %vm5695 = vcmp.ge.s32.totalorder %v2455, 1944
  %vm5696 = vcmp.ge.s32.totalorder %v2456, 1944
  %vm5697 = vcmp.ge.s32.totalorder %v2457, 1944
  %vm5698 = vcmp.ge.s32.totalorder %v2458, 1944
  %vm5699 = vcmp.ge.s32.totalorder %v2459, 1944
  %vm5700 = vcmp.ge.s32.totalorder %v2460, 1944
  %vm5701 = vcmp.ge.s32.totalorder %v2461, 1944
  %vm5702 = vcmp.ge.s32.totalorder %v2462, 1944
  %vm5703 = vcmp.ge.s32.totalorder %v2463, 1944
  %vm5704 = vcmp.ge.s32.totalorder %v2464, 1944
  %vm5705 = vcmp.ge.s32.totalorder %v2465, 1944
  %vm5706 = vcmp.ge.s32.totalorder %v2466, 1944
  %vm5707 = vcmp.ge.s32.totalorder %v2467, 1944
  %vm5708 = vcmp.ge.s32.totalorder %v2468, 1944
  %vm5709 = vcmp.ge.s32.totalorder %v2469, 1944
  %vm5710 = vcmp.ge.s32.totalorder %v2470, 1944
  %vm5711 = vcmp.ge.s32.totalorder %v2471, 1944
  %vm5712 = vcmp.ge.s32.totalorder %v2472, 1944
  %vm5713 = vcmp.ge.s32.totalorder %v2473, 1944
  %vm5714 = vcmp.ge.s32.totalorder %v2474, 1944
  %vm5715 = vcmp.ge.s32.totalorder %v2475, 1944
  %vm5716 = vcmp.ge.s32.totalorder %v2476, 1944
  %vm5717 = vcmp.ge.s32.totalorder %v2477, 1944
  %vm5718 = vcmp.ge.s32.totalorder %v2478, 1944
  %vm5719 = vcmp.ge.s32.totalorder %v2479, 1944
  %vm5720 = vcmp.ge.s32.totalorder %v2480, 1944
  %vm5721 = vcmp.ge.s32.totalorder %v2481, 1944
  %vm5722 = vcmp.ge.s32.totalorder %v2482, 1944
  %vm5723 = vcmp.ge.s32.totalorder %v2483, 1944
  %vm5724 = vcmp.ge.s32.totalorder %v2484, 1944
  %vm5725 = vcmp.ge.s32.totalorder %v2485, 1944
  %vm5726 = vcmp.ge.s32.totalorder %v2486, 1944
  %vm5727 = vcmp.ge.s32.totalorder %v2487, 1944
  %vm5728 = vcmp.ge.s32.totalorder %v2488, 1944
  %vm5729 = vcmp.ge.s32.totalorder %v2489, 1944
  %vm5730 = vcmp.ge.s32.totalorder %v2490, 1944
  %vm5731 = vcmp.ge.s32.totalorder %v2491, 1944
  %vm5732 = vcmp.ge.s32.totalorder %v2492, 1944
  %vm5733 = vcmp.ge.s32.totalorder %v2493, 1944
  %vm5734 = vcmp.ge.s32.totalorder %v2494, 1944
  %vm5735 = vcmp.ge.s32.totalorder %v2495, 1944
  %vm5736 = vcmp.ge.s32.totalorder %v2496, 1944
  %vm5737 = vcmp.ge.s32.totalorder %v2497, 1944
  %vm5738 = vcmp.ge.s32.totalorder %v2498, 1944
  %vm5739 = vcmp.ge.s32.totalorder %v2499, 1944
  %vm5740 = vcmp.ge.s32.totalorder %v2500, 1944
  %vm5741 = vcmp.ge.s32.totalorder %v2501, 1944
  %vm5742 = vcmp.ge.s32.totalorder %v2502, 1944
  %vm5743 = vcmp.ge.s32.totalorder %v2503, 1944
  %vm5744 = vcmp.ge.s32.totalorder %v2504, 1944
  %vm5745 = vcmp.ge.s32.totalorder %v2505, 1944
  %vm5746 = vcmp.ge.s32.totalorder %v2506, 1944
  %vm5747 = vcmp.ge.s32.totalorder %v2507, 1944
  %vm5748 = vcmp.ge.s32.totalorder %v2508, 1944
  %vm5749 = vcmp.ge.s32.totalorder %v2509, 1944
  %vm5750 = vcmp.ge.s32.totalorder %v2510, 1944
  %vm5751 = vcmp.ge.s32.totalorder %v2511, 1944
  %vm5752 = vcmp.ge.s32.totalorder %v2512, 1944
  %vm5753 = vcmp.ge.s32.totalorder %v2513, 1944
  %vm5754 = vcmp.ge.s32.totalorder %v2514, 1944
  %vm5755 = vcmp.ge.s32.totalorder %v2515, 1944
  %vm5756 = vcmp.ge.s32.totalorder %v2516, 1944
  %vm5757 = vcmp.ge.s32.totalorder %v2517, 1944
  %vm5758 = vcmp.ge.s32.totalorder %v2518, 1944
  %vm5759 = vcmp.ge.s32.totalorder %v2519, 1944
  %vm5760 = vcmp.ge.s32.totalorder %v2520, 1944
  %vm5761 = vcmp.ge.s32.totalorder %v2521, 1944
  %vm5762 = vcmp.ge.s32.totalorder %v2522, 1944
  %vm5763 = vcmp.ge.s32.totalorder %v2523, 1944
  %vm5764 = vcmp.ge.s32.totalorder %v2524, 1944
  %vm5765 = vcmp.ge.s32.totalorder %v2525, 1944
  %vm5766 = vcmp.ge.s32.totalorder %v2526, 1944
  %vm5767 = vcmp.ge.s32.totalorder %v2527, 1944
  %vm5768 = vcmp.ge.s32.totalorder %v2528, 1944
  %vm5769 = vcmp.ge.s32.totalorder %v2529, 1944
  %vm5770 = vcmp.ge.s32.totalorder %v2530, 1944
  %vm5771 = vcmp.ge.s32.totalorder %v2531, 1944
  %vm5772 = vcmp.ge.s32.totalorder %v2532, 1944
  %vm5773 = vcmp.ge.s32.totalorder %v2533, 1944
  %vm5774 = vcmp.ge.s32.totalorder %v2534, 1944
  %vm5775 = vcmp.ge.s32.totalorder %v2535, 1944
  %vm5776 = vcmp.ge.s32.totalorder %v2536, 1944
  %vm5777 = vcmp.ge.s32.totalorder %v2537, 1944
  %vm5778 = vcmp.ge.s32.totalorder %v2538, 1944
  %vm5779 = vcmp.ge.s32.totalorder %v2539, 1944
  %vm5780 = vcmp.ge.s32.totalorder %v2540, 1944
  %vm5781 = vcmp.ge.s32.totalorder %v2541, 1944
  %vm5782 = vcmp.ge.s32.totalorder %v2542, 1944
  %vm5783 = vcmp.ge.s32.totalorder %v2543, 1944
  %vm5784 = vcmp.ge.s32.totalorder %v2544, 1944
  %vm5785 = vcmp.ge.s32.totalorder %v2545, 1944
  %vm5786 = vcmp.ge.s32.totalorder %v2546, 1944
  %vm5787 = vcmp.ge.s32.totalorder %v2547, 1944
  %vm5788 = vcmp.ge.s32.totalorder %v2548, 1944
  %vm5789 = vcmp.ge.s32.totalorder %v2549, 1944
  %vm5790 = vcmp.ge.s32.totalorder %v2550, 1944
  %vm5791 = vcmp.ge.s32.totalorder %v2551, 1944
  %vm5792 = vcmp.ge.s32.totalorder %v2552, 1944
  %vm5793 = vcmp.ge.s32.totalorder %v2553, 1944
  %vm5794 = vcmp.ge.s32.totalorder %v2554, 1944
  %vm5795 = vcmp.ge.s32.totalorder %v2555, 1944
  %vm5796 = vcmp.ge.s32.totalorder %v2556, 1944
  %vm5797 = vcmp.ge.s32.totalorder %v2557, 1944
  %vm5798 = vcmp.ge.s32.totalorder %v2558, 1944
  %vm5799 = vcmp.ge.s32.totalorder %v2559, 1944
  %vm5800 = vcmp.ge.s32.totalorder %v2560, 1944
  %vm5801 = vcmp.ge.s32.totalorder %v2561, 1944
  %vm5802 = vcmp.ge.s32.totalorder %v2562, 1944
  %vm5803 = vcmp.ge.s32.totalorder %v2563, 1944
  %vm5804 = vcmp.ge.s32.totalorder %v2564, 1944
  %vm5805 = vcmp.ge.s32.totalorder %v2565, 1944
  %vm5806 = vcmp.ge.s32.totalorder %v2566, 1944
  %vm5807 = vcmp.ge.s32.totalorder %v2567, 1944
  %vm5808 = vcmp.ge.s32.totalorder %v2568, 1944
  %vm5809 = vcmp.ge.s32.totalorder %v2569, 1944
  %vm5810 = vcmp.ge.s32.totalorder %v2570, 1944
  %vm5811 = vcmp.ge.s32.totalorder %v2571, 1944
  %vm5812 = vcmp.ge.s32.totalorder %v2572, 1944
  %vm5813 = vcmp.ge.s32.totalorder %v2573, 1944
  %vm5814 = vcmp.ge.s32.totalorder %v2574, 1944
  %vm5815 = vcmp.ge.s32.totalorder %v2575, 1944
  %vm5816 = vcmp.ge.s32.totalorder %v2576, 1944
  %vm5817 = vcmp.ge.s32.totalorder %v2577, 1944
  %vm5818 = vcmp.ge.s32.totalorder %v2578, 1944
  %vm5819 = vcmp.ge.s32.totalorder %v2579, 1944
  %vm5820 = vcmp.ge.s32.totalorder %v2580, 1944
  %vm5821 = vcmp.ge.s32.totalorder %v2581, 1944
  %vm5822 = vcmp.ge.s32.totalorder %v2582, 1944
  %vm5823 = vcmp.ge.s32.totalorder %v2583, 1944
  %vm5824 = vcmp.ge.s32.totalorder %v2584, 1944
  %vm5825 = vcmp.ge.s32.totalorder %v2585, 1944
  %vm5826 = vcmp.ge.s32.totalorder %v2586, 1944
  %vm5827 = vcmp.ge.s32.totalorder %v2587, 1944
  %vm5828 = vcmp.ge.s32.totalorder %v2588, 1944
  %vm5829 = vcmp.ge.s32.totalorder %v2589, 1944
  %vm5830 = vcmp.ge.s32.totalorder %v2590, 1944
  %vm5831 = vcmp.ge.s32.totalorder %v2591, 1944
  %vm5832 = vcmp.ge.s32.totalorder %v2592, 1944
  %vm5833 = vcmp.ge.s32.totalorder %v2593, 1944
  %vm5834 = vcmp.ge.s32.totalorder %v2594, 1944
  %vm5835 = vcmp.ge.s32.totalorder %v2595, 1944
  %vm5836 = vcmp.ge.s32.totalorder %v2596, 1944
  %vm5837 = vcmp.ge.s32.totalorder %v2597, 1944
  %vm5838 = vcmp.ge.s32.totalorder %v2598, 1944
  %vm5839 = vcmp.ge.s32.totalorder %v2599, 1944
  %vm5840 = vcmp.ge.s32.totalorder %v2600, 1944
  %vm5841 = vcmp.ge.s32.totalorder %v2601, 1944
  %vm5842 = vcmp.ge.s32.totalorder %v2602, 1944
  %vm5843 = vcmp.ge.s32.totalorder %v2603, 1944
  %vm5844 = vcmp.ge.s32.totalorder %v2604, 1944
  %vm5845 = vcmp.ge.s32.totalorder %v2605, 1944
  %vm5846 = vcmp.ge.s32.totalorder %v2606, 1944
  %vm5847 = vcmp.ge.s32.totalorder %v2607, 1944
  %vm5848 = vcmp.ge.s32.totalorder %v2608, 1944
  %vm5849 = vcmp.ge.s32.totalorder %v2609, 1944
  %vm5850 = vcmp.ge.s32.totalorder %v2610, 1944
  %vm5851 = vcmp.ge.s32.totalorder %v2611, 1944
  %vm5852 = vcmp.ge.s32.totalorder %v2612, 1944
  %vm5853 = vcmp.ge.s32.totalorder %v2613, 1944
  %vm5854 = vcmp.ge.s32.totalorder %v2614, 1944
  %vm5855 = vcmp.ge.s32.totalorder %v2615, 1944
  %vm5856 = vcmp.ge.s32.totalorder %v2616, 1944
  %vm5857 = vcmp.ge.s32.totalorder %v2617, 1944
  %vm5858 = vcmp.ge.s32.totalorder %v2618, 1944
  %vm5859 = vcmp.ge.s32.totalorder %v2619, 1944
  %vm5860 = vcmp.ge.s32.totalorder %v2620, 1944
  %vm5861 = vcmp.ge.s32.totalorder %v2621, 1944
  %vm5862 = vcmp.ge.s32.totalorder %v2622, 1944
  %vm5863 = vcmp.ge.s32.totalorder %v2623, 1944
  %vm5864 = vcmp.ge.s32.totalorder %v2624, 1944
  %vm5865 = vcmp.ge.s32.totalorder %v2625, 1944
  %vm5866 = vcmp.ge.s32.totalorder %v2626, 1944
  %vm5867 = vcmp.ge.s32.totalorder %v2627, 1944
  %vm5868 = vcmp.ge.s32.totalorder %v2628, 1944
  %vm5869 = vcmp.ge.s32.totalorder %v2629, 1944
  %vm5870 = vcmp.ge.s32.totalorder %v2630, 1944
  %vm5871 = vcmp.ge.s32.totalorder %v2631, 1944
  %vm5872 = vcmp.ge.s32.totalorder %v2632, 1944
  %vm5873 = vcmp.ge.s32.totalorder %v2633, 1944
  %vm5874 = vcmp.ge.s32.totalorder %v2634, 1944
  %vm5875 = vcmp.ge.s32.totalorder %v2635, 1944
  %vm5876 = vcmp.ge.s32.totalorder %v2636, 1944
  %vm5877 = vcmp.ge.s32.totalorder %v2637, 1944
  %vm5878 = vcmp.ge.s32.totalorder %v2638, 1944
  %vm5879 = vcmp.lt.s32.totalorder %v2315, 2592
  %vm5880 = vcmp.lt.s32.totalorder %v2316, 2592
  %vm5881 = vcmp.lt.s32.totalorder %v2317, 2592
  %vm5882 = vcmp.lt.s32.totalorder %v2318, 2592
  %vm5883 = vcmp.lt.s32.totalorder %v2319, 2592
  %vm5884 = vcmp.lt.s32.totalorder %v2320, 2592
  %vm5885 = vcmp.lt.s32.totalorder %v2321, 2592
  %vm5886 = vcmp.lt.s32.totalorder %v2322, 2592
  %vm5887 = vcmp.lt.s32.totalorder %v2323, 2592
  %vm5888 = vcmp.lt.s32.totalorder %v2324, 2592
  %vm5889 = vcmp.lt.s32.totalorder %v2325, 2592
  %vm5890 = vcmp.lt.s32.totalorder %v2326, 2592
  %vm5891 = vcmp.lt.s32.totalorder %v2327, 2592
  %vm5892 = vcmp.lt.s32.totalorder %v2328, 2592
  %vm5893 = vcmp.lt.s32.totalorder %v2329, 2592
  %vm5894 = vcmp.lt.s32.totalorder %v2330, 2592
  %vm5895 = vcmp.lt.s32.totalorder %v2331, 2592
  %vm5896 = vcmp.lt.s32.totalorder %v2332, 2592
  %vm5897 = vcmp.lt.s32.totalorder %v2333, 2592
  %vm5898 = vcmp.lt.s32.totalorder %v2334, 2592
  %vm5899 = vcmp.lt.s32.totalorder %v2335, 2592
  %vm5900 = vcmp.lt.s32.totalorder %v2336, 2592
  %vm5901 = vcmp.lt.s32.totalorder %v2337, 2592
  %vm5902 = vcmp.lt.s32.totalorder %v2338, 2592
  %vm5903 = vcmp.lt.s32.totalorder %v2339, 2592
  %vm5904 = vcmp.lt.s32.totalorder %v2340, 2592
  %vm5905 = vcmp.lt.s32.totalorder %v2341, 2592
  %vm5906 = vcmp.lt.s32.totalorder %v2342, 2592
  %vm5907 = vcmp.lt.s32.totalorder %v2343, 2592
  %vm5908 = vcmp.lt.s32.totalorder %v2344, 2592
  %vm5909 = vcmp.lt.s32.totalorder %v2345, 2592
  %vm5910 = vcmp.lt.s32.totalorder %v2346, 2592
  %vm5911 = vcmp.lt.s32.totalorder %v2347, 2592
  %vm5912 = vcmp.lt.s32.totalorder %v2348, 2592
  %vm5913 = vcmp.lt.s32.totalorder %v2349, 2592
  %vm5914 = vcmp.lt.s32.totalorder %v2350, 2592
  %vm5915 = vcmp.lt.s32.totalorder %v2351, 2592
  %vm5916 = vcmp.lt.s32.totalorder %v2352, 2592
  %vm5917 = vcmp.lt.s32.totalorder %v2353, 2592
  %vm5918 = vcmp.lt.s32.totalorder %v2354, 2592
  %vm5919 = vcmp.lt.s32.totalorder %v2355, 2592
  %vm5920 = vcmp.lt.s32.totalorder %v2356, 2592
  %vm5921 = vcmp.lt.s32.totalorder %v2357, 2592
  %vm5922 = vcmp.lt.s32.totalorder %v2358, 2592
  %vm5923 = vcmp.lt.s32.totalorder %v2359, 2592
  %vm5924 = vcmp.lt.s32.totalorder %v2360, 2592
  %vm5925 = vcmp.lt.s32.totalorder %v2361, 2592
  %vm5926 = vcmp.lt.s32.totalorder %v2362, 2592
  %vm5927 = vcmp.lt.s32.totalorder %v2363, 2592
  %vm5928 = vcmp.lt.s32.totalorder %v2364, 2592
  %vm5929 = vcmp.lt.s32.totalorder %v2365, 2592
  %vm5930 = vcmp.lt.s32.totalorder %v2366, 2592
  %vm5931 = vcmp.lt.s32.totalorder %v2367, 2592
  %vm5932 = vcmp.lt.s32.totalorder %v2368, 2592
  %vm5933 = vcmp.lt.s32.totalorder %v2369, 2592
  %vm5934 = vcmp.lt.s32.totalorder %v2370, 2592
  %vm5935 = vcmp.lt.s32.totalorder %v2371, 2592
  %vm5936 = vcmp.lt.s32.totalorder %v2372, 2592
  %vm5937 = vcmp.lt.s32.totalorder %v2373, 2592
  %vm5938 = vcmp.lt.s32.totalorder %v2374, 2592
  %vm5939 = vcmp.lt.s32.totalorder %v2375, 2592
  %vm5940 = vcmp.lt.s32.totalorder %v2376, 2592
  %vm5941 = vcmp.lt.s32.totalorder %v2377, 2592
  %vm5942 = vcmp.lt.s32.totalorder %v2378, 2592
  %vm5943 = vcmp.lt.s32.totalorder %v2379, 2592
  %vm5944 = vcmp.lt.s32.totalorder %v2380, 2592
  %vm5945 = vcmp.lt.s32.totalorder %v2381, 2592
  %vm5946 = vcmp.lt.s32.totalorder %v2382, 2592
  %vm5947 = vcmp.lt.s32.totalorder %v2383, 2592
  %vm5948 = vcmp.lt.s32.totalorder %v2384, 2592
  %vm5949 = vcmp.lt.s32.totalorder %v2385, 2592
  %vm5950 = vcmp.lt.s32.totalorder %v2386, 2592
  %vm5951 = vcmp.lt.s32.totalorder %v2387, 2592
  %vm5952 = vcmp.lt.s32.totalorder %v2388, 2592
  %vm5953 = vcmp.lt.s32.totalorder %v2389, 2592
  %vm5954 = vcmp.lt.s32.totalorder %v2390, 2592
  %vm5955 = vcmp.lt.s32.totalorder %v2391, 2592
  %vm5956 = vcmp.lt.s32.totalorder %v2392, 2592
  %vm5957 = vcmp.lt.s32.totalorder %v2393, 2592
  %vm5958 = vcmp.lt.s32.totalorder %v2394, 2592
  %vm5959 = vcmp.lt.s32.totalorder %v2395, 2592
  %vm5960 = vcmp.lt.s32.totalorder %v2396, 2592
  %vm5961 = vcmp.lt.s32.totalorder %v2397, 2592
  %vm5962 = vcmp.lt.s32.totalorder %v2398, 2592
  %vm5963 = vcmp.lt.s32.totalorder %v2399, 2592
  %vm5964 = vcmp.lt.s32.totalorder %v2400, 2592
  %vm5965 = vcmp.lt.s32.totalorder %v2401, 2592
  %vm5966 = vcmp.lt.s32.totalorder %v2402, 2592
  %vm5967 = vcmp.lt.s32.totalorder %v2403, 2592
  %vm5968 = vcmp.lt.s32.totalorder %v2404, 2592
  %vm5969 = vcmp.lt.s32.totalorder %v2405, 2592
  %vm5970 = vcmp.lt.s32.totalorder %v2406, 2592
  %vm5971 = vcmp.lt.s32.totalorder %v2407, 2592
  %vm5972 = vcmp.lt.s32.totalorder %v2408, 2592
  %vm5973 = vcmp.lt.s32.totalorder %v2409, 2592
  %vm5974 = vcmp.lt.s32.totalorder %v2410, 2592
  %vm5975 = vcmp.lt.s32.totalorder %v2411, 2592
  %vm5976 = vcmp.lt.s32.totalorder %v2412, 2592
  %vm5977 = vcmp.lt.s32.totalorder %v2413, 2592
  %vm5978 = vcmp.lt.s32.totalorder %v2414, 2592
  %vm5979 = vcmp.lt.s32.totalorder %v2415, 2592
  %vm5980 = vcmp.lt.s32.totalorder %v2416, 2592
  %vm5981 = vcmp.lt.s32.totalorder %v2417, 2592
  %vm5982 = vcmp.lt.s32.totalorder %v2418, 2592
  %vm5983 = vcmp.lt.s32.totalorder %v2419, 2592
  %vm5984 = vcmp.lt.s32.totalorder %v2420, 2592
  %vm5985 = vcmp.lt.s32.totalorder %v2421, 2592
  %vm5986 = vcmp.lt.s32.totalorder %v2422, 2592
  %vm5987 = vcmp.lt.s32.totalorder %v2423, 2592
  %vm5988 = vcmp.lt.s32.totalorder %v2424, 2592
  %vm5989 = vcmp.lt.s32.totalorder %v2425, 2592
  %vm5990 = vcmp.lt.s32.totalorder %v2426, 2592
  %vm5991 = vcmp.lt.s32.totalorder %v2427, 2592
  %vm5992 = vcmp.lt.s32.totalorder %v2428, 2592
  %vm5993 = vcmp.lt.s32.totalorder %v2429, 2592
  %vm5994 = vcmp.lt.s32.totalorder %v2430, 2592
  %vm5995 = vcmp.lt.s32.totalorder %v2431, 2592
  %vm5996 = vcmp.lt.s32.totalorder %v2432, 2592
  %vm5997 = vcmp.lt.s32.totalorder %v2433, 2592
  %vm5998 = vcmp.lt.s32.totalorder %v2434, 2592
  %vm5999 = vcmp.lt.s32.totalorder %v2435, 2592
  %vm6000 = vcmp.lt.s32.totalorder %v2436, 2592
  %vm6001 = vcmp.lt.s32.totalorder %v2437, 2592
  %vm6002 = vcmp.lt.s32.totalorder %v2438, 2592
  %vm6003 = vcmp.lt.s32.totalorder %v2439, 2592
  %vm6004 = vcmp.lt.s32.totalorder %v2440, 2592
  %vm6005 = vcmp.lt.s32.totalorder %v2441, 2592
  %vm6006 = vcmp.lt.s32.totalorder %v2442, 2592
  %vm6007 = vcmp.lt.s32.totalorder %v2443, 2592
  %vm6008 = vcmp.lt.s32.totalorder %v2444, 2592
  %vm6009 = vcmp.lt.s32.totalorder %v2445, 2592
  %vm6010 = vcmp.lt.s32.totalorder %v2446, 2592
  %vm6011 = vcmp.lt.s32.totalorder %v2447, 2592
  %vm6012 = vcmp.lt.s32.totalorder %v2448, 2592
  %vm6013 = vcmp.lt.s32.totalorder %v2449, 2592
  %vm6014 = vcmp.lt.s32.totalorder %v2450, 2592
  %vm6015 = vcmp.lt.s32.totalorder %v2451, 2592
  %vm6016 = vcmp.lt.s32.totalorder %v2452, 2592
  %vm6017 = vcmp.lt.s32.totalorder %v2453, 2592
  %vm6018 = vcmp.lt.s32.totalorder %v2454, 2592
  %vm6019 = vcmp.lt.s32.totalorder %v2455, 2592
  %vm6020 = vcmp.lt.s32.totalorder %v2456, 2592
  %vm6021 = vcmp.lt.s32.totalorder %v2457, 2592
  %vm6022 = vcmp.lt.s32.totalorder %v2458, 2592
  %vm6023 = vcmp.lt.s32.totalorder %v2459, 2592
  %vm6024 = vcmp.lt.s32.totalorder %v2460, 2592
  %vm6025 = vcmp.lt.s32.totalorder %v2461, 2592
  %vm6026 = vcmp.lt.s32.totalorder %v2462, 2592
  %vm6027 = vcmp.lt.s32.totalorder %v2463, 2592
  %vm6028 = vcmp.lt.s32.totalorder %v2464, 2592
  %vm6029 = vcmp.lt.s32.totalorder %v2465, 2592
  %vm6030 = vcmp.lt.s32.totalorder %v2466, 2592
  %vm6031 = vcmp.lt.s32.totalorder %v2467, 2592
  %vm6032 = vcmp.lt.s32.totalorder %v2468, 2592
  %vm6033 = vcmp.lt.s32.totalorder %v2469, 2592
  %vm6034 = vcmp.lt.s32.totalorder %v2470, 2592
  %vm6035 = vcmp.lt.s32.totalorder %v2471, 2592
  %vm6036 = vcmp.lt.s32.totalorder %v2472, 2592
  %vm6037 = vcmp.lt.s32.totalorder %v2473, 2592
  %vm6038 = vcmp.lt.s32.totalorder %v2474, 2592
  %vm6039 = vcmp.lt.s32.totalorder %v2475, 2592
  %vm6040 = vcmp.lt.s32.totalorder %v2476, 2592
  %vm6041 = vcmp.lt.s32.totalorder %v2477, 2592
  %vm6042 = vcmp.lt.s32.totalorder %v2478, 2592
  %vm6043 = vcmp.lt.s32.totalorder %v2479, 2592
  %vm6044 = vcmp.lt.s32.totalorder %v2480, 2592
  %vm6045 = vcmp.lt.s32.totalorder %v2481, 2592
  %vm6046 = vcmp.lt.s32.totalorder %v2482, 2592
  %vm6047 = vcmp.lt.s32.totalorder %v2483, 2592
  %vm6048 = vcmp.lt.s32.totalorder %v2484, 2592
  %vm6049 = vcmp.lt.s32.totalorder %v2485, 2592
  %vm6050 = vcmp.lt.s32.totalorder %v2486, 2592
  %vm6051 = vcmp.lt.s32.totalorder %v2487, 2592
  %vm6052 = vcmp.lt.s32.totalorder %v2488, 2592
  %vm6053 = vcmp.lt.s32.totalorder %v2489, 2592
  %vm6054 = vcmp.lt.s32.totalorder %v2490, 2592
  %vm6055 = vcmp.lt.s32.totalorder %v2491, 2592
  %vm6056 = vcmp.lt.s32.totalorder %v2492, 2592
  %vm6057 = vcmp.lt.s32.totalorder %v2493, 2592
  %vm6058 = vcmp.lt.s32.totalorder %v2494, 2592
  %vm6059 = vcmp.lt.s32.totalorder %v2495, 2592
  %vm6060 = vcmp.lt.s32.totalorder %v2496, 2592
  %vm6061 = vcmp.lt.s32.totalorder %v2497, 2592
  %vm6062 = vcmp.lt.s32.totalorder %v2498, 2592
  %vm6063 = vcmp.lt.s32.totalorder %v2499, 2592
  %vm6064 = vcmp.lt.s32.totalorder %v2500, 2592
  %vm6065 = vcmp.lt.s32.totalorder %v2501, 2592
  %vm6066 = vcmp.lt.s32.totalorder %v2502, 2592
  %vm6067 = vcmp.lt.s32.totalorder %v2503, 2592
  %vm6068 = vcmp.lt.s32.totalorder %v2504, 2592
  %vm6069 = vcmp.lt.s32.totalorder %v2505, 2592
  %vm6070 = vcmp.lt.s32.totalorder %v2506, 2592
  %vm6071 = vcmp.lt.s32.totalorder %v2507, 2592
  %vm6072 = vcmp.lt.s32.totalorder %v2508, 2592
  %vm6073 = vcmp.lt.s32.totalorder %v2509, 2592
  %vm6074 = vcmp.lt.s32.totalorder %v2510, 2592
  %vm6075 = vcmp.lt.s32.totalorder %v2511, 2592
  %vm6076 = vcmp.lt.s32.totalorder %v2512, 2592
  %vm6077 = vcmp.lt.s32.totalorder %v2513, 2592
  %vm6078 = vcmp.lt.s32.totalorder %v2514, 2592
  %vm6079 = vcmp.lt.s32.totalorder %v2515, 2592
  %vm6080 = vcmp.lt.s32.totalorder %v2516, 2592
  %vm6081 = vcmp.lt.s32.totalorder %v2517, 2592
  %vm6082 = vcmp.lt.s32.totalorder %v2518, 2592
  %vm6083 = vcmp.lt.s32.totalorder %v2519, 2592
  %vm6084 = vcmp.lt.s32.totalorder %v2520, 2592
  %vm6085 = vcmp.lt.s32.totalorder %v2521, 2592
  %vm6086 = vcmp.lt.s32.totalorder %v2522, 2592
  %vm6087 = vcmp.lt.s32.totalorder %v2523, 2592
  %vm6088 = vcmp.lt.s32.totalorder %v2524, 2592
  %vm6089 = vcmp.lt.s32.totalorder %v2525, 2592
  %vm6090 = vcmp.lt.s32.totalorder %v2526, 2592
  %vm6091 = vcmp.lt.s32.totalorder %v2527, 2592
  %vm6092 = vcmp.lt.s32.totalorder %v2528, 2592
  %vm6093 = vcmp.lt.s32.totalorder %v2529, 2592
  %vm6094 = vcmp.lt.s32.totalorder %v2530, 2592
  %vm6095 = vcmp.lt.s32.totalorder %v2531, 2592
  %vm6096 = vcmp.lt.s32.totalorder %v2532, 2592
  %vm6097 = vcmp.lt.s32.totalorder %v2533, 2592
  %vm6098 = vcmp.lt.s32.totalorder %v2534, 2592
  %vm6099 = vcmp.lt.s32.totalorder %v2535, 2592
  %vm6100 = vcmp.lt.s32.totalorder %v2536, 2592
  %vm6101 = vcmp.lt.s32.totalorder %v2537, 2592
  %vm6102 = vcmp.lt.s32.totalorder %v2538, 2592
  %vm6103 = vcmp.lt.s32.totalorder %v2539, 2592
  %vm6104 = vcmp.lt.s32.totalorder %v2540, 2592
  %vm6105 = vcmp.lt.s32.totalorder %v2541, 2592
  %vm6106 = vcmp.lt.s32.totalorder %v2542, 2592
  %vm6107 = vcmp.lt.s32.totalorder %v2543, 2592
  %vm6108 = vcmp.lt.s32.totalorder %v2544, 2592
  %vm6109 = vcmp.lt.s32.totalorder %v2545, 2592
  %vm6110 = vcmp.lt.s32.totalorder %v2546, 2592
  %vm6111 = vcmp.lt.s32.totalorder %v2547, 2592
  %vm6112 = vcmp.lt.s32.totalorder %v2548, 2592
  %vm6113 = vcmp.lt.s32.totalorder %v2549, 2592
  %vm6114 = vcmp.lt.s32.totalorder %v2550, 2592
  %vm6115 = vcmp.lt.s32.totalorder %v2551, 2592
  %vm6116 = vcmp.lt.s32.totalorder %v2552, 2592
  %vm6117 = vcmp.lt.s32.totalorder %v2553, 2592
  %vm6118 = vcmp.lt.s32.totalorder %v2554, 2592
  %vm6119 = vcmp.lt.s32.totalorder %v2555, 2592
  %vm6120 = vcmp.lt.s32.totalorder %v2556, 2592
  %vm6121 = vcmp.lt.s32.totalorder %v2557, 2592
  %vm6122 = vcmp.lt.s32.totalorder %v2558, 2592
  %vm6123 = vcmp.lt.s32.totalorder %v2559, 2592
  %vm6124 = vcmp.lt.s32.totalorder %v2560, 2592
  %vm6125 = vcmp.lt.s32.totalorder %v2561, 2592
  %vm6126 = vcmp.lt.s32.totalorder %v2562, 2592
  %vm6127 = vcmp.lt.s32.totalorder %v2563, 2592
  %vm6128 = vcmp.lt.s32.totalorder %v2564, 2592
  %vm6129 = vcmp.lt.s32.totalorder %v2565, 2592
  %vm6130 = vcmp.lt.s32.totalorder %v2566, 2592
  %vm6131 = vcmp.lt.s32.totalorder %v2567, 2592
  %vm6132 = vcmp.lt.s32.totalorder %v2568, 2592
  %vm6133 = vcmp.lt.s32.totalorder %v2569, 2592
  %vm6134 = vcmp.lt.s32.totalorder %v2570, 2592
  %vm6135 = vcmp.lt.s32.totalorder %v2571, 2592
  %vm6136 = vcmp.lt.s32.totalorder %v2572, 2592
  %vm6137 = vcmp.lt.s32.totalorder %v2573, 2592
  %vm6138 = vcmp.lt.s32.totalorder %v2574, 2592
  %vm6139 = vcmp.lt.s32.totalorder %v2575, 2592
  %vm6140 = vcmp.lt.s32.totalorder %v2576, 2592
  %vm6141 = vcmp.lt.s32.totalorder %v2577, 2592
  %vm6142 = vcmp.lt.s32.totalorder %v2578, 2592
  %vm6143 = vcmp.lt.s32.totalorder %v2579, 2592
  %vm6144 = vcmp.lt.s32.totalorder %v2580, 2592
  %vm6145 = vcmp.lt.s32.totalorder %v2581, 2592
  %vm6146 = vcmp.lt.s32.totalorder %v2582, 2592
  %vm6147 = vcmp.lt.s32.totalorder %v2583, 2592
  %vm6148 = vcmp.lt.s32.totalorder %v2584, 2592
  %vm6149 = vcmp.lt.s32.totalorder %v2585, 2592
  %vm6150 = vcmp.lt.s32.totalorder %v2586, 2592
  %vm6151 = vcmp.lt.s32.totalorder %v2587, 2592
  %vm6152 = vcmp.lt.s32.totalorder %v2588, 2592
  %vm6153 = vcmp.lt.s32.totalorder %v2589, 2592
  %vm6154 = vcmp.lt.s32.totalorder %v2590, 2592
  %vm6155 = vcmp.lt.s32.totalorder %v2591, 2592
  %vm6156 = vcmp.lt.s32.totalorder %v2592, 2592
  %vm6157 = vcmp.lt.s32.totalorder %v2593, 2592
  %vm6158 = vcmp.lt.s32.totalorder %v2594, 2592
  %vm6159 = vcmp.lt.s32.totalorder %v2595, 2592
  %vm6160 = vcmp.lt.s32.totalorder %v2596, 2592
  %vm6161 = vcmp.lt.s32.totalorder %v2597, 2592
  %vm6162 = vcmp.lt.s32.totalorder %v2598, 2592
  %vm6163 = vcmp.lt.s32.totalorder %v2599, 2592
  %vm6164 = vcmp.lt.s32.totalorder %v2600, 2592
  %vm6165 = vcmp.lt.s32.totalorder %v2601, 2592
  %vm6166 = vcmp.lt.s32.totalorder %v2602, 2592
  %vm6167 = vcmp.lt.s32.totalorder %v2603, 2592
  %vm6168 = vcmp.lt.s32.totalorder %v2604, 2592
  %vm6169 = vcmp.lt.s32.totalorder %v2605, 2592
  %vm6170 = vcmp.lt.s32.totalorder %v2606, 2592
  %vm6171 = vcmp.lt.s32.totalorder %v2607, 2592
  %vm6172 = vcmp.lt.s32.totalorder %v2608, 2592
  %vm6173 = vcmp.lt.s32.totalorder %v2609, 2592
  %vm6174 = vcmp.lt.s32.totalorder %v2610, 2592
  %vm6175 = vcmp.lt.s32.totalorder %v2611, 2592
  %vm6176 = vcmp.lt.s32.totalorder %v2612, 2592
  %vm6177 = vcmp.lt.s32.totalorder %v2613, 2592
  %vm6178 = vcmp.lt.s32.totalorder %v2614, 2592
  %vm6179 = vcmp.lt.s32.totalorder %v2615, 2592
  %vm6180 = vcmp.lt.s32.totalorder %v2616, 2592
  %vm6181 = vcmp.lt.s32.totalorder %v2617, 2592
  %vm6182 = vcmp.lt.s32.totalorder %v2618, 2592
  %vm6183 = vcmp.lt.s32.totalorder %v2619, 2592
  %vm6184 = vcmp.lt.s32.totalorder %v2620, 2592
  %vm6185 = vcmp.lt.s32.totalorder %v2621, 2592
  %vm6186 = vcmp.lt.s32.totalorder %v2622, 2592
  %vm6187 = vcmp.lt.s32.totalorder %v2623, 2592
  %vm6188 = vcmp.lt.s32.totalorder %v2624, 2592
  %vm6189 = vcmp.lt.s32.totalorder %v2625, 2592
  %vm6190 = vcmp.lt.s32.totalorder %v2626, 2592
  %vm6191 = vcmp.lt.s32.totalorder %v2627, 2592
  %vm6192 = vcmp.lt.s32.totalorder %v2628, 2592
  %vm6193 = vcmp.lt.s32.totalorder %v2629, 2592
  %vm6194 = vcmp.lt.s32.totalorder %v2630, 2592
  %vm6195 = vcmp.lt.s32.totalorder %v2631, 2592
  %vm6196 = vcmp.lt.s32.totalorder %v2632, 2592
  %vm6197 = vcmp.lt.s32.totalorder %v2633, 2592
  %vm6198 = vcmp.lt.s32.totalorder %v2634, 2592
  %vm6199 = vcmp.lt.s32.totalorder %v2635, 2592
  %vm6200 = vcmp.lt.s32.totalorder %v2636, 2592
  %vm6201 = vcmp.lt.s32.totalorder %v2637, 2592
  %vm6202 = vcmp.lt.s32.totalorder %v2638, 2592
  %vm6203 = vmand %vm5555, %vm5879
  %vm6204 = vmand %vm5556, %vm5880
  %vm6205 = vmand %vm5557, %vm5881
  %vm6206 = vmand %vm5558, %vm5882
  %vm6207 = vmand %vm5559, %vm5883
  %vm6208 = vmand %vm5560, %vm5884
  %vm6209 = vmand %vm5561, %vm5885
  %vm6210 = vmand %vm5562, %vm5886
  %vm6211 = vmand %vm5563, %vm5887
  %vm6212 = vmand %vm5564, %vm5888
  %vm6213 = vmand %vm5565, %vm5889
  %vm6214 = vmand %vm5566, %vm5890
  %vm6215 = vmand %vm5567, %vm5891
  %vm6216 = vmand %vm5568, %vm5892
  %vm6217 = vmand %vm5569, %vm5893
  %vm6218 = vmand %vm5570, %vm5894
  %vm6219 = vmand %vm5571, %vm5895
  %vm6220 = vmand %vm5572, %vm5896
  %vm6221 = vmand %vm5573, %vm5897
  %vm6222 = vmand %vm5574, %vm5898
  %vm6223 = vmand %vm5575, %vm5899
  %vm6224 = vmand %vm5576, %vm5900
  %vm6225 = vmand %vm5577, %vm5901
  %vm6226 = vmand %vm5578, %vm5902
  %vm6227 = vmand %vm5579, %vm5903
  %vm6228 = vmand %vm5580, %vm5904
  %vm6229 = vmand %vm5581, %vm5905
  %vm6230 = vmand %vm5582, %vm5906
  %vm6231 = vmand %vm5583, %vm5907
  %vm6232 = vmand %vm5584, %vm5908
  %vm6233 = vmand %vm5585, %vm5909
  %vm6234 = vmand %vm5586, %vm5910
  %vm6235 = vmand %vm5587, %vm5911
  %vm6236 = vmand %vm5588, %vm5912
  %vm6237 = vmand %vm5589, %vm5913
  %vm6238 = vmand %vm5590, %vm5914
  %vm6239 = vmand %vm5591, %vm5915
  %vm6240 = vmand %vm5592, %vm5916
  %vm6241 = vmand %vm5593, %vm5917
  %vm6242 = vmand %vm5594, %vm5918
  %vm6243 = vmand %vm5595, %vm5919
  %vm6244 = vmand %vm5596, %vm5920
  %vm6245 = vmand %vm5597, %vm5921
  %vm6246 = vmand %vm5598, %vm5922
  %vm6247 = vmand %vm5599, %vm5923
  %vm6248 = vmand %vm5600, %vm5924
  %vm6249 = vmand %vm5601, %vm5925
  %vm6250 = vmand %vm5602, %vm5926
  %vm6251 = vmand %vm5603, %vm5927
  %vm6252 = vmand %vm5604, %vm5928
  %vm6253 = vmand %vm5605, %vm5929
  %vm6254 = vmand %vm5606, %vm5930
  %vm6255 = vmand %vm5607, %vm5931
  %vm6256 = vmand %vm5608, %vm5932
  %vm6257 = vmand %vm5609, %vm5933
  %vm6258 = vmand %vm5610, %vm5934
  %vm6259 = vmand %vm5611, %vm5935
  %vm6260 = vmand %vm5612, %vm5936
  %vm6261 = vmand %vm5613, %vm5937
  %vm6262 = vmand %vm5614, %vm5938
  %vm6263 = vmand %vm5615, %vm5939
  %vm6264 = vmand %vm5616, %vm5940
  %vm6265 = vmand %vm5617, %vm5941
  %vm6266 = vmand %vm5618, %vm5942
  %vm6267 = vmand %vm5619, %vm5943
  %vm6268 = vmand %vm5620, %vm5944
  %vm6269 = vmand %vm5621, %vm5945
  %vm6270 = vmand %vm5622, %vm5946
  %vm6271 = vmand %vm5623, %vm5947
  %vm6272 = vmand %vm5624, %vm5948
  %vm6273 = vmand %vm5625, %vm5949
  %vm6274 = vmand %vm5626, %vm5950
  %vm6275 = vmand %vm5627, %vm5951
  %vm6276 = vmand %vm5628, %vm5952
  %vm6277 = vmand %vm5629, %vm5953
  %vm6278 = vmand %vm5630, %vm5954
  %vm6279 = vmand %vm5631, %vm5955
  %vm6280 = vmand %vm5632, %vm5956
  %vm6281 = vmand %vm5633, %vm5957
  %vm6282 = vmand %vm5634, %vm5958
  %vm6283 = vmand %vm5635, %vm5959
  %vm6284 = vmand %vm5636, %vm5960
  %vm6285 = vmand %vm5637, %vm5961
  %vm6286 = vmand %vm5638, %vm5962
  %vm6287 = vmand %vm5639, %vm5963
  %vm6288 = vmand %vm5640, %vm5964
  %vm6289 = vmand %vm5641, %vm5965
  %vm6290 = vmand %vm5642, %vm5966
  %vm6291 = vmand %vm5643, %vm5967
  %vm6292 = vmand %vm5644, %vm5968
  %vm6293 = vmand %vm5645, %vm5969
  %vm6294 = vmand %vm5646, %vm5970
  %vm6295 = vmand %vm5647, %vm5971
  %vm6296 = vmand %vm5648, %vm5972
  %vm6297 = vmand %vm5649, %vm5973
  %vm6298 = vmand %vm5650, %vm5974
  %vm6299 = vmand %vm5651, %vm5975
  %vm6300 = vmand %vm5652, %vm5976
  %vm6301 = vmand %vm5653, %vm5977
  %vm6302 = vmand %vm5654, %vm5978
  %vm6303 = vmand %vm5655, %vm5979
  %vm6304 = vmand %vm5656, %vm5980
  %vm6305 = vmand %vm5657, %vm5981
  %vm6306 = vmand %vm5658, %vm5982
  %vm6307 = vmand %vm5659, %vm5983
  %vm6308 = vmand %vm5660, %vm5984
  %vm6309 = vmand %vm5661, %vm5985
  %vm6310 = vmand %vm5662, %vm5986
  %vm6311 = vmand %vm5663, %vm5987
  %vm6312 = vmand %vm5664, %vm5988
  %vm6313 = vmand %vm5665, %vm5989
  %vm6314 = vmand %vm5666, %vm5990
  %vm6315 = vmand %vm5667, %vm5991
  %vm6316 = vmand %vm5668, %vm5992
  %vm6317 = vmand %vm5669, %vm5993
  %vm6318 = vmand %vm5670, %vm5994
  %vm6319 = vmand %vm5671, %vm5995
  %vm6320 = vmand %vm5672, %vm5996
  %vm6321 = vmand %vm5673, %vm5997
  %vm6322 = vmand %vm5674, %vm5998
  %vm6323 = vmand %vm5675, %vm5999
  %vm6324 = vmand %vm5676, %vm6000
  %vm6325 = vmand %vm5677, %vm6001
  %vm6326 = vmand %vm5678, %vm6002
  %vm6327 = vmand %vm5679, %vm6003
  %vm6328 = vmand %vm5680, %vm6004
  %vm6329 = vmand %vm5681, %vm6005
  %vm6330 = vmand %vm5682, %vm6006
  %vm6331 = vmand %vm5683, %vm6007
  %vm6332 = vmand %vm5684, %vm6008
  %vm6333 = vmand %vm5685, %vm6009
  %vm6334 = vmand %vm5686, %vm6010
  %vm6335 = vmand %vm5687, %vm6011
  %vm6336 = vmand %vm5688, %vm6012
  %vm6337 = vmand %vm5689, %vm6013
  %vm6338 = vmand %vm5690, %vm6014
  %vm6339 = vmand %vm5691, %vm6015
  %vm6340 = vmand %vm5692, %vm6016
  %vm6341 = vmand %vm5693, %vm6017
  %vm6342 = vmand %vm5694, %vm6018
  %vm6343 = vmand %vm5695, %vm6019
  %vm6344 = vmand %vm5696, %vm6020
  %vm6345 = vmand %vm5697, %vm6021
  %vm6346 = vmand %vm5698, %vm6022
  %vm6347 = vmand %vm5699, %vm6023
  %vm6348 = vmand %vm5700, %vm6024
  %vm6349 = vmand %vm5701, %vm6025
  %vm6350 = vmand %vm5702, %vm6026
  %vm6351 = vmand %vm5703, %vm6027
  %vm6352 = vmand %vm5704, %vm6028
  %vm6353 = vmand %vm5705, %vm6029
  %vm6354 = vmand %vm5706, %vm6030
  %vm6355 = vmand %vm5707, %vm6031
  %vm6356 = vmand %vm5708, %vm6032
  %vm6357 = vmand %vm5709, %vm6033
  %vm6358 = vmand %vm5710, %vm6034
  %vm6359 = vmand %vm5711, %vm6035
  %vm6360 = vmand %vm5712, %vm6036
  %vm6361 = vmand %vm5713, %vm6037
  %vm6362 = vmand %vm5714, %vm6038
  %vm6363 = vmand %vm5715, %vm6039
  %vm6364 = vmand %vm5716, %vm6040
  %vm6365 = vmand %vm5717, %vm6041
  %vm6366 = vmand %vm5718, %vm6042
  %vm6367 = vmand %vm5719, %vm6043
  %vm6368 = vmand %vm5720, %vm6044
  %vm6369 = vmand %vm5721, %vm6045
  %vm6370 = vmand %vm5722, %vm6046
  %vm6371 = vmand %vm5723, %vm6047
  %vm6372 = vmand %vm5724, %vm6048
  %vm6373 = vmand %vm5725, %vm6049
  %vm6374 = vmand %vm5726, %vm6050
  %vm6375 = vmand %vm5727, %vm6051
  %vm6376 = vmand %vm5728, %vm6052
  %vm6377 = vmand %vm5729, %vm6053
  %vm6378 = vmand %vm5730, %vm6054
  %vm6379 = vmand %vm5731, %vm6055
  %vm6380 = vmand %vm5732, %vm6056
  %vm6381 = vmand %vm5733, %vm6057
  %vm6382 = vmand %vm5734, %vm6058
  %vm6383 = vmand %vm5735, %vm6059
  %vm6384 = vmand %vm5736, %vm6060
  %vm6385 = vmand %vm5737, %vm6061
  %vm6386 = vmand %vm5738, %vm6062
  %vm6387 = vmand %vm5739, %vm6063
  %vm6388 = vmand %vm5740, %vm6064
  %vm6389 = vmand %vm5741, %vm6065
  %vm6390 = vmand %vm5742, %vm6066
  %vm6391 = vmand %vm5743, %vm6067
  %vm6392 = vmand %vm5744, %vm6068
  %vm6393 = vmand %vm5745, %vm6069
  %vm6394 = vmand %vm5746, %vm6070
  %vm6395 = vmand %vm5747, %vm6071
  %vm6396 = vmand %vm5748, %vm6072
  %vm6397 = vmand %vm5749, %vm6073
  %vm6398 = vmand %vm5750, %vm6074
  %vm6399 = vmand %vm5751, %vm6075
  %vm6400 = vmand %vm5752, %vm6076
  %vm6401 = vmand %vm5753, %vm6077
  %vm6402 = vmand %vm5754, %vm6078
  %vm6403 = vmand %vm5755, %vm6079
  %vm6404 = vmand %vm5756, %vm6080
  %vm6405 = vmand %vm5757, %vm6081
  %vm6406 = vmand %vm5758, %vm6082
  %vm6407 = vmand %vm5759, %vm6083
  %vm6408 = vmand %vm5760, %vm6084
  %vm6409 = vmand %vm5761, %vm6085
  %vm6410 = vmand %vm5762, %vm6086
  %vm6411 = vmand %vm5763, %vm6087
  %vm6412 = vmand %vm5764, %vm6088
  %vm6413 = vmand %vm5765, %vm6089
  %vm6414 = vmand %vm5766, %vm6090
  %vm6415 = vmand %vm5767, %vm6091
  %vm6416 = vmand %vm5768, %vm6092
  %vm6417 = vmand %vm5769, %vm6093
  %vm6418 = vmand %vm5770, %vm6094
  %vm6419 = vmand %vm5771, %vm6095
  %vm6420 = vmand %vm5772, %vm6096
  %vm6421 = vmand %vm5773, %vm6097
  %vm6422 = vmand %vm5774, %vm6098
  %vm6423 = vmand %vm5775, %vm6099
  %vm6424 = vmand %vm5776, %vm6100
  %vm6425 = vmand %vm5777, %vm6101
  %vm6426 = vmand %vm5778, %vm6102
  %vm6427 = vmand %vm5779, %vm6103
  %vm6428 = vmand %vm5780, %vm6104
  %vm6429 = vmand %vm5781, %vm6105
  %vm6430 = vmand %vm5782, %vm6106
  %vm6431 = vmand %vm5783, %vm6107
  %vm6432 = vmand %vm5784, %vm6108
  %vm6433 = vmand %vm5785, %vm6109
  %vm6434 = vmand %vm5786, %vm6110
  %vm6435 = vmand %vm5787, %vm6111
  %vm6436 = vmand %vm5788, %vm6112
  %vm6437 = vmand %vm5789, %vm6113
  %vm6438 = vmand %vm5790, %vm6114
  %vm6439 = vmand %vm5791, %vm6115
  %vm6440 = vmand %vm5792, %vm6116
  %vm6441 = vmand %vm5793, %vm6117
  %vm6442 = vmand %vm5794, %vm6118
  %vm6443 = vmand %vm5795, %vm6119
  %vm6444 = vmand %vm5796, %vm6120
  %vm6445 = vmand %vm5797, %vm6121
  %vm6446 = vmand %vm5798, %vm6122
  %vm6447 = vmand %vm5799, %vm6123
  %vm6448 = vmand %vm5800, %vm6124
  %vm6449 = vmand %vm5801, %vm6125
  %vm6450 = vmand %vm5802, %vm6126
  %vm6451 = vmand %vm5803, %vm6127
  %vm6452 = vmand %vm5804, %vm6128
  %vm6453 = vmand %vm5805, %vm6129
  %vm6454 = vmand %vm5806, %vm6130
  %vm6455 = vmand %vm5807, %vm6131
  %vm6456 = vmand %vm5808, %vm6132
  %vm6457 = vmand %vm5809, %vm6133
  %vm6458 = vmand %vm5810, %vm6134
  %vm6459 = vmand %vm5811, %vm6135
  %vm6460 = vmand %vm5812, %vm6136
  %vm6461 = vmand %vm5813, %vm6137
  %vm6462 = vmand %vm5814, %vm6138
  %vm6463 = vmand %vm5815, %vm6139
  %vm6464 = vmand %vm5816, %vm6140
  %vm6465 = vmand %vm5817, %vm6141
  %vm6466 = vmand %vm5818, %vm6142
  %vm6467 = vmand %vm5819, %vm6143
  %vm6468 = vmand %vm5820, %vm6144
  %vm6469 = vmand %vm5821, %vm6145
  %vm6470 = vmand %vm5822, %vm6146
  %vm6471 = vmand %vm5823, %vm6147
  %vm6472 = vmand %vm5824, %vm6148
  %vm6473 = vmand %vm5825, %vm6149
  %vm6474 = vmand %vm5826, %vm6150
  %vm6475 = vmand %vm5827, %vm6151
  %vm6476 = vmand %vm5828, %vm6152
  %vm6477 = vmand %vm5829, %vm6153
  %vm6478 = vmand %vm5830, %vm6154
  %vm6479 = vmand %vm5831, %vm6155
  %vm6480 = vmand %vm5832, %vm6156
  %vm6481 = vmand %vm5833, %vm6157
  %vm6482 = vmand %vm5834, %vm6158
  %vm6483 = vmand %vm5835, %vm6159
  %vm6484 = vmand %vm5836, %vm6160
  %vm6485 = vmand %vm5837, %vm6161
  %vm6486 = vmand %vm5838, %vm6162
  %vm6487 = vmand %vm5839, %vm6163
  %vm6488 = vmand %vm5840, %vm6164
  %vm6489 = vmand %vm5841, %vm6165
  %vm6490 = vmand %vm5842, %vm6166
  %vm6491 = vmand %vm5843, %vm6167
  %vm6492 = vmand %vm5844, %vm6168
  %vm6493 = vmand %vm5845, %vm6169
  %vm6494 = vmand %vm5846, %vm6170
  %vm6495 = vmand %vm5847, %vm6171
  %vm6496 = vmand %vm5848, %vm6172
  %vm6497 = vmand %vm5849, %vm6173
  %vm6498 = vmand %vm5850, %vm6174
  %vm6499 = vmand %vm5851, %vm6175
  %vm6500 = vmand %vm5852, %vm6176
  %vm6501 = vmand %vm5853, %vm6177
  %vm6502 = vmand %vm5854, %vm6178
  %vm6503 = vmand %vm5855, %vm6179
  %vm6504 = vmand %vm5856, %vm6180
  %vm6505 = vmand %vm5857, %vm6181
  %vm6506 = vmand %vm5858, %vm6182
  %vm6507 = vmand %vm5859, %vm6183
  %vm6508 = vmand %vm5860, %vm6184
  %vm6509 = vmand %vm5861, %vm6185
  %vm6510 = vmand %vm5862, %vm6186
  %vm6511 = vmand %vm5863, %vm6187
  %vm6512 = vmand %vm5864, %vm6188
  %vm6513 = vmand %vm5865, %vm6189
  %vm6514 = vmand %vm5866, %vm6190
  %vm6515 = vmand %vm5867, %vm6191
  %vm6516 = vmand %vm5868, %vm6192
  %vm6517 = vmand %vm5869, %vm6193
  %vm6518 = vmand %vm5870, %vm6194
  %vm6519 = vmand %vm5871, %vm6195
  %vm6520 = vmand %vm5872, %vm6196
  %vm6521 = vmand %vm5873, %vm6197
  %vm6522 = vmand %vm5874, %vm6198
  %vm6523 = vmand %vm5875, %vm6199
  %vm6524 = vmand %vm5876, %vm6200
  %vm6525 = vmand %vm5877, %vm6201
  %vm6526 = vmand %vm5878, %vm6202
  %vm6527 = vmor %vm5231, %vm6203
  %vm6528 = vmor %vm5232, %vm6204
  %vm6529 = vmor %vm5233, %vm6205
  %vm6530 = vmor %vm5234, %vm6206
  %vm6531 = vmor %vm5235, %vm6207
  %vm6532 = vmor %vm5236, %vm6208
  %vm6533 = vmor %vm5237, %vm6209
  %vm6534 = vmor %vm5238, %vm6210
  %vm6535 = vmor %vm5239, %vm6211
  %vm6536 = vmor %vm5240, %vm6212
  %vm6537 = vmor %vm5241, %vm6213
  %vm6538 = vmor %vm5242, %vm6214
  %vm6539 = vmor %vm5243, %vm6215
  %vm6540 = vmor %vm5244, %vm6216
  %vm6541 = vmor %vm5245, %vm6217
  %vm6542 = vmor %vm5246, %vm6218
  %vm6543 = vmor %vm5247, %vm6219
  %vm6544 = vmor %vm5248, %vm6220
  %vm6545 = vmor %vm5249, %vm6221
  %vm6546 = vmor %vm5250, %vm6222
  %vm6547 = vmor %vm5251, %vm6223
  %vm6548 = vmor %vm5252, %vm6224
  %vm6549 = vmor %vm5253, %vm6225
  %vm6550 = vmor %vm5254, %vm6226
  %vm6551 = vmor %vm5255, %vm6227
  %vm6552 = vmor %vm5256, %vm6228
  %vm6553 = vmor %vm5257, %vm6229
  %vm6554 = vmor %vm5258, %vm6230
  %vm6555 = vmor %vm5259, %vm6231
  %vm6556 = vmor %vm5260, %vm6232
  %vm6557 = vmor %vm5261, %vm6233
  %vm6558 = vmor %vm5262, %vm6234
  %vm6559 = vmor %vm5263, %vm6235
  %vm6560 = vmor %vm5264, %vm6236
  %vm6561 = vmor %vm5265, %vm6237
  %vm6562 = vmor %vm5266, %vm6238
  %vm6563 = vmor %vm5267, %vm6239
  %vm6564 = vmor %vm5268, %vm6240
  %vm6565 = vmor %vm5269, %vm6241
  %vm6566 = vmor %vm5270, %vm6242
  %vm6567 = vmor %vm5271, %vm6243
  %vm6568 = vmor %vm5272, %vm6244
  %vm6569 = vmor %vm5273, %vm6245
  %vm6570 = vmor %vm5274, %vm6246
  %vm6571 = vmor %vm5275, %vm6247
  %vm6572 = vmor %vm5276, %vm6248
  %vm6573 = vmor %vm5277, %vm6249
  %vm6574 = vmor %vm5278, %vm6250
  %vm6575 = vmor %vm5279, %vm6251
  %vm6576 = vmor %vm5280, %vm6252
  %vm6577 = vmor %vm5281, %vm6253
  %vm6578 = vmor %vm5282, %vm6254
  %vm6579 = vmor %vm5283, %vm6255
  %vm6580 = vmor %vm5284, %vm6256
  %vm6581 = vmor %vm5285, %vm6257
  %vm6582 = vmor %vm5286, %vm6258
  %vm6583 = vmor %vm5287, %vm6259
  %vm6584 = vmor %vm5288, %vm6260
  %vm6585 = vmor %vm5289, %vm6261
  %vm6586 = vmor %vm5290, %vm6262
  %vm6587 = vmor %vm5291, %vm6263
  %vm6588 = vmor %vm5292, %vm6264
  %vm6589 = vmor %vm5293, %vm6265
  %vm6590 = vmor %vm5294, %vm6266
  %vm6591 = vmor %vm5295, %vm6267
  %vm6592 = vmor %vm5296, %vm6268
  %vm6593 = vmor %vm5297, %vm6269
  %vm6594 = vmor %vm5298, %vm6270
  %vm6595 = vmor %vm5299, %vm6271
  %vm6596 = vmor %vm5300, %vm6272
  %vm6597 = vmor %vm5301, %vm6273
  %vm6598 = vmor %vm5302, %vm6274
  %vm6599 = vmor %vm5303, %vm6275
  %vm6600 = vmor %vm5304, %vm6276
  %vm6601 = vmor %vm5305, %vm6277
  %vm6602 = vmor %vm5306, %vm6278
  %vm6603 = vmor %vm5307, %vm6279
  %vm6604 = vmor %vm5308, %vm6280
  %vm6605 = vmor %vm5309, %vm6281
  %vm6606 = vmor %vm5310, %vm6282
  %vm6607 = vmor %vm5311, %vm6283
  %vm6608 = vmor %vm5312, %vm6284
  %vm6609 = vmor %vm5313, %vm6285
  %vm6610 = vmor %vm5314, %vm6286
  %vm6611 = vmor %vm5315, %vm6287
  %vm6612 = vmor %vm5316, %vm6288
  %vm6613 = vmor %vm5317, %vm6289
  %vm6614 = vmor %vm5318, %vm6290
  %vm6615 = vmor %vm5319, %vm6291
  %vm6616 = vmor %vm5320, %vm6292
  %vm6617 = vmor %vm5321, %vm6293
  %vm6618 = vmor %vm5322, %vm6294
  %vm6619 = vmor %vm5323, %vm6295
  %vm6620 = vmor %vm5324, %vm6296
  %vm6621 = vmor %vm5325, %vm6297
  %vm6622 = vmor %vm5326, %vm6298
  %vm6623 = vmor %vm5327, %vm6299
  %vm6624 = vmor %vm5328, %vm6300
  %vm6625 = vmor %vm5329, %vm6301
  %vm6626 = vmor %vm5330, %vm6302
  %vm6627 = vmor %vm5331, %vm6303
  %vm6628 = vmor %vm5332, %vm6304
  %vm6629 = vmor %vm5333, %vm6305
  %vm6630 = vmor %vm5334, %vm6306
  %vm6631 = vmor %vm5335, %vm6307
  %vm6632 = vmor %vm5336, %vm6308
  %vm6633 = vmor %vm5337, %vm6309
  %vm6634 = vmor %vm5338, %vm6310
  %vm6635 = vmor %vm5339, %vm6311
  %vm6636 = vmor %vm5340, %vm6312
  %vm6637 = vmor %vm5341, %vm6313
  %vm6638 = vmor %vm5342, %vm6314
  %vm6639 = vmor %vm5343, %vm6315
  %vm6640 = vmor %vm5344, %vm6316
  %vm6641 = vmor %vm5345, %vm6317
  %vm6642 = vmor %vm5346, %vm6318
  %vm6643 = vmor %vm5347, %vm6319
  %vm6644 = vmor %vm5348, %vm6320
  %vm6645 = vmor %vm5349, %vm6321
  %vm6646 = vmor %vm5350, %vm6322
  %vm6647 = vmor %vm5351, %vm6323
  %vm6648 = vmor %vm5352, %vm6324
  %vm6649 = vmor %vm5353, %vm6325
  %vm6650 = vmor %vm5354, %vm6326
  %vm6651 = vmor %vm5355, %vm6327
  %vm6652 = vmor %vm5356, %vm6328
  %vm6653 = vmor %vm5357, %vm6329
  %vm6654 = vmor %vm5358, %vm6330
  %vm6655 = vmor %vm5359, %vm6331
  %vm6656 = vmor %vm5360, %vm6332
  %vm6657 = vmor %vm5361, %vm6333
  %vm6658 = vmor %vm5362, %vm6334
  %vm6659 = vmor %vm5363, %vm6335
  %vm6660 = vmor %vm5364, %vm6336
  %vm6661 = vmor %vm5365, %vm6337
  %vm6662 = vmor %vm5366, %vm6338
  %vm6663 = vmor %vm5367, %vm6339
  %vm6664 = vmor %vm5368, %vm6340
  %vm6665 = vmor %vm5369, %vm6341
  %vm6666 = vmor %vm5370, %vm6342
  %vm6667 = vmor %vm5371, %vm6343
  %vm6668 = vmor %vm5372, %vm6344
  %vm6669 = vmor %vm5373, %vm6345
  %vm6670 = vmor %vm5374, %vm6346
  %vm6671 = vmor %vm5375, %vm6347
  %vm6672 = vmor %vm5376, %vm6348
  %vm6673 = vmor %vm5377, %vm6349
  %vm6674 = vmor %vm5378, %vm6350
  %vm6675 = vmor %vm5379, %vm6351
  %vm6676 = vmor %vm5380, %vm6352
  %vm6677 = vmor %vm5381, %vm6353
  %vm6678 = vmor %vm5382, %vm6354
  %vm6679 = vmor %vm5383, %vm6355
  %vm6680 = vmor %vm5384, %vm6356
  %vm6681 = vmor %vm5385, %vm6357
  %vm6682 = vmor %vm5386, %vm6358
  %vm6683 = vmor %vm5387, %vm6359
  %vm6684 = vmor %vm5388, %vm6360
  %vm6685 = vmor %vm5389, %vm6361
  %vm6686 = vmor %vm5390, %vm6362
  %vm6687 = vmor %vm5391, %vm6363
  %vm6688 = vmor %vm5392, %vm6364
  %vm6689 = vmor %vm5393, %vm6365
  %vm6690 = vmor %vm5394, %vm6366
  %vm6691 = vmor %vm5395, %vm6367
  %vm6692 = vmor %vm5396, %vm6368
  %vm6693 = vmor %vm5397, %vm6369
  %vm6694 = vmor %vm5398, %vm6370
  %vm6695 = vmor %vm5399, %vm6371
  %vm6696 = vmor %vm5400, %vm6372
  %vm6697 = vmor %vm5401, %vm6373
  %vm6698 = vmor %vm5402, %vm6374
  %vm6699 = vmor %vm5403, %vm6375
  %vm6700 = vmor %vm5404, %vm6376
  %vm6701 = vmor %vm5405, %vm6377
  %vm6702 = vmor %vm5406, %vm6378
  %vm6703 = vmor %vm5407, %vm6379
  %vm6704 = vmor %vm5408, %vm6380
  %vm6705 = vmor %vm5409, %vm6381
  %vm6706 = vmor %vm5410, %vm6382
  %vm6707 = vmor %vm5411, %vm6383
  %vm6708 = vmor %vm5412, %vm6384
  %vm6709 = vmor %vm5413, %vm6385
  %vm6710 = vmor %vm5414, %vm6386
  %vm6711 = vmor %vm5415, %vm6387
  %vm6712 = vmor %vm5416, %vm6388
  %vm6713 = vmor %vm5417, %vm6389
  %vm6714 = vmor %vm5418, %vm6390
  %vm6715 = vmor %vm5419, %vm6391
  %vm6716 = vmor %vm5420, %vm6392
  %vm6717 = vmor %vm5421, %vm6393
  %vm6718 = vmor %vm5422, %vm6394
  %vm6719 = vmor %vm5423, %vm6395
  %vm6720 = vmor %vm5424, %vm6396
  %vm6721 = vmor %vm5425, %vm6397
  %vm6722 = vmor %vm5426, %vm6398
  %vm6723 = vmor %vm5427, %vm6399
  %vm6724 = vmor %vm5428, %vm6400
  %vm6725 = vmor %vm5429, %vm6401
  %vm6726 = vmor %vm5430, %vm6402
  %vm6727 = vmor %vm5431, %vm6403
  %vm6728 = vmor %vm5432, %vm6404
  %vm6729 = vmor %vm5433, %vm6405
  %vm6730 = vmor %vm5434, %vm6406
  %vm6731 = vmor %vm5435, %vm6407
  %vm6732 = vmor %vm5436, %vm6408
  %vm6733 = vmor %vm5437, %vm6409
  %vm6734 = vmor %vm5438, %vm6410
  %vm6735 = vmor %vm5439, %vm6411
  %vm6736 = vmor %vm5440, %vm6412
  %vm6737 = vmor %vm5441, %vm6413
  %vm6738 = vmor %vm5442, %vm6414
  %vm6739 = vmor %vm5443, %vm6415
  %vm6740 = vmor %vm5444, %vm6416
  %vm6741 = vmor %vm5445, %vm6417
  %vm6742 = vmor %vm5446, %vm6418
  %vm6743 = vmor %vm5447, %vm6419
  %vm6744 = vmor %vm5448, %vm6420
  %vm6745 = vmor %vm5449, %vm6421
  %vm6746 = vmor %vm5450, %vm6422
  %vm6747 = vmor %vm5451, %vm6423
  %vm6748 = vmor %vm5452, %vm6424
  %vm6749 = vmor %vm5453, %vm6425
  %vm6750 = vmor %vm5454, %vm6426
  %vm6751 = vmor %vm5455, %vm6427
  %vm6752 = vmor %vm5456, %vm6428
  %vm6753 = vmor %vm5457, %vm6429
  %vm6754 = vmor %vm5458, %vm6430
  %vm6755 = vmor %vm5459, %vm6431
  %vm6756 = vmor %vm5460, %vm6432
  %vm6757 = vmor %vm5461, %vm6433
  %vm6758 = vmor %vm5462, %vm6434
  %vm6759 = vmor %vm5463, %vm6435
  %vm6760 = vmor %vm5464, %vm6436
  %vm6761 = vmor %vm5465, %vm6437
  %vm6762 = vmor %vm5466, %vm6438
  %vm6763 = vmor %vm5467, %vm6439
  %vm6764 = vmor %vm5468, %vm6440
  %vm6765 = vmor %vm5469, %vm6441
  %vm6766 = vmor %vm5470, %vm6442
  %vm6767 = vmor %vm5471, %vm6443
  %vm6768 = vmor %vm5472, %vm6444
  %vm6769 = vmor %vm5473, %vm6445
  %vm6770 = vmor %vm5474, %vm6446
  %vm6771 = vmor %vm5475, %vm6447
  %vm6772 = vmor %vm5476, %vm6448
  %vm6773 = vmor %vm5477, %vm6449
  %vm6774 = vmor %vm5478, %vm6450
  %vm6775 = vmor %vm5479, %vm6451
  %vm6776 = vmor %vm5480, %vm6452
  %vm6777 = vmor %vm5481, %vm6453
  %vm6778 = vmor %vm5482, %vm6454
  %vm6779 = vmor %vm5483, %vm6455
  %vm6780 = vmor %vm5484, %vm6456
  %vm6781 = vmor %vm5485, %vm6457
  %vm6782 = vmor %vm5486, %vm6458
  %vm6783 = vmor %vm5487, %vm6459
  %vm6784 = vmor %vm5488, %vm6460
  %vm6785 = vmor %vm5489, %vm6461
  %vm6786 = vmor %vm5490, %vm6462
  %vm6787 = vmor %vm5491, %vm6463
  %vm6788 = vmor %vm5492, %vm6464
  %vm6789 = vmor %vm5493, %vm6465
  %vm6790 = vmor %vm5494, %vm6466
  %vm6791 = vmor %vm5495, %vm6467
  %vm6792 = vmor %vm5496, %vm6468
  %vm6793 = vmor %vm5497, %vm6469
  %vm6794 = vmor %vm5498, %vm6470
  %vm6795 = vmor %vm5499, %vm6471
  %vm6796 = vmor %vm5500, %vm6472
  %vm6797 = vmor %vm5501, %vm6473
  %vm6798 = vmor %vm5502, %vm6474
  %vm6799 = vmor %vm5503, %vm6475
  %vm6800 = vmor %vm5504, %vm6476
  %vm6801 = vmor %vm5505, %vm6477
  %vm6802 = vmor %vm5506, %vm6478
  %vm6803 = vmor %vm5507, %vm6479
  %vm6804 = vmor %vm5508, %vm6480
  %vm6805 = vmor %vm5509, %vm6481
  %vm6806 = vmor %vm5510, %vm6482
  %vm6807 = vmor %vm5511, %vm6483
  %vm6808 = vmor %vm5512, %vm6484
  %vm6809 = vmor %vm5513, %vm6485
  %vm6810 = vmor %vm5514, %vm6486
  %vm6811 = vmor %vm5515, %vm6487
  %vm6812 = vmor %vm5516, %vm6488
  %vm6813 = vmor %vm5517, %vm6489
  %vm6814 = vmor %vm5518, %vm6490
  %vm6815 = vmor %vm5519, %vm6491
  %vm6816 = vmor %vm5520, %vm6492
  %vm6817 = vmor %vm5521, %vm6493
  %vm6818 = vmor %vm5522, %vm6494
  %vm6819 = vmor %vm5523, %vm6495
  %vm6820 = vmor %vm5524, %vm6496
  %vm6821 = vmor %vm5525, %vm6497
  %vm6822 = vmor %vm5526, %vm6498
  %vm6823 = vmor %vm5527, %vm6499
  %vm6824 = vmor %vm5528, %vm6500
  %vm6825 = vmor %vm5529, %vm6501
  %vm6826 = vmor %vm5530, %vm6502
  %vm6827 = vmor %vm5531, %vm6503
  %vm6828 = vmor %vm5532, %vm6504
  %vm6829 = vmor %vm5533, %vm6505
  %vm6830 = vmor %vm5534, %vm6506
  %vm6831 = vmor %vm5535, %vm6507
  %vm6832 = vmor %vm5536, %vm6508
  %vm6833 = vmor %vm5537, %vm6509
  %vm6834 = vmor %vm5538, %vm6510
  %vm6835 = vmor %vm5539, %vm6511
  %vm6836 = vmor %vm5540, %vm6512
  %vm6837 = vmor %vm5541, %vm6513
  %vm6838 = vmor %vm5542, %vm6514
  %vm6839 = vmor %vm5543, %vm6515
  %vm6840 = vmor %vm5544, %vm6516
  %vm6841 = vmor %vm5545, %vm6517
  %vm6842 = vmor %vm5546, %vm6518
  %vm6843 = vmor %vm5547, %vm6519
  %vm6844 = vmor %vm5548, %vm6520
  %vm6845 = vmor %vm5549, %vm6521
  %vm6846 = vmor %vm5550, %vm6522
  %vm6847 = vmor %vm5551, %vm6523
  %vm6848 = vmor %vm5552, %vm6524
  %vm6849 = vmor %vm5553, %vm6525
  %vm6850 = vmor %vm5554, %vm6526
  %v6851 = vsel %vm6527, %v1343, 0.0
  %v6852 = vsel %vm6528, %v1346, 0.0
  %v6853 = vsel %vm6529, %v1349, 0.0
  %v6854 = vsel %vm6530, %v1352, 0.0
  %v6855 = vsel %vm6531, %v1355, 0.0
  %v6856 = vsel %vm6532, %v1358, 0.0
  %v6857 = vsel %vm6533, %v1361, 0.0
  %v6858 = vsel %vm6534, %v1364, 0.0
  %v6859 = vsel %vm6535, %v1367, 0.0
  %v6860 = vsel %vm6536, %v1370, 0.0
  %v6861 = vsel %vm6537, %v1373, 0.0
  %v6862 = vsel %vm6538, %v1376, 0.0
  %v6863 = vsel %vm6539, %v1379, 0.0
  %v6864 = vsel %vm6540, %v1382, 0.0
  %v6865 = vsel %vm6541, %v1385, 0.0
  %v6866 = vsel %vm6542, %v1388, 0.0
  %v6867 = vsel %vm6543, %v1391, 0.0
  %v6868 = vsel %vm6544, %v1394, 0.0
  %v6869 = vsel %vm6545, %v1397, 0.0
  %v6870 = vsel %vm6546, %v1400, 0.0
  %v6871 = vsel %vm6547, %v1403, 0.0
  %v6872 = vsel %vm6548, %v1406, 0.0
  %v6873 = vsel %vm6549, %v1409, 0.0
  %v6874 = vsel %vm6550, %v1412, 0.0
  %v6875 = vsel %vm6551, %v1415, 0.0
  %v6876 = vsel %vm6552, %v1418, 0.0
  %v6877 = vsel %vm6553, %v1421, 0.0
  %v6878 = vsel %vm6554, %v1424, 0.0
  %v6879 = vsel %vm6555, %v1427, 0.0
  %v6880 = vsel %vm6556, %v1430, 0.0
  %v6881 = vsel %vm6557, %v1433, 0.0
  %v6882 = vsel %vm6558, %v1436, 0.0
  %v6883 = vsel %vm6559, %v1439, 0.0
  %v6884 = vsel %vm6560, %v1442, 0.0
  %v6885 = vsel %vm6561, %v1445, 0.0
  %v6886 = vsel %vm6562, %v1448, 0.0
  %v6887 = vsel %vm6563, %v1451, 0.0
  %v6888 = vsel %vm6564, %v1454, 0.0
  %v6889 = vsel %vm6565, %v1457, 0.0
  %v6890 = vsel %vm6566, %v1460, 0.0
  %v6891 = vsel %vm6567, %v1463, 0.0
  %v6892 = vsel %vm6568, %v1466, 0.0
  %v6893 = vsel %vm6569, %v1469, 0.0
  %v6894 = vsel %vm6570, %v1472, 0.0
  %v6895 = vsel %vm6571, %v1475, 0.0
  %v6896 = vsel %vm6572, %v1478, 0.0
  %v6897 = vsel %vm6573, %v1481, 0.0
  %v6898 = vsel %vm6574, %v1484, 0.0
  %v6899 = vsel %vm6575, %v1487, 0.0
  %v6900 = vsel %vm6576, %v1490, 0.0
  %v6901 = vsel %vm6577, %v1493, 0.0
  %v6902 = vsel %vm6578, %v1496, 0.0
  %v6903 = vsel %vm6579, %v1499, 0.0
  %v6904 = vsel %vm6580, %v1502, 0.0
  %v6905 = vsel %vm6581, %v1505, 0.0
  %v6906 = vsel %vm6582, %v1508, 0.0
  %v6907 = vsel %vm6583, %v1511, 0.0
  %v6908 = vsel %vm6584, %v1514, 0.0
  %v6909 = vsel %vm6585, %v1517, 0.0
  %v6910 = vsel %vm6586, %v1520, 0.0
  %v6911 = vsel %vm6587, %v1523, 0.0
  %v6912 = vsel %vm6588, %v1526, 0.0
  %v6913 = vsel %vm6589, %v1529, 0.0
  %v6914 = vsel %vm6590, %v1532, 0.0
  %v6915 = vsel %vm6591, %v1535, 0.0
  %v6916 = vsel %vm6592, %v1538, 0.0
  %v6917 = vsel %vm6593, %v1541, 0.0
  %v6918 = vsel %vm6594, %v1544, 0.0
  %v6919 = vsel %vm6595, %v1547, 0.0
  %v6920 = vsel %vm6596, %v1550, 0.0
  %v6921 = vsel %vm6597, %v1553, 0.0
  %v6922 = vsel %vm6598, %v1556, 0.0
  %v6923 = vsel %vm6599, %v1559, 0.0
  %v6924 = vsel %vm6600, %v1562, 0.0
  %v6925 = vsel %vm6601, %v1565, 0.0
  %v6926 = vsel %vm6602, %v1568, 0.0
  %v6927 = vsel %vm6603, %v1571, 0.0
  %v6928 = vsel %vm6604, %v1574, 0.0
  %v6929 = vsel %vm6605, %v1577, 0.0
  %v6930 = vsel %vm6606, %v1580, 0.0
  %v6931 = vsel %vm6607, %v1583, 0.0
  %v6932 = vsel %vm6608, %v1586, 0.0
  %v6933 = vsel %vm6609, %v1589, 0.0
  %v6934 = vsel %vm6610, %v1592, 0.0
  %v6935 = vsel %vm6611, %v1595, 0.0
  %v6936 = vsel %vm6612, %v1598, 0.0
  %v6937 = vsel %vm6613, %v1601, 0.0
  %v6938 = vsel %vm6614, %v1604, 0.0
  %v6939 = vsel %vm6615, %v1607, 0.0
  %v6940 = vsel %vm6616, %v1610, 0.0
  %v6941 = vsel %vm6617, %v1613, 0.0
  %v6942 = vsel %vm6618, %v1616, 0.0
  %v6943 = vsel %vm6619, %v1619, 0.0
  %v6944 = vsel %vm6620, %v1622, 0.0
  %v6945 = vsel %vm6621, %v1625, 0.0
  %v6946 = vsel %vm6622, %v1628, 0.0
  %v6947 = vsel %vm6623, %v1631, 0.0
  %v6948 = vsel %vm6624, %v1634, 0.0
  %v6949 = vsel %vm6625, %v1637, 0.0
  %v6950 = vsel %vm6626, %v1640, 0.0
  %v6951 = vsel %vm6627, %v1643, 0.0
  %v6952 = vsel %vm6628, %v1646, 0.0
  %v6953 = vsel %vm6629, %v1649, 0.0
  %v6954 = vsel %vm6630, %v1652, 0.0
  %v6955 = vsel %vm6631, %v1655, 0.0
  %v6956 = vsel %vm6632, %v1658, 0.0
  %v6957 = vsel %vm6633, %v1661, 0.0
  %v6958 = vsel %vm6634, %v1664, 0.0
  %v6959 = vsel %vm6635, %v1667, 0.0
  %v6960 = vsel %vm6636, %v1670, 0.0
  %v6961 = vsel %vm6637, %v1673, 0.0
  %v6962 = vsel %vm6638, %v1676, 0.0
  %v6963 = vsel %vm6639, %v1679, 0.0
  %v6964 = vsel %vm6640, %v1682, 0.0
  %v6965 = vsel %vm6641, %v1685, 0.0
  %v6966 = vsel %vm6642, %v1688, 0.0
  %v6967 = vsel %vm6643, %v1691, 0.0
  %v6968 = vsel %vm6644, %v1694, 0.0
  %v6969 = vsel %vm6645, %v1697, 0.0
  %v6970 = vsel %vm6646, %v1700, 0.0
  %v6971 = vsel %vm6647, %v1703, 0.0
  %v6972 = vsel %vm6648, %v1706, 0.0
  %v6973 = vsel %vm6649, %v1709, 0.0
  %v6974 = vsel %vm6650, %v1712, 0.0
  %v6975 = vsel %vm6651, %v1715, 0.0
  %v6976 = vsel %vm6652, %v1718, 0.0
  %v6977 = vsel %vm6653, %v1721, 0.0
  %v6978 = vsel %vm6654, %v1724, 0.0
  %v6979 = vsel %vm6655, %v1727, 0.0
  %v6980 = vsel %vm6656, %v1730, 0.0
  %v6981 = vsel %vm6657, %v1733, 0.0
  %v6982 = vsel %vm6658, %v1736, 0.0
  %v6983 = vsel %vm6659, %v1739, 0.0
  %v6984 = vsel %vm6660, %v1742, 0.0
  %v6985 = vsel %vm6661, %v1745, 0.0
  %v6986 = vsel %vm6662, %v1748, 0.0
  %v6987 = vsel %vm6663, %v1751, 0.0
  %v6988 = vsel %vm6664, %v1754, 0.0
  %v6989 = vsel %vm6665, %v1757, 0.0
  %v6990 = vsel %vm6666, %v1760, 0.0
  %v6991 = vsel %vm6667, %v1763, 0.0
  %v6992 = vsel %vm6668, %v1766, 0.0
  %v6993 = vsel %vm6669, %v1769, 0.0
  %v6994 = vsel %vm6670, %v1772, 0.0
  %v6995 = vsel %vm6671, %v1775, 0.0
  %v6996 = vsel %vm6672, %v1778, 0.0
  %v6997 = vsel %vm6673, %v1781, 0.0
  %v6998 = vsel %vm6674, %v1784, 0.0
  %v6999 = vsel %vm6675, %v1787, 0.0
  %v7000 = vsel %vm6676, %v1790, 0.0
  %v7001 = vsel %vm6677, %v1793, 0.0
  %v7002 = vsel %vm6678, %v1796, 0.0
  %v7003 = vsel %vm6679, %v1799, 0.0
  %v7004 = vsel %vm6680, %v1802, 0.0
  %v7005 = vsel %vm6681, %v1805, 0.0
  %v7006 = vsel %vm6682, %v1808, 0.0
  %v7007 = vsel %vm6683, %v1811, 0.0
  %v7008 = vsel %vm6684, %v1814, 0.0
  %v7009 = vsel %vm6685, %v1817, 0.0
  %v7010 = vsel %vm6686, %v1820, 0.0
  %v7011 = vsel %vm6687, %v1823, 0.0
  %v7012 = vsel %vm6688, %v1826, 0.0
  %v7013 = vsel %vm6689, %v1829, 0.0
  %v7014 = vsel %vm6690, %v1832, 0.0
  %v7015 = vsel %vm6691, %v1835, 0.0
  %v7016 = vsel %vm6692, %v1838, 0.0
  %v7017 = vsel %vm6693, %v1841, 0.0
  %v7018 = vsel %vm6694, %v1844, 0.0
  %v7019 = vsel %vm6695, %v1847, 0.0
  %v7020 = vsel %vm6696, %v1850, 0.0
  %v7021 = vsel %vm6697, %v1853, 0.0
  %v7022 = vsel %vm6698, %v1856, 0.0
  %v7023 = vsel %vm6699, %v1859, 0.0
  %v7024 = vsel %vm6700, %v1862, 0.0
  %v7025 = vsel %vm6701, %v1865, 0.0
  %v7026 = vsel %vm6702, %v1868, 0.0
  %v7027 = vsel %vm6703, %v1871, 0.0
  %v7028 = vsel %vm6704, %v1874, 0.0
  %v7029 = vsel %vm6705, %v1877, 0.0
  %v7030 = vsel %vm6706, %v1880, 0.0
  %v7031 = vsel %vm6707, %v1883, 0.0
  %v7032 = vsel %vm6708, %v1886, 0.0
  %v7033 = vsel %vm6709, %v1889, 0.0
  %v7034 = vsel %vm6710, %v1892, 0.0
  %v7035 = vsel %vm6711, %v1895, 0.0
  %v7036 = vsel %vm6712, %v1898, 0.0
  %v7037 = vsel %vm6713, %v1901, 0.0
  %v7038 = vsel %vm6714, %v1904, 0.0
  %v7039 = vsel %vm6715, %v1907, 0.0
  %v7040 = vsel %vm6716, %v1910, 0.0
  %v7041 = vsel %vm6717, %v1913, 0.0
  %v7042 = vsel %vm6718, %v1916, 0.0
  %v7043 = vsel %vm6719, %v1919, 0.0
  %v7044 = vsel %vm6720, %v1922, 0.0
  %v7045 = vsel %vm6721, %v1925, 0.0
  %v7046 = vsel %vm6722, %v1928, 0.0
  %v7047 = vsel %vm6723, %v1931, 0.0
  %v7048 = vsel %vm6724, %v1934, 0.0
  %v7049 = vsel %vm6725, %v1937, 0.0
  %v7050 = vsel %vm6726, %v1940, 0.0
  %v7051 = vsel %vm6727, %v1943, 0.0
  %v7052 = vsel %vm6728, %v1946, 0.0
  %v7053 = vsel %vm6729, %v1949, 0.0
  %v7054 = vsel %vm6730, %v1952, 0.0
  %v7055 = vsel %vm6731, %v1955, 0.0
  %v7056 = vsel %vm6732, %v1958, 0.0
  %v7057 = vsel %vm6733, %v1961, 0.0
  %v7058 = vsel %vm6734, %v1964, 0.0
  %v7059 = vsel %vm6735, %v1967, 0.0
  %v7060 = vsel %vm6736, %v1970, 0.0
  %v7061 = vsel %vm6737, %v1973, 0.0
  %v7062 = vsel %vm6738, %v1976, 0.0
  %v7063 = vsel %vm6739, %v1979, 0.0
  %v7064 = vsel %vm6740, %v1982, 0.0
  %v7065 = vsel %vm6741, %v1985, 0.0
  %v7066 = vsel %vm6742, %v1988, 0.0
  %v7067 = vsel %vm6743, %v1991, 0.0
  %v7068 = vsel %vm6744, %v1994, 0.0
  %v7069 = vsel %vm6745, %v1997, 0.0
  %v7070 = vsel %vm6746, %v2000, 0.0
  %v7071 = vsel %vm6747, %v2003, 0.0
  %v7072 = vsel %vm6748, %v2006, 0.0
  %v7073 = vsel %vm6749, %v2009, 0.0
  %v7074 = vsel %vm6750, %v2012, 0.0
  %v7075 = vsel %vm6751, %v2015, 0.0
  %v7076 = vsel %vm6752, %v2018, 0.0
  %v7077 = vsel %vm6753, %v2021, 0.0
  %v7078 = vsel %vm6754, %v2024, 0.0
  %v7079 = vsel %vm6755, %v2027, 0.0
  %v7080 = vsel %vm6756, %v2030, 0.0
  %v7081 = vsel %vm6757, %v2033, 0.0
  %v7082 = vsel %vm6758, %v2036, 0.0
  %v7083 = vsel %vm6759, %v2039, 0.0
  %v7084 = vsel %vm6760, %v2042, 0.0
  %v7085 = vsel %vm6761, %v2045, 0.0
  %v7086 = vsel %vm6762, %v2048, 0.0
  %v7087 = vsel %vm6763, %v2051, 0.0
  %v7088 = vsel %vm6764, %v2054, 0.0
  %v7089 = vsel %vm6765, %v2057, 0.0
  %v7090 = vsel %vm6766, %v2060, 0.0
  %v7091 = vsel %vm6767, %v2063, 0.0
  %v7092 = vsel %vm6768, %v2066, 0.0
  %v7093 = vsel %vm6769, %v2069, 0.0
  %v7094 = vsel %vm6770, %v2072, 0.0
  %v7095 = vsel %vm6771, %v2075, 0.0
  %v7096 = vsel %vm6772, %v2078, 0.0
  %v7097 = vsel %vm6773, %v2081, 0.0
  %v7098 = vsel %vm6774, %v2084, 0.0
  %v7099 = vsel %vm6775, %v2087, 0.0
  %v7100 = vsel %vm6776, %v2090, 0.0
  %v7101 = vsel %vm6777, %v2093, 0.0
  %v7102 = vsel %vm6778, %v2096, 0.0
  %v7103 = vsel %vm6779, %v2099, 0.0
  %v7104 = vsel %vm6780, %v2102, 0.0
  %v7105 = vsel %vm6781, %v2105, 0.0
  %v7106 = vsel %vm6782, %v2108, 0.0
  %v7107 = vsel %vm6783, %v2111, 0.0
  %v7108 = vsel %vm6784, %v2114, 0.0
  %v7109 = vsel %vm6785, %v2117, 0.0
  %v7110 = vsel %vm6786, %v2120, 0.0
  %v7111 = vsel %vm6787, %v2123, 0.0
  %v7112 = vsel %vm6788, %v2126, 0.0
  %v7113 = vsel %vm6789, %v2129, 0.0
  %v7114 = vsel %vm6790, %v2132, 0.0
  %v7115 = vsel %vm6791, %v2135, 0.0
  %v7116 = vsel %vm6792, %v2138, 0.0
  %v7117 = vsel %vm6793, %v2141, 0.0
  %v7118 = vsel %vm6794, %v2144, 0.0
  %v7119 = vsel %vm6795, %v2147, 0.0
  %v7120 = vsel %vm6796, %v2150, 0.0
  %v7121 = vsel %vm6797, %v2153, 0.0
  %v7122 = vsel %vm6798, %v2156, 0.0
  %v7123 = vsel %vm6799, %v2159, 0.0
  %v7124 = vsel %vm6800, %v2162, 0.0
  %v7125 = vsel %vm6801, %v2165, 0.0
  %v7126 = vsel %vm6802, %v2168, 0.0
  %v7127 = vsel %vm6803, %v2171, 0.0
  %v7128 = vsel %vm6804, %v2174, 0.0
  %v7129 = vsel %vm6805, %v2177, 0.0
  %v7130 = vsel %vm6806, %v2180, 0.0
  %v7131 = vsel %vm6807, %v2183, 0.0
  %v7132 = vsel %vm6808, %v2186, 0.0
  %v7133 = vsel %vm6809, %v2189, 0.0
  %v7134 = vsel %vm6810, %v2192, 0.0
  %v7135 = vsel %vm6811, %v2195, 0.0
  %v7136 = vsel %vm6812, %v2198, 0.0
  %v7137 = vsel %vm6813, %v2201, 0.0
  %v7138 = vsel %vm6814, %v2204, 0.0
  %v7139 = vsel %vm6815, %v2207, 0.0
  %v7140 = vsel %vm6816, %v2210, 0.0
  %v7141 = vsel %vm6817, %v2213, 0.0
  %v7142 = vsel %vm6818, %v2216, 0.0
  %v7143 = vsel %vm6819, %v2219, 0.0
  %v7144 = vsel %vm6820, %v2222, 0.0
  %v7145 = vsel %vm6821, %v2225, 0.0
  %v7146 = vsel %vm6822, %v2228, 0.0
  %v7147 = vsel %vm6823, %v2231, 0.0
  %v7148 = vsel %vm6824, %v2234, 0.0
  %v7149 = vsel %vm6825, %v2237, 0.0
  %v7150 = vsel %vm6826, %v2240, 0.0
  %v7151 = vsel %vm6827, %v2243, 0.0
  %v7152 = vsel %vm6828, %v2246, 0.0
  %v7153 = vsel %vm6829, %v2249, 0.0
  %v7154 = vsel %vm6830, %v2252, 0.0
  %v7155 = vsel %vm6831, %v2255, 0.0
  %v7156 = vsel %vm6832, %v2258, 0.0
  %v7157 = vsel %vm6833, %v2261, 0.0
  %v7158 = vsel %vm6834, %v2264, 0.0
  %v7159 = vsel %vm6835, %v2267, 0.0
  %v7160 = vsel %vm6836, %v2270, 0.0
  %v7161 = vsel %vm6837, %v2273, 0.0
  %v7162 = vsel %vm6838, %v2276, 0.0
  %v7163 = vsel %vm6839, %v2279, 0.0
  %v7164 = vsel %vm6840, %v2282, 0.0
  %v7165 = vsel %vm6841, %v2285, 0.0
  %v7166 = vsel %vm6842, %v2288, 0.0
  %v7167 = vsel %vm6843, %v2291, 0.0
  %v7168 = vsel %vm6844, %v2294, 0.0
  %v7169 = vsel %vm6845, %v2297, 0.0
  %v7170 = vsel %vm6846, %v2300, 0.0
  %v7171 = vsel %vm6847, %v2303, 0.0
  %v7172 = vsel %vm6848, %v2306, 0.0
  %v7173 = vsel %vm6849, %v2309, 0.0
  %v7174 = vsel %vm6850, %v2312, 0.0
  %v7175 = vadd.f32 %v6851, %v6852
  %v7176 = vadd.f32 %v7175, %v6853
  %v7177 = vadd.f32 %v7176, %v6854
  %v7178 = vadd.f32 %v7177, %v6855
  %v7179 = vadd.f32 %v7178, %v6856
  %v7180 = vadd.f32 %v7179, %v6857
  %v7181 = vadd.f32 %v7180, %v6858
  %v7182 = vadd.f32 %v7181, %v6859
  %v7183 = vadd.f32 %v7182, %v6860
  %v7184 = vadd.f32 %v7183, %v6861
  %v7185 = vadd.f32 %v7184, %v6862
  %v7186 = vadd.f32 %v7185, %v6863
  %v7187 = vadd.f32 %v7186, %v6864
  %v7188 = vadd.f32 %v7187, %v6865
  %v7189 = vadd.f32 %v7188, %v6866
  %v7190 = vadd.f32 %v7189, %v6867
  %v7191 = vadd.f32 %v7190, %v6868
  %v7192 = vadd.f32 %v7191, %v6869
  %v7193 = vadd.f32 %v7192, %v6870
  %v7194 = vadd.f32 %v7193, %v6871
  %v7195 = vadd.f32 %v7194, %v6872
  %v7196 = vadd.f32 %v7195, %v6873
  %v7197 = vadd.f32 %v7196, %v6874
  %v7198 = vadd.f32 %v7197, %v6875
  %v7199 = vadd.f32 %v7198, %v6876
  %v7200 = vadd.f32 %v7199, %v6877
  %v7201 = vadd.f32 %v7200, %v6878
  %v7202 = vadd.f32 %v7201, %v6879
  %v7203 = vadd.f32 %v7202, %v6880
  %v7204 = vadd.f32 %v7203, %v6881
  %v7205 = vadd.f32 %v7204, %v6882
  %v7206 = vadd.f32 %v7205, %v6883
  %v7207 = vadd.f32 %v7206, %v6884
  %v7208 = vadd.f32 %v7207, %v6885
  %v7209 = vadd.f32 %v7208, %v6886
  %v7210 = vadd.f32 %v7209, %v6887
  %v7211 = vadd.f32 %v7210, %v6888
  %v7212 = vadd.f32 %v7211, %v6889
  %v7213 = vadd.f32 %v7212, %v6890
  %v7214 = vadd.f32 %v7213, %v6891
  %v7215 = vadd.f32 %v7214, %v6892
  %v7216 = vadd.f32 %v7215, %v6893
  %v7217 = vadd.f32 %v7216, %v6894
  %v7218 = vadd.f32 %v7217, %v6895
  %v7219 = vadd.f32 %v7218, %v6896
  %v7220 = vadd.f32 %v7219, %v6897
  %v7221 = vadd.f32 %v7220, %v6898
  %v7222 = vadd.f32 %v7221, %v6899
  %v7223 = vadd.f32 %v7222, %v6900
  %v7224 = vadd.f32 %v7223, %v6901
  %v7225 = vadd.f32 %v7224, %v6902
  %v7226 = vadd.f32 %v7225, %v6903
  %v7227 = vadd.f32 %v7226, %v6904
  %v7228 = vadd.f32 %v7227, %v6905
  %v7229 = vadd.f32 %v7228, %v6906
  %v7230 = vadd.f32 %v7229, %v6907
  %v7231 = vadd.f32 %v7230, %v6908
  %v7232 = vadd.f32 %v7231, %v6909
  %v7233 = vadd.f32 %v7232, %v6910
  %v7234 = vadd.f32 %v7233, %v6911
  %v7235 = vadd.f32 %v7234, %v6912
  %v7236 = vadd.f32 %v7235, %v6913
  %v7237 = vadd.f32 %v7236, %v6914
  %v7238 = vadd.f32 %v7237, %v6915
  %v7239 = vadd.f32 %v7238, %v6916
  %v7240 = vadd.f32 %v7239, %v6917
  %v7241 = vadd.f32 %v7240, %v6918
  %v7242 = vadd.f32 %v7241, %v6919
  %v7243 = vadd.f32 %v7242, %v6920
  %v7244 = vadd.f32 %v7243, %v6921
  %v7245 = vadd.f32 %v7244, %v6922
  %v7246 = vadd.f32 %v7245, %v6923
  %v7247 = vadd.f32 %v7246, %v6924
  %v7248 = vadd.f32 %v7247, %v6925
  %v7249 = vadd.f32 %v7248, %v6926
  %v7250 = vadd.f32 %v7249, %v6927
  %v7251 = vadd.f32 %v7250, %v6928
  %v7252 = vadd.f32 %v7251, %v6929
  %v7253 = vadd.f32 %v7252, %v6930
  %v7254 = vadd.f32 %v7253, %v6931
  %v7255 = vadd.f32 %v7254, %v6932
  %v7256 = vadd.f32 %v7255, %v6933
  %v7257 = vadd.f32 %v7256, %v6934
  %v7258 = vadd.f32 %v7257, %v6935
  %v7259 = vadd.f32 %v7258, %v6936
  %v7260 = vadd.f32 %v7259, %v6937
  %v7261 = vadd.f32 %v7260, %v6938
  %v7262 = vadd.f32 %v7261, %v6939
  %v7263 = vadd.f32 %v7262, %v6940
  %v7264 = vadd.f32 %v7263, %v6941
  %v7265 = vadd.f32 %v7264, %v6942
  %v7266 = vadd.f32 %v7265, %v6943
  %v7267 = vadd.f32 %v7266, %v6944
  %v7268 = vadd.f32 %v7267, %v6945
  %v7269 = vadd.f32 %v7268, %v6946
  %v7270 = vadd.f32 %v7269, %v6947
  %v7271 = vadd.f32 %v7270, %v6948
  %v7272 = vadd.f32 %v7271, %v6949
  %v7273 = vadd.f32 %v7272, %v6950
  %v7274 = vadd.f32 %v7273, %v6951
  %v7275 = vadd.f32 %v7274, %v6952
  %v7276 = vadd.f32 %v7275, %v6953
  %v7277 = vadd.f32 %v7276, %v6954
  %v7278 = vadd.f32 %v7277, %v6955
  %v7279 = vadd.f32 %v7278, %v6956
  %v7280 = vadd.f32 %v7279, %v6957
  %v7281 = vadd.f32 %v7280, %v6958
  %v7282 = vadd.f32 %v7281, %v6959
  %v7283 = vadd.f32 %v7282, %v6960
  %v7284 = vadd.f32 %v7283, %v6961
  %v7285 = vadd.f32 %v7284, %v6962
  %v7286 = vadd.f32 %v7285, %v6963
  %v7287 = vadd.f32 %v7286, %v6964
  %v7288 = vadd.f32 %v7287, %v6965
  %v7289 = vadd.f32 %v7288, %v6966
  %v7290 = vadd.f32 %v7289, %v6967
  %v7291 = vadd.f32 %v7290, %v6968
  %v7292 = vadd.f32 %v7291, %v6969
  %v7293 = vadd.f32 %v7292, %v6970
  %v7294 = vadd.f32 %v7293, %v6971
  %v7295 = vadd.f32 %v7294, %v6972
  %v7296 = vadd.f32 %v7295, %v6973
  %v7297 = vadd.f32 %v7296, %v6974
  %v7298 = vadd.f32 %v7297, %v6975
  %v7299 = vadd.f32 %v7298, %v6976
  %v7300 = vadd.f32 %v7299, %v6977
  %v7301 = vadd.f32 %v7300, %v6978
  %v7302 = vadd.f32 %v7301, %v6979
  %v7303 = vadd.f32 %v7302, %v6980
  %v7304 = vadd.f32 %v7303, %v6981
  %v7305 = vadd.f32 %v7304, %v6982
  %v7306 = vadd.f32 %v7305, %v6983
  %v7307 = vadd.f32 %v7306, %v6984
  %v7308 = vadd.f32 %v7307, %v6985
  %v7309 = vadd.f32 %v7308, %v6986
  %v7310 = vadd.f32 %v7309, %v6987
  %v7311 = vadd.f32 %v7310, %v6988
  %v7312 = vadd.f32 %v7311, %v6989
  %v7313 = vadd.f32 %v7312, %v6990
  %v7314 = vadd.f32 %v7313, %v6991
  %v7315 = vadd.f32 %v7314, %v6992
  %v7316 = vadd.f32 %v7315, %v6993
  %v7317 = vadd.f32 %v7316, %v6994
  %v7318 = vadd.f32 %v7317, %v6995
  %v7319 = vadd.f32 %v7318, %v6996
  %v7320 = vadd.f32 %v7319, %v6997
  %v7321 = vadd.f32 %v7320, %v6998
  %v7322 = vadd.f32 %v7321, %v6999
  %v7323 = vadd.f32 %v7322, %v7000
  %v7324 = vadd.f32 %v7323, %v7001
  %v7325 = vadd.f32 %v7324, %v7002
  %v7326 = vadd.f32 %v7325, %v7003
  %v7327 = vadd.f32 %v7326, %v7004
  %v7328 = vadd.f32 %v7327, %v7005
  %v7329 = vadd.f32 %v7328, %v7006
  %v7330 = vadd.f32 %v7329, %v7007
  %v7331 = vadd.f32 %v7330, %v7008
  %v7332 = vadd.f32 %v7331, %v7009
  %v7333 = vadd.f32 %v7332, %v7010
  %v7334 = vadd.f32 %v7333, %v7011
  %v7335 = vadd.f32 %v7334, %v7012
  %v7336 = vadd.f32 %v7335, %v7013
  %v7337 = vadd.f32 %v7336, %v7014
  %v7338 = vadd.f32 %v7337, %v7015
  %v7339 = vadd.f32 %v7338, %v7016
  %v7340 = vadd.f32 %v7339, %v7017
  %v7341 = vadd.f32 %v7340, %v7018
  %v7342 = vadd.f32 %v7341, %v7019
  %v7343 = vadd.f32 %v7342, %v7020
  %v7344 = vadd.f32 %v7343, %v7021
  %v7345 = vadd.f32 %v7344, %v7022
  %v7346 = vadd.f32 %v7345, %v7023
  %v7347 = vadd.f32 %v7346, %v7024
  %v7348 = vadd.f32 %v7347, %v7025
  %v7349 = vadd.f32 %v7348, %v7026
  %v7350 = vadd.f32 %v7349, %v7027
  %v7351 = vadd.f32 %v7350, %v7028
  %v7352 = vadd.f32 %v7351, %v7029
  %v7353 = vadd.f32 %v7352, %v7030
  %v7354 = vadd.f32 %v7353, %v7031
  %v7355 = vadd.f32 %v7354, %v7032
  %v7356 = vadd.f32 %v7355, %v7033
  %v7357 = vadd.f32 %v7356, %v7034
  %v7358 = vadd.f32 %v7357, %v7035
  %v7359 = vadd.f32 %v7358, %v7036
  %v7360 = vadd.f32 %v7359, %v7037
  %v7361 = vadd.f32 %v7360, %v7038
  %v7362 = vadd.f32 %v7361, %v7039
  %v7363 = vadd.f32 %v7362, %v7040
  %v7364 = vadd.f32 %v7363, %v7041
  %v7365 = vadd.f32 %v7364, %v7042
  %v7366 = vadd.f32 %v7365, %v7043
  %v7367 = vadd.f32 %v7366, %v7044
  %v7368 = vadd.f32 %v7367, %v7045
  %v7369 = vadd.f32 %v7368, %v7046
  %v7370 = vadd.f32 %v7369, %v7047
  %v7371 = vadd.f32 %v7370, %v7048
  %v7372 = vadd.f32 %v7371, %v7049
  %v7373 = vadd.f32 %v7372, %v7050
  %v7374 = vadd.f32 %v7373, %v7051
  %v7375 = vadd.f32 %v7374, %v7052
  %v7376 = vadd.f32 %v7375, %v7053
  %v7377 = vadd.f32 %v7376, %v7054
  %v7378 = vadd.f32 %v7377, %v7055
  %v7379 = vadd.f32 %v7378, %v7056
  %v7380 = vadd.f32 %v7379, %v7057
  %v7381 = vadd.f32 %v7380, %v7058
  %v7382 = vadd.f32 %v7381, %v7059
  %v7383 = vadd.f32 %v7382, %v7060
  %v7384 = vadd.f32 %v7383, %v7061
  %v7385 = vadd.f32 %v7384, %v7062
  %v7386 = vadd.f32 %v7385, %v7063
  %v7387 = vadd.f32 %v7386, %v7064
  %v7388 = vadd.f32 %v7387, %v7065
  %v7389 = vadd.f32 %v7388, %v7066
  %v7390 = vadd.f32 %v7389, %v7067
  %v7391 = vadd.f32 %v7390, %v7068
  %v7392 = vadd.f32 %v7391, %v7069
  %v7393 = vadd.f32 %v7392, %v7070
  %v7394 = vadd.f32 %v7393, %v7071
  %v7395 = vadd.f32 %v7394, %v7072
  %v7396 = vadd.f32 %v7395, %v7073
  %v7397 = vadd.f32 %v7396, %v7074
  %v7398 = vadd.f32 %v7397, %v7075
  %v7399 = vadd.f32 %v7398, %v7076
  %v7400 = vadd.f32 %v7399, %v7077
  %v7401 = vadd.f32 %v7400, %v7078
  %v7402 = vadd.f32 %v7401, %v7079
  %v7403 = vadd.f32 %v7402, %v7080
  %v7404 = vadd.f32 %v7403, %v7081
  %v7405 = vadd.f32 %v7404, %v7082
  %v7406 = vadd.f32 %v7405, %v7083
  %v7407 = vadd.f32 %v7406, %v7084
  %v7408 = vadd.f32 %v7407, %v7085
  %v7409 = vadd.f32 %v7408, %v7086
  %v7410 = vadd.f32 %v7409, %v7087
  %v7411 = vadd.f32 %v7410, %v7088
  %v7412 = vadd.f32 %v7411, %v7089
  %v7413 = vadd.f32 %v7412, %v7090
  %v7414 = vadd.f32 %v7413, %v7091
  %v7415 = vadd.f32 %v7414, %v7092
  %v7416 = vadd.f32 %v7415, %v7093
  %v7417 = vadd.f32 %v7416, %v7094
  %v7418 = vadd.f32 %v7417, %v7095
  %v7419 = vadd.f32 %v7418, %v7096
  %v7420 = vadd.f32 %v7419, %v7097
  %v7421 = vadd.f32 %v7420, %v7098
  %v7422 = vadd.f32 %v7421, %v7099
  %v7423 = vadd.f32 %v7422, %v7100
  %v7424 = vadd.f32 %v7423, %v7101
  %v7425 = vadd.f32 %v7424, %v7102
  %v7426 = vadd.f32 %v7425, %v7103
  %v7427 = vadd.f32 %v7426, %v7104
  %v7428 = vadd.f32 %v7427, %v7105
  %v7429 = vadd.f32 %v7428, %v7106
  %v7430 = vadd.f32 %v7429, %v7107
  %v7431 = vadd.f32 %v7430, %v7108
  %v7432 = vadd.f32 %v7431, %v7109
  %v7433 = vadd.f32 %v7432, %v7110
  %v7434 = vadd.f32 %v7433, %v7111
  %v7435 = vadd.f32 %v7434, %v7112
  %v7436 = vadd.f32 %v7435, %v7113
  %v7437 = vadd.f32 %v7436, %v7114
  %v7438 = vadd.f32 %v7437, %v7115
  %v7439 = vadd.f32 %v7438, %v7116
  %v7440 = vadd.f32 %v7439, %v7117
  %v7441 = vadd.f32 %v7440, %v7118
  %v7442 = vadd.f32 %v7441, %v7119
  %v7443 = vadd.f32 %v7442, %v7120
  %v7444 = vadd.f32 %v7443, %v7121
  %v7445 = vadd.f32 %v7444, %v7122
  %v7446 = vadd.f32 %v7445, %v7123
  %v7447 = vadd.f32 %v7446, %v7124
  %v7448 = vadd.f32 %v7447, %v7125
  %v7449 = vadd.f32 %v7448, %v7126
  %v7450 = vadd.f32 %v7449, %v7127
  %v7451 = vadd.f32 %v7450, %v7128
  %v7452 = vadd.f32 %v7451, %v7129
  %v7453 = vadd.f32 %v7452, %v7130
  %v7454 = vadd.f32 %v7453, %v7131
  %v7455 = vadd.f32 %v7454, %v7132
  %v7456 = vadd.f32 %v7455, %v7133
  %v7457 = vadd.f32 %v7456, %v7134
  %v7458 = vadd.f32 %v7457, %v7135
  %v7459 = vadd.f32 %v7458, %v7136
  %v7460 = vadd.f32 %v7459, %v7137
  %v7461 = vadd.f32 %v7460, %v7138
  %v7462 = vadd.f32 %v7461, %v7139
  %v7463 = vadd.f32 %v7462, %v7140
  %v7464 = vadd.f32 %v7463, %v7141
  %v7465 = vadd.f32 %v7464, %v7142
  %v7466 = vadd.f32 %v7465, %v7143
  %v7467 = vadd.f32 %v7466, %v7144
  %v7468 = vadd.f32 %v7467, %v7145
  %v7469 = vadd.f32 %v7468, %v7146
  %v7470 = vadd.f32 %v7469, %v7147
  %v7471 = vadd.f32 %v7470, %v7148
  %v7472 = vadd.f32 %v7471, %v7149
  %v7473 = vadd.f32 %v7472, %v7150
  %v7474 = vadd.f32 %v7473, %v7151
  %v7475 = vadd.f32 %v7474, %v7152
  %v7476 = vadd.f32 %v7475, %v7153
  %v7477 = vadd.f32 %v7476, %v7154
  %v7478 = vadd.f32 %v7477, %v7155
  %v7479 = vadd.f32 %v7478, %v7156
  %v7480 = vadd.f32 %v7479, %v7157
  %v7481 = vadd.f32 %v7480, %v7158
  %v7482 = vadd.f32 %v7481, %v7159
  %v7483 = vadd.f32 %v7482, %v7160
  %v7484 = vadd.f32 %v7483, %v7161
  %v7485 = vadd.f32 %v7484, %v7162
  %v7486 = vadd.f32 %v7485, %v7163
  %v7487 = vadd.f32 %v7486, %v7164
  %v7488 = vadd.f32 %v7487, %v7165
  %v7489 = vadd.f32 %v7488, %v7166
  %v7490 = vadd.f32 %v7489, %v7167
  %v7491 = vadd.f32 %v7490, %v7168
  %v7492 = vadd.f32 %v7491, %v7169
  %v7493 = vadd.f32 %v7492, %v7170
  %v7494 = vadd.f32 %v7493, %v7171
  %v7495 = vadd.f32 %v7494, %v7172
  %v7496 = vadd.f32 %v7495, %v7173
  %v7497 = vadd.f32 %v7496, %v7174
  %v7498 = vrot.slane %v7497, 4
  %v7499 = vadd.f32 %v7497, %v7498
  %v7500 = vrot.slane %v7499, 2
  %v7501 = vadd.f32 %v7499, %v7500
  %v7502 = vrot.slane %v7501, 1
  %v7503 = vadd.f32 %v7501, %v7502
  %v7504 = vmul.f32 %v6851, %v6851
  %v7505 = vmul.f32 %v6852, %v6852
  %v7506 = vmul.f32 %v6853, %v6853
  %v7507 = vmul.f32 %v6854, %v6854
  %v7508 = vmul.f32 %v6855, %v6855
  %v7509 = vmul.f32 %v6856, %v6856
  %v7510 = vmul.f32 %v6857, %v6857
  %v7511 = vmul.f32 %v6858, %v6858
  %v7512 = vmul.f32 %v6859, %v6859
  %v7513 = vmul.f32 %v6860, %v6860
  %v7514 = vmul.f32 %v6861, %v6861
  %v7515 = vmul.f32 %v6862, %v6862
  %v7516 = vmul.f32 %v6863, %v6863
  %v7517 = vmul.f32 %v6864, %v6864
  %v7518 = vmul.f32 %v6865, %v6865
  %v7519 = vmul.f32 %v6866, %v6866
  %v7520 = vmul.f32 %v6867, %v6867
  %v7521 = vmul.f32 %v6868, %v6868
  %v7522 = vmul.f32 %v6869, %v6869
  %v7523 = vmul.f32 %v6870, %v6870
  %v7524 = vmul.f32 %v6871, %v6871
  %v7525 = vmul.f32 %v6872, %v6872
  %v7526 = vmul.f32 %v6873, %v6873
  %v7527 = vmul.f32 %v6874, %v6874
  %v7528 = vmul.f32 %v6875, %v6875
  %v7529 = vmul.f32 %v6876, %v6876
  %v7530 = vmul.f32 %v6877, %v6877
  %v7531 = vmul.f32 %v6878, %v6878
  %v7532 = vmul.f32 %v6879, %v6879
  %v7533 = vmul.f32 %v6880, %v6880
  %v7534 = vmul.f32 %v6881, %v6881
  %v7535 = vmul.f32 %v6882, %v6882
  %v7536 = vmul.f32 %v6883, %v6883
  %v7537 = vmul.f32 %v6884, %v6884
  %v7538 = vmul.f32 %v6885, %v6885
  %v7539 = vmul.f32 %v6886, %v6886
  %v7540 = vmul.f32 %v6887, %v6887
  %v7541 = vmul.f32 %v6888, %v6888
  %v7542 = vmul.f32 %v6889, %v6889
  %v7543 = vmul.f32 %v6890, %v6890
  %v7544 = vmul.f32 %v6891, %v6891
  %v7545 = vmul.f32 %v6892, %v6892
  %v7546 = vmul.f32 %v6893, %v6893
  %v7547 = vmul.f32 %v6894, %v6894
  %v7548 = vmul.f32 %v6895, %v6895
  %v7549 = vmul.f32 %v6896, %v6896
  %v7550 = vmul.f32 %v6897, %v6897
  %v7551 = vmul.f32 %v6898, %v6898
  %v7552 = vmul.f32 %v6899, %v6899
  %v7553 = vmul.f32 %v6900, %v6900
  %v7554 = vmul.f32 %v6901, %v6901
  %v7555 = vmul.f32 %v6902, %v6902
  %v7556 = vmul.f32 %v6903, %v6903
  %v7557 = vmul.f32 %v6904, %v6904
  %v7558 = vmul.f32 %v6905, %v6905
  %v7559 = vmul.f32 %v6906, %v6906
  %v7560 = vmul.f32 %v6907, %v6907
  %v7561 = vmul.f32 %v6908, %v6908
  %v7562 = vmul.f32 %v6909, %v6909
  %v7563 = vmul.f32 %v6910, %v6910
  %v7564 = vmul.f32 %v6911, %v6911
  %v7565 = vmul.f32 %v6912, %v6912
  %v7566 = vmul.f32 %v6913, %v6913
  %v7567 = vmul.f32 %v6914, %v6914
  %v7568 = vmul.f32 %v6915, %v6915
  %v7569 = vmul.f32 %v6916, %v6916
  %v7570 = vmul.f32 %v6917, %v6917
  %v7571 = vmul.f32 %v6918, %v6918
  %v7572 = vmul.f32 %v6919, %v6919
  %v7573 = vmul.f32 %v6920, %v6920
  %v7574 = vmul.f32 %v6921, %v6921
  %v7575 = vmul.f32 %v6922, %v6922
  %v7576 = vmul.f32 %v6923, %v6923
  %v7577 = vmul.f32 %v6924, %v6924
  %v7578 = vmul.f32 %v6925, %v6925
  %v7579 = vmul.f32 %v6926, %v6926
  %v7580 = vmul.f32 %v6927, %v6927
  %v7581 = vmul.f32 %v6928, %v6928
  %v7582 = vmul.f32 %v6929, %v6929
  %v7583 = vmul.f32 %v6930, %v6930
  %v7584 = vmul.f32 %v6931, %v6931
  %v7585 = vmul.f32 %v6932, %v6932
  %v7586 = vmul.f32 %v6933, %v6933
  %v7587 = vmul.f32 %v6934, %v6934
  %v7588 = vmul.f32 %v6935, %v6935
  %v7589 = vmul.f32 %v6936, %v6936
  %v7590 = vmul.f32 %v6937, %v6937
  %v7591 = vmul.f32 %v6938, %v6938
  %v7592 = vmul.f32 %v6939, %v6939
  %v7593 = vmul.f32 %v6940, %v6940
  %v7594 = vmul.f32 %v6941, %v6941
  %v7595 = vmul.f32 %v6942, %v6942
  %v7596 = vmul.f32 %v6943, %v6943
  %v7597 = vmul.f32 %v6944, %v6944
  %v7598 = vmul.f32 %v6945, %v6945
  %v7599 = vmul.f32 %v6946, %v6946
  %v7600 = vmul.f32 %v6947, %v6947
  %v7601 = vmul.f32 %v6948, %v6948
  %v7602 = vmul.f32 %v6949, %v6949
  %v7603 = vmul.f32 %v6950, %v6950
  %v7604 = vmul.f32 %v6951, %v6951
  %v7605 = vmul.f32 %v6952, %v6952
  %v7606 = vmul.f32 %v6953, %v6953
  %v7607 = vmul.f32 %v6954, %v6954
  %v7608 = vmul.f32 %v6955, %v6955
  %v7609 = vmul.f32 %v6956, %v6956
  %v7610 = vmul.f32 %v6957, %v6957
  %v7611 = vmul.f32 %v6958, %v6958
  %v7612 = vmul.f32 %v6959, %v6959
  %v7613 = vmul.f32 %v6960, %v6960
  %v7614 = vmul.f32 %v6961, %v6961
  %v7615 = vmul.f32 %v6962, %v6962
  %v7616 = vmul.f32 %v6963, %v6963
  %v7617 = vmul.f32 %v6964, %v6964
  %v7618 = vmul.f32 %v6965, %v6965
  %v7619 = vmul.f32 %v6966, %v6966
  %v7620 = vmul.f32 %v6967, %v6967
  %v7621 = vmul.f32 %v6968, %v6968
  %v7622 = vmul.f32 %v6969, %v6969
  %v7623 = vmul.f32 %v6970, %v6970
  %v7624 = vmul.f32 %v6971, %v6971
  %v7625 = vmul.f32 %v6972, %v6972
  %v7626 = vmul.f32 %v6973, %v6973
  %v7627 = vmul.f32 %v6974, %v6974
  %v7628 = vmul.f32 %v6975, %v6975
  %v7629 = vmul.f32 %v6976, %v6976
  %v7630 = vmul.f32 %v6977, %v6977
  %v7631 = vmul.f32 %v6978, %v6978
  %v7632 = vmul.f32 %v6979, %v6979
  %v7633 = vmul.f32 %v6980, %v6980
  %v7634 = vmul.f32 %v6981, %v6981
  %v7635 = vmul.f32 %v6982, %v6982
  %v7636 = vmul.f32 %v6983, %v6983
  %v7637 = vmul.f32 %v6984, %v6984
  %v7638 = vmul.f32 %v6985, %v6985
  %v7639 = vmul.f32 %v6986, %v6986
  %v7640 = vmul.f32 %v6987, %v6987
  %v7641 = vmul.f32 %v6988, %v6988
  %v7642 = vmul.f32 %v6989, %v6989
  %v7643 = vmul.f32 %v6990, %v6990
  %v7644 = vmul.f32 %v6991, %v6991
  %v7645 = vmul.f32 %v6992, %v6992
  %v7646 = vmul.f32 %v6993, %v6993
  %v7647 = vmul.f32 %v6994, %v6994
  %v7648 = vmul.f32 %v6995, %v6995
  %v7649 = vmul.f32 %v6996, %v6996
  %v7650 = vmul.f32 %v6997, %v6997
  %v7651 = vmul.f32 %v6998, %v6998
  %v7652 = vmul.f32 %v6999, %v6999
  %v7653 = vmul.f32 %v7000, %v7000
  %v7654 = vmul.f32 %v7001, %v7001
  %v7655 = vmul.f32 %v7002, %v7002
  %v7656 = vmul.f32 %v7003, %v7003
  %v7657 = vmul.f32 %v7004, %v7004
  %v7658 = vmul.f32 %v7005, %v7005
  %v7659 = vmul.f32 %v7006, %v7006
  %v7660 = vmul.f32 %v7007, %v7007
  %v7661 = vmul.f32 %v7008, %v7008
  %v7662 = vmul.f32 %v7009, %v7009
  %v7663 = vmul.f32 %v7010, %v7010
  %v7664 = vmul.f32 %v7011, %v7011
  %v7665 = vmul.f32 %v7012, %v7012
  %v7666 = vmul.f32 %v7013, %v7013
  %v7667 = vmul.f32 %v7014, %v7014
  %v7668 = vmul.f32 %v7015, %v7015
  %v7669 = vmul.f32 %v7016, %v7016
  %v7670 = vmul.f32 %v7017, %v7017
  %v7671 = vmul.f32 %v7018, %v7018
  %v7672 = vmul.f32 %v7019, %v7019
  %v7673 = vmul.f32 %v7020, %v7020
  %v7674 = vmul.f32 %v7021, %v7021
  %v7675 = vmul.f32 %v7022, %v7022
  %v7676 = vmul.f32 %v7023, %v7023
  %v7677 = vmul.f32 %v7024, %v7024
  %v7678 = vmul.f32 %v7025, %v7025
  %v7679 = vmul.f32 %v7026, %v7026
  %v7680 = vmul.f32 %v7027, %v7027
  %v7681 = vmul.f32 %v7028, %v7028
  %v7682 = vmul.f32 %v7029, %v7029
  %v7683 = vmul.f32 %v7030, %v7030
  %v7684 = vmul.f32 %v7031, %v7031
  %v7685 = vmul.f32 %v7032, %v7032
  %v7686 = vmul.f32 %v7033, %v7033
  %v7687 = vmul.f32 %v7034, %v7034
  %v7688 = vmul.f32 %v7035, %v7035
  %v7689 = vmul.f32 %v7036, %v7036
  %v7690 = vmul.f32 %v7037, %v7037
  %v7691 = vmul.f32 %v7038, %v7038
  %v7692 = vmul.f32 %v7039, %v7039
  %v7693 = vmul.f32 %v7040, %v7040
  %v7694 = vmul.f32 %v7041, %v7041
  %v7695 = vmul.f32 %v7042, %v7042
  %v7696 = vmul.f32 %v7043, %v7043
  %v7697 = vmul.f32 %v7044, %v7044
  %v7698 = vmul.f32 %v7045, %v7045
  %v7699 = vmul.f32 %v7046, %v7046
  %v7700 = vmul.f32 %v7047, %v7047
  %v7701 = vmul.f32 %v7048, %v7048
  %v7702 = vmul.f32 %v7049, %v7049
  %v7703 = vmul.f32 %v7050, %v7050
  %v7704 = vmul.f32 %v7051, %v7051
  %v7705 = vmul.f32 %v7052, %v7052
  %v7706 = vmul.f32 %v7053, %v7053
  %v7707 = vmul.f32 %v7054, %v7054
  %v7708 = vmul.f32 %v7055, %v7055
  %v7709 = vmul.f32 %v7056, %v7056
  %v7710 = vmul.f32 %v7057, %v7057
  %v7711 = vmul.f32 %v7058, %v7058
  %v7712 = vmul.f32 %v7059, %v7059
  %v7713 = vmul.f32 %v7060, %v7060
  %v7714 = vmul.f32 %v7061, %v7061
  %v7715 = vmul.f32 %v7062, %v7062
  %v7716 = vmul.f32 %v7063, %v7063
  %v7717 = vmul.f32 %v7064, %v7064
  %v7718 = vmul.f32 %v7065, %v7065
  %v7719 = vmul.f32 %v7066, %v7066
  %v7720 = vmul.f32 %v7067, %v7067
  %v7721 = vmul.f32 %v7068, %v7068
  %v7722 = vmul.f32 %v7069, %v7069
  %v7723 = vmul.f32 %v7070, %v7070
  %v7724 = vmul.f32 %v7071, %v7071
  %v7725 = vmul.f32 %v7072, %v7072
  %v7726 = vmul.f32 %v7073, %v7073
  %v7727 = vmul.f32 %v7074, %v7074
  %v7728 = vmul.f32 %v7075, %v7075
  %v7729 = vmul.f32 %v7076, %v7076
  %v7730 = vmul.f32 %v7077, %v7077
  %v7731 = vmul.f32 %v7078, %v7078
  %v7732 = vmul.f32 %v7079, %v7079
  %v7733 = vmul.f32 %v7080, %v7080
  %v7734 = vmul.f32 %v7081, %v7081
  %v7735 = vmul.f32 %v7082, %v7082
  %v7736 = vmul.f32 %v7083, %v7083
  %v7737 = vmul.f32 %v7084, %v7084
  %v7738 = vmul.f32 %v7085, %v7085
  %v7739 = vmul.f32 %v7086, %v7086
  %v7740 = vmul.f32 %v7087, %v7087
  %v7741 = vmul.f32 %v7088, %v7088
  %v7742 = vmul.f32 %v7089, %v7089
  %v7743 = vmul.f32 %v7090, %v7090
  %v7744 = vmul.f32 %v7091, %v7091
  %v7745 = vmul.f32 %v7092, %v7092
  %v7746 = vmul.f32 %v7093, %v7093
  %v7747 = vmul.f32 %v7094, %v7094
  %v7748 = vmul.f32 %v7095, %v7095
  %v7749 = vmul.f32 %v7096, %v7096
  %v7750 = vmul.f32 %v7097, %v7097
  %v7751 = vmul.f32 %v7098, %v7098
  %v7752 = vmul.f32 %v7099, %v7099
  %v7753 = vmul.f32 %v7100, %v7100
  %v7754 = vmul.f32 %v7101, %v7101
  %v7755 = vmul.f32 %v7102, %v7102
  %v7756 = vmul.f32 %v7103, %v7103
  %v7757 = vmul.f32 %v7104, %v7104
  %v7758 = vmul.f32 %v7105, %v7105
  %v7759 = vmul.f32 %v7106, %v7106
  %v7760 = vmul.f32 %v7107, %v7107
  %v7761 = vmul.f32 %v7108, %v7108
  %v7762 = vmul.f32 %v7109, %v7109
  %v7763 = vmul.f32 %v7110, %v7110
  %v7764 = vmul.f32 %v7111, %v7111
  %v7765 = vmul.f32 %v7112, %v7112
  %v7766 = vmul.f32 %v7113, %v7113
  %v7767 = vmul.f32 %v7114, %v7114
  %v7768 = vmul.f32 %v7115, %v7115
  %v7769 = vmul.f32 %v7116, %v7116
  %v7770 = vmul.f32 %v7117, %v7117
  %v7771 = vmul.f32 %v7118, %v7118
  %v7772 = vmul.f32 %v7119, %v7119
  %v7773 = vmul.f32 %v7120, %v7120
  %v7774 = vmul.f32 %v7121, %v7121
  %v7775 = vmul.f32 %v7122, %v7122
  %v7776 = vmul.f32 %v7123, %v7123
  %v7777 = vmul.f32 %v7124, %v7124
  %v7778 = vmul.f32 %v7125, %v7125
  %v7779 = vmul.f32 %v7126, %v7126
  %v7780 = vmul.f32 %v7127, %v7127
  %v7781 = vmul.f32 %v7128, %v7128
  %v7782 = vmul.f32 %v7129, %v7129
  %v7783 = vmul.f32 %v7130, %v7130
  %v7784 = vmul.f32 %v7131, %v7131
  %v7785 = vmul.f32 %v7132, %v7132
  %v7786 = vmul.f32 %v7133, %v7133
  %v7787 = vmul.f32 %v7134, %v7134
  %v7788 = vmul.f32 %v7135, %v7135
  %v7789 = vmul.f32 %v7136, %v7136
  %v7790 = vmul.f32 %v7137, %v7137
  %v7791 = vmul.f32 %v7138, %v7138
  %v7792 = vmul.f32 %v7139, %v7139
  %v7793 = vmul.f32 %v7140, %v7140
  %v7794 = vmul.f32 %v7141, %v7141
  %v7795 = vmul.f32 %v7142, %v7142
  %v7796 = vmul.f32 %v7143, %v7143
  %v7797 = vmul.f32 %v7144, %v7144
  %v7798 = vmul.f32 %v7145, %v7145
  %v7799 = vmul.f32 %v7146, %v7146
  %v7800 = vmul.f32 %v7147, %v7147
  %v7801 = vmul.f32 %v7148, %v7148
  %v7802 = vmul.f32 %v7149, %v7149
  %v7803 = vmul.f32 %v7150, %v7150
  %v7804 = vmul.f32 %v7151, %v7151
  %v7805 = vmul.f32 %v7152, %v7152
  %v7806 = vmul.f32 %v7153, %v7153
  %v7807 = vmul.f32 %v7154, %v7154
  %v7808 = vmul.f32 %v7155, %v7155
  %v7809 = vmul.f32 %v7156, %v7156
  %v7810 = vmul.f32 %v7157, %v7157
  %v7811 = vmul.f32 %v7158, %v7158
  %v7812 = vmul.f32 %v7159, %v7159
  %v7813 = vmul.f32 %v7160, %v7160
  %v7814 = vmul.f32 %v7161, %v7161
  %v7815 = vmul.f32 %v7162, %v7162
  %v7816 = vmul.f32 %v7163, %v7163
  %v7817 = vmul.f32 %v7164, %v7164
  %v7818 = vmul.f32 %v7165, %v7165
  %v7819 = vmul.f32 %v7166, %v7166
  %v7820 = vmul.f32 %v7167, %v7167
  %v7821 = vmul.f32 %v7168, %v7168
  %v7822 = vmul.f32 %v7169, %v7169
  %v7823 = vmul.f32 %v7170, %v7170
  %v7824 = vmul.f32 %v7171, %v7171
  %v7825 = vmul.f32 %v7172, %v7172
  %v7826 = vmul.f32 %v7173, %v7173
  %v7827 = vmul.f32 %v7174, %v7174
  %v7828 = vadd.f32 %v7504, %v7505
  %v7829 = vadd.f32 %v7828, %v7506
  %v7830 = vadd.f32 %v7829, %v7507
  %v7831 = vadd.f32 %v7830, %v7508
  %v7832 = vadd.f32 %v7831, %v7509
  %v7833 = vadd.f32 %v7832, %v7510
  %v7834 = vadd.f32 %v7833, %v7511
  %v7835 = vadd.f32 %v7834, %v7512
  %v7836 = vadd.f32 %v7835, %v7513
  %v7837 = vadd.f32 %v7836, %v7514
  %v7838 = vadd.f32 %v7837, %v7515
  %v7839 = vadd.f32 %v7838, %v7516
  %v7840 = vadd.f32 %v7839, %v7517
  %v7841 = vadd.f32 %v7840, %v7518
  %v7842 = vadd.f32 %v7841, %v7519
  %v7843 = vadd.f32 %v7842, %v7520
  %v7844 = vadd.f32 %v7843, %v7521
  %v7845 = vadd.f32 %v7844, %v7522
  %v7846 = vadd.f32 %v7845, %v7523
  %v7847 = vadd.f32 %v7846, %v7524
  %v7848 = vadd.f32 %v7847, %v7525
  %v7849 = vadd.f32 %v7848, %v7526
  %v7850 = vadd.f32 %v7849, %v7527
  %v7851 = vadd.f32 %v7850, %v7528
  %v7852 = vadd.f32 %v7851, %v7529
  %v7853 = vadd.f32 %v7852, %v7530
  %v7854 = vadd.f32 %v7853, %v7531
  %v7855 = vadd.f32 %v7854, %v7532
  %v7856 = vadd.f32 %v7855, %v7533
  %v7857 = vadd.f32 %v7856, %v7534
  %v7858 = vadd.f32 %v7857, %v7535
  %v7859 = vadd.f32 %v7858, %v7536
  %v7860 = vadd.f32 %v7859, %v7537
  %v7861 = vadd.f32 %v7860, %v7538
  %v7862 = vadd.f32 %v7861, %v7539
  %v7863 = vadd.f32 %v7862, %v7540
  %v7864 = vadd.f32 %v7863, %v7541
  %v7865 = vadd.f32 %v7864, %v7542
  %v7866 = vadd.f32 %v7865, %v7543
  %v7867 = vadd.f32 %v7866, %v7544
  %v7868 = vadd.f32 %v7867, %v7545
  %v7869 = vadd.f32 %v7868, %v7546
  %v7870 = vadd.f32 %v7869, %v7547
  %v7871 = vadd.f32 %v7870, %v7548
  %v7872 = vadd.f32 %v7871, %v7549
  %v7873 = vadd.f32 %v7872, %v7550
  %v7874 = vadd.f32 %v7873, %v7551
  %v7875 = vadd.f32 %v7874, %v7552
  %v7876 = vadd.f32 %v7875, %v7553
  %v7877 = vadd.f32 %v7876, %v7554
  %v7878 = vadd.f32 %v7877, %v7555
  %v7879 = vadd.f32 %v7878, %v7556
  %v7880 = vadd.f32 %v7879, %v7557
  %v7881 = vadd.f32 %v7880, %v7558
  %v7882 = vadd.f32 %v7881, %v7559
  %v7883 = vadd.f32 %v7882, %v7560
  %v7884 = vadd.f32 %v7883, %v7561
  %v7885 = vadd.f32 %v7884, %v7562
  %v7886 = vadd.f32 %v7885, %v7563
  %v7887 = vadd.f32 %v7886, %v7564
  %v7888 = vadd.f32 %v7887, %v7565
  %v7889 = vadd.f32 %v7888, %v7566
  %v7890 = vadd.f32 %v7889, %v7567
  %v7891 = vadd.f32 %v7890, %v7568
  %v7892 = vadd.f32 %v7891, %v7569
  %v7893 = vadd.f32 %v7892, %v7570
  %v7894 = vadd.f32 %v7893, %v7571
  %v7895 = vadd.f32 %v7894, %v7572
  %v7896 = vadd.f32 %v7895, %v7573
  %v7897 = vadd.f32 %v7896, %v7574
  %v7898 = vadd.f32 %v7897, %v7575
  %v7899 = vadd.f32 %v7898, %v7576
  %v7900 = vadd.f32 %v7899, %v7577
  %v7901 = vadd.f32 %v7900, %v7578
  %v7902 = vadd.f32 %v7901, %v7579
  %v7903 = vadd.f32 %v7902, %v7580
  %v7904 = vadd.f32 %v7903, %v7581
  %v7905 = vadd.f32 %v7904, %v7582
  %v7906 = vadd.f32 %v7905, %v7583
  %v7907 = vadd.f32 %v7906, %v7584
  %v7908 = vadd.f32 %v7907, %v7585
  %v7909 = vadd.f32 %v7908, %v7586
  %v7910 = vadd.f32 %v7909, %v7587
  %v7911 = vadd.f32 %v7910, %v7588
  %v7912 = vadd.f32 %v7911, %v7589
  %v7913 = vadd.f32 %v7912, %v7590
  %v7914 = vadd.f32 %v7913, %v7591
  %v7915 = vadd.f32 %v7914, %v7592
  %v7916 = vadd.f32 %v7915, %v7593
  %v7917 = vadd.f32 %v7916, %v7594
  %v7918 = vadd.f32 %v7917, %v7595
  %v7919 = vadd.f32 %v7918, %v7596
  %v7920 = vadd.f32 %v7919, %v7597
  %v7921 = vadd.f32 %v7920, %v7598
  %v7922 = vadd.f32 %v7921, %v7599
  %v7923 = vadd.f32 %v7922, %v7600
  %v7924 = vadd.f32 %v7923, %v7601
  %v7925 = vadd.f32 %v7924, %v7602
  %v7926 = vadd.f32 %v7925, %v7603
  %v7927 = vadd.f32 %v7926, %v7604
  %v7928 = vadd.f32 %v7927, %v7605
  %v7929 = vadd.f32 %v7928, %v7606
  %v7930 = vadd.f32 %v7929, %v7607
  %v7931 = vadd.f32 %v7930, %v7608
  %v7932 = vadd.f32 %v7931, %v7609
  %v7933 = vadd.f32 %v7932, %v7610
  %v7934 = vadd.f32 %v7933, %v7611
  %v7935 = vadd.f32 %v7934, %v7612
  %v7936 = vadd.f32 %v7935, %v7613
  %v7937 = vadd.f32 %v7936, %v7614
  %v7938 = vadd.f32 %v7937, %v7615
  %v7939 = vadd.f32 %v7938, %v7616
  %v7940 = vadd.f32 %v7939, %v7617
  %v7941 = vadd.f32 %v7940, %v7618
  %v7942 = vadd.f32 %v7941, %v7619
  %v7943 = vadd.f32 %v7942, %v7620
  %v7944 = vadd.f32 %v7943, %v7621
  %v7945 = vadd.f32 %v7944, %v7622
  %v7946 = vadd.f32 %v7945, %v7623
  %v7947 = vadd.f32 %v7946, %v7624
  %v7948 = vadd.f32 %v7947, %v7625
  %v7949 = vadd.f32 %v7948, %v7626
  %v7950 = vadd.f32 %v7949, %v7627
  %v7951 = vadd.f32 %v7950, %v7628
  %v7952 = vadd.f32 %v7951, %v7629
  %v7953 = vadd.f32 %v7952, %v7630
  %v7954 = vadd.f32 %v7953, %v7631
  %v7955 = vadd.f32 %v7954, %v7632
  %v7956 = vadd.f32 %v7955, %v7633
  %v7957 = vadd.f32 %v7956, %v7634
  %v7958 = vadd.f32 %v7957, %v7635
  %v7959 = vadd.f32 %v7958, %v7636
  %v7960 = vadd.f32 %v7959, %v7637
  %v7961 = vadd.f32 %v7960, %v7638
  %v7962 = vadd.f32 %v7961, %v7639
  %v7963 = vadd.f32 %v7962, %v7640
  %v7964 = vadd.f32 %v7963, %v7641
  %v7965 = vadd.f32 %v7964, %v7642
  %v7966 = vadd.f32 %v7965, %v7643
  %v7967 = vadd.f32 %v7966, %v7644
  %v7968 = vadd.f32 %v7967, %v7645
  %v7969 = vadd.f32 %v7968, %v7646
  %v7970 = vadd.f32 %v7969, %v7647
  %v7971 = vadd.f32 %v7970, %v7648
  %v7972 = vadd.f32 %v7971, %v7649
  %v7973 = vadd.f32 %v7972, %v7650
  %v7974 = vadd.f32 %v7973, %v7651
  %v7975 = vadd.f32 %v7974, %v7652
  %v7976 = vadd.f32 %v7975, %v7653
  %v7977 = vadd.f32 %v7976, %v7654
  %v7978 = vadd.f32 %v7977, %v7655
  %v7979 = vadd.f32 %v7978, %v7656
  %v7980 = vadd.f32 %v7979, %v7657
  %v7981 = vadd.f32 %v7980, %v7658
  %v7982 = vadd.f32 %v7981, %v7659
  %v7983 = vadd.f32 %v7982, %v7660
  %v7984 = vadd.f32 %v7983, %v7661
  %v7985 = vadd.f32 %v7984, %v7662
  %v7986 = vadd.f32 %v7985, %v7663
  %v7987 = vadd.f32 %v7986, %v7664
  %v7988 = vadd.f32 %v7987, %v7665
  %v7989 = vadd.f32 %v7988, %v7666
  %v7990 = vadd.f32 %v7989, %v7667
  %v7991 = vadd.f32 %v7990, %v7668
  %v7992 = vadd.f32 %v7991, %v7669
  %v7993 = vadd.f32 %v7992, %v7670
  %v7994 = vadd.f32 %v7993, %v7671
  %v7995 = vadd.f32 %v7994, %v7672
  %v7996 = vadd.f32 %v7995, %v7673
  %v7997 = vadd.f32 %v7996, %v7674
  %v7998 = vadd.f32 %v7997, %v7675
  %v7999 = vadd.f32 %v7998, %v7676
  %v8000 = vadd.f32 %v7999, %v7677
  %v8001 = vadd.f32 %v8000, %v7678
  %v8002 = vadd.f32 %v8001, %v7679
  %v8003 = vadd.f32 %v8002, %v7680
  %v8004 = vadd.f32 %v8003, %v7681
  %v8005 = vadd.f32 %v8004, %v7682
  %v8006 = vadd.f32 %v8005, %v7683
  %v8007 = vadd.f32 %v8006, %v7684
  %v8008 = vadd.f32 %v8007, %v7685
  %v8009 = vadd.f32 %v8008, %v7686
  %v8010 = vadd.f32 %v8009, %v7687
  %v8011 = vadd.f32 %v8010, %v7688
  %v8012 = vadd.f32 %v8011, %v7689
  %v8013 = vadd.f32 %v8012, %v7690
  %v8014 = vadd.f32 %v8013, %v7691
  %v8015 = vadd.f32 %v8014, %v7692
  %v8016 = vadd.f32 %v8015, %v7693
  %v8017 = vadd.f32 %v8016, %v7694
  %v8018 = vadd.f32 %v8017, %v7695
  %v8019 = vadd.f32 %v8018, %v7696
  %v8020 = vadd.f32 %v8019, %v7697
  %v8021 = vadd.f32 %v8020, %v7698
  %v8022 = vadd.f32 %v8021, %v7699
  %v8023 = vadd.f32 %v8022, %v7700
  %v8024 = vadd.f32 %v8023, %v7701
  %v8025 = vadd.f32 %v8024, %v7702
  %v8026 = vadd.f32 %v8025, %v7703
  %v8027 = vadd.f32 %v8026, %v7704
  %v8028 = vadd.f32 %v8027, %v7705
  %v8029 = vadd.f32 %v8028, %v7706
  %v8030 = vadd.f32 %v8029, %v7707
  %v8031 = vadd.f32 %v8030, %v7708
  %v8032 = vadd.f32 %v8031, %v7709
  %v8033 = vadd.f32 %v8032, %v7710
  %v8034 = vadd.f32 %v8033, %v7711
  %v8035 = vadd.f32 %v8034, %v7712
  %v8036 = vadd.f32 %v8035, %v7713
  %v8037 = vadd.f32 %v8036, %v7714
  %v8038 = vadd.f32 %v8037, %v7715
  %v8039 = vadd.f32 %v8038, %v7716
  %v8040 = vadd.f32 %v8039, %v7717
  %v8041 = vadd.f32 %v8040, %v7718
  %v8042 = vadd.f32 %v8041, %v7719
  %v8043 = vadd.f32 %v8042, %v7720
  %v8044 = vadd.f32 %v8043, %v7721
  %v8045 = vadd.f32 %v8044, %v7722
  %v8046 = vadd.f32 %v8045, %v7723
  %v8047 = vadd.f32 %v8046, %v7724
  %v8048 = vadd.f32 %v8047, %v7725
  %v8049 = vadd.f32 %v8048, %v7726
  %v8050 = vadd.f32 %v8049, %v7727
  %v8051 = vadd.f32 %v8050, %v7728
  %v8052 = vadd.f32 %v8051, %v7729
  %v8053 = vadd.f32 %v8052, %v7730
  %v8054 = vadd.f32 %v8053, %v7731
  %v8055 = vadd.f32 %v8054, %v7732
  %v8056 = vadd.f32 %v8055, %v7733
  %v8057 = vadd.f32 %v8056, %v7734
  %v8058 = vadd.f32 %v8057, %v7735
  %v8059 = vadd.f32 %v8058, %v7736
  %v8060 = vadd.f32 %v8059, %v7737
  %v8061 = vadd.f32 %v8060, %v7738
  %v8062 = vadd.f32 %v8061, %v7739
  %v8063 = vadd.f32 %v8062, %v7740
  %v8064 = vadd.f32 %v8063, %v7741
  %v8065 = vadd.f32 %v8064, %v7742
  %v8066 = vadd.f32 %v8065, %v7743
  %v8067 = vadd.f32 %v8066, %v7744
  %v8068 = vadd.f32 %v8067, %v7745
  %v8069 = vadd.f32 %v8068, %v7746
  %v8070 = vadd.f32 %v8069, %v7747
  %v8071 = vadd.f32 %v8070, %v7748
  %v8072 = vadd.f32 %v8071, %v7749
  %v8073 = vadd.f32 %v8072, %v7750
  %v8074 = vadd.f32 %v8073, %v7751
  %v8075 = vadd.f32 %v8074, %v7752
  %v8076 = vadd.f32 %v8075, %v7753
  %v8077 = vadd.f32 %v8076, %v7754
  %v8078 = vadd.f32 %v8077, %v7755
  %v8079 = vadd.f32 %v8078, %v7756
  %v8080 = vadd.f32 %v8079, %v7757
  %v8081 = vadd.f32 %v8080, %v7758
  %v8082 = vadd.f32 %v8081, %v7759
  %v8083 = vadd.f32 %v8082, %v7760
  %v8084 = vadd.f32 %v8083, %v7761
  %v8085 = vadd.f32 %v8084, %v7762
  %v8086 = vadd.f32 %v8085, %v7763
  %v8087 = vadd.f32 %v8086, %v7764
  %v8088 = vadd.f32 %v8087, %v7765
  %v8089 = vadd.f32 %v8088, %v7766
  %v8090 = vadd.f32 %v8089, %v7767
  %v8091 = vadd.f32 %v8090, %v7768
  %v8092 = vadd.f32 %v8091, %v7769
  %v8093 = vadd.f32 %v8092, %v7770
  %v8094 = vadd.f32 %v8093, %v7771
  %v8095 = vadd.f32 %v8094, %v7772
  %v8096 = vadd.f32 %v8095, %v7773
  %v8097 = vadd.f32 %v8096, %v7774
  %v8098 = vadd.f32 %v8097, %v7775
  %v8099 = vadd.f32 %v8098, %v7776
  %v8100 = vadd.f32 %v8099, %v7777
  %v8101 = vadd.f32 %v8100, %v7778
  %v8102 = vadd.f32 %v8101, %v7779
  %v8103 = vadd.f32 %v8102, %v7780
  %v8104 = vadd.f32 %v8103, %v7781
  %v8105 = vadd.f32 %v8104, %v7782
  %v8106 = vadd.f32 %v8105, %v7783
  %v8107 = vadd.f32 %v8106, %v7784
  %v8108 = vadd.f32 %v8107, %v7785
  %v8109 = vadd.f32 %v8108, %v7786
  %v8110 = vadd.f32 %v8109, %v7787
  %v8111 = vadd.f32 %v8110, %v7788
  %v8112 = vadd.f32 %v8111, %v7789
  %v8113 = vadd.f32 %v8112, %v7790
  %v8114 = vadd.f32 %v8113, %v7791
  %v8115 = vadd.f32 %v8114, %v7792
  %v8116 = vadd.f32 %v8115, %v7793
  %v8117 = vadd.f32 %v8116, %v7794
  %v8118 = vadd.f32 %v8117, %v7795
  %v8119 = vadd.f32 %v8118, %v7796
  %v8120 = vadd.f32 %v8119, %v7797
  %v8121 = vadd.f32 %v8120, %v7798
  %v8122 = vadd.f32 %v8121, %v7799
  %v8123 = vadd.f32 %v8122, %v7800
  %v8124 = vadd.f32 %v8123, %v7801
  %v8125 = vadd.f32 %v8124, %v7802
  %v8126 = vadd.f32 %v8125, %v7803
  %v8127 = vadd.f32 %v8126, %v7804
  %v8128 = vadd.f32 %v8127, %v7805
  %v8129 = vadd.f32 %v8128, %v7806
  %v8130 = vadd.f32 %v8129, %v7807
  %v8131 = vadd.f32 %v8130, %v7808
  %v8132 = vadd.f32 %v8131, %v7809
  %v8133 = vadd.f32 %v8132, %v7810
  %v8134 = vadd.f32 %v8133, %v7811
  %v8135 = vadd.f32 %v8134, %v7812
  %v8136 = vadd.f32 %v8135, %v7813
  %v8137 = vadd.f32 %v8136, %v7814
  %v8138 = vadd.f32 %v8137, %v7815
  %v8139 = vadd.f32 %v8138, %v7816
  %v8140 = vadd.f32 %v8139, %v7817
  %v8141 = vadd.f32 %v8140, %v7818
  %v8142 = vadd.f32 %v8141, %v7819
  %v8143 = vadd.f32 %v8142, %v7820
  %v8144 = vadd.f32 %v8143, %v7821
  %v8145 = vadd.f32 %v8144, %v7822
  %v8146 = vadd.f32 %v8145, %v7823
  %v8147 = vadd.f32 %v8146, %v7824
  %v8148 = vadd.f32 %v8147, %v7825
  %v8149 = vadd.f32 %v8148, %v7826
  %v8150 = vadd.f32 %v8149, %v7827
  %v8151 = vrot.slane %v8150, 4
  %v8152 = vadd.f32 %v8150, %v8151
  %v8153 = vrot.slane %v8152, 2
  %v8154 = vadd.f32 %v8152, %v8153
  %v8155 = vrot.slane %v8154, 1
  %v8156 = vadd.f32 %v8154, %v8155
  %v8157 = vrcp.pop 2592.0
  %v8158 = vmul.f32 2592.0, %v8157
  %v8159 = vsub.f32 1.0, %v8158
  %v8160 = vmul.f32 %v8157, %v8159
  %v8161 = vadd.f32 %v8157, %v8160
  %vm8162 = vweird.f32 %v8157
  %v8163 = vsel %vm8162, %v8157, %v8161
  %v8164 = vmul.f32 %v7503, %v8163
  %v8165 = vmul.f32 %v8156, %v8163
  %v8166 = vmul.f32 %v8164, %v8164
  %v8167 = vsub.f32 %v8165, %v8166
  %v8168 = vadd.f32 %v8167, 1e-05
  %v8169 = vrsqrt.pop %v8168
  %v8170 = vmul.f32 %v8169, %v8168
  %v8171 = vmul.f32 %v8170, %v8169
  %v8172 = vmul.f32 0.5, %v8171
  %v8173 = vsub.f32 1.5, %v8172
  %v8174 = vmul.f32 %v8169, %v8173
  %vm8175 = vweird.f32 %v8168
  %vm8176 = vweird.f32 %v8169
  %vm8177 = vmor %vm8175, %vm8176
  %v8178 = vsel %vm8177, %v8169, %v8174
  %v8179 = vsub.f32 %v1343, %v8164
  %v8180 = vsub.f32 %v1346, %v8164
  %v8181 = vsub.f32 %v1349, %v8164
  %v8182 = vsub.f32 %v1352, %v8164
  %v8183 = vsub.f32 %v1355, %v8164
  %v8184 = vsub.f32 %v1358, %v8164
  %v8185 = vsub.f32 %v1361, %v8164
  %v8186 = vsub.f32 %v1364, %v8164
  %v8187 = vsub.f32 %v1367, %v8164
  %v8188 = vsub.f32 %v1370, %v8164
  %v8189 = vsub.f32 %v1373, %v8164
  %v8190 = vsub.f32 %v1376, %v8164
  %v8191 = vsub.f32 %v1379, %v8164
  %v8192 = vsub.f32 %v1382, %v8164
  %v8193 = vsub.f32 %v1385, %v8164
  %v8194 = vsub.f32 %v1388, %v8164
  %v8195 = vsub.f32 %v1391, %v8164
  %v8196 = vsub.f32 %v1394, %v8164
  %v8197 = vsub.f32 %v1397, %v8164
  %v8198 = vsub.f32 %v1400, %v8164
  %v8199 = vsub.f32 %v1403, %v8164
  %v8200 = vsub.f32 %v1406, %v8164
  %v8201 = vsub.f32 %v1409, %v8164
  %v8202 = vsub.f32 %v1412, %v8164
  %v8203 = vsub.f32 %v1415, %v8164
  %v8204 = vsub.f32 %v1418, %v8164
  %v8205 = vsub.f32 %v1421, %v8164
  %v8206 = vsub.f32 %v1424, %v8164
  %v8207 = vsub.f32 %v1427, %v8164
  %v8208 = vsub.f32 %v1430, %v8164
  %v8209 = vsub.f32 %v1433, %v8164
  %v8210 = vsub.f32 %v1436, %v8164
  %v8211 = vsub.f32 %v1439, %v8164
  %v8212 = vsub.f32 %v1442, %v8164
  %v8213 = vsub.f32 %v1445, %v8164
  %v8214 = vsub.f32 %v1448, %v8164
  %v8215 = vsub.f32 %v1451, %v8164
  %v8216 = vsub.f32 %v1454, %v8164
  %v8217 = vsub.f32 %v1457, %v8164
  %v8218 = vsub.f32 %v1460, %v8164
  %v8219 = vsub.f32 %v1463, %v8164
  %v8220 = vsub.f32 %v1466, %v8164
  %v8221 = vsub.f32 %v1469, %v8164
  %v8222 = vsub.f32 %v1472, %v8164
  %v8223 = vsub.f32 %v1475, %v8164
  %v8224 = vsub.f32 %v1478, %v8164
  %v8225 = vsub.f32 %v1481, %v8164
  %v8226 = vsub.f32 %v1484, %v8164
  %v8227 = vsub.f32 %v1487, %v8164
  %v8228 = vsub.f32 %v1490, %v8164
  %v8229 = vsub.f32 %v1493, %v8164
  %v8230 = vsub.f32 %v1496, %v8164
  %v8231 = vsub.f32 %v1499, %v8164
  %v8232 = vsub.f32 %v1502, %v8164
  %v8233 = vsub.f32 %v1505, %v8164
  %v8234 = vsub.f32 %v1508, %v8164
  %v8235 = vsub.f32 %v1511, %v8164
  %v8236 = vsub.f32 %v1514, %v8164
  %v8237 = vsub.f32 %v1517, %v8164
  %v8238 = vsub.f32 %v1520, %v8164
  %v8239 = vsub.f32 %v1523, %v8164
  %v8240 = vsub.f32 %v1526, %v8164
  %v8241 = vsub.f32 %v1529, %v8164
  %v8242 = vsub.f32 %v1532, %v8164
  %v8243 = vsub.f32 %v1535, %v8164
  %v8244 = vsub.f32 %v1538, %v8164
  %v8245 = vsub.f32 %v1541, %v8164
  %v8246 = vsub.f32 %v1544, %v8164
  %v8247 = vsub.f32 %v1547, %v8164
  %v8248 = vsub.f32 %v1550, %v8164
  %v8249 = vsub.f32 %v1553, %v8164
  %v8250 = vsub.f32 %v1556, %v8164
  %v8251 = vsub.f32 %v1559, %v8164
  %v8252 = vsub.f32 %v1562, %v8164
  %v8253 = vsub.f32 %v1565, %v8164
  %v8254 = vsub.f32 %v1568, %v8164
  %v8255 = vsub.f32 %v1571, %v8164
  %v8256 = vsub.f32 %v1574, %v8164
  %v8257 = vsub.f32 %v1577, %v8164
  %v8258 = vsub.f32 %v1580, %v8164
  %v8259 = vsub.f32 %v1583, %v8164
  %v8260 = vsub.f32 %v1586, %v8164
  %v8261 = vsub.f32 %v1589, %v8164
  %v8262 = vsub.f32 %v1592, %v8164
  %v8263 = vsub.f32 %v1595, %v8164
  %v8264 = vsub.f32 %v1598, %v8164
  %v8265 = vsub.f32 %v1601, %v8164
  %v8266 = vsub.f32 %v1604, %v8164
  %v8267 = vsub.f32 %v1607, %v8164
  %v8268 = vsub.f32 %v1610, %v8164
  %v8269 = vsub.f32 %v1613, %v8164
  %v8270 = vsub.f32 %v1616, %v8164
  %v8271 = vsub.f32 %v1619, %v8164
  %v8272 = vsub.f32 %v1622, %v8164
  %v8273 = vsub.f32 %v1625, %v8164
  %v8274 = vsub.f32 %v1628, %v8164
  %v8275 = vsub.f32 %v1631, %v8164
  %v8276 = vsub.f32 %v1634, %v8164
  %v8277 = vsub.f32 %v1637, %v8164
  %v8278 = vsub.f32 %v1640, %v8164
  %v8279 = vsub.f32 %v1643, %v8164
  %v8280 = vsub.f32 %v1646, %v8164
  %v8281 = vsub.f32 %v1649, %v8164
  %v8282 = vsub.f32 %v1652, %v8164
  %v8283 = vsub.f32 %v1655, %v8164
  %v8284 = vsub.f32 %v1658, %v8164
  %v8285 = vsub.f32 %v1661, %v8164
  %v8286 = vsub.f32 %v1664, %v8164
  %v8287 = vsub.f32 %v1667, %v8164
  %v8288 = vsub.f32 %v1670, %v8164
  %v8289 = vsub.f32 %v1673, %v8164
  %v8290 = vsub.f32 %v1676, %v8164
  %v8291 = vsub.f32 %v1679, %v8164
  %v8292 = vsub.f32 %v1682, %v8164
  %v8293 = vsub.f32 %v1685, %v8164
  %v8294 = vsub.f32 %v1688, %v8164
  %v8295 = vsub.f32 %v1691, %v8164
  %v8296 = vsub.f32 %v1694, %v8164
  %v8297 = vsub.f32 %v1697, %v8164
  %v8298 = vsub.f32 %v1700, %v8164
  %v8299 = vsub.f32 %v1703, %v8164
  %v8300 = vsub.f32 %v1706, %v8164
  %v8301 = vsub.f32 %v1709, %v8164
  %v8302 = vsub.f32 %v1712, %v8164
  %v8303 = vsub.f32 %v1715, %v8164
  %v8304 = vsub.f32 %v1718, %v8164
  %v8305 = vsub.f32 %v1721, %v8164
  %v8306 = vsub.f32 %v1724, %v8164
  %v8307 = vsub.f32 %v1727, %v8164
  %v8308 = vsub.f32 %v1730, %v8164
  %v8309 = vsub.f32 %v1733, %v8164
  %v8310 = vsub.f32 %v1736, %v8164
  %v8311 = vsub.f32 %v1739, %v8164
  %v8312 = vsub.f32 %v1742, %v8164
  %v8313 = vsub.f32 %v1745, %v8164
  %v8314 = vsub.f32 %v1748, %v8164
  %v8315 = vsub.f32 %v1751, %v8164
  %v8316 = vsub.f32 %v1754, %v8164
  %v8317 = vsub.f32 %v1757, %v8164
  %v8318 = vsub.f32 %v1760, %v8164
  %v8319 = vsub.f32 %v1763, %v8164
  %v8320 = vsub.f32 %v1766, %v8164
  %v8321 = vsub.f32 %v1769, %v8164
  %v8322 = vsub.f32 %v1772, %v8164
  %v8323 = vsub.f32 %v1775, %v8164
  %v8324 = vsub.f32 %v1778, %v8164
  %v8325 = vsub.f32 %v1781, %v8164
  %v8326 = vsub.f32 %v1784, %v8164
  %v8327 = vsub.f32 %v1787, %v8164
  %v8328 = vsub.f32 %v1790, %v8164
  %v8329 = vsub.f32 %v1793, %v8164
  %v8330 = vsub.f32 %v1796, %v8164
  %v8331 = vsub.f32 %v1799, %v8164
  %v8332 = vsub.f32 %v1802, %v8164
  %v8333 = vsub.f32 %v1805, %v8164
  %v8334 = vsub.f32 %v1808, %v8164
  %v8335 = vsub.f32 %v1811, %v8164
  %v8336 = vsub.f32 %v1814, %v8164
  %v8337 = vsub.f32 %v1817, %v8164
  %v8338 = vsub.f32 %v1820, %v8164
  %v8339 = vsub.f32 %v1823, %v8164
  %v8340 = vsub.f32 %v1826, %v8164
  %v8341 = vsub.f32 %v1829, %v8164
  %v8342 = vsub.f32 %v1832, %v8164
  %v8343 = vsub.f32 %v1835, %v8164
  %v8344 = vsub.f32 %v1838, %v8164
  %v8345 = vsub.f32 %v1841, %v8164
  %v8346 = vsub.f32 %v1844, %v8164
  %v8347 = vsub.f32 %v1847, %v8164
  %v8348 = vsub.f32 %v1850, %v8164
  %v8349 = vsub.f32 %v1853, %v8164
  %v8350 = vsub.f32 %v1856, %v8164
  %v8351 = vsub.f32 %v1859, %v8164
  %v8352 = vsub.f32 %v1862, %v8164
  %v8353 = vsub.f32 %v1865, %v8164
  %v8354 = vsub.f32 %v1868, %v8164
  %v8355 = vsub.f32 %v1871, %v8164
  %v8356 = vsub.f32 %v1874, %v8164
  %v8357 = vsub.f32 %v1877, %v8164
  %v8358 = vsub.f32 %v1880, %v8164
  %v8359 = vsub.f32 %v1883, %v8164
  %v8360 = vsub.f32 %v1886, %v8164
  %v8361 = vsub.f32 %v1889, %v8164
  %v8362 = vsub.f32 %v1892, %v8164
  %v8363 = vsub.f32 %v1895, %v8164
  %v8364 = vsub.f32 %v1898, %v8164
  %v8365 = vsub.f32 %v1901, %v8164
  %v8366 = vsub.f32 %v1904, %v8164
  %v8367 = vsub.f32 %v1907, %v8164
  %v8368 = vsub.f32 %v1910, %v8164
  %v8369 = vsub.f32 %v1913, %v8164
  %v8370 = vsub.f32 %v1916, %v8164
  %v8371 = vsub.f32 %v1919, %v8164
  %v8372 = vsub.f32 %v1922, %v8164
  %v8373 = vsub.f32 %v1925, %v8164
  %v8374 = vsub.f32 %v1928, %v8164
  %v8375 = vsub.f32 %v1931, %v8164
  %v8376 = vsub.f32 %v1934, %v8164
  %v8377 = vsub.f32 %v1937, %v8164
  %v8378 = vsub.f32 %v1940, %v8164
  %v8379 = vsub.f32 %v1943, %v8164
  %v8380 = vsub.f32 %v1946, %v8164
  %v8381 = vsub.f32 %v1949, %v8164
  %v8382 = vsub.f32 %v1952, %v8164
  %v8383 = vsub.f32 %v1955, %v8164
  %v8384 = vsub.f32 %v1958, %v8164
  %v8385 = vsub.f32 %v1961, %v8164
  %v8386 = vsub.f32 %v1964, %v8164
  %v8387 = vsub.f32 %v1967, %v8164
  %v8388 = vsub.f32 %v1970, %v8164
  %v8389 = vsub.f32 %v1973, %v8164
  %v8390 = vsub.f32 %v1976, %v8164
  %v8391 = vsub.f32 %v1979, %v8164
  %v8392 = vsub.f32 %v1982, %v8164
  %v8393 = vsub.f32 %v1985, %v8164
  %v8394 = vsub.f32 %v1988, %v8164
  %v8395 = vsub.f32 %v1991, %v8164
  %v8396 = vsub.f32 %v1994, %v8164
  %v8397 = vsub.f32 %v1997, %v8164
  %v8398 = vsub.f32 %v2000, %v8164
  %v8399 = vsub.f32 %v2003, %v8164
  %v8400 = vsub.f32 %v2006, %v8164
  %v8401 = vsub.f32 %v2009, %v8164
  %v8402 = vsub.f32 %v2012, %v8164
  %v8403 = vsub.f32 %v2015, %v8164
  %v8404 = vsub.f32 %v2018, %v8164
  %v8405 = vsub.f32 %v2021, %v8164
  %v8406 = vsub.f32 %v2024, %v8164
  %v8407 = vsub.f32 %v2027, %v8164
  %v8408 = vsub.f32 %v2030, %v8164
  %v8409 = vsub.f32 %v2033, %v8164
  %v8410 = vsub.f32 %v2036, %v8164
  %v8411 = vsub.f32 %v2039, %v8164
  %v8412 = vsub.f32 %v2042, %v8164
  %v8413 = vsub.f32 %v2045, %v8164
  %v8414 = vsub.f32 %v2048, %v8164
  %v8415 = vsub.f32 %v2051, %v8164
  %v8416 = vsub.f32 %v2054, %v8164
  %v8417 = vsub.f32 %v2057, %v8164
  %v8418 = vsub.f32 %v2060, %v8164
  %v8419 = vsub.f32 %v2063, %v8164
  %v8420 = vsub.f32 %v2066, %v8164
  %v8421 = vsub.f32 %v2069, %v8164
  %v8422 = vsub.f32 %v2072, %v8164
  %v8423 = vsub.f32 %v2075, %v8164
  %v8424 = vsub.f32 %v2078, %v8164
  %v8425 = vsub.f32 %v2081, %v8164
  %v8426 = vsub.f32 %v2084, %v8164
  %v8427 = vsub.f32 %v2087, %v8164
  %v8428 = vsub.f32 %v2090, %v8164
  %v8429 = vsub.f32 %v2093, %v8164
  %v8430 = vsub.f32 %v2096, %v8164
  %v8431 = vsub.f32 %v2099, %v8164
  %v8432 = vsub.f32 %v2102, %v8164
  %v8433 = vsub.f32 %v2105, %v8164
  %v8434 = vsub.f32 %v2108, %v8164
  %v8435 = vsub.f32 %v2111, %v8164
  %v8436 = vsub.f32 %v2114, %v8164
  %v8437 = vsub.f32 %v2117, %v8164
  %v8438 = vsub.f32 %v2120, %v8164
  %v8439 = vsub.f32 %v2123, %v8164
  %v8440 = vsub.f32 %v2126, %v8164
  %v8441 = vsub.f32 %v2129, %v8164
  %v8442 = vsub.f32 %v2132, %v8164
  %v8443 = vsub.f32 %v2135, %v8164
  %v8444 = vsub.f32 %v2138, %v8164
  %v8445 = vsub.f32 %v2141, %v8164
  %v8446 = vsub.f32 %v2144, %v8164
  %v8447 = vsub.f32 %v2147, %v8164
  %v8448 = vsub.f32 %v2150, %v8164
  %v8449 = vsub.f32 %v2153, %v8164
  %v8450 = vsub.f32 %v2156, %v8164
  %v8451 = vsub.f32 %v2159, %v8164
  %v8452 = vsub.f32 %v2162, %v8164
  %v8453 = vsub.f32 %v2165, %v8164
  %v8454 = vsub.f32 %v2168, %v8164
  %v8455 = vsub.f32 %v2171, %v8164
  %v8456 = vsub.f32 %v2174, %v8164
  %v8457 = vsub.f32 %v2177, %v8164
  %v8458 = vsub.f32 %v2180, %v8164
  %v8459 = vsub.f32 %v2183, %v8164
  %v8460 = vsub.f32 %v2186, %v8164
  %v8461 = vsub.f32 %v2189, %v8164
  %v8462 = vsub.f32 %v2192, %v8164
  %v8463 = vsub.f32 %v2195, %v8164
  %v8464 = vsub.f32 %v2198, %v8164
  %v8465 = vsub.f32 %v2201, %v8164
  %v8466 = vsub.f32 %v2204, %v8164
  %v8467 = vsub.f32 %v2207, %v8164
  %v8468 = vsub.f32 %v2210, %v8164
  %v8469 = vsub.f32 %v2213, %v8164
  %v8470 = vsub.f32 %v2216, %v8164
  %v8471 = vsub.f32 %v2219, %v8164
  %v8472 = vsub.f32 %v2222, %v8164
  %v8473 = vsub.f32 %v2225, %v8164
  %v8474 = vsub.f32 %v2228, %v8164
  %v8475 = vsub.f32 %v2231, %v8164
  %v8476 = vsub.f32 %v2234, %v8164
  %v8477 = vsub.f32 %v2237, %v8164
  %v8478 = vsub.f32 %v2240, %v8164
  %v8479 = vsub.f32 %v2243, %v8164
  %v8480 = vsub.f32 %v2246, %v8164
  %v8481 = vsub.f32 %v2249, %v8164
  %v8482 = vsub.f32 %v2252, %v8164
  %v8483 = vsub.f32 %v2255, %v8164
  %v8484 = vsub.f32 %v2258, %v8164
  %v8485 = vsub.f32 %v2261, %v8164
  %v8486 = vsub.f32 %v2264, %v8164
  %v8487 = vsub.f32 %v2267, %v8164
  %v8488 = vsub.f32 %v2270, %v8164
  %v8489 = vsub.f32 %v2273, %v8164
  %v8490 = vsub.f32 %v2276, %v8164
  %v8491 = vsub.f32 %v2279, %v8164
  %v8492 = vsub.f32 %v2282, %v8164
  %v8493 = vsub.f32 %v2285, %v8164
  %v8494 = vsub.f32 %v2288, %v8164
  %v8495 = vsub.f32 %v2291, %v8164
  %v8496 = vsub.f32 %v2294, %v8164
  %v8497 = vsub.f32 %v2297, %v8164
  %v8498 = vsub.f32 %v2300, %v8164
  %v8499 = vsub.f32 %v2303, %v8164
  %v8500 = vsub.f32 %v2306, %v8164
  %v8501 = vsub.f32 %v2309, %v8164
  %v8502 = vsub.f32 %v2312, %v8164
  %v8503 = vld [vmem:[%s3] sm:$0x1]
  %v8504 = vmul.f32 %v8178, %v8503
  %v8505 = vperm.slane %v8504, 0
  %v8506 = vmul.f32 %v8179, %v8505
  %v8507 = vmul.f32 %v8180, %v8505
  %v8508 = vmul.f32 %v8181, %v8505
  %v8509 = vmul.f32 %v8182, %v8505
  %v8510 = vmul.f32 %v8183, %v8505
  %v8511 = vmul.f32 %v8184, %v8505
  %v8512 = vmul.f32 %v8185, %v8505
  %v8513 = vmul.f32 %v8186, %v8505
  %v8514 = vmul.f32 %v8187, %v8505
  %v8515 = vmul.f32 %v8188, %v8505
  %v8516 = vmul.f32 %v8189, %v8505
  %v8517 = vmul.f32 %v8190, %v8505
  %v8518 = vmul.f32 %v8191, %v8505
  %v8519 = vmul.f32 %v8192, %v8505
  %v8520 = vmul.f32 %v8193, %v8505
  %v8521 = vmul.f32 %v8194, %v8505
  %v8522 = vmul.f32 %v8195, %v8505
  %v8523 = vmul.f32 %v8196, %v8505
  %v8524 = vmul.f32 %v8197, %v8505
  %v8525 = vmul.f32 %v8198, %v8505
  %v8526 = vmul.f32 %v8199, %v8505
  %v8527 = vmul.f32 %v8200, %v8505
  %v8528 = vmul.f32 %v8201, %v8505
  %v8529 = vmul.f32 %v8202, %v8505
  %v8530 = vmul.f32 %v8203, %v8505
  %v8531 = vmul.f32 %v8204, %v8505
  %v8532 = vmul.f32 %v8205, %v8505
  %v8533 = vmul.f32 %v8206, %v8505
  %v8534 = vmul.f32 %v8207, %v8505
  %v8535 = vmul.f32 %v8208, %v8505
  %v8536 = vmul.f32 %v8209, %v8505
  %v8537 = vmul.f32 %v8210, %v8505
  %v8538 = vmul.f32 %v8211, %v8505
  %v8539 = vmul.f32 %v8212, %v8505
  %v8540 = vmul.f32 %v8213, %v8505
  %v8541 = vmul.f32 %v8214, %v8505
  %v8542 = vmul.f32 %v8215, %v8505
  %v8543 = vmul.f32 %v8216, %v8505
  %v8544 = vmul.f32 %v8217, %v8505
  %v8545 = vmul.f32 %v8218, %v8505
  %v8546 = vmul.f32 %v8219, %v8505
  %v8547 = vmul.f32 %v8220, %v8505
  %v8548 = vmul.f32 %v8221, %v8505
  %v8549 = vmul.f32 %v8222, %v8505
  %v8550 = vmul.f32 %v8223, %v8505
  %v8551 = vmul.f32 %v8224, %v8505
  %v8552 = vmul.f32 %v8225, %v8505
  %v8553 = vmul.f32 %v8226, %v8505
  %v8554 = vmul.f32 %v8227, %v8505
  %v8555 = vmul.f32 %v8228, %v8505
  %v8556 = vmul.f32 %v8229, %v8505
  %v8557 = vmul.f32 %v8230, %v8505
  %v8558 = vmul.f32 %v8231, %v8505
  %v8559 = vmul.f32 %v8232, %v8505
  %v8560 = vmul.f32 %v8233, %v8505
  %v8561 = vmul.f32 %v8234, %v8505
  %v8562 = vmul.f32 %v8235, %v8505
  %v8563 = vmul.f32 %v8236, %v8505
  %v8564 = vmul.f32 %v8237, %v8505
  %v8565 = vmul.f32 %v8238, %v8505
  %v8566 = vmul.f32 %v8239, %v8505
  %v8567 = vmul.f32 %v8240, %v8505
  %v8568 = vmul.f32 %v8241, %v8505
  %v8569 = vmul.f32 %v8242, %v8505
  %v8570 = vmul.f32 %v8243, %v8505
  %v8571 = vmul.f32 %v8244, %v8505
  %v8572 = vmul.f32 %v8245, %v8505
  %v8573 = vmul.f32 %v8246, %v8505
  %v8574 = vmul.f32 %v8247, %v8505
  %v8575 = vmul.f32 %v8248, %v8505
  %v8576 = vmul.f32 %v8249, %v8505
  %v8577 = vmul.f32 %v8250, %v8505
  %v8578 = vmul.f32 %v8251, %v8505
  %v8579 = vmul.f32 %v8252, %v8505
  %v8580 = vmul.f32 %v8253, %v8505
  %v8581 = vmul.f32 %v8254, %v8505
  %v8582 = vmul.f32 %v8255, %v8505
  %v8583 = vmul.f32 %v8256, %v8505
  %v8584 = vmul.f32 %v8257, %v8505
  %v8585 = vmul.f32 %v8258, %v8505
  %v8586 = vmul.f32 %v8259, %v8505
  %v8587 = vmul.f32 %v8260, %v8505
  %v8588 = vmul.f32 %v8261, %v8505
  %v8589 = vmul.f32 %v8262, %v8505
  %v8590 = vmul.f32 %v8263, %v8505
  %v8591 = vmul.f32 %v8264, %v8505
  %v8592 = vmul.f32 %v8265, %v8505
  %v8593 = vmul.f32 %v8266, %v8505
  %v8594 = vmul.f32 %v8267, %v8505
  %v8595 = vmul.f32 %v8268, %v8505
  %v8596 = vmul.f32 %v8269, %v8505
  %v8597 = vmul.f32 %v8270, %v8505
  %v8598 = vmul.f32 %v8271, %v8505
  %v8599 = vmul.f32 %v8272, %v8505
  %v8600 = vmul.f32 %v8273, %v8505
  %v8601 = vmul.f32 %v8274, %v8505
  %v8602 = vmul.f32 %v8275, %v8505
  %v8603 = vmul.f32 %v8276, %v8505
  %v8604 = vmul.f32 %v8277, %v8505
  %v8605 = vmul.f32 %v8278, %v8505
  %v8606 = vmul.f32 %v8279, %v8505
  %v8607 = vmul.f32 %v8280, %v8505
  %v8608 = vmul.f32 %v8281, %v8505
  %v8609 = vmul.f32 %v8282, %v8505
  %v8610 = vmul.f32 %v8283, %v8505
  %v8611 = vmul.f32 %v8284, %v8505
  %v8612 = vmul.f32 %v8285, %v8505
  %v8613 = vmul.f32 %v8286, %v8505
  %v8614 = vmul.f32 %v8287, %v8505
  %v8615 = vmul.f32 %v8288, %v8505
  %v8616 = vmul.f32 %v8289, %v8505
  %v8617 = vmul.f32 %v8290, %v8505
  %v8618 = vmul.f32 %v8291, %v8505
  %v8619 = vmul.f32 %v8292, %v8505
  %v8620 = vmul.f32 %v8293, %v8505
  %v8621 = vmul.f32 %v8294, %v8505
  %v8622 = vmul.f32 %v8295, %v8505
  %v8623 = vmul.f32 %v8296, %v8505
  %v8624 = vmul.f32 %v8297, %v8505
  %v8625 = vmul.f32 %v8298, %v8505
  %v8626 = vmul.f32 %v8299, %v8505
  %v8627 = vmul.f32 %v8300, %v8505
  %v8628 = vmul.f32 %v8301, %v8505
  %v8629 = vmul.f32 %v8302, %v8505
  %v8630 = vmul.f32 %v8303, %v8505
  %v8631 = vmul.f32 %v8304, %v8505
  %v8632 = vmul.f32 %v8305, %v8505
  %v8633 = vmul.f32 %v8306, %v8505
  %v8634 = vmul.f32 %v8307, %v8505
  %v8635 = vmul.f32 %v8308, %v8505
  %v8636 = vmul.f32 %v8309, %v8505
  %v8637 = vmul.f32 %v8310, %v8505
  %v8638 = vmul.f32 %v8311, %v8505
  %v8639 = vmul.f32 %v8312, %v8505
  %v8640 = vmul.f32 %v8313, %v8505
  %v8641 = vmul.f32 %v8314, %v8505
  %v8642 = vmul.f32 %v8315, %v8505
  %v8643 = vmul.f32 %v8316, %v8505
  %v8644 = vmul.f32 %v8317, %v8505
  %v8645 = vmul.f32 %v8318, %v8505
  %v8646 = vmul.f32 %v8319, %v8505
  %v8647 = vmul.f32 %v8320, %v8505
  %v8648 = vmul.f32 %v8321, %v8505
  %v8649 = vmul.f32 %v8322, %v8505
  %v8650 = vmul.f32 %v8323, %v8505
  %v8651 = vmul.f32 %v8324, %v8505
  %v8652 = vmul.f32 %v8325, %v8505
  %v8653 = vmul.f32 %v8326, %v8505
  %v8654 = vmul.f32 %v8327, %v8505
  %v8655 = vmul.f32 %v8328, %v8505
  %v8656 = vmul.f32 %v8329, %v8505
  %v8657 = vmul.f32 %v8330, %v8505
  %v8658 = vmul.f32 %v8331, %v8505
  %v8659 = vmul.f32 %v8332, %v8505
  %v8660 = vmul.f32 %v8333, %v8505
  %v8661 = vmul.f32 %v8334, %v8505
  %v8662 = vmul.f32 %v8335, %v8505
  %v8663 = vmul.f32 %v8336, %v8505
  %v8664 = vmul.f32 %v8337, %v8505
  %v8665 = vmul.f32 %v8338, %v8505
  %v8666 = vmul.f32 %v8339, %v8505
  %v8667 = vmul.f32 %v8340, %v8505
  %v8668 = vmul.f32 %v8341, %v8505
  %v8669 = vmul.f32 %v8342, %v8505
  %v8670 = vmul.f32 %v8343, %v8505
  %v8671 = vmul.f32 %v8344, %v8505
  %v8672 = vmul.f32 %v8345, %v8505
  %v8673 = vmul.f32 %v8346, %v8505
  %v8674 = vmul.f32 %v8347, %v8505
  %v8675 = vmul.f32 %v8348, %v8505
  %v8676 = vmul.f32 %v8349, %v8505
  %v8677 = vmul.f32 %v8350, %v8505
  %v8678 = vmul.f32 %v8351, %v8505
  %v8679 = vmul.f32 %v8352, %v8505
  %v8680 = vmul.f32 %v8353, %v8505
  %v8681 = vmul.f32 %v8354, %v8505
  %v8682 = vmul.f32 %v8355, %v8505
  %v8683 = vmul.f32 %v8356, %v8505
  %v8684 = vmul.f32 %v8357, %v8505
  %v8685 = vmul.f32 %v8358, %v8505
  %v8686 = vmul.f32 %v8359, %v8505
  %v8687 = vmul.f32 %v8360, %v8505
  %v8688 = vmul.f32 %v8361, %v8505
  %v8689 = vmul.f32 %v8362, %v8505
  %v8690 = vmul.f32 %v8363, %v8505
  %v8691 = vmul.f32 %v8364, %v8505
  %v8692 = vmul.f32 %v8365, %v8505
  %v8693 = vmul.f32 %v8366, %v8505
  %v8694 = vmul.f32 %v8367, %v8505
  %v8695 = vmul.f32 %v8368, %v8505
  %v8696 = vmul.f32 %v8369, %v8505
  %v8697 = vmul.f32 %v8370, %v8505
  %v8698 = vmul.f32 %v8371, %v8505
  %v8699 = vmul.f32 %v8372, %v8505
  %v8700 = vmul.f32 %v8373, %v8505
  %v8701 = vmul.f32 %v8374, %v8505
  %v8702 = vmul.f32 %v8375, %v8505
  %v8703 = vmul.f32 %v8376, %v8505
  %v8704 = vmul.f32 %v8377, %v8505
  %v8705 = vmul.f32 %v8378, %v8505
  %v8706 = vmul.f32 %v8379, %v8505
  %v8707 = vmul.f32 %v8380, %v8505
  %v8708 = vmul.f32 %v8381, %v8505
  %v8709 = vmul.f32 %v8382, %v8505
  %v8710 = vmul.f32 %v8383, %v8505
  %v8711 = vmul.f32 %v8384, %v8505
  %v8712 = vmul.f32 %v8385, %v8505
  %v8713 = vmul.f32 %v8386, %v8505
  %v8714 = vmul.f32 %v8387, %v8505
  %v8715 = vmul.f32 %v8388, %v8505
  %v8716 = vmul.f32 %v8389, %v8505
  %v8717 = vmul.f32 %v8390, %v8505
  %v8718 = vmul.f32 %v8391, %v8505
  %v8719 = vmul.f32 %v8392, %v8505
  %v8720 = vmul.f32 %v8393, %v8505
  %v8721 = vmul.f32 %v8394, %v8505
  %v8722 = vmul.f32 %v8395, %v8505
  %v8723 = vmul.f32 %v8396, %v8505
  %v8724 = vmul.f32 %v8397, %v8505
  %v8725 = vmul.f32 %v8398, %v8505
  %v8726 = vmul.f32 %v8399, %v8505
  %v8727 = vmul.f32 %v8400, %v8505
  %v8728 = vmul.f32 %v8401, %v8505
  %v8729 = vmul.f32 %v8402, %v8505
  %v8730 = vmul.f32 %v8403, %v8505
  %v8731 = vmul.f32 %v8404, %v8505
  %v8732 = vmul.f32 %v8405, %v8505
  %v8733 = vmul.f32 %v8406, %v8505
  %v8734 = vmul.f32 %v8407, %v8505
  %v8735 = vmul.f32 %v8408, %v8505
  %v8736 = vmul.f32 %v8409, %v8505
  %v8737 = vmul.f32 %v8410, %v8505
  %v8738 = vmul.f32 %v8411, %v8505
  %v8739 = vmul.f32 %v8412, %v8505
  %v8740 = vmul.f32 %v8413, %v8505
  %v8741 = vmul.f32 %v8414, %v8505
  %v8742 = vmul.f32 %v8415, %v8505
  %v8743 = vmul.f32 %v8416, %v8505
  %v8744 = vmul.f32 %v8417, %v8505
  %v8745 = vmul.f32 %v8418, %v8505
  %v8746 = vmul.f32 %v8419, %v8505
  %v8747 = vmul.f32 %v8420, %v8505
  %v8748 = vmul.f32 %v8421, %v8505
  %v8749 = vmul.f32 %v8422, %v8505
  %v8750 = vmul.f32 %v8423, %v8505
  %v8751 = vmul.f32 %v8424, %v8505
  %v8752 = vmul.f32 %v8425, %v8505
  %v8753 = vmul.f32 %v8426, %v8505
  %v8754 = vmul.f32 %v8427, %v8505
  %v8755 = vmul.f32 %v8428, %v8505
  %v8756 = vmul.f32 %v8429, %v8505
  %v8757 = vmul.f32 %v8430, %v8505
  %v8758 = vmul.f32 %v8431, %v8505
  %v8759 = vmul.f32 %v8432, %v8505
  %v8760 = vmul.f32 %v8433, %v8505
  %v8761 = vmul.f32 %v8434, %v8505
  %v8762 = vmul.f32 %v8435, %v8505
  %v8763 = vmul.f32 %v8436, %v8505
  %v8764 = vmul.f32 %v8437, %v8505
  %v8765 = vmul.f32 %v8438, %v8505
  %v8766 = vmul.f32 %v8439, %v8505
  %v8767 = vmul.f32 %v8440, %v8505
  %v8768 = vmul.f32 %v8441, %v8505
  %v8769 = vmul.f32 %v8442, %v8505
  %v8770 = vmul.f32 %v8443, %v8505
  %v8771 = vmul.f32 %v8444, %v8505
  %v8772 = vmul.f32 %v8445, %v8505
  %v8773 = vmul.f32 %v8446, %v8505
  %v8774 = vmul.f32 %v8447, %v8505
  %v8775 = vmul.f32 %v8448, %v8505
  %v8776 = vmul.f32 %v8449, %v8505
  %v8777 = vmul.f32 %v8450, %v8505
  %v8778 = vmul.f32 %v8451, %v8505
  %v8779 = vmul.f32 %v8452, %v8505
  %v8780 = vmul.f32 %v8453, %v8505
  %v8781 = vmul.f32 %v8454, %v8505
  %v8782 = vmul.f32 %v8455, %v8505
  %v8783 = vmul.f32 %v8456, %v8505
  %v8784 = vmul.f32 %v8457, %v8505
  %v8785 = vmul.f32 %v8458, %v8505
  %v8786 = vmul.f32 %v8459, %v8505
  %v8787 = vmul.f32 %v8460, %v8505
  %v8788 = vmul.f32 %v8461, %v8505
  %v8789 = vmul.f32 %v8462, %v8505
  %v8790 = vmul.f32 %v8463, %v8505
  %v8791 = vmul.f32 %v8464, %v8505
  %v8792 = vmul.f32 %v8465, %v8505
  %v8793 = vmul.f32 %v8466, %v8505
  %v8794 = vmul.f32 %v8467, %v8505
  %v8795 = vmul.f32 %v8468, %v8505
  %v8796 = vmul.f32 %v8469, %v8505
  %v8797 = vmul.f32 %v8470, %v8505
  %v8798 = vmul.f32 %v8471, %v8505
  %v8799 = vmul.f32 %v8472, %v8505
  %v8800 = vmul.f32 %v8473, %v8505
  %v8801 = vmul.f32 %v8474, %v8505
  %v8802 = vmul.f32 %v8475, %v8505
  %v8803 = vmul.f32 %v8476, %v8505
  %v8804 = vmul.f32 %v8477, %v8505
  %v8805 = vmul.f32 %v8478, %v8505
  %v8806 = vmul.f32 %v8479, %v8505
  %v8807 = vmul.f32 %v8480, %v8505
  %v8808 = vmul.f32 %v8481, %v8505
  %v8809 = vmul.f32 %v8482, %v8505
  %v8810 = vmul.f32 %v8483, %v8505
  %v8811 = vmul.f32 %v8484, %v8505
  %v8812 = vmul.f32 %v8485, %v8505
  %v8813 = vmul.f32 %v8486, %v8505
  %v8814 = vmul.f32 %v8487, %v8505
  %v8815 = vmul.f32 %v8488, %v8505
  %v8816 = vmul.f32 %v8489, %v8505
  %v8817 = vmul.f32 %v8490, %v8505
  %v8818 = vmul.f32 %v8491, %v8505
  %v8819 = vmul.f32 %v8492, %v8505
  %v8820 = vmul.f32 %v8493, %v8505
  %v8821 = vmul.f32 %v8494, %v8505
  %v8822 = vmul.f32 %v8495, %v8505
  %v8823 = vmul.f32 %v8496, %v8505
  %v8824 = vmul.f32 %v8497, %v8505
  %v8825 = vmul.f32 %v8498, %v8505
  %v8826 = vmul.f32 %v8499, %v8505
  %v8827 = vmul.f32 %v8500, %v8505
  %v8828 = vmul.f32 %v8501, %v8505
  %v8829 = vmul.f32 %v8502, %v8505
  %v8830 = vld [vmem:[%s4] sm:$0x1]
  %v8832 = vperm.slane %v8830, 0
  %v8834 = vadd.f32 %v8506, %v8832
  %v8835 = vadd.f32 %v8507, %v8832
  %v8836 = vadd.f32 %v8508, %v8832
  %v8837 = vadd.f32 %v8509, %v8832
  %v8838 = vadd.f32 %v8510, %v8832
  %v8839 = vadd.f32 %v8511, %v8832
  %v8840 = vadd.f32 %v8512, %v8832
  %v8841 = vadd.f32 %v8513, %v8832
  %v8842 = vadd.f32 %v8514, %v8832
  %v8843 = vadd.f32 %v8515, %v8832
  %v8844 = vadd.f32 %v8516, %v8832
  %v8845 = vadd.f32 %v8517, %v8832
  %v8846 = vadd.f32 %v8518, %v8832
  %v8847 = vadd.f32 %v8519, %v8832
  %v8848 = vadd.f32 %v8520, %v8832
  %v8849 = vadd.f32 %v8521, %v8832
  %v8850 = vadd.f32 %v8522, %v8832
  %v8851 = vadd.f32 %v8523, %v8832
  %v8852 = vadd.f32 %v8524, %v8832
  %v8853 = vadd.f32 %v8525, %v8832
  %v8854 = vadd.f32 %v8526, %v8832
  %v8855 = vadd.f32 %v8527, %v8832
  %v8856 = vadd.f32 %v8528, %v8832
  %v8857 = vadd.f32 %v8529, %v8832
  %v8858 = vadd.f32 %v8530, %v8832
  %v8859 = vadd.f32 %v8531, %v8832
  %v8860 = vadd.f32 %v8532, %v8832
  %v8861 = vadd.f32 %v8533, %v8832
  %v8862 = vadd.f32 %v8534, %v8832
  %v8863 = vadd.f32 %v8535, %v8832
  %v8864 = vadd.f32 %v8536, %v8832
  %v8865 = vadd.f32 %v8537, %v8832
  %v8866 = vadd.f32 %v8538, %v8832
  %v8867 = vadd.f32 %v8539, %v8832
  %v8868 = vadd.f32 %v8540, %v8832
  %v8869 = vadd.f32 %v8541, %v8832
  %v8870 = vadd.f32 %v8542, %v8832
  %v8871 = vadd.f32 %v8543, %v8832
  %v8872 = vadd.f32 %v8544, %v8832
  %v8873 = vadd.f32 %v8545, %v8832
  %v8874 = vadd.f32 %v8546, %v8832
  %v8875 = vadd.f32 %v8547, %v8832
  %v8876 = vadd.f32 %v8548, %v8832
  %v8877 = vadd.f32 %v8549, %v8832
  %v8878 = vadd.f32 %v8550, %v8832
  %v8879 = vadd.f32 %v8551, %v8832
  %v8880 = vadd.f32 %v8552, %v8832
  %v8881 = vadd.f32 %v8553, %v8832
  %v8882 = vadd.f32 %v8554, %v8832
  %v8883 = vadd.f32 %v8555, %v8832
  %v8884 = vadd.f32 %v8556, %v8832
  %v8885 = vadd.f32 %v8557, %v8832
  %v8886 = vadd.f32 %v8558, %v8832
  %v8887 = vadd.f32 %v8559, %v8832
  %v8888 = vadd.f32 %v8560, %v8832
  %v8889 = vadd.f32 %v8561, %v8832
  %v8890 = vadd.f32 %v8562, %v8832
  %v8891 = vadd.f32 %v8563, %v8832
  %v8892 = vadd.f32 %v8564, %v8832
  %v8893 = vadd.f32 %v8565, %v8832
  %v8894 = vadd.f32 %v8566, %v8832
  %v8895 = vadd.f32 %v8567, %v8832
  %v8896 = vadd.f32 %v8568, %v8832
  %v8897 = vadd.f32 %v8569, %v8832
  %v8898 = vadd.f32 %v8570, %v8832
  %v8899 = vadd.f32 %v8571, %v8832
  %v8900 = vadd.f32 %v8572, %v8832
  %v8901 = vadd.f32 %v8573, %v8832
  %v8902 = vadd.f32 %v8574, %v8832
  %v8903 = vadd.f32 %v8575, %v8832
  %v8904 = vadd.f32 %v8576, %v8832
  %v8905 = vadd.f32 %v8577, %v8832
  %v8906 = vadd.f32 %v8578, %v8832
  %v8907 = vadd.f32 %v8579, %v8832
  %v8908 = vadd.f32 %v8580, %v8832
  %v8909 = vadd.f32 %v8581, %v8832
  %v8910 = vadd.f32 %v8582, %v8832
  %v8911 = vadd.f32 %v8583, %v8832
  %v8912 = vadd.f32 %v8584, %v8832
  %v8913 = vadd.f32 %v8585, %v8832
  %v8914 = vadd.f32 %v8586, %v8832
  %v8915 = vadd.f32 %v8587, %v8832
  %v8916 = vadd.f32 %v8588, %v8832
  %v8917 = vadd.f32 %v8589, %v8832
  %v8918 = vadd.f32 %v8590, %v8832
  %v8919 = vadd.f32 %v8591, %v8832
  %v8920 = vadd.f32 %v8592, %v8832
  %v8921 = vadd.f32 %v8593, %v8832
  %v8922 = vadd.f32 %v8594, %v8832
  %v8923 = vadd.f32 %v8595, %v8832
  %v8924 = vadd.f32 %v8596, %v8832
  %v8925 = vadd.f32 %v8597, %v8832
  %v8926 = vadd.f32 %v8598, %v8832
  %v8927 = vadd.f32 %v8599, %v8832
  %v8928 = vadd.f32 %v8600, %v8832
  %v8929 = vadd.f32 %v8601, %v8832
  %v8930 = vadd.f32 %v8602, %v8832
  %v8931 = vadd.f32 %v8603, %v8832
  %v8932 = vadd.f32 %v8604, %v8832
  %v8933 = vadd.f32 %v8605, %v8832
  %v8934 = vadd.f32 %v8606, %v8832
  %v8935 = vadd.f32 %v8607, %v8832
  %v8936 = vadd.f32 %v8608, %v8832
  %v8937 = vadd.f32 %v8609, %v8832
  %v8938 = vadd.f32 %v8610, %v8832
  %v8939 = vadd.f32 %v8611, %v8832
  %v8940 = vadd.f32 %v8612, %v8832
  %v8941 = vadd.f32 %v8613, %v8832
  %v8942 = vadd.f32 %v8614, %v8832
  %v8943 = vadd.f32 %v8615, %v8832
  %v8944 = vadd.f32 %v8616, %v8832
  %v8945 = vadd.f32 %v8617, %v8832
  %v8946 = vadd.f32 %v8618, %v8832
  %v8947 = vadd.f32 %v8619, %v8832
  %v8948 = vadd.f32 %v8620, %v8832
  %v8949 = vadd.f32 %v8621, %v8832
  %v8950 = vadd.f32 %v8622, %v8832
  %v8951 = vadd.f32 %v8623, %v8832
  %v8952 = vadd.f32 %v8624, %v8832
  %v8953 = vadd.f32 %v8625, %v8832
  %v8954 = vadd.f32 %v8626, %v8832
  %v8955 = vadd.f32 %v8627, %v8832
  %v8956 = vadd.f32 %v8628, %v8832
  %v8957 = vadd.f32 %v8629, %v8832
  %v8958 = vadd.f32 %v8630, %v8832
  %v8959 = vadd.f32 %v8631, %v8832
  %v8960 = vadd.f32 %v8632, %v8832
  %v8961 = vadd.f32 %v8633, %v8832
  %v8962 = vadd.f32 %v8634, %v8832
  %v8963 = vadd.f32 %v8635, %v8832
  %v8964 = vadd.f32 %v8636, %v8832
  %v8965 = vadd.f32 %v8637, %v8832
  %v8966 = vadd.f32 %v8638, %v8832
  %v8967 = vadd.f32 %v8639, %v8832
  %v8968 = vadd.f32 %v8640, %v8832
  %v8969 = vadd.f32 %v8641, %v8832
  %v8970 = vadd.f32 %v8642, %v8832
  %v8971 = vadd.f32 %v8643, %v8832
  %v8972 = vadd.f32 %v8644, %v8832
  %v8973 = vadd.f32 %v8645, %v8832
  %v8974 = vadd.f32 %v8646, %v8832
  %v8975 = vadd.f32 %v8647, %v8832
  %v8976 = vadd.f32 %v8648, %v8832
  %v8977 = vadd.f32 %v8649, %v8832
  %v8978 = vadd.f32 %v8650, %v8832
  %v8979 = vadd.f32 %v8651, %v8832
  %v8980 = vadd.f32 %v8652, %v8832
  %v8981 = vadd.f32 %v8653, %v8832
  %v8982 = vadd.f32 %v8654, %v8832
  %v8983 = vadd.f32 %v8655, %v8832
  %v8984 = vadd.f32 %v8656, %v8832
  %v8985 = vadd.f32 %v8657, %v8832
  %v8986 = vadd.f32 %v8658, %v8832
  %v8987 = vadd.f32 %v8659, %v8832
  %v8988 = vadd.f32 %v8660, %v8832
  %v8989 = vadd.f32 %v8661, %v8832
  %v8990 = vadd.f32 %v8662, %v8832
  %v8991 = vadd.f32 %v8663, %v8832
  %v8992 = vadd.f32 %v8664, %v8832
  %v8993 = vadd.f32 %v8665, %v8832
  %v8994 = vadd.f32 %v8666, %v8832
  %v8995 = vadd.f32 %v8667, %v8832
  %v8996 = vadd.f32 %v8668, %v8832
  %v8997 = vadd.f32 %v8669, %v8832
  %v8998 = vadd.f32 %v8670, %v8832
  %v8999 = vadd.f32 %v8671, %v8832
  %v9000 = vadd.f32 %v8672, %v8832
  %v9001 = vadd.f32 %v8673, %v8832
  %v9002 = vadd.f32 %v8674, %v8832
  %v9003 = vadd.f32 %v8675, %v8832
  %v9004 = vadd.f32 %v8676, %v8832
  %v9005 = vadd.f32 %v8677, %v8832
  %v9006 = vadd.f32 %v8678, %v8832
  %v9007 = vadd.f32 %v8679, %v8832
  %v9008 = vadd.f32 %v8680, %v8832
  %v9009 = vadd.f32 %v8681, %v8832
  %v9010 = vadd.f32 %v8682, %v8832
  %v9011 = vadd.f32 %v8683, %v8832
  %v9012 = vadd.f32 %v8684, %v8832
  %v9013 = vadd.f32 %v8685, %v8832
  %v9014 = vadd.f32 %v8686, %v8832
  %v9015 = vadd.f32 %v8687, %v8832
  %v9016 = vadd.f32 %v8688, %v8832
  %v9017 = vadd.f32 %v8689, %v8832
  %v9018 = vadd.f32 %v8690, %v8832
  %v9019 = vadd.f32 %v8691, %v8832
  %v9020 = vadd.f32 %v8692, %v8832
  %v9021 = vadd.f32 %v8693, %v8832
  %v9022 = vadd.f32 %v8694, %v8832
  %v9023 = vadd.f32 %v8695, %v8832
  %v9024 = vadd.f32 %v8696, %v8832
  %v9025 = vadd.f32 %v8697, %v8832
  %v9026 = vadd.f32 %v8698, %v8832
  %v9027 = vadd.f32 %v8699, %v8832
  %v9028 = vadd.f32 %v8700, %v8832
  %v9029 = vadd.f32 %v8701, %v8832
  %v9030 = vadd.f32 %v8702, %v8832
  %v9031 = vadd.f32 %v8703, %v8832
  %v9032 = vadd.f32 %v8704, %v8832
  %v9033 = vadd.f32 %v8705, %v8832
  %v9034 = vadd.f32 %v8706, %v8832
  %v9035 = vadd.f32 %v8707, %v8832
  %v9036 = vadd.f32 %v8708, %v8832
  %v9037 = vadd.f32 %v8709, %v8832
  %v9038 = vadd.f32 %v8710, %v8832
  %v9039 = vadd.f32 %v8711, %v8832
  %v9040 = vadd.f32 %v8712, %v8832
  %v9041 = vadd.f32 %v8713, %v8832
  %v9042 = vadd.f32 %v8714, %v8832
  %v9043 = vadd.f32 %v8715, %v8832
  %v9044 = vadd.f32 %v8716, %v8832
  %v9045 = vadd.f32 %v8717, %v8832
  %v9046 = vadd.f32 %v8718, %v8832
  %v9047 = vadd.f32 %v8719, %v8832
  %v9048 = vadd.f32 %v8720, %v8832
  %v9049 = vadd.f32 %v8721, %v8832
  %v9050 = vadd.f32 %v8722, %v8832
  %v9051 = vadd.f32 %v8723, %v8832
  %v9052 = vadd.f32 %v8724, %v8832
  %v9053 = vadd.f32 %v8725, %v8832
  %v9054 = vadd.f32 %v8726, %v8832
  %v9055 = vadd.f32 %v8727, %v8832
  %v9056 = vadd.f32 %v8728, %v8832
  %v9057 = vadd.f32 %v8729, %v8832
  %v9058 = vadd.f32 %v8730, %v8832
  %v9059 = vadd.f32 %v8731, %v8832
  %v9060 = vadd.f32 %v8732, %v8832
  %v9061 = vadd.f32 %v8733, %v8832
  %v9062 = vadd.f32 %v8734, %v8832
  %v9063 = vadd.f32 %v8735, %v8832
  %v9064 = vadd.f32 %v8736, %v8832
  %v9065 = vadd.f32 %v8737, %v8832
  %v9066 = vadd.f32 %v8738, %v8832
  %v9067 = vadd.f32 %v8739, %v8832
  %v9068 = vadd.f32 %v8740, %v8832
  %v9069 = vadd.f32 %v8741, %v8832
  %v9070 = vadd.f32 %v8742, %v8832
  %v9071 = vadd.f32 %v8743, %v8832
  %v9072 = vadd.f32 %v8744, %v8832
  %v9073 = vadd.f32 %v8745, %v8832
  %v9074 = vadd.f32 %v8746, %v8832
  %v9075 = vadd.f32 %v8747, %v8832
  %v9076 = vadd.f32 %v8748, %v8832
  %v9077 = vadd.f32 %v8749, %v8832
  %v9078 = vadd.f32 %v8750, %v8832
  %v9079 = vadd.f32 %v8751, %v8832
  %v9080 = vadd.f32 %v8752, %v8832
  %v9081 = vadd.f32 %v8753, %v8832
  %v9082 = vadd.f32 %v8754, %v8832
  %v9083 = vadd.f32 %v8755, %v8832
  %v9084 = vadd.f32 %v8756, %v8832
  %v9085 = vadd.f32 %v8757, %v8832
  %v9086 = vadd.f32 %v8758, %v8832
  %v9087 = vadd.f32 %v8759, %v8832
  %v9088 = vadd.f32 %v8760, %v8832
  %v9089 = vadd.f32 %v8761, %v8832
  %v9090 = vadd.f32 %v8762, %v8832
  %v9091 = vadd.f32 %v8763, %v8832
  %v9092 = vadd.f32 %v8764, %v8832
  %v9093 = vadd.f32 %v8765, %v8832
  %v9094 = vadd.f32 %v8766, %v8832
  %v9095 = vadd.f32 %v8767, %v8832
  %v9096 = vadd.f32 %v8768, %v8832
  %v9097 = vadd.f32 %v8769, %v8832
  %v9098 = vadd.f32 %v8770, %v8832
  %v9099 = vadd.f32 %v8771, %v8832
  %v9100 = vadd.f32 %v8772, %v8832
  %v9101 = vadd.f32 %v8773, %v8832
  %v9102 = vadd.f32 %v8774, %v8832
  %v9103 = vadd.f32 %v8775, %v8832
  %v9104 = vadd.f32 %v8776, %v8832
  %v9105 = vadd.f32 %v8777, %v8832
  %v9106 = vadd.f32 %v8778, %v8832
  %v9107 = vadd.f32 %v8779, %v8832
  %v9108 = vadd.f32 %v8780, %v8832
  %v9109 = vadd.f32 %v8781, %v8832
  %v9110 = vadd.f32 %v8782, %v8832
  %v9111 = vadd.f32 %v8783, %v8832
  %v9112 = vadd.f32 %v8784, %v8832
  %v9113 = vadd.f32 %v8785, %v8832
  %v9114 = vadd.f32 %v8786, %v8832
  %v9115 = vadd.f32 %v8787, %v8832
  %v9116 = vadd.f32 %v8788, %v8832
  %v9117 = vadd.f32 %v8789, %v8832
  %v9118 = vadd.f32 %v8790, %v8832
  %v9119 = vadd.f32 %v8791, %v8832
  %v9120 = vadd.f32 %v8792, %v8832
  %v9121 = vadd.f32 %v8793, %v8832
  %v9122 = vadd.f32 %v8794, %v8832
  %v9123 = vadd.f32 %v8795, %v8832
  %v9124 = vadd.f32 %v8796, %v8832
  %v9125 = vadd.f32 %v8797, %v8832
  %v9126 = vadd.f32 %v8798, %v8832
  %v9127 = vadd.f32 %v8799, %v8832
  %v9128 = vadd.f32 %v8800, %v8832
  %v9129 = vadd.f32 %v8801, %v8832
  %v9130 = vadd.f32 %v8802, %v8832
  %v9131 = vadd.f32 %v8803, %v8832
  %v9132 = vadd.f32 %v8804, %v8832
  %v9133 = vadd.f32 %v8805, %v8832
  %v9134 = vadd.f32 %v8806, %v8832
  %v9135 = vadd.f32 %v8807, %v8832
  %v9136 = vadd.f32 %v8808, %v8832
  %v9137 = vadd.f32 %v8809, %v8832
  %v9138 = vadd.f32 %v8810, %v8832
  %v9139 = vadd.f32 %v8811, %v8832
  %v9140 = vadd.f32 %v8812, %v8832
  %v9141 = vadd.f32 %v8813, %v8832
  %v9142 = vadd.f32 %v8814, %v8832
  %v9143 = vadd.f32 %v8815, %v8832
  %v9144 = vadd.f32 %v8816, %v8832
  %v9145 = vadd.f32 %v8817, %v8832
  %v9146 = vadd.f32 %v8818, %v8832
  %v9147 = vadd.f32 %v8819, %v8832
  %v9148 = vadd.f32 %v8820, %v8832
  %v9149 = vadd.f32 %v8821, %v8832
  %v9150 = vadd.f32 %v8822, %v8832
  %v9151 = vadd.f32 %v8823, %v8832
  %v9152 = vadd.f32 %v8824, %v8832
  %v9153 = vadd.f32 %v8825, %v8832
  %v9154 = vadd.f32 %v8826, %v8832
  %v9155 = vadd.f32 %v8827, %v8832
  %v9156 = vadd.f32 %v8828, %v8832
  %v9157 = vadd.f32 %v8829, %v8832
  %v9158 = vmax.f32 %v8834, 0.0
  %v9159 = vmax.f32 %v8835, 0.0
  %v9160 = vmax.f32 %v8836, 0.0
  %v9161 = vmax.f32 %v8837, 0.0
  %v9162 = vmax.f32 %v8838, 0.0
  %v9163 = vmax.f32 %v8839, 0.0
  %v9164 = vmax.f32 %v8840, 0.0
  %v9165 = vmax.f32 %v8841, 0.0
  %v9166 = vmax.f32 %v8842, 0.0
  %v9167 = vmax.f32 %v8843, 0.0
  %v9168 = vmax.f32 %v8844, 0.0
  %v9169 = vmax.f32 %v8845, 0.0
  %v9170 = vmax.f32 %v8846, 0.0
  %v9171 = vmax.f32 %v8847, 0.0
  %v9172 = vmax.f32 %v8848, 0.0
  %v9173 = vmax.f32 %v8849, 0.0
  %v9174 = vmax.f32 %v8850, 0.0
  %v9175 = vmax.f32 %v8851, 0.0
  %v9176 = vmax.f32 %v8852, 0.0
  %v9177 = vmax.f32 %v8853, 0.0
  %v9178 = vmax.f32 %v8854, 0.0
  %v9179 = vmax.f32 %v8855, 0.0
  %v9180 = vmax.f32 %v8856, 0.0
  %v9181 = vmax.f32 %v8857, 0.0
  %v9182 = vmax.f32 %v8858, 0.0
  %v9183 = vmax.f32 %v8859, 0.0
  %v9184 = vmax.f32 %v8860, 0.0
  %v9185 = vmax.f32 %v8861, 0.0
  %v9186 = vmax.f32 %v8862, 0.0
  %v9187 = vmax.f32 %v8863, 0.0
  %v9188 = vmax.f32 %v8864, 0.0
  %v9189 = vmax.f32 %v8865, 0.0
  %v9190 = vmax.f32 %v8866, 0.0
  %v9191 = vmax.f32 %v8867, 0.0
  %v9192 = vmax.f32 %v8868, 0.0
  %v9193 = vmax.f32 %v8869, 0.0
  %v9194 = vmax.f32 %v8870, 0.0
  %v9195 = vmax.f32 %v8871, 0.0
  %v9196 = vmax.f32 %v8872, 0.0
  %v9197 = vmax.f32 %v8873, 0.0
  %v9198 = vmax.f32 %v8874, 0.0
  %v9199 = vmax.f32 %v8875, 0.0
  %v9200 = vmax.f32 %v8876, 0.0
  %v9201 = vmax.f32 %v8877, 0.0
  %v9202 = vmax.f32 %v8878, 0.0
  %v9203 = vmax.f32 %v8879, 0.0
  %v9204 = vmax.f32 %v8880, 0.0
  %v9205 = vmax.f32 %v8881, 0.0
  %v9206 = vmax.f32 %v8882, 0.0
  %v9207 = vmax.f32 %v8883, 0.0
  %v9208 = vmax.f32 %v8884, 0.0
  %v9209 = vmax.f32 %v8885, 0.0
  %v9210 = vmax.f32 %v8886, 0.0
  %v9211 = vmax.f32 %v8887, 0.0
  %v9212 = vmax.f32 %v8888, 0.0
  %v9213 = vmax.f32 %v8889, 0.0
  %v9214 = vmax.f32 %v8890, 0.0
  %v9215 = vmax.f32 %v8891, 0.0
  %v9216 = vmax.f32 %v8892, 0.0
  %v9217 = vmax.f32 %v8893, 0.0
  %v9218 = vmax.f32 %v8894, 0.0
  %v9219 = vmax.f32 %v8895, 0.0
  %v9220 = vmax.f32 %v8896, 0.0
  %v9221 = vmax.f32 %v8897, 0.0
  %v9222 = vmax.f32 %v8898, 0.0
  %v9223 = vmax.f32 %v8899, 0.0
  %v9224 = vmax.f32 %v8900, 0.0
  %v9225 = vmax.f32 %v8901, 0.0
  %v9226 = vmax.f32 %v8902, 0.0
  %v9227 = vmax.f32 %v8903, 0.0
  %v9228 = vmax.f32 %v8904, 0.0
  %v9229 = vmax.f32 %v8905, 0.0
  %v9230 = vmax.f32 %v8906, 0.0
  %v9231 = vmax.f32 %v8907, 0.0
  %v9232 = vmax.f32 %v8908, 0.0
  %v9233 = vmax.f32 %v8909, 0.0
  %v9234 = vmax.f32 %v8910, 0.0
  %v9235 = vmax.f32 %v8911, 0.0
  %v9236 = vmax.f32 %v8912, 0.0
  %v9237 = vmax.f32 %v8913, 0.0
  %v9238 = vmax.f32 %v8914, 0.0
  %v9239 = vmax.f32 %v8915, 0.0
  %v9240 = vmax.f32 %v8916, 0.0
  %v9241 = vmax.f32 %v8917, 0.0
  %v9242 = vmax.f32 %v8918, 0.0
  %v9243 = vmax.f32 %v8919, 0.0
  %v9244 = vmax.f32 %v8920, 0.0
  %v9245 = vmax.f32 %v8921, 0.0
  %v9246 = vmax.f32 %v8922, 0.0
  %v9247 = vmax.f32 %v8923, 0.0
  %v9248 = vmax.f32 %v8924, 0.0
  %v9249 = vmax.f32 %v8925, 0.0
  %v9250 = vmax.f32 %v8926, 0.0
  %v9251 = vmax.f32 %v8927, 0.0
  %v9252 = vmax.f32 %v8928, 0.0
  %v9253 = vmax.f32 %v8929, 0.0
  %v9254 = vmax.f32 %v8930, 0.0
  %v9255 = vmax.f32 %v8931, 0.0
  %v9256 = vmax.f32 %v8932, 0.0
  %v9257 = vmax.f32 %v8933, 0.0
  %v9258 = vmax.f32 %v8934, 0.0
  %v9259 = vmax.f32 %v8935, 0.0
  %v9260 = vmax.f32 %v8936, 0.0
  %v9261 = vmax.f32 %v8937, 0.0
  %v9262 = vmax.f32 %v8938, 0.0
  %v9263 = vmax.f32 %v8939, 0.0
  %v9264 = vmax.f32 %v8940, 0.0
  %v9265 = vmax.f32 %v8941, 0.0
  %v9266 = vmax.f32 %v8942, 0.0
  %v9267 = vmax.f32 %v8943, 0.0
  %v9268 = vmax.f32 %v8944, 0.0
  %v9269 = vmax.f32 %v8945, 0.0
  %v9270 = vmax.f32 %v8946, 0.0
  %v9271 = vmax.f32 %v8947, 0.0
  %v9272 = vmax.f32 %v8948, 0.0
  %v9273 = vmax.f32 %v8949, 0.0
  %v9274 = vmax.f32 %v8950, 0.0
  %v9275 = vmax.f32 %v8951, 0.0
  %v9276 = vmax.f32 %v8952, 0.0
  %v9277 = vmax.f32 %v8953, 0.0
  %v9278 = vmax.f32 %v8954, 0.0
  %v9279 = vmax.f32 %v8955, 0.0
  %v9280 = vmax.f32 %v8956, 0.0
  %v9281 = vmax.f32 %v8957, 0.0
  %v9282 = vmax.f32 %v8958, 0.0
  %v9283 = vmax.f32 %v8959, 0.0
  %v9284 = vmax.f32 %v8960, 0.0
  %v9285 = vmax.f32 %v8961, 0.0
  %v9286 = vmax.f32 %v8962, 0.0
  %v9287 = vmax.f32 %v8963, 0.0
  %v9288 = vmax.f32 %v8964, 0.0
  %v9289 = vmax.f32 %v8965, 0.0
  %v9290 = vmax.f32 %v8966, 0.0
  %v9291 = vmax.f32 %v8967, 0.0
  %v9292 = vmax.f32 %v8968, 0.0
  %v9293 = vmax.f32 %v8969, 0.0
  %v9294 = vmax.f32 %v8970, 0.0
  %v9295 = vmax.f32 %v8971, 0.0
  %v9296 = vmax.f32 %v8972, 0.0
  %v9297 = vmax.f32 %v8973, 0.0
  %v9298 = vmax.f32 %v8974, 0.0
  %v9299 = vmax.f32 %v8975, 0.0
  %v9300 = vmax.f32 %v8976, 0.0
  %v9301 = vmax.f32 %v8977, 0.0
  %v9302 = vmax.f32 %v8978, 0.0
  %v9303 = vmax.f32 %v8979, 0.0
  %v9304 = vmax.f32 %v8980, 0.0
  %v9305 = vmax.f32 %v8981, 0.0
  %v9306 = vmax.f32 %v8982, 0.0
  %v9307 = vmax.f32 %v8983, 0.0
  %v9308 = vmax.f32 %v8984, 0.0
  %v9309 = vmax.f32 %v8985, 0.0
  %v9310 = vmax.f32 %v8986, 0.0
  %v9311 = vmax.f32 %v8987, 0.0
  %v9312 = vmax.f32 %v8988, 0.0
  %v9313 = vmax.f32 %v8989, 0.0
  %v9314 = vmax.f32 %v8990, 0.0
  %v9315 = vmax.f32 %v8991, 0.0
  %v9316 = vmax.f32 %v8992, 0.0
  %v9317 = vmax.f32 %v8993, 0.0
  %v9318 = vmax.f32 %v8994, 0.0
  %v9319 = vmax.f32 %v8995, 0.0
  %v9320 = vmax.f32 %v8996, 0.0
  %v9321 = vmax.f32 %v8997, 0.0
  %v9322 = vmax.f32 %v8998, 0.0
  %v9323 = vmax.f32 %v8999, 0.0
  %v9324 = vmax.f32 %v9000, 0.0
  %v9325 = vmax.f32 %v9001, 0.0
  %v9326 = vmax.f32 %v9002, 0.0
  %v9327 = vmax.f32 %v9003, 0.0
  %v9328 = vmax.f32 %v9004, 0.0
  %v9329 = vmax.f32 %v9005, 0.0
  %v9330 = vmax.f32 %v9006, 0.0
  %v9331 = vmax.f32 %v9007, 0.0
  %v9332 = vmax.f32 %v9008, 0.0
  %v9333 = vmax.f32 %v9009, 0.0
  %v9334 = vmax.f32 %v9010, 0.0
  %v9335 = vmax.f32 %v9011, 0.0
  %v9336 = vmax.f32 %v9012, 0.0
  %v9337 = vmax.f32 %v9013, 0.0
  %v9338 = vmax.f32 %v9014, 0.0
  %v9339 = vmax.f32 %v9015, 0.0
  %v9340 = vmax.f32 %v9016, 0.0
  %v9341 = vmax.f32 %v9017, 0.0
  %v9342 = vmax.f32 %v9018, 0.0
  %v9343 = vmax.f32 %v9019, 0.0
  %v9344 = vmax.f32 %v9020, 0.0
  %v9345 = vmax.f32 %v9021, 0.0
  %v9346 = vmax.f32 %v9022, 0.0
  %v9347 = vmax.f32 %v9023, 0.0
  %v9348 = vmax.f32 %v9024, 0.0
  %v9349 = vmax.f32 %v9025, 0.0
  %v9350 = vmax.f32 %v9026, 0.0
  %v9351 = vmax.f32 %v9027, 0.0
  %v9352 = vmax.f32 %v9028, 0.0
  %v9353 = vmax.f32 %v9029, 0.0
  %v9354 = vmax.f32 %v9030, 0.0
  %v9355 = vmax.f32 %v9031, 0.0
  %v9356 = vmax.f32 %v9032, 0.0
  %v9357 = vmax.f32 %v9033, 0.0
  %v9358 = vmax.f32 %v9034, 0.0
  %v9359 = vmax.f32 %v9035, 0.0
  %v9360 = vmax.f32 %v9036, 0.0
  %v9361 = vmax.f32 %v9037, 0.0
  %v9362 = vmax.f32 %v9038, 0.0
  %v9363 = vmax.f32 %v9039, 0.0
  %v9364 = vmax.f32 %v9040, 0.0
  %v9365 = vmax.f32 %v9041, 0.0
  %v9366 = vmax.f32 %v9042, 0.0
  %v9367 = vmax.f32 %v9043, 0.0
  %v9368 = vmax.f32 %v9044, 0.0
  %v9369 = vmax.f32 %v9045, 0.0
  %v9370 = vmax.f32 %v9046, 0.0
  %v9371 = vmax.f32 %v9047, 0.0
  %v9372 = vmax.f32 %v9048, 0.0
  %v9373 = vmax.f32 %v9049, 0.0
  %v9374 = vmax.f32 %v9050, 0.0
  %v9375 = vmax.f32 %v9051, 0.0
  %v9376 = vmax.f32 %v9052, 0.0
  %v9377 = vmax.f32 %v9053, 0.0
  %v9378 = vmax.f32 %v9054, 0.0
  %v9379 = vmax.f32 %v9055, 0.0
  %v9380 = vmax.f32 %v9056, 0.0
  %v9381 = vmax.f32 %v9057, 0.0
  %v9382 = vmax.f32 %v9058, 0.0
  %v9383 = vmax.f32 %v9059, 0.0
  %v9384 = vmax.f32 %v9060, 0.0
  %v9385 = vmax.f32 %v9061, 0.0
  %v9386 = vmax.f32 %v9062, 0.0
  %v9387 = vmax.f32 %v9063, 0.0
  %v9388 = vmax.f32 %v9064, 0.0
  %v9389 = vmax.f32 %v9065, 0.0
  %v9390 = vmax.f32 %v9066, 0.0
  %v9391 = vmax.f32 %v9067, 0.0
  %v9392 = vmax.f32 %v9068, 0.0
  %v9393 = vmax.f32 %v9069, 0.0
  %v9394 = vmax.f32 %v9070, 0.0
  %v9395 = vmax.f32 %v9071, 0.0
  %v9396 = vmax.f32 %v9072, 0.0
  %v9397 = vmax.f32 %v9073, 0.0
  %v9398 = vmax.f32 %v9074, 0.0
  %v9399 = vmax.f32 %v9075, 0.0
  %v9400 = vmax.f32 %v9076, 0.0
  %v9401 = vmax.f32 %v9077, 0.0
  %v9402 = vmax.f32 %v9078, 0.0
  %v9403 = vmax.f32 %v9079, 0.0
  %v9404 = vmax.f32 %v9080, 0.0
  %v9405 = vmax.f32 %v9081, 0.0
  %v9406 = vmax.f32 %v9082, 0.0
  %v9407 = vmax.f32 %v9083, 0.0
  %v9408 = vmax.f32 %v9084, 0.0
  %v9409 = vmax.f32 %v9085, 0.0
  %v9410 = vmax.f32 %v9086, 0.0
  %v9411 = vmax.f32 %v9087, 0.0
  %v9412 = vmax.f32 %v9088, 0.0
  %v9413 = vmax.f32 %v9089, 0.0
  %v9414 = vmax.f32 %v9090, 0.0
  %v9415 = vmax.f32 %v9091, 0.0
  %v9416 = vmax.f32 %v9092, 0.0
  %v9417 = vmax.f32 %v9093, 0.0
  %v9418 = vmax.f32 %v9094, 0.0
  %v9419 = vmax.f32 %v9095, 0.0
  %v9420 = vmax.f32 %v9096, 0.0
  %v9421 = vmax.f32 %v9097, 0.0
  %v9422 = vmax.f32 %v9098, 0.0
  %v9423 = vmax.f32 %v9099, 0.0
  %v9424 = vmax.f32 %v9100, 0.0
  %v9425 = vmax.f32 %v9101, 0.0
  %v9426 = vmax.f32 %v9102, 0.0
  %v9427 = vmax.f32 %v9103, 0.0
  %v9428 = vmax.f32 %v9104, 0.0
  %v9429 = vmax.f32 %v9105, 0.0
  %v9430 = vmax.f32 %v9106, 0.0
  %v9431 = vmax.f32 %v9107, 0.0
  %v9432 = vmax.f32 %v9108, 0.0
  %v9433 = vmax.f32 %v9109, 0.0
  %v9434 = vmax.f32 %v9110, 0.0
  %v9435 = vmax.f32 %v9111, 0.0
  %v9436 = vmax.f32 %v9112, 0.0
  %v9437 = vmax.f32 %v9113, 0.0
  %v9438 = vmax.f32 %v9114, 0.0
  %v9439 = vmax.f32 %v9115, 0.0
  %v9440 = vmax.f32 %v9116, 0.0
  %v9441 = vmax.f32 %v9117, 0.0
  %v9442 = vmax.f32 %v9118, 0.0
  %v9443 = vmax.f32 %v9119, 0.0
  %v9444 = vmax.f32 %v9120, 0.0
  %v9445 = vmax.f32 %v9121, 0.0
  %v9446 = vmax.f32 %v9122, 0.0
  %v9447 = vmax.f32 %v9123, 0.0
  %v9448 = vmax.f32 %v9124, 0.0
  %v9449 = vmax.f32 %v9125, 0.0
  %v9450 = vmax.f32 %v9126, 0.0
  %v9451 = vmax.f32 %v9127, 0.0
  %v9452 = vmax.f32 %v9128, 0.0
  %v9453 = vmax.f32 %v9129, 0.0
  %v9454 = vmax.f32 %v9130, 0.0
  %v9455 = vmax.f32 %v9131, 0.0
  %v9456 = vmax.f32 %v9132, 0.0
  %v9457 = vmax.f32 %v9133, 0.0
  %v9458 = vmax.f32 %v9134, 0.0
  %v9459 = vmax.f32 %v9135, 0.0
  %v9460 = vmax.f32 %v9136, 0.0
  %v9461 = vmax.f32 %v9137, 0.0
  %v9462 = vmax.f32 %v9138, 0.0
  %v9463 = vmax.f32 %v9139, 0.0
  %v9464 = vmax.f32 %v9140, 0.0
  %v9465 = vmax.f32 %v9141, 0.0
  %v9466 = vmax.f32 %v9142, 0.0
  %v9467 = vmax.f32 %v9143, 0.0
  %v9468 = vmax.f32 %v9144, 0.0
  %v9469 = vmax.f32 %v9145, 0.0
  %v9470 = vmax.f32 %v9146, 0.0
  %v9471 = vmax.f32 %v9147, 0.0
  %v9472 = vmax.f32 %v9148, 0.0
  %v9473 = vmax.f32 %v9149, 0.0
  %v9474 = vmax.f32 %v9150, 0.0
  %v9475 = vmax.f32 %v9151, 0.0
  %v9476 = vmax.f32 %v9152, 0.0
  %v9477 = vmax.f32 %v9153, 0.0
  %v9478 = vmax.f32 %v9154, 0.0
  %v9479 = vmax.f32 %v9155, 0.0
  %v9480 = vmax.f32 %v9156, 0.0
  %v9481 = vmax.f32 %v9157, 0.0
  %v9482 = vmax.f32 %v9158, %v9239
  %v9483 = vmax.f32 %v9159, %v9240
  %v9484 = vmax.f32 %v9160, %v9241
  %v9485 = vmax.f32 %v9161, %v9242
  %v9486 = vmax.f32 %v9162, %v9243
  %v9487 = vmax.f32 %v9163, %v9244
  %v9488 = vmax.f32 %v9164, %v9245
  %v9489 = vmax.f32 %v9165, %v9246
  %v9490 = vmax.f32 %v9166, %v9247
  %v9491 = vmax.f32 %v9167, %v9248
  %v9492 = vmax.f32 %v9168, %v9249
  %v9493 = vmax.f32 %v9169, %v9250
  %v9494 = vmax.f32 %v9170, %v9251
  %v9495 = vmax.f32 %v9171, %v9252
  %v9496 = vmax.f32 %v9172, %v9253
  %v9497 = vmax.f32 %v9173, %v9254
  %v9498 = vmax.f32 %v9174, %v9255
  %v9499 = vmax.f32 %v9175, %v9256
  %v9500 = vmax.f32 %v9176, %v9257
  %v9501 = vmax.f32 %v9177, %v9258
  %v9502 = vmax.f32 %v9178, %v9259
  %v9503 = vmax.f32 %v9179, %v9260
  %v9504 = vmax.f32 %v9180, %v9261
  %v9505 = vmax.f32 %v9181, %v9262
  %v9506 = vmax.f32 %v9182, %v9263
  %v9507 = vmax.f32 %v9183, %v9264
  %v9508 = vmax.f32 %v9184, %v9265
  %v9509 = vmax.f32 %v9185, %v9266
  %v9510 = vmax.f32 %v9186, %v9267
  %v9511 = vmax.f32 %v9187, %v9268
  %v9512 = vmax.f32 %v9188, %v9269
  %v9513 = vmax.f32 %v9189, %v9270
  %v9514 = vmax.f32 %v9190, %v9271
  %v9515 = vmax.f32 %v9191, %v9272
  %v9516 = vmax.f32 %v9192, %v9273
  %v9517 = vmax.f32 %v9193, %v9274
  %v9518 = vmax.f32 %v9194, %v9275
  %v9519 = vmax.f32 %v9195, %v9276
  %v9520 = vmax.f32 %v9196, %v9277
  %v9521 = vmax.f32 %v9197, %v9278
  %v9522 = vmax.f32 %v9198, %v9279
  %v9523 = vmax.f32 %v9199, %v9280
  %v9524 = vmax.f32 %v9200, %v9281
  %v9525 = vmax.f32 %v9201, %v9282
  %v9526 = vmax.f32 %v9202, %v9283
  %v9527 = vmax.f32 %v9203, %v9284
  %v9528 = vmax.f32 %v9204, %v9285
  %v9529 = vmax.f32 %v9205, %v9286
  %v9530 = vmax.f32 %v9206, %v9287
  %v9531 = vmax.f32 %v9207, %v9288
  %v9532 = vmax.f32 %v9208, %v9289
  %v9533 = vmax.f32 %v9209, %v9290
  %v9534 = vmax.f32 %v9210, %v9291
  %v9535 = vmax.f32 %v9211, %v9292
  %v9536 = vmax.f32 %v9212, %v9293
  %v9537 = vmax.f32 %v9213, %v9294
  %v9538 = vmax.f32 %v9214, %v9295
  %v9539 = vmax.f32 %v9215, %v9296
  %v9540 = vmax.f32 %v9216, %v9297
  %v9541 = vmax.f32 %v9217, %v9298
  %v9542 = vmax.f32 %v9218, %v9299
  %v9543 = vmax.f32 %v9219, %v9300
  %v9544 = vmax.f32 %v9220, %v9301
  %v9545 = vmax.f32 %v9221, %v9302
  %v9546 = vmax.f32 %v9222, %v9303
  %v9547 = vmax.f32 %v9223, %v9304
  %v9548 = vmax.f32 %v9224, %v9305
  %v9549 = vmax.f32 %v9225, %v9306
  %v9550 = vmax.f32 %v9226, %v9307
  %v9551 = vmax.f32 %v9227, %v9308
  %v9552 = vmax.f32 %v9228, %v9309
  %v9553 = vmax.f32 %v9229, %v9310
  %v9554 = vmax.f32 %v9230, %v9311
  %v9555 = vmax.f32 %v9231, %v9312
  %v9556 = vmax.f32 %v9232, %v9313
  %v9557 = vmax.f32 %v9233, %v9314
  %v9558 = vmax.f32 %v9234, %v9315
  %v9559 = vmax.f32 %v9235, %v9316
  %v9560 = vmax.f32 %v9236, %v9317
  %v9561 = vmax.f32 %v9237, %v9318
  %v9562 = vmax.f32 %v9238, %v9319
  %v9563 = vmax.f32 %v9320, %v9401
  %v9564 = vmax.f32 %v9321, %v9402
  %v9565 = vmax.f32 %v9322, %v9403
  %v9566 = vmax.f32 %v9323, %v9404
  %v9567 = vmax.f32 %v9324, %v9405
  %v9568 = vmax.f32 %v9325, %v9406
  %v9569 = vmax.f32 %v9326, %v9407
  %v9570 = vmax.f32 %v9327, %v9408
  %v9571 = vmax.f32 %v9328, %v9409
  %v9572 = vmax.f32 %v9329, %v9410
  %v9573 = vmax.f32 %v9330, %v9411
  %v9574 = vmax.f32 %v9331, %v9412
  %v9575 = vmax.f32 %v9332, %v9413
  %v9576 = vmax.f32 %v9333, %v9414
  %v9577 = vmax.f32 %v9334, %v9415
  %v9578 = vmax.f32 %v9335, %v9416
  %v9579 = vmax.f32 %v9336, %v9417
  %v9580 = vmax.f32 %v9337, %v9418
  %v9581 = vmax.f32 %v9338, %v9419
  %v9582 = vmax.f32 %v9339, %v9420
  %v9583 = vmax.f32 %v9340, %v9421
  %v9584 = vmax.f32 %v9341, %v9422
  %v9585 = vmax.f32 %v9342, %v9423
  %v9586 = vmax.f32 %v9343, %v9424
  %v9587 = vmax.f32 %v9344, %v9425
  %v9588 = vmax.f32 %v9345, %v9426
  %v9589 = vmax.f32 %v9346, %v9427
  %v9590 = vmax.f32 %v9347, %v9428
  %v9591 = vmax.f32 %v9348, %v9429
  %v9592 = vmax.f32 %v9349, %v9430
  %v9593 = vmax.f32 %v9350, %v9431
  %v9594 = vmax.f32 %v9351, %v9432
  %v9595 = vmax.f32 %v9352, %v9433
  %v9596 = vmax.f32 %v9353, %v9434
  %v9597 = vmax.f32 %v9354, %v9435
  %v9598 = vmax.f32 %v9355, %v9436
  %v9599 = vmax.f32 %v9356, %v9437
  %v9600 = vmax.f32 %v9357, %v9438
  %v9601 = vmax.f32 %v9358, %v9439
  %v9602 = vmax.f32 %v9359, %v9440
  %v9603 = vmax.f32 %v9360, %v9441
  %v9604 = vmax.f32 %v9361, %v9442
  %v9605 = vmax.f32 %v9362, %v9443
  %v9606 = vmax.f32 %v9363, %v9444
  %v9607 = vmax.f32 %v9364, %v9445
  %v9608 = vmax.f32 %v9365, %v9446
  %v9609 = vmax.f32 %v9366, %v9447
  %v9610 = vmax.f32 %v9367, %v9448
  %v9611 = vmax.f32 %v9368, %v9449
  %v9612 = vmax.f32 %v9369, %v9450
  %v9613 = vmax.f32 %v9370, %v9451
  %v9614 = vmax.f32 %v9371, %v9452
  %v9615 = vmax.f32 %v9372, %v9453
  %v9616 = vmax.f32 %v9373, %v9454
  %v9617 = vmax.f32 %v9374, %v9455
  %v9618 = vmax.f32 %v9375, %v9456
  %v9619 = vmax.f32 %v9376, %v9457
  %v9620 = vmax.f32 %v9377, %v9458
  %v9621 = vmax.f32 %v9378, %v9459
  %v9622 = vmax.f32 %v9379, %v9460
  %v9623 = vmax.f32 %v9380, %v9461
  %v9624 = vmax.f32 %v9381, %v9462
  %v9625 = vmax.f32 %v9382, %v9463
  %v9626 = vmax.f32 %v9383, %v9464
  %v9627 = vmax.f32 %v9384, %v9465
  %v9628 = vmax.f32 %v9385, %v9466
  %v9629 = vmax.f32 %v9386, %v9467
  %v9630 = vmax.f32 %v9387, %v9468
  %v9631 = vmax.f32 %v9388, %v9469
  %v9632 = vmax.f32 %v9389, %v9470
  %v9633 = vmax.f32 %v9390, %v9471
  %v9634 = vmax.f32 %v9391, %v9472
  %v9635 = vmax.f32 %v9392, %v9473
  %v9636 = vmax.f32 %v9393, %v9474
  %v9637 = vmax.f32 %v9394, %v9475
  %v9638 = vmax.f32 %v9395, %v9476
  %v9639 = vmax.f32 %v9396, %v9477
  %v9640 = vmax.f32 %v9397, %v9478
  %v9641 = vmax.f32 %v9398, %v9479
  %v9642 = vmax.f32 %v9399, %v9480
  %v9643 = vmax.f32 %v9400, %v9481
  %v9644 = vmax.f32 %v9482, %v9563
  %v9645 = vmax.f32 %v9483, %v9564
  %v9646 = vmax.f32 %v9484, %v9565
  %v9647 = vmax.f32 %v9485, %v9566
  %v9648 = vmax.f32 %v9486, %v9567
  %v9649 = vmax.f32 %v9487, %v9568
  %v9650 = vmax.f32 %v9488, %v9569
  %v9651 = vmax.f32 %v9489, %v9570
  %v9652 = vmax.f32 %v9490, %v9571
  %v9653 = vmax.f32 %v9491, %v9572
  %v9654 = vmax.f32 %v9492, %v9573
  %v9655 = vmax.f32 %v9493, %v9574
  %v9656 = vmax.f32 %v9494, %v9575
  %v9657 = vmax.f32 %v9495, %v9576
  %v9658 = vmax.f32 %v9496, %v9577
  %v9659 = vmax.f32 %v9497, %v9578
  %v9660 = vmax.f32 %v9498, %v9579
  %v9661 = vmax.f32 %v9499, %v9580
  %v9662 = vmax.f32 %v9500, %v9581
  %v9663 = vmax.f32 %v9501, %v9582
  %v9664 = vmax.f32 %v9502, %v9583
  %v9665 = vmax.f32 %v9503, %v9584
  %v9666 = vmax.f32 %v9504, %v9585
  %v9667 = vmax.f32 %v9505, %v9586
  %v9668 = vmax.f32 %v9506, %v9587
  %v9669 = vmax.f32 %v9507, %v9588
  %v9670 = vmax.f32 %v9508, %v9589
  %v9671 = vmax.f32 %v9509, %v9590
  %v9672 = vmax.f32 %v9510, %v9591
  %v9673 = vmax.f32 %v9511, %v9592
  %v9674 = vmax.f32 %v9512, %v9593
  %v9675 = vmax.f32 %v9513, %v9594
  %v9676 = vmax.f32 %v9514, %v9595
  %v9677 = vmax.f32 %v9515, %v9596
  %v9678 = vmax.f32 %v9516, %v9597
  %v9679 = vmax.f32 %v9517, %v9598
  %v9680 = vmax.f32 %v9518, %v9599
  %v9681 = vmax.f32 %v9519, %v9600
  %v9682 = vmax.f32 %v9520, %v9601
  %v9683 = vmax.f32 %v9521, %v9602
  %v9684 = vmax.f32 %v9522, %v9603
  %v9685 = vmax.f32 %v9523, %v9604
  %v9686 = vmax.f32 %v9524, %v9605
  %v9687 = vmax.f32 %v9525, %v9606
  %v9688 = vmax.f32 %v9526, %v9607
  %v9689 = vmax.f32 %v9527, %v9608
  %v9690 = vmax.f32 %v9528, %v9609
  %v9691 = vmax.f32 %v9529, %v9610
  %v9692 = vmax.f32 %v9530, %v9611
  %v9693 = vmax.f32 %v9531, %v9612
  %v9694 = vmax.f32 %v9532, %v9613
  %v9695 = vmax.f32 %v9533, %v9614
  %v9696 = vmax.f32 %v9534, %v9615
  %v9697 = vmax.f32 %v9535, %v9616
  %v9698 = vmax.f32 %v9536, %v9617
  %v9699 = vmax.f32 %v9537, %v9618
  %v9700 = vmax.f32 %v9538, %v9619
  %v9701 = vmax.f32 %v9539, %v9620
  %v9702 = vmax.f32 %v9540, %v9621
  %v9703 = vmax.f32 %v9541, %v9622
  %v9704 = vmax.f32 %v9542, %v9623
  %v9705 = vmax.f32 %v9543, %v9624
  %v9706 = vmax.f32 %v9544, %v9625
  %v9707 = vmax.f32 %v9545, %v9626
  %v9708 = vmax.f32 %v9546, %v9627
  %v9709 = vmax.f32 %v9547, %v9628
  %v9710 = vmax.f32 %v9548, %v9629
  %v9711 = vmax.f32 %v9549, %v9630
  %v9712 = vmax.f32 %v9550, %v9631
  %v9713 = vmax.f32 %v9551, %v9632
  %v9714 = vmax.f32 %v9552, %v9633
  %v9715 = vmax.f32 %v9553, %v9634
  %v9716 = vmax.f32 %v9554, %v9635
  %v9717 = vmax.f32 %v9555, %v9636
  %v9718 = vmax.f32 %v9556, %v9637
  %v9719 = vmax.f32 %v9557, %v9638
  %v9720 = vmax.f32 %v9558, %v9639
  %v9721 = vmax.f32 %v9559, %v9640
  %v9722 = vmax.f32 %v9560, %v9641
  %v9723 = vmax.f32 %v9561, %v9642
  %v9724 = vmax.f32 %v9562, %v9643
  %9725 = vst [vmem:[%s5] sm:$0xff] %v9644
  %9726 = vst [vmem:[%s5 + $0x8] sm:$0xff] %v9645
  %9727 = vst [vmem:[%s5 + $0x10] sm:$0xff] %v9646
  %9728 = vst [vmem:[%s5 + $0x18] sm:$0xff] %v9647
  %9729 = vst [vmem:[%s5 + $0x20] sm:$0xff] %v9648
  %9730 = vst [vmem:[%s5 + $0x28] sm:$0xff] %v9649
  %9731 = vst [vmem:[%s5 + $0x30] sm:$0xff] %v9650
  %9732 = vst [vmem:[%s5 + $0x38] sm:$0xff] %v9651
  %9733 = vst [vmem:[%s5 + $0x40] sm:$0xff] %v9652
  %9734 = vst [vmem:[%s5 + $0x48] sm:$0xff] %v9653
  %9735 = vst [vmem:[%s5 + $0x50] sm:$0xff] %v9654
  %9736 = vst [vmem:[%s5 + $0x58] sm:$0xff] %v9655
  %9737 = vst [vmem:[%s5 + $0x60] sm:$0xff] %v9656
  %9738 = vst [vmem:[%s5 + $0x68] sm:$0xff] %v9657
  %9739 = vst [vmem:[%s5 + $0x70] sm:$0xff] %v9658
  %9740 = vst [vmem:[%s5 + $0x78] sm:$0xff] %v9659
  %9741 = vst [vmem:[%s5 + $0x80] sm:$0xff] %v9660
  %9742 = vst [vmem:[%s5 + $0x88] sm:$0xff] %v9661
  %9743 = vst [vmem:[%s5 + $0x90] sm:$0xff] %v9662
  %9744 = vst [vmem:[%s5 + $0x98] sm:$0xff] %v9663
  %9745 = vst [vmem:[%s5 + $0xa0] sm:$0xff] %v9664
  %9746 = vst [vmem:[%s5 + $0xa8] sm:$0xff] %v9665
  %9747 = vst [vmem:[%s5 + $0xb0] sm:$0xff] %v9666
  %9748 = vst [vmem:[%s5 + $0xb8] sm:$0xff] %v9667
  %9749 = vst [vmem:[%s5 + $0xc0] sm:$0xff] %v9668
  %9750 = vst [vmem:[%s5 + $0xc8] sm:$0xff] %v9669
  %9751 = vst [vmem:[%s5 + $0xd0] sm:$0xff] %v9670
  %9752 = vst [vmem:[%s5 + $0xd8] sm:$0xff] %v9671
  %9753 = vst [vmem:[%s5 + $0xe0] sm:$0xff] %v9672
  %9754 = vst [vmem:[%s5 + $0xe8] sm:$0xff] %v9673
  %9755 = vst [vmem:[%s5 + $0xf0] sm:$0xff] %v9674
  %9756 = vst [vmem:[%s5 + $0xf8] sm:$0xff] %v9675
  %9757 = vst [vmem:[%s5 + $0x100] sm:$0xff] %v9676
  %9758 = vst [vmem:[%s5 + $0x108] sm:$0xff] %v9677
  %9759 = vst [vmem:[%s5 + $0x110] sm:$0xff] %v9678
  %9760 = vst [vmem:[%s5 + $0x118] sm:$0xff] %v9679
  %9761 = vst [vmem:[%s5 + $0x120] sm:$0xff] %v9680
  %9762 = vst [vmem:[%s5 + $0x128] sm:$0xff] %v9681
  %9763 = vst [vmem:[%s5 + $0x130] sm:$0xff] %v9682
  %9764 = vst [vmem:[%s5 + $0x138] sm:$0xff] %v9683
  %9765 = vst [vmem:[%s5 + $0x140] sm:$0xff] %v9684
  %9766 = vst [vmem:[%s5 + $0x148] sm:$0xff] %v9685
  %9767 = vst [vmem:[%s5 + $0x150] sm:$0xff] %v9686
  %9768 = vst [vmem:[%s5 + $0x158] sm:$0xff] %v9687
  %9769 = vst [vmem:[%s5 + $0x160] sm:$0xff] %v9688
  %9770 = vst [vmem:[%s5 + $0x168] sm:$0xff] %v9689
  %9771 = vst [vmem:[%s5 + $0x170] sm:$0xff] %v9690
  %9772 = vst [vmem:[%s5 + $0x178] sm:$0xff] %v9691
  %9773 = vst [vmem:[%s5 + $0x180] sm:$0xff] %v9692
  %9774 = vst [vmem:[%s5 + $0x188] sm:$0xff] %v9693
  %9775 = vst [vmem:[%s5 + $0x190] sm:$0xff] %v9694
  %9776 = vst [vmem:[%s5 + $0x198] sm:$0xff] %v9695
  %9777 = vst [vmem:[%s5 + $0x1a0] sm:$0xff] %v9696
  %9778 = vst [vmem:[%s5 + $0x1a8] sm:$0xff] %v9697
  %9779 = vst [vmem:[%s5 + $0x1b0] sm:$0xff] %v9698
  %9780 = vst [vmem:[%s5 + $0x1b8] sm:$0xff] %v9699
  %9781 = vst [vmem:[%s5 + $0x1c0] sm:$0xff] %v9700
  %9782 = vst [vmem:[%s5 + $0x1c8] sm:$0xff] %v9701
  %9783 = vst [vmem:[%s5 + $0x1d0] sm:$0xff] %v9702
  %9784 = vst [vmem:[%s5 + $0x1d8] sm:$0xff] %v9703
  %9785 = vst [vmem:[%s5 + $0x1e0] sm:$0xff] %v9704
  %9786 = vst [vmem:[%s5 + $0x1e8] sm:$0xff] %v9705
  %9787 = vst [vmem:[%s5 + $0x1f0] sm:$0xff] %v9706
  %9788 = vst [vmem:[%s5 + $0x1f8] sm:$0xff] %v9707
  %9789 = vst [vmem:[%s5 + $0x200] sm:$0xff] %v9708
  %9790 = vst [vmem:[%s5 + $0x208] sm:$0xff] %v9709
  %9791 = vst [vmem:[%s5 + $0x210] sm:$0xff] %v9710
  %9792 = vst [vmem:[%s5 + $0x218] sm:$0xff] %v9711
  %9793 = vst [vmem:[%s5 + $0x220] sm:$0xff] %v9712
  %9794 = vst [vmem:[%s5 + $0x228] sm:$0xff] %v9713
  %9795 = vst [vmem:[%s5 + $0x230] sm:$0xff] %v9714
  %9796 = vst [vmem:[%s5 + $0x238] sm:$0xff] %v9715
  %9797 = vst [vmem:[%s5 + $0x240] sm:$0xff] %v9716
  %9798 = vst [vmem:[%s5 + $0x248] sm:$0xff] %v9717
  %9799 = vst [vmem:[%s5 + $0x250] sm:$0xff] %v9718
  %9800 = vst [vmem:[%s5 + $0x258] sm:$0xff] %v9719
  %9801 = vst [vmem:[%s5 + $0x260] sm:$0xff] %v9720
  %9802 = vst [vmem:[%s5 + $0x268] sm:$0xff] %v9721
  %9803 = vst [vmem:[%s5 + $0x270] sm:$0xff] %v9722
  %9804 = vst [vmem:[%s5 + $0x278] sm:$0xff] %v9723
  %9805 = vst [vmem:[%s5 + $0x280] sm:$0xff] %v9724
  // Predicated region
  $region22: #{the_recognizer_forward.3} parent=0 // pred_check
    _
  $region23: #{the_recognizer_forward.3} parent=0 // pred_check_branch
    %9807 = sbr.rel (0) target = $region25
  $region24: #{the_recognizer_forward.3} parent=0 // pred_region
    _
  $region25: #{the_recognizer_forward.3} parent=0 // pred_fallthru
    _
  // Predicated region
  $region26: #{the_recognizer_forward.3} parent=0 // pred_check
    _
  $region27: #{the_recognizer_forward.3} parent=0 // pred_check_branch
    %9809 = sbr.rel (0) target = $region29
  $region28: #{the_recognizer_forward.3} parent=0 // pred_region
    _
  $region29: #{the_recognizer_forward.3} parent=0 // pred_fallthru
    _

// kernel: squeeze.12
$region0: #{squeeze.12}
  %s0 = inlined_call_operand.vmem [shape: f32[2,7,7,250], index: 0, kind: input, shape index: {}]
  %s1 = inlined_call_operand.vmem [shape: f32[98,250], index: 1, kind: output, shape index: {}]
  %s2 = scalar_lea.vmem %s0, 8
  %v3 = vld [vmem:[%s2] sm:$0x7f]
  %vm4 = vcmask 998400
  %s5 = scalar_lea.vmem %s1, 8
  %6 = vst.msk [vmem:[%s5] sm:$0x7f] %vm4, %v3
  %s7 = scalar_lea.vmem %s0, 24
  %v8 = vld [vmem:[%s7] sm:$0x7f]
  %vm9 = vcmask 998400
  %s10 = scalar_lea.vmem %s1, 15
  %11 = vst.msk [vmem:[%s10] ss:$9 sm:$0x3] %vm9, %v8
  %s12 = scalar_lea.vmem %s1, 23
  %13 = vst.msk [vmem:[%s12] sm:$0x7c] %vm9, %v8
  %s14 = scalar_lea.vmem %s0, 40
  %v15 = vld [vmem:[%s14] sm:$0x7f]
  %vm16 = vcmask 998400
  %s17 = scalar_lea.vmem %s1, 30
  %18 = vst.msk [vmem:[%s17] sm:$0x3] %vm16, %v15
  %s19 = scalar_lea.vmem %s1, 38
  %20 = vst.msk [vmem:[%s19] sm:$0x7c] %vm16, %v15
  %s21 = scalar_lea.vmem %s0, 56
  %v22 = vld [vmem:[%s21] sm:$0x7f]
  %vm23 = vcmask 998400
  %s24 = scalar_lea.vmem %s1, 45
  %25 = vst.msk [vmem:[%s24] sm:$0x7] %vm23, %v22
  %s26 = scalar_lea.vmem %s1, 53
  %27 = vst.msk [vmem:[%s26] sm:$0x78] %vm23, %v22
  %s28 = scalar_lea.vmem %s0, 72
  %v29 = vld [vmem:[%s28] sm:$0x7f]
  %vm30 = vcmask 998400
  %s31 = scalar_lea.vmem %s1, 60
  %32 = vst.msk [vmem:[%s31] sm:$0xf] %vm30, %v29
  %s33 = scalar_lea.vmem %s1, 68
  %34 = vst.msk [vmem:[%s33] sm:$0x70] %vm30, %v29
  %s35 = scalar_lea.vmem %s0, 88
  %v36 = vld [vmem:[%s35] sm:$0x7f]
  %vm37 = vcmask 998400
  %s38 = scalar_lea.vmem %s1, 75
  %39 = vst.msk [vmem:[%s38] sm:$0x1f] %vm37, %v36
  %s40 = scalar_lea.vmem %s1, 83
  %41 = vst.msk [vmem:[%s40] sm:$0x60] %vm37, %v36
  %s42 = scalar_lea.vmem %s0, 104
  %v43 = vld [vmem:[%s42] sm:$0x7f]
  %vm44 = vcmask 998400
  %s45 = scalar_lea.vmem %s1, 90
  %46 = vst.msk [vmem:[%s45] sm:$0x3f] %vm44, %v43
  %s47 = scalar_lea.vmem %s1, 98
  %48 = vst.msk [vmem:[%s47] sm:$0x40] %vm44, %v43
  %s49 = scalar_lea.vmem %s0, 120
  %v50 = vld [vmem:[%s49] sm:$0x7f]
  %vm51 = vcmask 998400
  %s52 = scalar_lea.vmem %s1, 105
  %53 = vst.msk [vmem:[%s52] sm:$0x7f] %vm51, %v50
  %s54 = scalar_lea.vmem %s0, 136
  %v55 = vld [vmem:[%s54] sm:$0x7f]
  %vm56 = vcmask 998400
  %s57 = scalar_lea.vmem %s1, 120
  %58 = vst.msk [vmem:[%s57] sm:$0x7f] %vm56, %v55
  %s59 = scalar_lea.vmem %s0, 152
  %v60 = vld [vmem:[%s59] sm:$0x7f]
  %vm61 = vcmask 998400
  %s62 = scalar_lea.vmem %s1, 127
  %63 = vst.msk [vmem:[%s62] ss:$9 sm:$0x3] %vm61, %v60
  %s64 = scalar_lea.vmem %s1, 135
  %65 = vst.msk [vmem:[%s64] sm:$0x7c] %vm61, %v60
  %s66 = scalar_lea.vmem %s0, 168
  %v67 = vld [vmem:[%s66] sm:$0x7f]
  %vm68 = vcmask 998400
  %s69 = scalar_lea.vmem %s1, 142
  %70 = vst.msk [vmem:[%s69] sm:$0x3] %vm68, %v67
  %s71 = scalar_lea.vmem %s1, 150
  %72 = vst.msk [vmem:[%s71] sm:$0x7c] %vm68, %v67
  %s73 = scalar_lea.vmem %s0, 184
  %v74 = vld [vmem:[%s73] sm:$0x7f]
  %vm75 = vcmask 998400
  %s76 = scalar_lea.vmem %s1, 157
  %77 = vst.msk [vmem:[%s76] sm:$0x7] %vm75, %v74
  %s78 = scalar_lea.vmem %s1, 165
  %79 = vst.msk [vmem:[%s78] sm:$0x78] %vm75, %v74
  %s80 = scalar_lea.vmem %s0, 200
  %v81 = vld [vmem:[%s80] sm:$0x7f]
  %vm82 = vcmask 998400
  %s83 = scalar_lea.vmem %s1, 172
  %84 = vst.msk [vmem:[%s83] sm:$0xf] %vm82, %v81
  %s85 = scalar_lea.vmem %s1, 180
  %86 = vst.msk [vmem:[%s85] sm:$0x70] %vm82, %v81
  %s87 = scalar_lea.vmem %s0, 216
  %v88 = vld [vmem:[%s87] sm:$0x7f]
  %vm89 = vcmask 998400
  %s90 = scalar_lea.vmem %s1, 187
  %91 = vst.msk [vmem:[%s90] sm:$0x1f] %vm89, %v88
  %s92 = scalar_lea.vmem %s1, 195
  %93 = vst.msk [vmem:[%s92] sm:$0x60] %vm89, %v88
  %v94 = vld [vmem:[%s0] sm:$0x7f]
  %95 = vst [vmem:[%s1] sm:$0x7f] %v94
  %s96 = scalar_lea.vmem %s0, 16
  %v97 = vld [vmem:[%s96] sm:$0x7f]
  %s98 = scalar_lea.vmem %s1, 7
  %99 = vst [vmem:[%s98] ss:$9 sm:$0x3] %v97
  %s100 = scalar_lea.vmem %s1, 15
  %101 = vst [vmem:[%s100] sm:$0x7c] %v97
  %s102 = scalar_lea.vmem %s0, 32
  %v103 = vld [vmem:[%s102] sm:$0x7f]
  %s104 = scalar_lea.vmem %s1, 22
  %105 = vst [vmem:[%s104] sm:$0x3] %v103
  %s106 = scalar_lea.vmem %s1, 30
  %107 = vst [vmem:[%s106] sm:$0x7c] %v103
  %s108 = scalar_lea.vmem %s0, 48
  %v109 = vld [vmem:[%s108] sm:$0x7f]
  %s110 = scalar_lea.vmem %s1, 37
  %111 = vst [vmem:[%s110] sm:$0x7] %v109
  %s112 = scalar_lea.vmem %s1, 45
  %113 = vst [vmem:[%s112] sm:$0x78] %v109
  %s114 = scalar_lea.vmem %s0, 64
  %v115 = vld [vmem:[%s114] sm:$0x7f]
  %s116 = scalar_lea.vmem %s1, 52
  %117 = vst [vmem:[%s116] sm:$0xf] %v115
  %s118 = scalar_lea.vmem %s1, 60
  %119 = vst [vmem:[%s118] sm:$0x70] %v115
  %s120 = scalar_lea.vmem %s0, 80
  %v121 = vld [vmem:[%s120] sm:$0x7f]
  %s122 = scalar_lea.vmem %s1, 67
  %123 = vst [vmem:[%s122] sm:$0x1f] %v121
  %s124 = scalar_lea.vmem %s1, 75
  %125 = vst [vmem:[%s124] sm:$0x60] %v121
  %s126 = scalar_lea.vmem %s0, 96
  %v127 = vld [vmem:[%s126] sm:$0x7f]
  %s128 = scalar_lea.vmem %s1, 82
  %129 = vst [vmem:[%s128] sm:$0x3f] %v127
  %s130 = scalar_lea.vmem %s1, 90
  %131 = vst [vmem:[%s130] sm:$0x40] %v127
  %s132 = scalar_lea.vmem %s0, 112
  %v133 = vld [vmem:[%s132] sm:$0x7f]
  %s134 = scalar_lea.vmem %s1, 97
  %135 = vst [vmem:[%s134] sm:$0x7f] %v133
  %s136 = scalar_lea.vmem %s0, 128
  %v137 = vld [vmem:[%s136] sm:$0x7f]
  %s138 = scalar_lea.vmem %s1, 112
  %139 = vst [vmem:[%s138] sm:$0x7f] %v137
  %s140 = scalar_lea.vmem %s0, 144
  %v141 = vld [vmem:[%s140] sm:$0x7f]
  %s142 = scalar_lea.vmem %s1, 119
  %143 = vst [vmem:[%s142] ss:$9 sm:$0x3] %v141
  %s144 = scalar_lea.vmem %s1, 127
  %145 = vst [vmem:[%s144] sm:$0x7c] %v141
  %s146 = scalar_lea.vmem %s0, 160
  %v147 = vld [vmem:[%s146] sm:$0x7f]
  %s148 = scalar_lea.vmem %s1, 134
  %149 = vst [vmem:[%s148] sm:$0x3] %v147
  %s150 = scalar_lea.vmem %s1, 142
  %151 = vst [vmem:[%s150] sm:$0x7c] %v147
  %s152 = scalar_lea.vmem %s0, 176
  %v153 = vld [vmem:[%s152] sm:$0x7f]
  %s154 = scalar_lea.vmem %s1, 149
  %155 = vst [vmem:[%s154] sm:$0x7] %v153
  %s156 = scalar_lea.vmem %s1, 157
  %157 = vst [vmem:[%s156] sm:$0x78] %v153
  %s158 = scalar_lea.vmem %s0, 192
  %v159 = vld [vmem:[%s158] sm:$0x7f]
  %s160 = scalar_lea.vmem %s1, 164
  %161 = vst [vmem:[%s160] sm:$0xf] %v159
  %s162 = scalar_lea.vmem %s1, 172
  %163 = vst [vmem:[%s162] sm:$0x70] %v159
  %s164 = scalar_lea.vmem %s0, 208
  %v165 = vld [vmem:[%s164] sm:$0x7f]
  %s166 = scalar_lea.vmem %s1, 179
  %167 = vst [vmem:[%s166] sm:$0x1f] %v165
  %s168 = scalar_lea.vmem %s1, 187
  %169 = vst [vmem:[%s168] sm:$0x60] %v165

// kernel: the_recognizer_forward.4
$region0: #{the_recognizer_forward.4}
  #allocation0 [shape = 'u32[]', space=smem, size = 0x4, offset = 0x4, fixed_abs, tag = 'smem constant byte address 0x4 - core index']
  #allocation1 [shape = 'u32[72,128]{1,0:T(1,128)}', space=vmem, size = 0x9000, scoped, tag = 'internal scratch']
  %s0 = inlined_call_operand.vmem [shape: f32[416,256], index: 0, kind: input, shape index: {}]
  %s1 = inlined_call_operand.vmem [shape: f32[256,128], index: 1, kind: input, shape index: {}]
  %s2 = inlined_call_operand.vmem [shape: f32[1,128], index: 2, kind: input, shape index: {}]
  %s3 = inlined_call_operand.vmem [shape: f32[1,128], index: 3, kind: input, shape index: {}]
  %s4 = inlined_call_operand.vmem [shape: f32[1,128], index: 4, kind: input, shape index: {}]
  %s5 = inlined_call_operand.vmem [shape: f32[104,128], index: 5, kind: output, shape index: {}]
  %s6 = sld [smem:[#allocation0]]
  $region30: #{the_recognizer_forward.4} parent=0
    _
  %s8 = ssub.s32 1, %s6
  %s9 = scalar_select 0, %s8, %s6
  // Predicated region
  $region2: #{the_recognizer_forward.4} parent=0 // pred_check
    _
  $region3: #{the_recognizer_forward.4} parent=0 // pred_check_branch
    %11 = sbr.rel (0) target = $region5
  $region4: #{the_recognizer_forward.4} parent=0 // pred_region
    _
  $region5: #{the_recognizer_forward.4} parent=0 // pred_fallthru
    _
  // Predicated region
  $region6: #{the_recognizer_forward.4} parent=0 // pred_check
    _
  $region7: #{the_recognizer_forward.4} parent=0 // pred_check_branch
    %13 = sbr.rel (0) target = $region9
  $region8: #{the_recognizer_forward.4} parent=0 // pred_region
    _
  $region9: #{the_recognizer_forward.4} parent=0 // pred_fallthru
    _
  // Predicated region
  $region10: #{the_recognizer_forward.4} parent=0 // pred_check
    _
  $region11: #{the_recognizer_forward.4} parent=0 // pred_check_branch
    %15 = sbr.rel (0) target = $region13
  $region12: #{the_recognizer_forward.4} parent=0 // pred_region
    _
  $region13: #{the_recognizer_forward.4} parent=0 // pred_fallthru
    _
  // Predicated region
  $region14: #{the_recognizer_forward.4} parent=0 // pred_check
    _
  $region15: #{the_recognizer_forward.4} parent=0 // pred_check_branch
    %17 = sbr.rel (0) target = $region17
  $region16: #{the_recognizer_forward.4} parent=0 // pred_region
    _
  $region17: #{the_recognizer_forward.4} parent=0 // pred_fallthru
    _
  // Predicated region
  $region18: #{the_recognizer_forward.4} parent=0 // pred_check
    _
  $region19: #{the_recognizer_forward.4} parent=0 // pred_check_branch
    %19 = sbr.rel (0) target = $region21
  $region20: #{the_recognizer_forward.4} parent=0 // pred_region
    _
  $region21: #{the_recognizer_forward.4} parent=0 // pred_fallthru
    _
  %v20 = vld [vmem:[%s1] sm:$0xff]
  %v21 = vld [vmem:[%s1 + $0x8] sm:$0xff]
  %v22 = vld [vmem:[%s1 + $0x10] sm:$0xff]
  %v23 = vld [vmem:[%s1 + $0x18] sm:$0xff]
  %v24 = vld [vmem:[%s1 + $0x20] sm:$0xff]
  %v25 = vld [vmem:[%s1 + $0x28] sm:$0xff]
  %v26 = vld [vmem:[%s1 + $0x30] sm:$0xff]
  %v27 = vld [vmem:[%s1 + $0x38] sm:$0xff]
  %v28 = vld [vmem:[%s1 + $0x40] sm:$0xff]
  %v29 = vld [vmem:[%s1 + $0x48] sm:$0xff]
  %v30 = vld [vmem:[%s1 + $0x50] sm:$0xff]
  %v31 = vld [vmem:[%s1 + $0x58] sm:$0xff]
  %v32 = vld [vmem:[%s1 + $0x60] sm:$0xff]
  %v33 = vld [vmem:[%s1 + $0x68] sm:$0xff]
  %v34 = vld [vmem:[%s1 + $0x70] sm:$0xff]
  %v35 = vld [vmem:[%s1 + $0x78] sm:$0xff]
  %v36 = vld [vmem:[%s1 + $0x80] sm:$0xff]
  %v37 = vld [vmem:[%s1 + $0x88] sm:$0xff]
  %v38 = vld [vmem:[%s1 + $0x90] sm:$0xff]
  %v39 = vld [vmem:[%s1 + $0x98] sm:$0xff]
  %v40 = vld [vmem:[%s1 + $0xa0] sm:$0xff]
  %v41 = vld [vmem:[%s1 + $0xa8] sm:$0xff]
  %v42 = vld [vmem:[%s1 + $0xb0] sm:$0xff]
  %v43 = vld [vmem:[%s1 + $0xb8] sm:$0xff]
  %v44 = vld [vmem:[%s1 + $0xc0] sm:$0xff]
  %v45 = vld [vmem:[%s1 + $0xc8] sm:$0xff]
  %v46 = vld [vmem:[%s1 + $0xd0] sm:$0xff]
  %v47 = vld [vmem:[%s1 + $0xd8] sm:$0xff]
  %v48 = vld [vmem:[%s1 + $0xe0] sm:$0xff]
  %v49 = vld [vmem:[%s1 + $0xe8] sm:$0xff]
  %v50 = vld [vmem:[%s1 + $0xf0] sm:$0xff]
  %v51 = vld [vmem:[%s1 + $0xf8] sm:$0xff]
  %v52 = vld [vmem:[%s2] sm:$0x1]
  %v53 = vld [vmem:[%s0] sm:$0xff]
  %v54 = vld [vmem:[%s0 + $0x8] sm:$0xff]
  %v55 = vld [vmem:[%s0 + $0x10] sm:$0xff]
  %v56 = vld [vmem:[%s0 + $0x18] sm:$0xff]
  %v57 = vld [vmem:[%s0 + $0x20] sm:$0xff]
  %v58 = vld [vmem:[%s0 + $0x28] sm:$0xff]
  %v59 = vld [vmem:[%s0 + $0x30] sm:$0xff]
  %v60 = vld [vmem:[%s0 + $0x38] sm:$0xff]
  %v61 = vld [vmem:[%s0 + $0x40] sm:$0xff]
  %v62 = vld [vmem:[%s0 + $0x48] sm:$0xff]
  %v63 = vld [vmem:[%s0 + $0x50] sm:$0xff]
  %v64 = vld [vmem:[%s0 + $0x58] sm:$0xff]
  %v65 = vld [vmem:[%s0 + $0x60] sm:$0xff]
  %v66 = vld [vmem:[%s0 + $0x68] sm:$0xff]
  %v67 = vld [vmem:[%s0 + $0x70] sm:$0xff]
  %v68 = vld [vmem:[%s0 + $0x78] sm:$0xff]
  %v69 = vld [vmem:[%s0 + $0x80] sm:$0xff]
  %v70 = vld [vmem:[%s0 + $0x88] sm:$0xff]
  %v71 = vld [vmem:[%s0 + $0x90] sm:$0xff]
  %v72 = vld [vmem:[%s0 + $0x98] sm:$0xff]
  %v73 = vld [vmem:[%s0 + $0xa0] sm:$0xff]
  %v74 = vld [vmem:[%s0 + $0xa8] sm:$0xff]
  %v75 = vld [vmem:[%s0 + $0xb0] sm:$0xff]
  %v76 = vld [vmem:[%s0 + $0xb8] sm:$0xff]
  %v77 = vld [vmem:[%s0 + $0xc0] sm:$0xff]
  %v78 = vld [vmem:[%s0 + $0xc8] sm:$0xff]
  %v79 = vld [vmem:[%s0 + $0xd0] sm:$0xff]
  %v80 = vld [vmem:[%s0 + $0xd8] sm:$0xff]
  %v81 = vld [vmem:[%s0 + $0xe0] sm:$0xff]
  %v82 = vld [vmem:[%s0 + $0xe8] sm:$0xff]
  %v83 = vld [vmem:[%s0 + $0xf0] sm:$0xff]
  %v84 = vld [vmem:[%s0 + $0xf8] sm:$0xff]
  %v85 = vld [vmem:[%s0 + $0x100] sm:$0xff]
  %v86 = vld [vmem:[%s0 + $0x108] sm:$0xff]
  %v87 = vld [vmem:[%s0 + $0x110] sm:$0xff]
  %v88 = vld [vmem:[%s0 + $0x118] sm:$0xff]
  %v89 = vld [vmem:[%s0 + $0x120] sm:$0xff]
  %v90 = vld [vmem:[%s0 + $0x128] sm:$0xff]
  %v91 = vld [vmem:[%s0 + $0x130] sm:$0xff]
  %v92 = vld [vmem:[%s0 + $0x138] sm:$0xff]
  %v93 = vld [vmem:[%s0 + $0x140] sm:$0xff]
  %v94 = vld [vmem:[%s0 + $0x148] sm:$0xff]
  %v95 = vld [vmem:[%s0 + $0x150] sm:$0xff]
  %v96 = vld [vmem:[%s0 + $0x158] sm:$0xff]
  %v97 = vld [vmem:[%s0 + $0x160] sm:$0xff]
  %v98 = vld [vmem:[%s0 + $0x168] sm:$0xff]
  %v99 = vld [vmem:[%s0 + $0x170] sm:$0xff]
  %v100 = vld [vmem:[%s0 + $0x178] sm:$0xff]
  %v101 = vld [vmem:[%s0 + $0x180] sm:$0xff]
  %v102 = vld [vmem:[%s0 + $0x188] sm:$0xff]
  %v103 = vld [vmem:[%s0 + $0x190] sm:$0xff]
  %v104 = vld [vmem:[%s0 + $0x198] sm:$0xff]
  %v105 = vld [vmem:[%s0 + $0x1a0] sm:$0xff]
  %v106 = vld [vmem:[%s0 + $0x1a8] sm:$0xff]
  %v107 = vld [vmem:[%s0 + $0x1b0] sm:$0xff]
  %v108 = vld [vmem:[%s0 + $0x1b8] sm:$0xff]
  %v109 = vld [vmem:[%s0 + $0x1c0] sm:$0xff]
  %v110 = vld [vmem:[%s0 + $0x1c8] sm:$0xff]
  %v111 = vld [vmem:[%s0 + $0x1d0] sm:$0xff]
  %v112 = vld [vmem:[%s0 + $0x1d8] sm:$0xff]
  %v113 = vld [vmem:[%s0 + $0x1e0] sm:$0xff]
  %v114 = vld [vmem:[%s0 + $0x1e8] sm:$0xff]
  %v115 = vld [vmem:[%s0 + $0x1f0] sm:$0xff]
  %v116 = vld [vmem:[%s0 + $0x1f8] sm:$0xff]
  %v117 = vld [vmem:[%s0 + $0x200] sm:$0xff]
  %v118 = vld [vmem:[%s0 + $0x208] sm:$0xff]
  %v119 = vld [vmem:[%s0 + $0x210] sm:$0xff]
  %v120 = vld [vmem:[%s0 + $0x218] sm:$0xff]
  %v121 = vld [vmem:[%s0 + $0x220] sm:$0xff]
  %v122 = vld [vmem:[%s0 + $0x228] sm:$0xff]
  %v123 = vld [vmem:[%s0 + $0x230] sm:$0xff]
  %v124 = vld [vmem:[%s0 + $0x238] sm:$0xff]
  %v125 = vld [vmem:[%s0 + $0x240] sm:$0xff]
  %v126 = vld [vmem:[%s0 + $0x248] sm:$0xff]
  %v127 = vld [vmem:[%s0 + $0x250] sm:$0xff]
  %v128 = vld [vmem:[%s0 + $0x258] sm:$0xff]
  %v129 = vld [vmem:[%s0 + $0x260] sm:$0xff]
  %v130 = vld [vmem:[%s0 + $0x268] sm:$0xff]
  %v131 = vld [vmem:[%s0 + $0x270] sm:$0xff]
  %v132 = vld [vmem:[%s0 + $0x278] sm:$0xff]
  %v133 = vld [vmem:[%s0 + $0x280] sm:$0xff]
  %v134 = vld [vmem:[%s0 + $0x288] sm:$0xff]
  %v135 = vld [vmem:[%s0 + $0x290] sm:$0xff]
  %v136 = vld [vmem:[%s0 + $0x298] sm:$0xff]
  %v137 = vld [vmem:[%s0 + $0x2a0] sm:$0xff]
  %v138 = vld [vmem:[%s0 + $0x2a8] sm:$0xff]
  %v139 = vld [vmem:[%s0 + $0x2b0] sm:$0xff]
  %v140 = vld [vmem:[%s0 + $0x2b8] sm:$0xff]
  %v141 = vld [vmem:[%s0 + $0x2c0] sm:$0xff]
  %v142 = vld [vmem:[%s0 + $0x2c8] sm:$0xff]
  %v143 = vld [vmem:[%s0 + $0x2d0] sm:$0xff]
  %v144 = vld [vmem:[%s0 + $0x2d8] sm:$0xff]
  %v145 = vld [vmem:[%s0 + $0x2e0] sm:$0xff]
  %v146 = vld [vmem:[%s0 + $0x2e8] sm:$0xff]
  %v147 = vld [vmem:[%s0 + $0x2f0] sm:$0xff]
  %v148 = vld [vmem:[%s0 + $0x2f8] sm:$0xff]
  %v149 = vld [vmem:[%s0 + $0x300] sm:$0xff]
  %v150 = vld [vmem:[%s0 + $0x308] sm:$0xff]
  %v151 = vld [vmem:[%s0 + $0x310] sm:$0xff]
  %v152 = vld [vmem:[%s0 + $0x318] sm:$0xff]
  %v153 = vld [vmem:[%s0 + $0x320] sm:$0xff]
  %v154 = vld [vmem:[%s0 + $0x328] sm:$0xff]
  %v155 = vld [vmem:[%s0 + $0x330] sm:$0xff]
  %v156 = vld [vmem:[%s0 + $0x338] sm:$0xff]
  %v158 = vperm.slane %v52, 0
  %160 = vmatpush.msra.mxu0 %v35
  %161 = vmatpush.msra.mxu0 %v34
  %162 = vmatpush.msra.mxu0 %v33
  %163 = vmatpush.msra.mxu0 %v32
  %164 = vmatpush.msra.mxu0 %v31
  %165 = vmatpush.msra.mxu0 %v30
  %166 = vmatpush.msra.mxu0 %v29
  %167 = vmatpush.msra.mxu0 %v28
  %168 = vmatpush.msra.mxu0 %v27
  %169 = vmatpush.msra.mxu0 %v26
  %170 = vmatpush.msra.mxu0 %v25
  %171 = vmatpush.msra.mxu0 %v24
  %172 = vmatpush.msra.mxu0 %v23
  %173 = vmatpush.msra.mxu0 %v22
  %174 = vmatpush.msra.mxu0 %v21
  %175 = vmatpush.msra.mxu0 %v20
  %176 = vmatmul.f32.gmra.mxu0 %v53
  %v177 = vpop.f32.mrf.mxu0
  %v178 = vadd.f32 %v158, %v177
  %179 = vmatmul.f32.gmra.mxu0 %v55
  %v180 = vpop.f32.mrf.mxu0
  %v181 = vadd.f32 %v158, %v180
  %182 = vmatmul.f32.gmra.mxu0 %v57
  %v183 = vpop.f32.mrf.mxu0
  %v184 = vadd.f32 %v158, %v183
  %185 = vmatmul.f32.gmra.mxu0 %v59
  %v186 = vpop.f32.mrf.mxu0
  %v187 = vadd.f32 %v158, %v186
  %188 = vmatmul.f32.gmra.mxu0 %v61
  %v189 = vpop.f32.mrf.mxu0
  %v190 = vadd.f32 %v158, %v189
  %191 = vmatmul.f32.gmra.mxu0 %v63
  %v192 = vpop.f32.mrf.mxu0
  %v193 = vadd.f32 %v158, %v192
  %194 = vmatmul.f32.gmra.mxu0 %v65
  %v195 = vpop.f32.mrf.mxu0
  %v196 = vadd.f32 %v158, %v195
  %197 = vmatmul.f32.gmra.mxu0 %v67
  %v198 = vpop.f32.mrf.mxu0
  %v199 = vadd.f32 %v158, %v198
  %200 = vmatmul.f32.gmra.mxu0 %v69
  %v201 = vpop.f32.mrf.mxu0
  %v202 = vadd.f32 %v158, %v201
  %203 = vmatmul.f32.gmra.mxu0 %v71
  %v204 = vpop.f32.mrf.mxu0
  %v205 = vadd.f32 %v158, %v204
  %206 = vmatmul.f32.gmra.mxu0 %v73
  %v207 = vpop.f32.mrf.mxu0
  %v208 = vadd.f32 %v158, %v207
  %209 = vmatmul.f32.gmra.mxu0 %v75
  %v210 = vpop.f32.mrf.mxu0
  %v211 = vadd.f32 %v158, %v210
  %212 = vmatmul.f32.gmra.mxu0 %v77
  %v213 = vpop.f32.mrf.mxu0
  %v214 = vadd.f32 %v158, %v213
  %215 = vmatmul.f32.gmra.mxu0 %v79
  %v216 = vpop.f32.mrf.mxu0
  %v217 = vadd.f32 %v158, %v216
  %218 = vmatmul.f32.gmra.mxu0 %v81
  %v219 = vpop.f32.mrf.mxu0
  %v220 = vadd.f32 %v158, %v219
  %221 = vmatmul.f32.gmra.mxu0 %v83
  %v222 = vpop.f32.mrf.mxu0
  %v223 = vadd.f32 %v158, %v222
  %224 = vmatmul.f32.gmra.mxu0 %v85
  %v225 = vpop.f32.mrf.mxu0
  %v226 = vadd.f32 %v158, %v225
  %227 = vmatmul.f32.gmra.mxu0 %v87
  %v228 = vpop.f32.mrf.mxu0
  %v229 = vadd.f32 %v158, %v228
  %230 = vmatmul.f32.gmra.mxu0 %v89
  %v231 = vpop.f32.mrf.mxu0
  %v232 = vadd.f32 %v158, %v231
  %233 = vmatmul.f32.gmra.mxu0 %v91
  %v234 = vpop.f32.mrf.mxu0
  %v235 = vadd.f32 %v158, %v234
  %236 = vmatmul.f32.gmra.mxu0 %v93
  %v237 = vpop.f32.mrf.mxu0
  %v238 = vadd.f32 %v158, %v237
  %239 = vmatmul.f32.gmra.mxu0 %v95
  %v240 = vpop.f32.mrf.mxu0
  %v241 = vadd.f32 %v158, %v240
  %242 = vmatmul.f32.gmra.mxu0 %v97
  %v243 = vpop.f32.mrf.mxu0
  %v244 = vadd.f32 %v158, %v243
  %245 = vmatmul.f32.gmra.mxu0 %v99
  %v246 = vpop.f32.mrf.mxu0
  %v247 = vadd.f32 %v158, %v246
  %248 = vmatmul.f32.gmra.mxu0 %v101
  %v249 = vpop.f32.mrf.mxu0
  %v250 = vadd.f32 %v158, %v249
  %251 = vmatmul.f32.gmra.mxu0 %v103
  %v252 = vpop.f32.mrf.mxu0
  %v253 = vadd.f32 %v158, %v252
  %254 = vmatmul.f32.gmra.mxu0 %v105
  %v255 = vpop.f32.mrf.mxu0
  %v256 = vadd.f32 %v158, %v255
  %257 = vmatmul.f32.gmra.mxu0 %v107
  %v258 = vpop.f32.mrf.mxu0
  %v259 = vadd.f32 %v158, %v258
  %260 = vmatmul.f32.gmra.mxu0 %v109
  %v261 = vpop.f32.mrf.mxu0
  %v262 = vadd.f32 %v158, %v261
  %263 = vmatmul.f32.gmra.mxu0 %v111
  %v264 = vpop.f32.mrf.mxu0
  %v265 = vadd.f32 %v158, %v264
  %266 = vmatmul.f32.gmra.mxu0 %v113
  %v267 = vpop.f32.mrf.mxu0
  %v268 = vadd.f32 %v158, %v267
  %269 = vmatmul.f32.gmra.mxu0 %v115
  %v270 = vpop.f32.mrf.mxu0
  %v271 = vadd.f32 %v158, %v270
  %272 = vmatmul.f32.gmra.mxu0 %v117
  %v273 = vpop.f32.mrf.mxu0
  %v274 = vadd.f32 %v158, %v273
  %275 = vmatmul.f32.gmra.mxu0 %v119
  %v276 = vpop.f32.mrf.mxu0
  %v277 = vadd.f32 %v158, %v276
  %278 = vmatmul.f32.gmra.mxu0 %v121
  %v279 = vpop.f32.mrf.mxu0
  %v280 = vadd.f32 %v158, %v279
  %281 = vmatmul.f32.gmra.mxu0 %v123
  %v282 = vpop.f32.mrf.mxu0
  %v283 = vadd.f32 %v158, %v282
  %284 = vmatmul.f32.gmra.mxu0 %v125
  %v285 = vpop.f32.mrf.mxu0
  %v286 = vadd.f32 %v158, %v285
  %287 = vmatmul.f32.gmra.mxu0 %v127
  %v288 = vpop.f32.mrf.mxu0
  %v289 = vadd.f32 %v158, %v288
  %290 = vmatmul.f32.gmra.mxu0 %v129
  %v291 = vpop.f32.mrf.mxu0
  %v292 = vadd.f32 %v158, %v291
  %293 = vmatmul.f32.gmra.mxu0 %v131
  %v294 = vpop.f32.mrf.mxu0
  %v295 = vadd.f32 %v158, %v294
  %296 = vmatmul.f32.gmra.mxu0 %v133
  %v297 = vpop.f32.mrf.mxu0
  %v298 = vadd.f32 %v158, %v297
  %299 = vmatmul.f32.gmra.mxu0 %v135
  %v300 = vpop.f32.mrf.mxu0
  %v301 = vadd.f32 %v158, %v300
  %302 = vmatmul.f32.gmra.mxu0 %v137
  %v303 = vpop.f32.mrf.mxu0
  %v304 = vadd.f32 %v158, %v303
  %305 = vmatmul.f32.gmra.mxu0 %v139
  %v306 = vpop.f32.mrf.mxu0
  %v307 = vadd.f32 %v158, %v306
  %308 = vmatmul.f32.gmra.mxu0 %v141
  %v309 = vpop.f32.mrf.mxu0
  %v310 = vadd.f32 %v158, %v309
  %311 = vmatmul.f32.gmra.mxu0 %v143
  %v312 = vpop.f32.mrf.mxu0
  %v313 = vadd.f32 %v158, %v312
  %314 = vmatmul.f32.gmra.mxu0 %v145
  %v315 = vpop.f32.mrf.mxu0
  %v316 = vadd.f32 %v158, %v315
  %317 = vmatmul.f32.gmra.mxu0 %v147
  %v318 = vpop.f32.mrf.mxu0
  %v319 = vadd.f32 %v158, %v318
  %320 = vmatmul.f32.gmra.mxu0 %v149
  %v321 = vpop.f32.mrf.mxu0
  %v322 = vadd.f32 %v158, %v321
  %323 = vmatmul.f32.gmra.mxu0 %v151
  %v324 = vpop.f32.mrf.mxu0
  %v325 = vadd.f32 %v158, %v324
  %326 = vmatmul.f32.gmra.mxu0 %v153
  %v327 = vpop.f32.mrf.mxu0
  %v328 = vadd.f32 %v158, %v327
  %329 = vmatmul.f32.gmra.mxu0 %v155
  %v330 = vpop.f32.mrf.mxu0
  %v331 = vadd.f32 %v158, %v330
  %332 = vdwg.mxu0
  %333 = vmatpush.msra.mxu0 %v51
  %334 = vmatpush.msra.mxu0 %v50
  %335 = vmatpush.msra.mxu0 %v49
  %336 = vmatpush.msra.mxu0 %v48
  %337 = vmatpush.msra.mxu0 %v47
  %338 = vmatpush.msra.mxu0 %v46
  %339 = vmatpush.msra.mxu0 %v45
  %340 = vmatpush.msra.mxu0 %v44
  %341 = vmatpush.msra.mxu0 %v43
  %342 = vmatpush.msra.mxu0 %v42
  %343 = vmatpush.msra.mxu0 %v41
  %344 = vmatpush.msra.mxu0 %v40
  %345 = vmatpush.msra.mxu0 %v39
  %346 = vmatpush.msra.mxu0 %v38
  %347 = vmatpush.msra.mxu0 %v37
  %348 = vmatpush.msra.mxu0 %v36
  %349 = vmatmul.f32.gmra.mxu0 %v54
  %v350 = vpop.f32.mrf.mxu0
  %v351 = vadd.f32 %v178, %v350
  %352 = vmatmul.f32.gmra.mxu0 %v56
  %v353 = vpop.f32.mrf.mxu0
  %v354 = vadd.f32 %v181, %v353
  %355 = vmatmul.f32.gmra.mxu0 %v58
  %v356 = vpop.f32.mrf.mxu0
  %v357 = vadd.f32 %v184, %v356
  %358 = vmatmul.f32.gmra.mxu0 %v60
  %v359 = vpop.f32.mrf.mxu0
  %v360 = vadd.f32 %v187, %v359
  %361 = vmatmul.f32.gmra.mxu0 %v62
  %v362 = vpop.f32.mrf.mxu0
  %v363 = vadd.f32 %v190, %v362
  %364 = vmatmul.f32.gmra.mxu0 %v64
  %v365 = vpop.f32.mrf.mxu0
  %v366 = vadd.f32 %v193, %v365
  %367 = vmatmul.f32.gmra.mxu0 %v66
  %v368 = vpop.f32.mrf.mxu0
  %v369 = vadd.f32 %v196, %v368
  %370 = vmatmul.f32.gmra.mxu0 %v68
  %v371 = vpop.f32.mrf.mxu0
  %v372 = vadd.f32 %v199, %v371
  %373 = vmatmul.f32.gmra.mxu0 %v70
  %v374 = vpop.f32.mrf.mxu0
  %v375 = vadd.f32 %v202, %v374
  %376 = vmatmul.f32.gmra.mxu0 %v72
  %v377 = vpop.f32.mrf.mxu0
  %v378 = vadd.f32 %v205, %v377
  %379 = vmatmul.f32.gmra.mxu0 %v74
  %v380 = vpop.f32.mrf.mxu0
  %v381 = vadd.f32 %v208, %v380
  %382 = vmatmul.f32.gmra.mxu0 %v76
  %v383 = vpop.f32.mrf.mxu0
  %v384 = vadd.f32 %v211, %v383
  %385 = vmatmul.f32.gmra.mxu0 %v78
  %v386 = vpop.f32.mrf.mxu0
  %v387 = vadd.f32 %v214, %v386
  %388 = vmatmul.f32.gmra.mxu0 %v80
  %v389 = vpop.f32.mrf.mxu0
  %v390 = vadd.f32 %v217, %v389
  %391 = vmatmul.f32.gmra.mxu0 %v82
  %v392 = vpop.f32.mrf.mxu0
  %v393 = vadd.f32 %v220, %v392
  %394 = vmatmul.f32.gmra.mxu0 %v84
  %v395 = vpop.f32.mrf.mxu0
  %v396 = vadd.f32 %v223, %v395
  %397 = vmatmul.f32.gmra.mxu0 %v86
  %v398 = vpop.f32.mrf.mxu0
  %v399 = vadd.f32 %v226, %v398
  %400 = vmatmul.f32.gmra.mxu0 %v88
  %v401 = vpop.f32.mrf.mxu0
  %v402 = vadd.f32 %v229, %v401
  %403 = vmatmul.f32.gmra.mxu0 %v90
  %v404 = vpop.f32.mrf.mxu0
  %v405 = vadd.f32 %v232, %v404
  %406 = vmatmul.f32.gmra.mxu0 %v92
  %v407 = vpop.f32.mrf.mxu0
  %v408 = vadd.f32 %v235, %v407
  %409 = vmatmul.f32.gmra.mxu0 %v94
  %v410 = vpop.f32.mrf.mxu0
  %v411 = vadd.f32 %v238, %v410
  %412 = vmatmul.f32.gmra.mxu0 %v96
  %v413 = vpop.f32.mrf.mxu0
  %v414 = vadd.f32 %v241, %v413
  %415 = vmatmul.f32.gmra.mxu0 %v98
  %v416 = vpop.f32.mrf.mxu0
  %v417 = vadd.f32 %v244, %v416
  %418 = vmatmul.f32.gmra.mxu0 %v100
  %v419 = vpop.f32.mrf.mxu0
  %v420 = vadd.f32 %v247, %v419
  %421 = vmatmul.f32.gmra.mxu0 %v102
  %v422 = vpop.f32.mrf.mxu0
  %v423 = vadd.f32 %v250, %v422
  %424 = vmatmul.f32.gmra.mxu0 %v104
  %v425 = vpop.f32.mrf.mxu0
  %v426 = vadd.f32 %v253, %v425
  %427 = vmatmul.f32.gmra.mxu0 %v106
  %v428 = vpop.f32.mrf.mxu0
  %v429 = vadd.f32 %v256, %v428
  %430 = vmatmul.f32.gmra.mxu0 %v108
  %v431 = vpop.f32.mrf.mxu0
  %v432 = vadd.f32 %v259, %v431
  %433 = vmatmul.f32.gmra.mxu0 %v110
  %v434 = vpop.f32.mrf.mxu0
  %v435 = vadd.f32 %v262, %v434
  %436 = vmatmul.f32.gmra.mxu0 %v112
  %v437 = vpop.f32.mrf.mxu0
  %v438 = vadd.f32 %v265, %v437
  %439 = vmatmul.f32.gmra.mxu0 %v114
  %v440 = vpop.f32.mrf.mxu0
  %v441 = vadd.f32 %v268, %v440
  %442 = vmatmul.f32.gmra.mxu0 %v116
  %v443 = vpop.f32.mrf.mxu0
  %v444 = vadd.f32 %v271, %v443
  %445 = vmatmul.f32.gmra.mxu0 %v118
  %v446 = vpop.f32.mrf.mxu0
  %v447 = vadd.f32 %v274, %v446
  %448 = vmatmul.f32.gmra.mxu0 %v120
  %v449 = vpop.f32.mrf.mxu0
  %v450 = vadd.f32 %v277, %v449
  %451 = vmatmul.f32.gmra.mxu0 %v122
  %v452 = vpop.f32.mrf.mxu0
  %v453 = vadd.f32 %v280, %v452
  %454 = vmatmul.f32.gmra.mxu0 %v124
  %v455 = vpop.f32.mrf.mxu0
  %v456 = vadd.f32 %v283, %v455
  %457 = vmatmul.f32.gmra.mxu0 %v126
  %v458 = vpop.f32.mrf.mxu0
  %v459 = vadd.f32 %v286, %v458
  %460 = vmatmul.f32.gmra.mxu0 %v128
  %v461 = vpop.f32.mrf.mxu0
  %v462 = vadd.f32 %v289, %v461
  %463 = vmatmul.f32.gmra.mxu0 %v130
  %v464 = vpop.f32.mrf.mxu0
  %v465 = vadd.f32 %v292, %v464
  %466 = vmatmul.f32.gmra.mxu0 %v132
  %v467 = vpop.f32.mrf.mxu0
  %v468 = vadd.f32 %v295, %v467
  %469 = vmatmul.f32.gmra.mxu0 %v134
  %v470 = vpop.f32.mrf.mxu0
  %v471 = vadd.f32 %v298, %v470
  %472 = vmatmul.f32.gmra.mxu0 %v136
  %v473 = vpop.f32.mrf.mxu0
  %v474 = vadd.f32 %v301, %v473
  %475 = vmatmul.f32.gmra.mxu0 %v138
  %v476 = vpop.f32.mrf.mxu0
  %v477 = vadd.f32 %v304, %v476
  %478 = vmatmul.f32.gmra.mxu0 %v140
  %v479 = vpop.f32.mrf.mxu0
  %v480 = vadd.f32 %v307, %v479
  %481 = vmatmul.f32.gmra.mxu0 %v142
  %v482 = vpop.f32.mrf.mxu0
  %v483 = vadd.f32 %v310, %v482
  %484 = vmatmul.f32.gmra.mxu0 %v144
  %v485 = vpop.f32.mrf.mxu0
  %v486 = vadd.f32 %v313, %v485
  %487 = vmatmul.f32.gmra.mxu0 %v146
  %v488 = vpop.f32.mrf.mxu0
  %v489 = vadd.f32 %v316, %v488
  %490 = vmatmul.f32.gmra.mxu0 %v148
  %v491 = vpop.f32.mrf.mxu0
  %v492 = vadd.f32 %v319, %v491
  %493 = vmatmul.f32.gmra.mxu0 %v150
  %v494 = vpop.f32.mrf.mxu0
  %v495 = vadd.f32 %v322, %v494
  %496 = vmatmul.f32.gmra.mxu0 %v152
  %v497 = vpop.f32.mrf.mxu0
  %v498 = vadd.f32 %v325, %v497
  %499 = vmatmul.f32.gmra.mxu0 %v154
  %v500 = vpop.f32.mrf.mxu0
  %v501 = vadd.f32 %v328, %v500
  %502 = vmatmul.f32.gmra.mxu0 %v156
  %v503 = vpop.f32.mrf.mxu0
  %v504 = vadd.f32 %v331, %v503
  %505 = vdwg.mxu0
  %v506 = vlaneseq
  %v507 = vshrl.u32 %v506, 7
  %v508 = vadd.s32 %v507, 8
  %v509 = vadd.s32 %v507, 16
  %v510 = vadd.s32 %v507, 24
  %v511 = vadd.s32 %v507, 32
  %v512 = vadd.s32 %v507, 40
  %v513 = vadd.s32 %v507, 48
  %v514 = vadd.s32 %v507, 56
  %v515 = vadd.s32 %v507, 64
  %v516 = vadd.s32 %v507, 72
  %v517 = vadd.s32 %v507, 80
  %v518 = vadd.s32 %v507, 88
  %v519 = vadd.s32 %v507, 96
  %v520 = vadd.s32 %v507, 104
  %v521 = vadd.s32 %v507, 112
  %v522 = vadd.s32 %v507, 120
  %v523 = vadd.s32 %v507, 128
  %v524 = vadd.s32 %v507, 136
  %v525 = vadd.s32 %v507, 144
  %v526 = vadd.s32 %v507, 152
  %v527 = vadd.s32 %v507, 160
  %v528 = vadd.s32 %v507, 168
  %v529 = vadd.s32 %v507, 176
  %v530 = vadd.s32 %v507, 184
  %v531 = vadd.s32 %v507, 192
  %v532 = vadd.s32 %v507, 200
  %v533 = vadd.s32 %v507, 208
  %v534 = vadd.s32 %v507, 216
  %v535 = vadd.s32 %v507, 224
  %v536 = vadd.s32 %v507, 232
  %v537 = vadd.s32 %v507, 240
  %v538 = vadd.s32 %v507, 248
  %v539 = vadd.s32 %v507, 256
  %v540 = vadd.s32 %v507, 264
  %v541 = vadd.s32 %v507, 272
  %v542 = vadd.s32 %v507, 280
  %v543 = vadd.s32 %v507, 288
  %v544 = vadd.s32 %v507, 296
  %v545 = vadd.s32 %v507, 304
  %v546 = vadd.s32 %v507, 312
  %v547 = vadd.s32 %v507, 320
  %v548 = vadd.s32 %v507, 328
  %v549 = vadd.s32 %v507, 336
  %v550 = vadd.s32 %v507, 344
  %v551 = vadd.s32 %v507, 352
  %v552 = vadd.s32 %v507, 360
  %v553 = vadd.s32 %v507, 368
  %v554 = vadd.s32 %v507, 376
  %v555 = vadd.s32 %v507, 384
  %v556 = vadd.s32 %v507, 392
  %v557 = vadd.s32 %v507, 400
  %v558 = vadd.s32 %v507, 408
  %vm559 = vcmp.lt.s32.totalorder %v507, 98
  %vm560 = vcmp.lt.s32.totalorder %v508, 98
  %vm561 = vcmp.lt.s32.totalorder %v509, 98
  %vm562 = vcmp.lt.s32.totalorder %v510, 98
  %vm563 = vcmp.lt.s32.totalorder %v511, 98
  %vm564 = vcmp.lt.s32.totalorder %v512, 98
  %vm565 = vcmp.lt.s32.totalorder %v513, 98
  %vm566 = vcmp.lt.s32.totalorder %v514, 98
  %vm567 = vcmp.lt.s32.totalorder %v515, 98
  %vm568 = vcmp.lt.s32.totalorder %v516, 98
  %vm569 = vcmp.lt.s32.totalorder %v517, 98
  %vm570 = vcmp.lt.s32.totalorder %v518, 98
  %vm571 = vcmp.lt.s32.totalorder %v519, 98
  %vm572 = vcmp.lt.s32.totalorder %v520, 98
  %vm573 = vcmp.lt.s32.totalorder %v521, 98
  %vm574 = vcmp.lt.s32.totalorder %v522, 98
  %vm575 = vcmp.lt.s32.totalorder %v523, 98
  %vm576 = vcmp.lt.s32.totalorder %v524, 98
  %vm577 = vcmp.lt.s32.totalorder %v525, 98
  %vm578 = vcmp.lt.s32.totalorder %v526, 98
  %vm579 = vcmp.lt.s32.totalorder %v527, 98
  %vm580 = vcmp.lt.s32.totalorder %v528, 98
  %vm581 = vcmp.lt.s32.totalorder %v529, 98
  %vm582 = vcmp.lt.s32.totalorder %v530, 98
  %vm583 = vcmp.lt.s32.totalorder %v531, 98
  %vm584 = vcmp.lt.s32.totalorder %v532, 98
  %vm585 = vcmp.lt.s32.totalorder %v533, 98
  %vm586 = vcmp.lt.s32.totalorder %v534, 98
  %vm587 = vcmp.lt.s32.totalorder %v535, 98
  %vm588 = vcmp.lt.s32.totalorder %v536, 98
  %vm589 = vcmp.lt.s32.totalorder %v537, 98
  %vm590 = vcmp.lt.s32.totalorder %v538, 98
  %vm591 = vcmp.lt.s32.totalorder %v539, 98
  %vm592 = vcmp.lt.s32.totalorder %v540, 98
  %vm593 = vcmp.lt.s32.totalorder %v541, 98
  %vm594 = vcmp.lt.s32.totalorder %v542, 98
  %vm595 = vcmp.lt.s32.totalorder %v543, 98
  %vm596 = vcmp.lt.s32.totalorder %v544, 98
  %vm597 = vcmp.lt.s32.totalorder %v545, 98
  %vm598 = vcmp.lt.s32.totalorder %v546, 98
  %vm599 = vcmp.lt.s32.totalorder %v547, 98
  %vm600 = vcmp.lt.s32.totalorder %v548, 98
  %vm601 = vcmp.lt.s32.totalorder %v549, 98
  %vm602 = vcmp.lt.s32.totalorder %v550, 98
  %vm603 = vcmp.lt.s32.totalorder %v551, 98
  %vm604 = vcmp.lt.s32.totalorder %v552, 98
  %vm605 = vcmp.lt.s32.totalorder %v553, 98
  %vm606 = vcmp.lt.s32.totalorder %v554, 98
  %vm607 = vcmp.lt.s32.totalorder %v555, 98
  %vm608 = vcmp.lt.s32.totalorder %v556, 98
  %vm609 = vcmp.lt.s32.totalorder %v557, 98
  %vm610 = vcmp.lt.s32.totalorder %v558, 98
  %vm611 = vcmp.ge.s32.totalorder %v507, 104
  %vm612 = vcmp.ge.s32.totalorder %v508, 104
  %vm613 = vcmp.ge.s32.totalorder %v509, 104
  %vm614 = vcmp.ge.s32.totalorder %v510, 104
  %vm615 = vcmp.ge.s32.totalorder %v511, 104
  %vm616 = vcmp.ge.s32.totalorder %v512, 104
  %vm617 = vcmp.ge.s32.totalorder %v513, 104
  %vm618 = vcmp.ge.s32.totalorder %v514, 104
  %vm619 = vcmp.ge.s32.totalorder %v515, 104
  %vm620 = vcmp.ge.s32.totalorder %v516, 104
  %vm621 = vcmp.ge.s32.totalorder %v517, 104
  %vm622 = vcmp.ge.s32.totalorder %v518, 104
  %vm623 = vcmp.ge.s32.totalorder %v519, 104
  %vm624 = vcmp.ge.s32.totalorder %v520, 104
  %vm625 = vcmp.ge.s32.totalorder %v521, 104
  %vm626 = vcmp.ge.s32.totalorder %v522, 104
  %vm627 = vcmp.ge.s32.totalorder %v523, 104
  %vm628 = vcmp.ge.s32.totalorder %v524, 104
  %vm629 = vcmp.ge.s32.totalorder %v525, 104
  %vm630 = vcmp.ge.s32.totalorder %v526, 104
  %vm631 = vcmp.ge.s32.totalorder %v527, 104
  %vm632 = vcmp.ge.s32.totalorder %v528, 104
  %vm633 = vcmp.ge.s32.totalorder %v529, 104
  %vm634 = vcmp.ge.s32.totalorder %v530, 104
  %vm635 = vcmp.ge.s32.totalorder %v531, 104
  %vm636 = vcmp.ge.s32.totalorder %v532, 104
  %vm637 = vcmp.ge.s32.totalorder %v533, 104
  %vm638 = vcmp.ge.s32.totalorder %v534, 104
  %vm639 = vcmp.ge.s32.totalorder %v535, 104
  %vm640 = vcmp.ge.s32.totalorder %v536, 104
  %vm641 = vcmp.ge.s32.totalorder %v537, 104
  %vm642 = vcmp.ge.s32.totalorder %v538, 104
  %vm643 = vcmp.ge.s32.totalorder %v539, 104
  %vm644 = vcmp.ge.s32.totalorder %v540, 104
  %vm645 = vcmp.ge.s32.totalorder %v541, 104
  %vm646 = vcmp.ge.s32.totalorder %v542, 104
  %vm647 = vcmp.ge.s32.totalorder %v543, 104
  %vm648 = vcmp.ge.s32.totalorder %v544, 104
  %vm649 = vcmp.ge.s32.totalorder %v545, 104
  %vm650 = vcmp.ge.s32.totalorder %v546, 104
  %vm651 = vcmp.ge.s32.totalorder %v547, 104
  %vm652 = vcmp.ge.s32.totalorder %v548, 104
  %vm653 = vcmp.ge.s32.totalorder %v549, 104
  %vm654 = vcmp.ge.s32.totalorder %v550, 104
  %vm655 = vcmp.ge.s32.totalorder %v551, 104
  %vm656 = vcmp.ge.s32.totalorder %v552, 104
  %vm657 = vcmp.ge.s32.totalorder %v553, 104
  %vm658 = vcmp.ge.s32.totalorder %v554, 104
  %vm659 = vcmp.ge.s32.totalorder %v555, 104
  %vm660 = vcmp.ge.s32.totalorder %v556, 104
  %vm661 = vcmp.ge.s32.totalorder %v557, 104
  %vm662 = vcmp.ge.s32.totalorder %v558, 104
  %vm663 = vcmp.lt.s32.totalorder %v507, 202
  %vm664 = vcmp.lt.s32.totalorder %v508, 202
  %vm665 = vcmp.lt.s32.totalorder %v509, 202
  %vm666 = vcmp.lt.s32.totalorder %v510, 202
  %vm667 = vcmp.lt.s32.totalorder %v511, 202
  %vm668 = vcmp.lt.s32.totalorder %v512, 202
  %vm669 = vcmp.lt.s32.totalorder %v513, 202
  %vm670 = vcmp.lt.s32.totalorder %v514, 202
  %vm671 = vcmp.lt.s32.totalorder %v515, 202
  %vm672 = vcmp.lt.s32.totalorder %v516, 202
  %vm673 = vcmp.lt.s32.totalorder %v517, 202
  %vm674 = vcmp.lt.s32.totalorder %v518, 202
  %vm675 = vcmp.lt.s32.totalorder %v519, 202
  %vm676 = vcmp.lt.s32.totalorder %v520, 202
  %vm677 = vcmp.lt.s32.totalorder %v521, 202
  %vm678 = vcmp.lt.s32.totalorder %v522, 202
  %vm679 = vcmp.lt.s32.totalorder %v523, 202
  %vm680 = vcmp.lt.s32.totalorder %v524, 202
  %vm681 = vcmp.lt.s32.totalorder %v525, 202
  %vm682 = vcmp.lt.s32.totalorder %v526, 202
  %vm683 = vcmp.lt.s32.totalorder %v527, 202
  %vm684 = vcmp.lt.s32.totalorder %v528, 202
  %vm685 = vcmp.lt.s32.totalorder %v529, 202
  %vm686 = vcmp.lt.s32.totalorder %v530, 202
  %vm687 = vcmp.lt.s32.totalorder %v531, 202
  %vm688 = vcmp.lt.s32.totalorder %v532, 202
  %vm689 = vcmp.lt.s32.totalorder %v533, 202
  %vm690 = vcmp.lt.s32.totalorder %v534, 202
  %vm691 = vcmp.lt.s32.totalorder %v535, 202
  %vm692 = vcmp.lt.s32.totalorder %v536, 202
  %vm693 = vcmp.lt.s32.totalorder %v537, 202
  %vm694 = vcmp.lt.s32.totalorder %v538, 202
  %vm695 = vcmp.lt.s32.totalorder %v539, 202
  %vm696 = vcmp.lt.s32.totalorder %v540, 202
  %vm697 = vcmp.lt.s32.totalorder %v541, 202
  %vm698 = vcmp.lt.s32.totalorder %v542, 202
  %vm699 = vcmp.lt.s32.totalorder %v543, 202
  %vm700 = vcmp.lt.s32.totalorder %v544, 202
  %vm701 = vcmp.lt.s32.totalorder %v545, 202
  %vm702 = vcmp.lt.s32.totalorder %v546, 202
  %vm703 = vcmp.lt.s32.totalorder %v547, 202
  %vm704 = vcmp.lt.s32.totalorder %v548, 202
  %vm705 = vcmp.lt.s32.totalorder %v549, 202
  %vm706 = vcmp.lt.s32.totalorder %v550, 202
  %vm707 = vcmp.lt.s32.totalorder %v551, 202
  %vm708 = vcmp.lt.s32.totalorder %v552, 202
  %vm709 = vcmp.lt.s32.totalorder %v553, 202
  %vm710 = vcmp.lt.s32.totalorder %v554, 202
  %vm711 = vcmp.lt.s32.totalorder %v555, 202
  %vm712 = vcmp.lt.s32.totalorder %v556, 202
  %vm713 = vcmp.lt.s32.totalorder %v557, 202
  %vm714 = vcmp.lt.s32.totalorder %v558, 202
  %vm715 = vmand %vm611, %vm663
  %vm716 = vmand %vm612, %vm664
  %vm717 = vmand %vm613, %vm665
  %vm718 = vmand %vm614, %vm666
  %vm719 = vmand %vm615, %vm667
  %vm720 = vmand %vm616, %vm668
  %vm721 = vmand %vm617, %vm669
  %vm722 = vmand %vm618, %vm670
  %vm723 = vmand %vm619, %vm671
  %vm724 = vmand %vm620, %vm672
  %vm725 = vmand %vm621, %vm673
  %vm726 = vmand %vm622, %vm674
  %vm727 = vmand %vm623, %vm675
  %vm728 = vmand %vm624, %vm676
  %vm729 = vmand %vm625, %vm677
  %vm730 = vmand %vm626, %vm678
  %vm731 = vmand %vm627, %vm679
  %vm732 = vmand %vm628, %vm680
  %vm733 = vmand %vm629, %vm681
  %vm734 = vmand %vm630, %vm682
  %vm735 = vmand %vm631, %vm683
  %vm736 = vmand %vm632, %vm684
  %vm737 = vmand %vm633, %vm685
  %vm738 = vmand %vm634, %vm686
  %vm739 = vmand %vm635, %vm687
  %vm740 = vmand %vm636, %vm688
  %vm741 = vmand %vm637, %vm689
  %vm742 = vmand %vm638, %vm690
  %vm743 = vmand %vm639, %vm691
  %vm744 = vmand %vm640, %vm692
  %vm745 = vmand %vm641, %vm693
  %vm746 = vmand %vm642, %vm694
  %vm747 = vmand %vm643, %vm695
  %vm748 = vmand %vm644, %vm696
  %vm749 = vmand %vm645, %vm697
  %vm750 = vmand %vm646, %vm698
  %vm751 = vmand %vm647, %vm699
  %vm752 = vmand %vm648, %vm700
  %vm753 = vmand %vm649, %vm701
  %vm754 = vmand %vm650, %vm702
  %vm755 = vmand %vm651, %vm703
  %vm756 = vmand %vm652, %vm704
  %vm757 = vmand %vm653, %vm705
  %vm758 = vmand %vm654, %vm706
  %vm759 = vmand %vm655, %vm707
  %vm760 = vmand %vm656, %vm708
  %vm761 = vmand %vm657, %vm709
  %vm762 = vmand %vm658, %vm710
  %vm763 = vmand %vm659, %vm711
  %vm764 = vmand %vm660, %vm712
  %vm765 = vmand %vm661, %vm713
  %vm766 = vmand %vm662, %vm714
  %vm767 = vmor %vm559, %vm715
  %vm768 = vmor %vm560, %vm716
  %vm769 = vmor %vm561, %vm717
  %vm770 = vmor %vm562, %vm718
  %vm771 = vmor %vm563, %vm719
  %vm772 = vmor %vm564, %vm720
  %vm773 = vmor %vm565, %vm721
  %vm774 = vmor %vm566, %vm722
  %vm775 = vmor %vm567, %vm723
  %vm776 = vmor %vm568, %vm724
  %vm777 = vmor %vm569, %vm725
  %vm778 = vmor %vm570, %vm726
  %vm779 = vmor %vm571, %vm727
  %vm780 = vmor %vm572, %vm728
  %vm781 = vmor %vm573, %vm729
  %vm782 = vmor %vm574, %vm730
  %vm783 = vmor %vm575, %vm731
  %vm784 = vmor %vm576, %vm732
  %vm785 = vmor %vm577, %vm733
  %vm786 = vmor %vm578, %vm734
  %vm787 = vmor %vm579, %vm735
  %vm788 = vmor %vm580, %vm736
  %vm789 = vmor %vm581, %vm737
  %vm790 = vmor %vm582, %vm738
  %vm791 = vmor %vm583, %vm739
  %vm792 = vmor %vm584, %vm740
  %vm793 = vmor %vm585, %vm741
  %vm794 = vmor %vm586, %vm742
  %vm795 = vmor %vm587, %vm743
  %vm796 = vmor %vm588, %vm744
  %vm797 = vmor %vm589, %vm745
  %vm798 = vmor %vm590, %vm746
  %vm799 = vmor %vm591, %vm747
  %vm800 = vmor %vm592, %vm748
  %vm801 = vmor %vm593, %vm749
  %vm802 = vmor %vm594, %vm750
  %vm803 = vmor %vm595, %vm751
  %vm804 = vmor %vm596, %vm752
  %vm805 = vmor %vm597, %vm753
  %vm806 = vmor %vm598, %vm754
  %vm807 = vmor %vm599, %vm755
  %vm808 = vmor %vm600, %vm756
  %vm809 = vmor %vm601, %vm757
  %vm810 = vmor %vm602, %vm758
  %vm811 = vmor %vm603, %vm759
  %vm812 = vmor %vm604, %vm760
  %vm813 = vmor %vm605, %vm761
  %vm814 = vmor %vm606, %vm762
  %vm815 = vmor %vm607, %vm763
  %vm816 = vmor %vm608, %vm764
  %vm817 = vmor %vm609, %vm765
  %vm818 = vmor %vm610, %vm766
  %vm819 = vcmp.ge.s32.totalorder %v507, 208
  %vm820 = vcmp.ge.s32.totalorder %v508, 208
  %vm821 = vcmp.ge.s32.totalorder %v509, 208
  %vm822 = vcmp.ge.s32.totalorder %v510, 208
  %vm823 = vcmp.ge.s32.totalorder %v511, 208
  %vm824 = vcmp.ge.s32.totalorder %v512, 208
  %vm825 = vcmp.ge.s32.totalorder %v513, 208
  %vm826 = vcmp.ge.s32.totalorder %v514, 208
  %vm827 = vcmp.ge.s32.totalorder %v515, 208
  %vm828 = vcmp.ge.s32.totalorder %v516, 208
  %vm829 = vcmp.ge.s32.totalorder %v517, 208
  %vm830 = vcmp.ge.s32.totalorder %v518, 208
  %vm831 = vcmp.ge.s32.totalorder %v519, 208
  %vm832 = vcmp.ge.s32.totalorder %v520, 208
  %vm833 = vcmp.ge.s32.totalorder %v521, 208
  %vm834 = vcmp.ge.s32.totalorder %v522, 208
  %vm835 = vcmp.ge.s32.totalorder %v523, 208
  %vm836 = vcmp.ge.s32.totalorder %v524, 208
  %vm837 = vcmp.ge.s32.totalorder %v525, 208
  %vm838 = vcmp.ge.s32.totalorder %v526, 208
  %vm839 = vcmp.ge.s32.totalorder %v527, 208
  %vm840 = vcmp.ge.s32.totalorder %v528, 208
  %vm841 = vcmp.ge.s32.totalorder %v529, 208
  %vm842 = vcmp.ge.s32.totalorder %v530, 208
  %vm843 = vcmp.ge.s32.totalorder %v531, 208
  %vm844 = vcmp.ge.s32.totalorder %v532, 208
  %vm845 = vcmp.ge.s32.totalorder %v533, 208
  %vm846 = vcmp.ge.s32.totalorder %v534, 208
  %vm847 = vcmp.ge.s32.totalorder %v535, 208
  %vm848 = vcmp.ge.s32.totalorder %v536, 208
  %vm849 = vcmp.ge.s32.totalorder %v537, 208
  %vm850 = vcmp.ge.s32.totalorder %v538, 208
  %vm851 = vcmp.ge.s32.totalorder %v539, 208
  %vm852 = vcmp.ge.s32.totalorder %v540, 208
  %vm853 = vcmp.ge.s32.totalorder %v541, 208
  %vm854 = vcmp.ge.s32.totalorder %v542, 208
  %vm855 = vcmp.ge.s32.totalorder %v543, 208
  %vm856 = vcmp.ge.s32.totalorder %v544, 208
  %vm857 = vcmp.ge.s32.totalorder %v545, 208
  %vm858 = vcmp.ge.s32.totalorder %v546, 208
  %vm859 = vcmp.ge.s32.totalorder %v547, 208
  %vm860 = vcmp.ge.s32.totalorder %v548, 208
  %vm861 = vcmp.ge.s32.totalorder %v549, 208
  %vm862 = vcmp.ge.s32.totalorder %v550, 208
  %vm863 = vcmp.ge.s32.totalorder %v551, 208
  %vm864 = vcmp.ge.s32.totalorder %v552, 208
  %vm865 = vcmp.ge.s32.totalorder %v553, 208
  %vm866 = vcmp.ge.s32.totalorder %v554, 208
  %vm867 = vcmp.ge.s32.totalorder %v555, 208
  %vm868 = vcmp.ge.s32.totalorder %v556, 208
  %vm869 = vcmp.ge.s32.totalorder %v557, 208
  %vm870 = vcmp.ge.s32.totalorder %v558, 208
  %vm871 = vcmp.lt.s32.totalorder %v507, 306
  %vm872 = vcmp.lt.s32.totalorder %v508, 306
  %vm873 = vcmp.lt.s32.totalorder %v509, 306
  %vm874 = vcmp.lt.s32.totalorder %v510, 306
  %vm875 = vcmp.lt.s32.totalorder %v511, 306
  %vm876 = vcmp.lt.s32.totalorder %v512, 306
  %vm877 = vcmp.lt.s32.totalorder %v513, 306
  %vm878 = vcmp.lt.s32.totalorder %v514, 306
  %vm879 = vcmp.lt.s32.totalorder %v515, 306
  %vm880 = vcmp.lt.s32.totalorder %v516, 306
  %vm881 = vcmp.lt.s32.totalorder %v517, 306
  %vm882 = vcmp.lt.s32.totalorder %v518, 306
  %vm883 = vcmp.lt.s32.totalorder %v519, 306
  %vm884 = vcmp.lt.s32.totalorder %v520, 306
  %vm885 = vcmp.lt.s32.totalorder %v521, 306
  %vm886 = vcmp.lt.s32.totalorder %v522, 306
  %vm887 = vcmp.lt.s32.totalorder %v523, 306
  %vm888 = vcmp.lt.s32.totalorder %v524, 306
  %vm889 = vcmp.lt.s32.totalorder %v525, 306
  %vm890 = vcmp.lt.s32.totalorder %v526, 306
  %vm891 = vcmp.lt.s32.totalorder %v527, 306
  %vm892 = vcmp.lt.s32.totalorder %v528, 306
  %vm893 = vcmp.lt.s32.totalorder %v529, 306
  %vm894 = vcmp.lt.s32.totalorder %v530, 306
  %vm895 = vcmp.lt.s32.totalorder %v531, 306
  %vm896 = vcmp.lt.s32.totalorder %v532, 306
  %vm897 = vcmp.lt.s32.totalorder %v533, 306
  %vm898 = vcmp.lt.s32.totalorder %v534, 306
  %vm899 = vcmp.lt.s32.totalorder %v535, 306
  %vm900 = vcmp.lt.s32.totalorder %v536, 306
  %vm901 = vcmp.lt.s32.totalorder %v537, 306
  %vm902 = vcmp.lt.s32.totalorder %v538, 306
  %vm903 = vcmp.lt.s32.totalorder %v539, 306
  %vm904 = vcmp.lt.s32.totalorder %v540, 306
  %vm905 = vcmp.lt.s32.totalorder %v541, 306
  %vm906 = vcmp.lt.s32.totalorder %v542, 306
  %vm907 = vcmp.lt.s32.totalorder %v543, 306
  %vm908 = vcmp.lt.s32.totalorder %v544, 306
  %vm909 = vcmp.lt.s32.totalorder %v545, 306
  %vm910 = vcmp.lt.s32.totalorder %v546, 306
  %vm911 = vcmp.lt.s32.totalorder %v547, 306
  %vm912 = vcmp.lt.s32.totalorder %v548, 306
  %vm913 = vcmp.lt.s32.totalorder %v549, 306
  %vm914 = vcmp.lt.s32.totalorder %v550, 306
  %vm915 = vcmp.lt.s32.totalorder %v551, 306
  %vm916 = vcmp.lt.s32.totalorder %v552, 306
  %vm917 = vcmp.lt.s32.totalorder %v553, 306
  %vm918 = vcmp.lt.s32.totalorder %v554, 306
  %vm919 = vcmp.lt.s32.totalorder %v555, 306
  %vm920 = vcmp.lt.s32.totalorder %v556, 306
  %vm921 = vcmp.lt.s32.totalorder %v557, 306
  %vm922 = vcmp.lt.s32.totalorder %v558, 306
  %vm923 = vmand %vm819, %vm871
  %vm924 = vmand %vm820, %vm872
  %vm925 = vmand %vm821, %vm873
  %vm926 = vmand %vm822, %vm874
  %vm927 = vmand %vm823, %vm875
  %vm928 = vmand %vm824, %vm876
  %vm929 = vmand %vm825, %vm877
  %vm930 = vmand %vm826, %vm878
  %vm931 = vmand %vm827, %vm879
  %vm932 = vmand %vm828, %vm880
  %vm933 = vmand %vm829, %vm881
  %vm934 = vmand %vm830, %vm882
  %vm935 = vmand %vm831, %vm883
  %vm936 = vmand %vm832, %vm884
  %vm937 = vmand %vm833, %vm885
  %vm938 = vmand %vm834, %vm886
  %vm939 = vmand %vm835, %vm887
  %vm940 = vmand %vm836, %vm888
  %vm941 = vmand %vm837, %vm889
  %vm942 = vmand %vm838, %vm890
  %vm943 = vmand %vm839, %vm891
  %vm944 = vmand %vm840, %vm892
  %vm945 = vmand %vm841, %vm893
  %vm946 = vmand %vm842, %vm894
  %vm947 = vmand %vm843, %vm895
  %vm948 = vmand %vm844, %vm896
  %vm949 = vmand %vm845, %vm897
  %vm950 = vmand %vm846, %vm898
  %vm951 = vmand %vm847, %vm899
  %vm952 = vmand %vm848, %vm900
  %vm953 = vmand %vm849, %vm901
  %vm954 = vmand %vm850, %vm902
  %vm955 = vmand %vm851, %vm903
  %vm956 = vmand %vm852, %vm904
  %vm957 = vmand %vm853, %vm905
  %vm958 = vmand %vm854, %vm906
  %vm959 = vmand %vm855, %vm907
  %vm960 = vmand %vm856, %vm908
  %vm961 = vmand %vm857, %vm909
  %vm962 = vmand %vm858, %vm910
  %vm963 = vmand %vm859, %vm911
  %vm964 = vmand %vm860, %vm912
  %vm965 = vmand %vm861, %vm913
  %vm966 = vmand %vm862, %vm914
  %vm967 = vmand %vm863, %vm915
  %vm968 = vmand %vm864, %vm916
  %vm969 = vmand %vm865, %vm917
  %vm970 = vmand %vm866, %vm918
  %vm971 = vmand %vm867, %vm919
  %vm972 = vmand %vm868, %vm920
  %vm973 = vmand %vm869, %vm921
  %vm974 = vmand %vm870, %vm922
  %vm975 = vmor %vm767, %vm923
  %vm976 = vmor %vm768, %vm924
  %vm977 = vmor %vm769, %vm925
  %vm978 = vmor %vm770, %vm926
  %vm979 = vmor %vm771, %vm927
  %vm980 = vmor %vm772, %vm928
  %vm981 = vmor %vm773, %vm929
  %vm982 = vmor %vm774, %vm930
  %vm983 = vmor %vm775, %vm931
  %vm984 = vmor %vm776, %vm932
  %vm985 = vmor %vm777, %vm933
  %vm986 = vmor %vm778, %vm934
  %vm987 = vmor %vm779, %vm935
  %vm988 = vmor %vm780, %vm936
  %vm989 = vmor %vm781, %vm937
  %vm990 = vmor %vm782, %vm938
  %vm991 = vmor %vm783, %vm939
  %vm992 = vmor %vm784, %vm940
  %vm993 = vmor %vm785, %vm941
  %vm994 = vmor %vm786, %vm942
  %vm995 = vmor %vm787, %vm943
  %vm996 = vmor %vm788, %vm944
  %vm997 = vmor %vm789, %vm945
  %vm998 = vmor %vm790, %vm946
  %vm999 = vmor %vm791, %vm947
  %vm1000 = vmor %vm792, %vm948
  %vm1001 = vmor %vm793, %vm949
  %vm1002 = vmor %vm794, %vm950
  %vm1003 = vmor %vm795, %vm951
  %vm1004 = vmor %vm796, %vm952
  %vm1005 = vmor %vm797, %vm953
  %vm1006 = vmor %vm798, %vm954
  %vm1007 = vmor %vm799, %vm955
  %vm1008 = vmor %vm800, %vm956
  %vm1009 = vmor %vm801, %vm957
  %vm1010 = vmor %vm802, %vm958
  %vm1011 = vmor %vm803, %vm959
  %vm1012 = vmor %vm804, %vm960
  %vm1013 = vmor %vm805, %vm961
  %vm1014 = vmor %vm806, %vm962
  %vm1015 = vmor %vm807, %vm963
  %vm1016 = vmor %vm808, %vm964
  %vm1017 = vmor %vm809, %vm965
  %vm1018 = vmor %vm810, %vm966
  %vm1019 = vmor %vm811, %vm967
  %vm1020 = vmor %vm812, %vm968
  %vm1021 = vmor %vm813, %vm969
  %vm1022 = vmor %vm814, %vm970
  %vm1023 = vmor %vm815, %vm971
  %vm1024 = vmor %vm816, %vm972
  %vm1025 = vmor %vm817, %vm973
  %vm1026 = vmor %vm818, %vm974
  %vm1027 = vcmp.ge.s32.totalorder %v507, 312
  %vm1028 = vcmp.ge.s32.totalorder %v508, 312
  %vm1029 = vcmp.ge.s32.totalorder %v509, 312
  %vm1030 = vcmp.ge.s32.totalorder %v510, 312
  %vm1031 = vcmp.ge.s32.totalorder %v511, 312
  %vm1032 = vcmp.ge.s32.totalorder %v512, 312
  %vm1033 = vcmp.ge.s32.totalorder %v513, 312
  %vm1034 = vcmp.ge.s32.totalorder %v514, 312
  %vm1035 = vcmp.ge.s32.totalorder %v515, 312
  %vm1036 = vcmp.ge.s32.totalorder %v516, 312
  %vm1037 = vcmp.ge.s32.totalorder %v517, 312
  %vm1038 = vcmp.ge.s32.totalorder %v518, 312
  %vm1039 = vcmp.ge.s32.totalorder %v519, 312
  %vm1040 = vcmp.ge.s32.totalorder %v520, 312
  %vm1041 = vcmp.ge.s32.totalorder %v521, 312
  %vm1042 = vcmp.ge.s32.totalorder %v522, 312
  %vm1043 = vcmp.ge.s32.totalorder %v523, 312
  %vm1044 = vcmp.ge.s32.totalorder %v524, 312
  %vm1045 = vcmp.ge.s32.totalorder %v525, 312
  %vm1046 = vcmp.ge.s32.totalorder %v526, 312
  %vm1047 = vcmp.ge.s32.totalorder %v527, 312
  %vm1048 = vcmp.ge.s32.totalorder %v528, 312
  %vm1049 = vcmp.ge.s32.totalorder %v529, 312
  %vm1050 = vcmp.ge.s32.totalorder %v530, 312
  %vm1051 = vcmp.ge.s32.totalorder %v531, 312
  %vm1052 = vcmp.ge.s32.totalorder %v532, 312
  %vm1053 = vcmp.ge.s32.totalorder %v533, 312
  %vm1054 = vcmp.ge.s32.totalorder %v534, 312
  %vm1055 = vcmp.ge.s32.totalorder %v535, 312
  %vm1056 = vcmp.ge.s32.totalorder %v536, 312
  %vm1057 = vcmp.ge.s32.totalorder %v537, 312
  %vm1058 = vcmp.ge.s32.totalorder %v538, 312
  %vm1059 = vcmp.ge.s32.totalorder %v539, 312
  %vm1060 = vcmp.ge.s32.totalorder %v540, 312
  %vm1061 = vcmp.ge.s32.totalorder %v541, 312
  %vm1062 = vcmp.ge.s32.totalorder %v542, 312
  %vm1063 = vcmp.ge.s32.totalorder %v543, 312
  %vm1064 = vcmp.ge.s32.totalorder %v544, 312
  %vm1065 = vcmp.ge.s32.totalorder %v545, 312
  %vm1066 = vcmp.ge.s32.totalorder %v546, 312
  %vm1067 = vcmp.ge.s32.totalorder %v547, 312
  %vm1068 = vcmp.ge.s32.totalorder %v548, 312
  %vm1069 = vcmp.ge.s32.totalorder %v549, 312
  %vm1070 = vcmp.ge.s32.totalorder %v550, 312
  %vm1071 = vcmp.ge.s32.totalorder %v551, 312
  %vm1072 = vcmp.ge.s32.totalorder %v552, 312
  %vm1073 = vcmp.ge.s32.totalorder %v553, 312
  %vm1074 = vcmp.ge.s32.totalorder %v554, 312
  %vm1075 = vcmp.ge.s32.totalorder %v555, 312
  %vm1076 = vcmp.ge.s32.totalorder %v556, 312
  %vm1077 = vcmp.ge.s32.totalorder %v557, 312
  %vm1078 = vcmp.ge.s32.totalorder %v558, 312
  %vm1079 = vcmp.lt.s32.totalorder %v507, 410
  %vm1080 = vcmp.lt.s32.totalorder %v508, 410
  %vm1081 = vcmp.lt.s32.totalorder %v509, 410
  %vm1082 = vcmp.lt.s32.totalorder %v510, 410
  %vm1083 = vcmp.lt.s32.totalorder %v511, 410
  %vm1084 = vcmp.lt.s32.totalorder %v512, 410
  %vm1085 = vcmp.lt.s32.totalorder %v513, 410
  %vm1086 = vcmp.lt.s32.totalorder %v514, 410
  %vm1087 = vcmp.lt.s32.totalorder %v515, 410
  %vm1088 = vcmp.lt.s32.totalorder %v516, 410
  %vm1089 = vcmp.lt.s32.totalorder %v517, 410
  %vm1090 = vcmp.lt.s32.totalorder %v518, 410
  %vm1091 = vcmp.lt.s32.totalorder %v519, 410
  %vm1092 = vcmp.lt.s32.totalorder %v520, 410
  %vm1093 = vcmp.lt.s32.totalorder %v521, 410
  %vm1094 = vcmp.lt.s32.totalorder %v522, 410
  %vm1095 = vcmp.lt.s32.totalorder %v523, 410
  %vm1096 = vcmp.lt.s32.totalorder %v524, 410
  %vm1097 = vcmp.lt.s32.totalorder %v525, 410
  %vm1098 = vcmp.lt.s32.totalorder %v526, 410
  %vm1099 = vcmp.lt.s32.totalorder %v527, 410
  %vm1100 = vcmp.lt.s32.totalorder %v528, 410
  %vm1101 = vcmp.lt.s32.totalorder %v529, 410
  %vm1102 = vcmp.lt.s32.totalorder %v530, 410
  %vm1103 = vcmp.lt.s32.totalorder %v531, 410
  %vm1104 = vcmp.lt.s32.totalorder %v532, 410
  %vm1105 = vcmp.lt.s32.totalorder %v533, 410
  %vm1106 = vcmp.lt.s32.totalorder %v534, 410
  %vm1107 = vcmp.lt.s32.totalorder %v535, 410
  %vm1108 = vcmp.lt.s32.totalorder %v536, 410
  %vm1109 = vcmp.lt.s32.totalorder %v537, 410
  %vm1110 = vcmp.lt.s32.totalorder %v538, 410
  %vm1111 = vcmp.lt.s32.totalorder %v539, 410
  %vm1112 = vcmp.lt.s32.totalorder %v540, 410
  %vm1113 = vcmp.lt.s32.totalorder %v541, 410
  %vm1114 = vcmp.lt.s32.totalorder %v542, 410
  %vm1115 = vcmp.lt.s32.totalorder %v543, 410
  %vm1116 = vcmp.lt.s32.totalorder %v544, 410
  %vm1117 = vcmp.lt.s32.totalorder %v545, 410
  %vm1118 = vcmp.lt.s32.totalorder %v546, 410
  %vm1119 = vcmp.lt.s32.totalorder %v547, 410
  %vm1120 = vcmp.lt.s32.totalorder %v548, 410
  %vm1121 = vcmp.lt.s32.totalorder %v549, 410
  %vm1122 = vcmp.lt.s32.totalorder %v550, 410
  %vm1123 = vcmp.lt.s32.totalorder %v551, 410
  %vm1124 = vcmp.lt.s32.totalorder %v552, 410
  %vm1125 = vcmp.lt.s32.totalorder %v553, 410
  %vm1126 = vcmp.lt.s32.totalorder %v554, 410
  %vm1127 = vcmp.lt.s32.totalorder %v555, 410
  %vm1128 = vcmp.lt.s32.totalorder %v556, 410
  %vm1129 = vcmp.lt.s32.totalorder %v557, 410
  %vm1130 = vcmp.lt.s32.totalorder %v558, 410
  %vm1131 = vmand %vm1027, %vm1079
  %vm1132 = vmand %vm1028, %vm1080
  %vm1133 = vmand %vm1029, %vm1081
  %vm1134 = vmand %vm1030, %vm1082
  %vm1135 = vmand %vm1031, %vm1083
  %vm1136 = vmand %vm1032, %vm1084
  %vm1137 = vmand %vm1033, %vm1085
  %vm1138 = vmand %vm1034, %vm1086
  %vm1139 = vmand %vm1035, %vm1087
  %vm1140 = vmand %vm1036, %vm1088
  %vm1141 = vmand %vm1037, %vm1089
  %vm1142 = vmand %vm1038, %vm1090
  %vm1143 = vmand %vm1039, %vm1091
  %vm1144 = vmand %vm1040, %vm1092
  %vm1145 = vmand %vm1041, %vm1093
  %vm1146 = vmand %vm1042, %vm1094
  %vm1147 = vmand %vm1043, %vm1095
  %vm1148 = vmand %vm1044, %vm1096
  %vm1149 = vmand %vm1045, %vm1097
  %vm1150 = vmand %vm1046, %vm1098
  %vm1151 = vmand %vm1047, %vm1099
  %vm1152 = vmand %vm1048, %vm1100
  %vm1153 = vmand %vm1049, %vm1101
  %vm1154 = vmand %vm1050, %vm1102
  %vm1155 = vmand %vm1051, %vm1103
  %vm1156 = vmand %vm1052, %vm1104
  %vm1157 = vmand %vm1053, %vm1105
  %vm1158 = vmand %vm1054, %vm1106
  %vm1159 = vmand %vm1055, %vm1107
  %vm1160 = vmand %vm1056, %vm1108
  %vm1161 = vmand %vm1057, %vm1109
  %vm1162 = vmand %vm1058, %vm1110
  %vm1163 = vmand %vm1059, %vm1111
  %vm1164 = vmand %vm1060, %vm1112
  %vm1165 = vmand %vm1061, %vm1113
  %vm1166 = vmand %vm1062, %vm1114
  %vm1167 = vmand %vm1063, %vm1115
  %vm1168 = vmand %vm1064, %vm1116
  %vm1169 = vmand %vm1065, %vm1117
  %vm1170 = vmand %vm1066, %vm1118
  %vm1171 = vmand %vm1067, %vm1119
  %vm1172 = vmand %vm1068, %vm1120
  %vm1173 = vmand %vm1069, %vm1121
  %vm1174 = vmand %vm1070, %vm1122
  %vm1175 = vmand %vm1071, %vm1123
  %vm1176 = vmand %vm1072, %vm1124
  %vm1177 = vmand %vm1073, %vm1125
  %vm1178 = vmand %vm1074, %vm1126
  %vm1179 = vmand %vm1075, %vm1127
  %vm1180 = vmand %vm1076, %vm1128
  %vm1181 = vmand %vm1077, %vm1129
  %vm1182 = vmand %vm1078, %vm1130
  %vm1183 = vmor %vm975, %vm1131
  %vm1184 = vmor %vm976, %vm1132
  %vm1185 = vmor %vm977, %vm1133
  %vm1186 = vmor %vm978, %vm1134
  %vm1187 = vmor %vm979, %vm1135
  %vm1188 = vmor %vm980, %vm1136
  %vm1189 = vmor %vm981, %vm1137
  %vm1190 = vmor %vm982, %vm1138
  %vm1191 = vmor %vm983, %vm1139
  %vm1192 = vmor %vm984, %vm1140
  %vm1193 = vmor %vm985, %vm1141
  %vm1194 = vmor %vm986, %vm1142
  %vm1195 = vmor %vm987, %vm1143
  %vm1196 = vmor %vm988, %vm1144
  %vm1197 = vmor %vm989, %vm1145
  %vm1198 = vmor %vm990, %vm1146
  %vm1199 = vmor %vm991, %vm1147
  %vm1200 = vmor %vm992, %vm1148
  %vm1201 = vmor %vm993, %vm1149
  %vm1202 = vmor %vm994, %vm1150
  %vm1203 = vmor %vm995, %vm1151
  %vm1204 = vmor %vm996, %vm1152
  %vm1205 = vmor %vm997, %vm1153
  %vm1206 = vmor %vm998, %vm1154
  %vm1207 = vmor %vm999, %vm1155
  %vm1208 = vmor %vm1000, %vm1156
  %vm1209 = vmor %vm1001, %vm1157
  %vm1210 = vmor %vm1002, %vm1158
  %vm1211 = vmor %vm1003, %vm1159
  %vm1212 = vmor %vm1004, %vm1160
  %vm1213 = vmor %vm1005, %vm1161
  %vm1214 = vmor %vm1006, %vm1162
  %vm1215 = vmor %vm1007, %vm1163
  %vm1216 = vmor %vm1008, %vm1164
  %vm1217 = vmor %vm1009, %vm1165
  %vm1218 = vmor %vm1010, %vm1166
  %vm1219 = vmor %vm1011, %vm1167
  %vm1220 = vmor %vm1012, %vm1168
  %vm1221 = vmor %vm1013, %vm1169
  %vm1222 = vmor %vm1014, %vm1170
  %vm1223 = vmor %vm1015, %vm1171
  %vm1224 = vmor %vm1016, %vm1172
  %vm1225 = vmor %vm1017, %vm1173
  %vm1226 = vmor %vm1018, %vm1174
  %vm1227 = vmor %vm1019, %vm1175
  %vm1228 = vmor %vm1020, %vm1176
  %vm1229 = vmor %vm1021, %vm1177
  %vm1230 = vmor %vm1022, %vm1178
  %vm1231 = vmor %vm1023, %vm1179
  %vm1232 = vmor %vm1024, %vm1180
  %vm1233 = vmor %vm1025, %vm1181
  %vm1234 = vmor %vm1026, %vm1182
  %v1235 = vsel %vm1183, %v351, 0.0
  %v1236 = vsel %vm1184, %v354, 0.0
  %v1237 = vsel %vm1185, %v357, 0.0
  %v1238 = vsel %vm1186, %v360, 0.0
  %v1239 = vsel %vm1187, %v363, 0.0
  %v1240 = vsel %vm1188, %v366, 0.0
  %v1241 = vsel %vm1189, %v369, 0.0
  %v1242 = vsel %vm1190, %v372, 0.0
  %v1243 = vsel %vm1191, %v375, 0.0
  %v1244 = vsel %vm1192, %v378, 0.0
  %v1245 = vsel %vm1193, %v381, 0.0
  %v1246 = vsel %vm1194, %v384, 0.0
  %v1247 = vsel %vm1195, %v387, 0.0
  %v1248 = vsel %vm1196, %v390, 0.0
  %v1249 = vsel %vm1197, %v393, 0.0
  %v1250 = vsel %vm1198, %v396, 0.0
  %v1251 = vsel %vm1199, %v399, 0.0
  %v1252 = vsel %vm1200, %v402, 0.0
  %v1253 = vsel %vm1201, %v405, 0.0
  %v1254 = vsel %vm1202, %v408, 0.0
  %v1255 = vsel %vm1203, %v411, 0.0
  %v1256 = vsel %vm1204, %v414, 0.0
  %v1257 = vsel %vm1205, %v417, 0.0
  %v1258 = vsel %vm1206, %v420, 0.0
  %v1259 = vsel %vm1207, %v423, 0.0
  %v1260 = vsel %vm1208, %v426, 0.0
  %v1261 = vsel %vm1209, %v429, 0.0
  %v1262 = vsel %vm1210, %v432, 0.0
  %v1263 = vsel %vm1211, %v435, 0.0
  %v1264 = vsel %vm1212, %v438, 0.0
  %v1265 = vsel %vm1213, %v441, 0.0
  %v1266 = vsel %vm1214, %v444, 0.0
  %v1267 = vsel %vm1215, %v447, 0.0
  %v1268 = vsel %vm1216, %v450, 0.0
  %v1269 = vsel %vm1217, %v453, 0.0
  %v1270 = vsel %vm1218, %v456, 0.0
  %v1271 = vsel %vm1219, %v459, 0.0
  %v1272 = vsel %vm1220, %v462, 0.0
  %v1273 = vsel %vm1221, %v465, 0.0
  %v1274 = vsel %vm1222, %v468, 0.0
  %v1275 = vsel %vm1223, %v471, 0.0
  %v1276 = vsel %vm1224, %v474, 0.0
  %v1277 = vsel %vm1225, %v477, 0.0
  %v1278 = vsel %vm1226, %v480, 0.0
  %v1279 = vsel %vm1227, %v483, 0.0
  %v1280 = vsel %vm1228, %v486, 0.0
  %v1281 = vsel %vm1229, %v489, 0.0
  %v1282 = vsel %vm1230, %v492, 0.0
  %v1283 = vsel %vm1231, %v495, 0.0
  %v1284 = vsel %vm1232, %v498, 0.0
  %v1285 = vsel %vm1233, %v501, 0.0
  %v1286 = vsel %vm1234, %v504, 0.0
  %v1287 = vadd.f32 %v1235, %v1236
  %v1288 = vadd.f32 %v1287, %v1237
  %v1289 = vadd.f32 %v1288, %v1238
  %v1290 = vadd.f32 %v1289, %v1239
  %v1291 = vadd.f32 %v1290, %v1240
  %v1292 = vadd.f32 %v1291, %v1241
  %v1293 = vadd.f32 %v1292, %v1242
  %v1294 = vadd.f32 %v1293, %v1243
  %v1295 = vadd.f32 %v1294, %v1244
  %v1296 = vadd.f32 %v1295, %v1245
  %v1297 = vadd.f32 %v1296, %v1246
  %v1298 = vadd.f32 %v1297, %v1247
  %v1299 = vadd.f32 %v1298, %v1248
  %v1300 = vadd.f32 %v1299, %v1249
  %v1301 = vadd.f32 %v1300, %v1250
  %v1302 = vadd.f32 %v1301, %v1251
  %v1303 = vadd.f32 %v1302, %v1252
  %v1304 = vadd.f32 %v1303, %v1253
  %v1305 = vadd.f32 %v1304, %v1254
  %v1306 = vadd.f32 %v1305, %v1255
  %v1307 = vadd.f32 %v1306, %v1256
  %v1308 = vadd.f32 %v1307, %v1257
  %v1309 = vadd.f32 %v1308, %v1258
  %v1310 = vadd.f32 %v1309, %v1259
  %v1311 = vadd.f32 %v1310, %v1260
  %v1312 = vadd.f32 %v1311, %v1261
  %v1313 = vadd.f32 %v1312, %v1262
  %v1314 = vadd.f32 %v1313, %v1263
  %v1315 = vadd.f32 %v1314, %v1264
  %v1316 = vadd.f32 %v1315, %v1265
  %v1317 = vadd.f32 %v1316, %v1266
  %v1318 = vadd.f32 %v1317, %v1267
  %v1319 = vadd.f32 %v1318, %v1268
  %v1320 = vadd.f32 %v1319, %v1269
  %v1321 = vadd.f32 %v1320, %v1270
  %v1322 = vadd.f32 %v1321, %v1271
  %v1323 = vadd.f32 %v1322, %v1272
  %v1324 = vadd.f32 %v1323, %v1273
  %v1325 = vadd.f32 %v1324, %v1274
  %v1326 = vadd.f32 %v1325, %v1275
  %v1327 = vadd.f32 %v1326, %v1276
  %v1328 = vadd.f32 %v1327, %v1277
  %v1329 = vadd.f32 %v1328, %v1278
  %v1330 = vadd.f32 %v1329, %v1279
  %v1331 = vadd.f32 %v1330, %v1280
  %v1332 = vadd.f32 %v1331, %v1281
  %v1333 = vadd.f32 %v1332, %v1282
  %v1334 = vadd.f32 %v1333, %v1283
  %v1335 = vadd.f32 %v1334, %v1284
  %v1336 = vadd.f32 %v1335, %v1285
  %v1337 = vadd.f32 %v1336, %v1286
  %v1338 = vrot.slane %v1337, 4
  %v1339 = vadd.f32 %v1337, %v1338
  %v1340 = vrot.slane %v1339, 2
  %v1341 = vadd.f32 %v1339, %v1340
  %v1342 = vrot.slane %v1341, 1
  %v1343 = vadd.f32 %v1341, %v1342
  %v1344 = vmul.f32 %v1235, %v1235
  %v1345 = vmul.f32 %v1236, %v1236
  %v1346 = vmul.f32 %v1237, %v1237
  %v1347 = vmul.f32 %v1238, %v1238
  %v1348 = vmul.f32 %v1239, %v1239
  %v1349 = vmul.f32 %v1240, %v1240
  %v1350 = vmul.f32 %v1241, %v1241
  %v1351 = vmul.f32 %v1242, %v1242
  %v1352 = vmul.f32 %v1243, %v1243
  %v1353 = vmul.f32 %v1244, %v1244
  %v1354 = vmul.f32 %v1245, %v1245
  %v1355 = vmul.f32 %v1246, %v1246
  %v1356 = vmul.f32 %v1247, %v1247
  %v1357 = vmul.f32 %v1248, %v1248
  %v1358 = vmul.f32 %v1249, %v1249
  %v1359 = vmul.f32 %v1250, %v1250
  %v1360 = vmul.f32 %v1251, %v1251
  %v1361 = vmul.f32 %v1252, %v1252
  %v1362 = vmul.f32 %v1253, %v1253
  %v1363 = vmul.f32 %v1254, %v1254
  %v1364 = vmul.f32 %v1255, %v1255
  %v1365 = vmul.f32 %v1256, %v1256
  %v1366 = vmul.f32 %v1257, %v1257
  %v1367 = vmul.f32 %v1258, %v1258
  %v1368 = vmul.f32 %v1259, %v1259
  %v1369 = vmul.f32 %v1260, %v1260
  %v1370 = vmul.f32 %v1261, %v1261
  %v1371 = vmul.f32 %v1262, %v1262
  %v1372 = vmul.f32 %v1263, %v1263
  %v1373 = vmul.f32 %v1264, %v1264
  %v1374 = vmul.f32 %v1265, %v1265
  %v1375 = vmul.f32 %v1266, %v1266
  %v1376 = vmul.f32 %v1267, %v1267
  %v1377 = vmul.f32 %v1268, %v1268
  %v1378 = vmul.f32 %v1269, %v1269
  %v1379 = vmul.f32 %v1270, %v1270
  %v1380 = vmul.f32 %v1271, %v1271
  %v1381 = vmul.f32 %v1272, %v1272
  %v1382 = vmul.f32 %v1273, %v1273
  %v1383 = vmul.f32 %v1274, %v1274
  %v1384 = vmul.f32 %v1275, %v1275
  %v1385 = vmul.f32 %v1276, %v1276
  %v1386 = vmul.f32 %v1277, %v1277
  %v1387 = vmul.f32 %v1278, %v1278
  %v1388 = vmul.f32 %v1279, %v1279
  %v1389 = vmul.f32 %v1280, %v1280
  %v1390 = vmul.f32 %v1281, %v1281
  %v1391 = vmul.f32 %v1282, %v1282
  %v1392 = vmul.f32 %v1283, %v1283
  %v1393 = vmul.f32 %v1284, %v1284
  %v1394 = vmul.f32 %v1285, %v1285
  %v1395 = vmul.f32 %v1286, %v1286
  %v1396 = vadd.f32 %v1344, %v1345
  %v1397 = vadd.f32 %v1396, %v1346
  %v1398 = vadd.f32 %v1397, %v1347
  %v1399 = vadd.f32 %v1398, %v1348
  %v1400 = vadd.f32 %v1399, %v1349
  %v1401 = vadd.f32 %v1400, %v1350
  %v1402 = vadd.f32 %v1401, %v1351
  %v1403 = vadd.f32 %v1402, %v1352
  %v1404 = vadd.f32 %v1403, %v1353
  %v1405 = vadd.f32 %v1404, %v1354
  %v1406 = vadd.f32 %v1405, %v1355
  %v1407 = vadd.f32 %v1406, %v1356
  %v1408 = vadd.f32 %v1407, %v1357
  %v1409 = vadd.f32 %v1408, %v1358
  %v1410 = vadd.f32 %v1409, %v1359
  %v1411 = vadd.f32 %v1410, %v1360
  %v1412 = vadd.f32 %v1411, %v1361
  %v1413 = vadd.f32 %v1412, %v1362
  %v1414 = vadd.f32 %v1413, %v1363
  %v1415 = vadd.f32 %v1414, %v1364
  %v1416 = vadd.f32 %v1415, %v1365
  %v1417 = vadd.f32 %v1416, %v1366
  %v1418 = vadd.f32 %v1417, %v1367
  %v1419 = vadd.f32 %v1418, %v1368
  %v1420 = vadd.f32 %v1419, %v1369
  %v1421 = vadd.f32 %v1420, %v1370
  %v1422 = vadd.f32 %v1421, %v1371
  %v1423 = vadd.f32 %v1422, %v1372
  %v1424 = vadd.f32 %v1423, %v1373
  %v1425 = vadd.f32 %v1424, %v1374
  %v1426 = vadd.f32 %v1425, %v1375
  %v1427 = vadd.f32 %v1426, %v1376
  %v1428 = vadd.f32 %v1427, %v1377
  %v1429 = vadd.f32 %v1428, %v1378
  %v1430 = vadd.f32 %v1429, %v1379
  %v1431 = vadd.f32 %v1430, %v1380
  %v1432 = vadd.f32 %v1431, %v1381
  %v1433 = vadd.f32 %v1432, %v1382
  %v1434 = vadd.f32 %v1433, %v1383
  %v1435 = vadd.f32 %v1434, %v1384
  %v1436 = vadd.f32 %v1435, %v1385
  %v1437 = vadd.f32 %v1436, %v1386
  %v1438 = vadd.f32 %v1437, %v1387
  %v1439 = vadd.f32 %v1438, %v1388
  %v1440 = vadd.f32 %v1439, %v1389
  %v1441 = vadd.f32 %v1440, %v1390
  %v1442 = vadd.f32 %v1441, %v1391
  %v1443 = vadd.f32 %v1442, %v1392
  %v1444 = vadd.f32 %v1443, %v1393
  %v1445 = vadd.f32 %v1444, %v1394
  %v1446 = vadd.f32 %v1445, %v1395
  %v1447 = vrot.slane %v1446, 4
  %v1448 = vadd.f32 %v1446, %v1447
  %v1449 = vrot.slane %v1448, 2
  %v1450 = vadd.f32 %v1448, %v1449
  %v1451 = vrot.slane %v1450, 1
  %v1452 = vadd.f32 %v1450, %v1451
  %v1453 = vrcp.pop 392.0
  %v1454 = vmul.f32 392.0, %v1453
  %v1455 = vsub.f32 1.0, %v1454
  %v1456 = vmul.f32 %v1453, %v1455
  %v1457 = vadd.f32 %v1453, %v1456
  %vm1458 = vweird.f32 %v1453
  %v1459 = vsel %vm1458, %v1453, %v1457
  %v1460 = vmul.f32 %v1343, %v1459
  %v1461 = vmul.f32 %v1452, %v1459
  %v1462 = vmul.f32 %v1460, %v1460
  %v1463 = vsub.f32 %v1461, %v1462
  %v1464 = vadd.f32 %v1463, 1e-05
  %v1465 = vrsqrt.pop %v1464
  %v1466 = vmul.f32 %v1465, %v1464
  %v1467 = vmul.f32 %v1466, %v1465
  %v1468 = vmul.f32 0.5, %v1467
  %v1469 = vsub.f32 1.5, %v1468
  %v1470 = vmul.f32 %v1465, %v1469
  %vm1471 = vweird.f32 %v1464
  %vm1472 = vweird.f32 %v1465
  %vm1473 = vmor %vm1471, %vm1472
  %v1474 = vsel %vm1473, %v1465, %v1470
  %v1475 = vsub.f32 %v351, %v1460
  %v1476 = vsub.f32 %v354, %v1460
  %v1477 = vsub.f32 %v357, %v1460
  %v1478 = vsub.f32 %v360, %v1460
  %v1479 = vsub.f32 %v363, %v1460
  %v1480 = vsub.f32 %v366, %v1460
  %v1481 = vsub.f32 %v369, %v1460
  %v1482 = vsub.f32 %v372, %v1460
  %v1483 = vsub.f32 %v375, %v1460
  %v1484 = vsub.f32 %v378, %v1460
  %v1485 = vsub.f32 %v381, %v1460
  %v1486 = vsub.f32 %v384, %v1460
  %v1487 = vsub.f32 %v387, %v1460
  %v1488 = vsub.f32 %v390, %v1460
  %v1489 = vsub.f32 %v393, %v1460
  %v1490 = vsub.f32 %v396, %v1460
  %v1491 = vsub.f32 %v399, %v1460
  %v1492 = vsub.f32 %v402, %v1460
  %v1493 = vsub.f32 %v405, %v1460
  %v1494 = vsub.f32 %v408, %v1460
  %v1495 = vsub.f32 %v411, %v1460
  %v1496 = vsub.f32 %v414, %v1460
  %v1497 = vsub.f32 %v417, %v1460
  %v1498 = vsub.f32 %v420, %v1460
  %v1499 = vsub.f32 %v423, %v1460
  %v1500 = vsub.f32 %v426, %v1460
  %v1501 = vsub.f32 %v429, %v1460
  %v1502 = vsub.f32 %v432, %v1460
  %v1503 = vsub.f32 %v435, %v1460
  %v1504 = vsub.f32 %v438, %v1460
  %v1505 = vsub.f32 %v441, %v1460
  %v1506 = vsub.f32 %v444, %v1460
  %v1507 = vsub.f32 %v447, %v1460
  %v1508 = vsub.f32 %v450, %v1460
  %v1509 = vsub.f32 %v453, %v1460
  %v1510 = vsub.f32 %v456, %v1460
  %v1511 = vsub.f32 %v459, %v1460
  %v1512 = vsub.f32 %v462, %v1460
  %v1513 = vsub.f32 %v465, %v1460
  %v1514 = vsub.f32 %v468, %v1460
  %v1515 = vsub.f32 %v471, %v1460
  %v1516 = vsub.f32 %v474, %v1460
  %v1517 = vsub.f32 %v477, %v1460
  %v1518 = vsub.f32 %v480, %v1460
  %v1519 = vsub.f32 %v483, %v1460
  %v1520 = vsub.f32 %v486, %v1460
  %v1521 = vsub.f32 %v489, %v1460
  %v1522 = vsub.f32 %v492, %v1460
  %v1523 = vsub.f32 %v495, %v1460
  %v1524 = vsub.f32 %v498, %v1460
  %v1525 = vsub.f32 %v501, %v1460
  %v1526 = vsub.f32 %v504, %v1460
  %v1527 = vld [vmem:[%s3] sm:$0x1]
  %v1528 = vmul.f32 %v1474, %v1527
  %v1529 = vperm.slane %v1528, 0
  %v1530 = vmul.f32 %v1475, %v1529
  %v1531 = vmul.f32 %v1476, %v1529
  %v1532 = vmul.f32 %v1477, %v1529
  %v1533 = vmul.f32 %v1478, %v1529
  %v1534 = vmul.f32 %v1479, %v1529
  %v1535 = vmul.f32 %v1480, %v1529
  %v1536 = vmul.f32 %v1481, %v1529
  %v1537 = vmul.f32 %v1482, %v1529
  %v1538 = vmul.f32 %v1483, %v1529
  %v1539 = vmul.f32 %v1484, %v1529
  %v1540 = vmul.f32 %v1485, %v1529
  %v1541 = vmul.f32 %v1486, %v1529
  %v1542 = vmul.f32 %v1487, %v1529
  %v1543 = vmul.f32 %v1488, %v1529
  %v1544 = vmul.f32 %v1489, %v1529
  %v1545 = vmul.f32 %v1490, %v1529
  %v1546 = vmul.f32 %v1491, %v1529
  %v1547 = vmul.f32 %v1492, %v1529
  %v1548 = vmul.f32 %v1493, %v1529
  %v1549 = vmul.f32 %v1494, %v1529
  %v1550 = vmul.f32 %v1495, %v1529
  %v1551 = vmul.f32 %v1496, %v1529
  %v1552 = vmul.f32 %v1497, %v1529
  %v1553 = vmul.f32 %v1498, %v1529
  %v1554 = vmul.f32 %v1499, %v1529
  %v1555 = vmul.f32 %v1500, %v1529
  %v1556 = vmul.f32 %v1501, %v1529
  %v1557 = vmul.f32 %v1502, %v1529
  %v1558 = vmul.f32 %v1503, %v1529
  %v1559 = vmul.f32 %v1504, %v1529
  %v1560 = vmul.f32 %v1505, %v1529
  %v1561 = vmul.f32 %v1506, %v1529
  %v1562 = vmul.f32 %v1507, %v1529
  %v1563 = vmul.f32 %v1508, %v1529
  %v1564 = vmul.f32 %v1509, %v1529
  %v1565 = vmul.f32 %v1510, %v1529
  %v1566 = vmul.f32 %v1511, %v1529
  %v1567 = vmul.f32 %v1512, %v1529
  %v1568 = vmul.f32 %v1513, %v1529
  %v1569 = vmul.f32 %v1514, %v1529
  %v1570 = vmul.f32 %v1515, %v1529
  %v1571 = vmul.f32 %v1516, %v1529
  %v1572 = vmul.f32 %v1517, %v1529
  %v1573 = vmul.f32 %v1518, %v1529
  %v1574 = vmul.f32 %v1519, %v1529
  %v1575 = vmul.f32 %v1520, %v1529
  %v1576 = vmul.f32 %v1521, %v1529
  %v1577 = vmul.f32 %v1522, %v1529
  %v1578 = vmul.f32 %v1523, %v1529
  %v1579 = vmul.f32 %v1524, %v1529
  %v1580 = vmul.f32 %v1525, %v1529
  %v1581 = vmul.f32 %v1526, %v1529
  %v1582 = vld [vmem:[%s4] sm:$0x1]
  %v1584 = vperm.slane %v1582, 0
  %v1586 = vadd.f32 %v1530, %v1584
  %v1587 = vadd.f32 %v1531, %v1584
  %v1588 = vadd.f32 %v1532, %v1584
  %v1589 = vadd.f32 %v1533, %v1584
  %v1590 = vadd.f32 %v1534, %v1584
  %v1591 = vadd.f32 %v1535, %v1584
  %v1592 = vadd.f32 %v1536, %v1584
  %v1593 = vadd.f32 %v1537, %v1584
  %v1594 = vadd.f32 %v1538, %v1584
  %v1595 = vadd.f32 %v1539, %v1584
  %v1596 = vadd.f32 %v1540, %v1584
  %v1597 = vadd.f32 %v1541, %v1584
  %v1598 = vadd.f32 %v1542, %v1584
  %v1599 = vadd.f32 %v1543, %v1584
  %v1600 = vadd.f32 %v1544, %v1584
  %v1601 = vadd.f32 %v1545, %v1584
  %v1602 = vadd.f32 %v1546, %v1584
  %v1603 = vadd.f32 %v1547, %v1584
  %v1604 = vadd.f32 %v1548, %v1584
  %v1605 = vadd.f32 %v1549, %v1584
  %v1606 = vadd.f32 %v1550, %v1584
  %v1607 = vadd.f32 %v1551, %v1584
  %v1608 = vadd.f32 %v1552, %v1584
  %v1609 = vadd.f32 %v1553, %v1584
  %v1610 = vadd.f32 %v1554, %v1584
  %v1611 = vadd.f32 %v1555, %v1584
  %v1612 = vadd.f32 %v1556, %v1584
  %v1613 = vadd.f32 %v1557, %v1584
  %v1614 = vadd.f32 %v1558, %v1584
  %v1615 = vadd.f32 %v1559, %v1584
  %v1616 = vadd.f32 %v1560, %v1584
  %v1617 = vadd.f32 %v1561, %v1584
  %v1618 = vadd.f32 %v1562, %v1584
  %v1619 = vadd.f32 %v1563, %v1584
  %v1620 = vadd.f32 %v1564, %v1584
  %v1621 = vadd.f32 %v1565, %v1584
  %v1622 = vadd.f32 %v1566, %v1584
  %v1623 = vadd.f32 %v1567, %v1584
  %v1624 = vadd.f32 %v1568, %v1584
  %v1625 = vadd.f32 %v1569, %v1584
  %v1626 = vadd.f32 %v1570, %v1584
  %v1627 = vadd.f32 %v1571, %v1584
  %v1628 = vadd.f32 %v1572, %v1584
  %v1629 = vadd.f32 %v1573, %v1584
  %v1630 = vadd.f32 %v1574, %v1584
  %v1631 = vadd.f32 %v1575, %v1584
  %v1632 = vadd.f32 %v1576, %v1584
  %v1633 = vadd.f32 %v1577, %v1584
  %v1634 = vadd.f32 %v1578, %v1584
  %v1635 = vadd.f32 %v1579, %v1584
  %v1636 = vadd.f32 %v1580, %v1584
  %v1637 = vadd.f32 %v1581, %v1584
  %v1638 = vmax.f32 %v1586, 0.0
  %v1639 = vmax.f32 %v1587, 0.0
  %v1640 = vmax.f32 %v1588, 0.0
  %v1641 = vmax.f32 %v1589, 0.0
  %v1642 = vmax.f32 %v1590, 0.0
  %v1643 = vmax.f32 %v1591, 0.0
  %v1644 = vmax.f32 %v1592, 0.0
  %v1645 = vmax.f32 %v1593, 0.0
  %v1646 = vmax.f32 %v1594, 0.0
  %v1647 = vmax.f32 %v1595, 0.0
  %v1648 = vmax.f32 %v1596, 0.0
  %v1649 = vmax.f32 %v1597, 0.0
  %v1650 = vmax.f32 %v1598, 0.0
  %v1651 = vmax.f32 %v1599, 0.0
  %v1652 = vmax.f32 %v1600, 0.0
  %v1653 = vmax.f32 %v1601, 0.0
  %v1654 = vmax.f32 %v1602, 0.0
  %v1655 = vmax.f32 %v1603, 0.0
  %v1656 = vmax.f32 %v1604, 0.0
  %v1657 = vmax.f32 %v1605, 0.0
  %v1658 = vmax.f32 %v1606, 0.0
  %v1659 = vmax.f32 %v1607, 0.0
  %v1660 = vmax.f32 %v1608, 0.0
  %v1661 = vmax.f32 %v1609, 0.0
  %v1662 = vmax.f32 %v1610, 0.0
  %v1663 = vmax.f32 %v1611, 0.0
  %v1664 = vmax.f32 %v1612, 0.0
  %v1665 = vmax.f32 %v1613, 0.0
  %v1666 = vmax.f32 %v1614, 0.0
  %v1667 = vmax.f32 %v1615, 0.0
  %v1668 = vmax.f32 %v1616, 0.0
  %v1669 = vmax.f32 %v1617, 0.0
  %v1670 = vmax.f32 %v1618, 0.0
  %v1671 = vmax.f32 %v1619, 0.0
  %v1672 = vmax.f32 %v1620, 0.0
  %v1673 = vmax.f32 %v1621, 0.0
  %v1674 = vmax.f32 %v1622, 0.0
  %v1675 = vmax.f32 %v1623, 0.0
  %v1676 = vmax.f32 %v1624, 0.0
  %v1677 = vmax.f32 %v1625, 0.0
  %v1678 = vmax.f32 %v1626, 0.0
  %v1679 = vmax.f32 %v1627, 0.0
  %v1680 = vmax.f32 %v1628, 0.0
  %v1681 = vmax.f32 %v1629, 0.0
  %v1682 = vmax.f32 %v1630, 0.0
  %v1683 = vmax.f32 %v1631, 0.0
  %v1684 = vmax.f32 %v1632, 0.0
  %v1685 = vmax.f32 %v1633, 0.0
  %v1686 = vmax.f32 %v1634, 0.0
  %v1687 = vmax.f32 %v1635, 0.0
  %v1688 = vmax.f32 %v1636, 0.0
  %v1689 = vmax.f32 %v1637, 0.0
  %v1690 = vmax.f32 %v1638, %v1651
  %v1691 = vmax.f32 %v1639, %v1652
  %v1692 = vmax.f32 %v1640, %v1653
  %v1693 = vmax.f32 %v1641, %v1654
  %v1694 = vmax.f32 %v1642, %v1655
  %v1695 = vmax.f32 %v1643, %v1656
  %v1696 = vmax.f32 %v1644, %v1657
  %v1697 = vmax.f32 %v1645, %v1658
  %v1698 = vmax.f32 %v1646, %v1659
  %v1699 = vmax.f32 %v1647, %v1660
  %v1700 = vmax.f32 %v1648, %v1661
  %v1701 = vmax.f32 %v1649, %v1662
  %v1702 = vmax.f32 %v1650, %v1663
  %v1703 = vmax.f32 %v1664, %v1677
  %v1704 = vmax.f32 %v1665, %v1678
  %v1705 = vmax.f32 %v1666, %v1679
  %v1706 = vmax.f32 %v1667, %v1680
  %v1707 = vmax.f32 %v1668, %v1681
  %v1708 = vmax.f32 %v1669, %v1682
  %v1709 = vmax.f32 %v1670, %v1683
  %v1710 = vmax.f32 %v1671, %v1684
  %v1711 = vmax.f32 %v1672, %v1685
  %v1712 = vmax.f32 %v1673, %v1686
  %v1713 = vmax.f32 %v1674, %v1687
  %v1714 = vmax.f32 %v1675, %v1688
  %v1715 = vmax.f32 %v1676, %v1689
  %v1716 = vmax.f32 %v1690, %v1703
  %v1717 = vmax.f32 %v1691, %v1704
  %v1718 = vmax.f32 %v1692, %v1705
  %v1719 = vmax.f32 %v1693, %v1706
  %v1720 = vmax.f32 %v1694, %v1707
  %v1721 = vmax.f32 %v1695, %v1708
  %v1722 = vmax.f32 %v1696, %v1709
  %v1723 = vmax.f32 %v1697, %v1710
  %v1724 = vmax.f32 %v1698, %v1711
  %v1725 = vmax.f32 %v1699, %v1712
  %v1726 = vmax.f32 %v1700, %v1713
  %v1727 = vmax.f32 %v1701, %v1714
  %v1728 = vmax.f32 %v1702, %v1715
  %1729 = vst [vmem:[%s5] sm:$0xff] %v1716
  %1730 = vst [vmem:[%s5 + $0x8] sm:$0xff] %v1717
  %1731 = vst [vmem:[%s5 + $0x10] sm:$0xff] %v1718
  %1732 = vst [vmem:[%s5 + $0x18] sm:$0xff] %v1719
  %1733 = vst [vmem:[%s5 + $0x20] sm:$0xff] %v1720
  %1734 = vst [vmem:[%s5 + $0x28] sm:$0xff] %v1721
  %1735 = vst [vmem:[%s5 + $0x30] sm:$0xff] %v1722
  %1736 = vst [vmem:[%s5 + $0x38] sm:$0xff] %v1723
  %1737 = vst [vmem:[%s5 + $0x40] sm:$0xff] %v1724
  %1738 = vst [vmem:[%s5 + $0x48] sm:$0xff] %v1725
  %1739 = vst [vmem:[%s5 + $0x50] sm:$0xff] %v1726
  %1740 = vst [vmem:[%s5 + $0x58] sm:$0xff] %v1727
  %1741 = vst [vmem:[%s5 + $0x60] sm:$0xff] %v1728
  // Predicated region
  $region22: #{the_recognizer_forward.4} parent=0 // pred_check
    _
  $region23: #{the_recognizer_forward.4} parent=0 // pred_check_branch
    %1743 = sbr.rel (0) target = $region25
  $region24: #{the_recognizer_forward.4} parent=0 // pred_region
    _
  $region25: #{the_recognizer_forward.4} parent=0 // pred_fallthru
    _
  // Predicated region
  $region26: #{the_recognizer_forward.4} parent=0 // pred_check
    _
  $region27: #{the_recognizer_forward.4} parent=0 // pred_check_branch
    %1745 = sbr.rel (0) target = $region29
  $region28: #{the_recognizer_forward.4} parent=0 // pred_region
    _
  $region29: #{the_recognizer_forward.4} parent=0 // pred_fallthru
    _

// kernel: the_recognizer_forward.5
$region0: #{the_recognizer_forward.5}
  #allocation0 [shape = 'u32[]', space=smem, size = 0x4, offset = 0x4, fixed_abs, tag = 'smem constant byte address 0x4 - core index']
  #allocation1 [shape = 'u32[72,128]{1,0:T(1,128)}', space=vmem, size = 0x9000, scoped, tag = 'internal scratch']
  %s0 = inlined_call_operand.vmem [shape: f32[2,768], index: 0, kind: input, shape index: {}]
  %s1 = inlined_call_operand.vmem [shape: f32[768,384], index: 1, kind: input, shape index: {}]
  %s2 = inlined_call_operand.vmem [shape: f32[1,384], index: 2, kind: input, shape index: {}]
  %s3 = inlined_call_operand.vmem [shape: f32[384,128], index: 3, kind: input, shape index: {}]
  %s4 = inlined_call_operand.vmem [shape: f32[1,128], index: 4, kind: input, shape index: {}]
  %s5 = inlined_call_operand.hbm [shape: f32[2,128], index: 5, kind: output, shape index: {}]
  %s6 = sld [smem:[#allocation0]]
  $region30: #{the_recognizer_forward.5} parent=0
    _
  %s8 = ssub.s32 1, %s6
  %s9 = scalar_select 0, %s8, %s6
  $region1: #{the_recognizer_forward.5} parent=0
    #allocation2 [shape = 'u8[1024]{0}', space=vmem, size = 0x400, scoped, tag = 'output window, operand 0, single buffered']
    #allocation3 [shape = 's32[1]{0}', space=sflag, size = 0x4, scoped, tag = 'scoped memory for the_recognizer_forward.5']
    %10 = vsyncpa [#allocation3], 0
    // Predicated region
    $region2: #{the_recognizer_forward.5} parent=1 // pred_check
      _
    $region3: #{the_recognizer_forward.5} parent=1 // pred_check_branch
      %12 = sbr.rel (0) target = $region5
    $region4: #{the_recognizer_forward.5} parent=1 // pred_region
      _
    $region5: #{the_recognizer_forward.5} parent=1 // pred_fallthru
      _
    // Predicated region
    $region6: #{the_recognizer_forward.5} parent=1 // pred_check
      _
    $region7: #{the_recognizer_forward.5} parent=1 // pred_check_branch
      %14 = sbr.rel (0) target = $region9
    $region8: #{the_recognizer_forward.5} parent=1 // pred_region
      _
    $region9: #{the_recognizer_forward.5} parent=1 // pred_fallthru
      _
    // Predicated region
    $region10: #{the_recognizer_forward.5} parent=1 // pred_check
      _
    $region11: #{the_recognizer_forward.5} parent=1 // pred_check_branch
      %16 = sbr.rel (0) target = $region13
    $region12: #{the_recognizer_forward.5} parent=1 // pred_region
      _
    $region13: #{the_recognizer_forward.5} parent=1 // pred_fallthru
      _
    // Predicated region
    $region14: #{the_recognizer_forward.5} parent=1 // pred_check
      _
    $region15: #{the_recognizer_forward.5} parent=1 // pred_check_branch
      %18 = sbr.rel (0) target = $region17
    $region16: #{the_recognizer_forward.5} parent=1 // pred_region
      _
    $region17: #{the_recognizer_forward.5} parent=1 // pred_fallthru
      _
    // Predicated region
    $region18: #{the_recognizer_forward.5} parent=1 // pred_check
      _
    $region19: #{the_recognizer_forward.5} parent=1 // pred_check_branch
      %20 = sbr.rel (0) target = $region21
    $region20: #{the_recognizer_forward.5} parent=1 // pred_region
      _
    $region21: #{the_recognizer_forward.5} parent=1 // pred_fallthru
      _
    %v21 = vld [vmem:[%s0] sm:$0xff]
    %v22 = vld [vmem:[%s0 + $0x8] sm:$0xf]
    %v23 = vld [vmem:[%s1] sm:$0xff]
    %v24 = vld [vmem:[%s1 + $0x8] sm:$0xff]
    %v25 = vld [vmem:[%s1 + $0x10] sm:$0xff]
    %v26 = vld [vmem:[%s1 + $0x18] sm:$0xff]
    %v27 = vld [vmem:[%s1 + $0x20] sm:$0xff]
    %v28 = vld [vmem:[%s1 + $0x28] sm:$0xff]
    %v29 = vld [vmem:[%s1 + $0x30] sm:$0xff]
    %v30 = vld [vmem:[%s1 + $0x38] sm:$0xff]
    %v31 = vld [vmem:[%s1 + $0x40] sm:$0xff]
    %v32 = vld [vmem:[%s1 + $0x48] sm:$0xff]
    %v33 = vld [vmem:[%s1 + $0x50] sm:$0xff]
    %v34 = vld [vmem:[%s1 + $0x58] sm:$0xff]
    %v35 = vld [vmem:[%s1 + $0x60] sm:$0xff]
    %v36 = vld [vmem:[%s1 + $0x68] sm:$0xff]
    %v37 = vld [vmem:[%s1 + $0x70] sm:$0xff]
    %v38 = vld [vmem:[%s1 + $0x78] sm:$0xff]
    %v39 = vld [vmem:[%s1 + $0x80] sm:$0xff]
    %v40 = vld [vmem:[%s1 + $0x88] sm:$0xff]
    %v41 = vld [vmem:[%s1 + $0x90] sm:$0xff]
    %v42 = vld [vmem:[%s1 + $0x98] sm:$0xff]
    %v43 = vld [vmem:[%s1 + $0xa0] sm:$0xff]
    %v44 = vld [vmem:[%s1 + $0xa8] sm:$0xff]
    %v45 = vld [vmem:[%s1 + $0xb0] sm:$0xff]
    %v46 = vld [vmem:[%s1 + $0xb8] sm:$0xff]
    %v47 = vld [vmem:[%s1 + $0xc0] sm:$0xff]
    %v48 = vld [vmem:[%s1 + $0xc8] sm:$0xff]
    %v49 = vld [vmem:[%s1 + $0xd0] sm:$0xff]
    %v50 = vld [vmem:[%s1 + $0xd8] sm:$0xff]
    %v51 = vld [vmem:[%s1 + $0xe0] sm:$0xff]
    %v52 = vld [vmem:[%s1 + $0xe8] sm:$0xff]
    %v53 = vld [vmem:[%s1 + $0xf0] sm:$0xff]
    %v54 = vld [vmem:[%s1 + $0xf8] sm:$0xff]
    %v55 = vld [vmem:[%s1 + $0x100] sm:$0xff]
    %v56 = vld [vmem:[%s1 + $0x108] sm:$0xff]
    %v57 = vld [vmem:[%s1 + $0x110] sm:$0xff]
    %v58 = vld [vmem:[%s1 + $0x118] sm:$0xff]
    %v59 = vld [vmem:[%s1 + $0x120] sm:$0xff]
    %v60 = vld [vmem:[%s1 + $0x128] sm:$0xff]
    %v61 = vld [vmem:[%s1 + $0x130] sm:$0xff]
    %v62 = vld [vmem:[%s1 + $0x138] sm:$0xff]
    %v63 = vld [vmem:[%s1 + $0x140] sm:$0xff]
    %v64 = vld [vmem:[%s1 + $0x148] sm:$0xff]
    %v65 = vld [vmem:[%s1 + $0x150] sm:$0xff]
    %v66 = vld [vmem:[%s1 + $0x158] sm:$0xff]
    %v67 = vld [vmem:[%s1 + $0x160] sm:$0xff]
    %v68 = vld [vmem:[%s1 + $0x168] sm:$0xff]
    %v69 = vld [vmem:[%s1 + $0x170] sm:$0xff]
    %v70 = vld [vmem:[%s1 + $0x178] sm:$0xff]
    %v71 = vld [vmem:[%s1 + $0x180] sm:$0xff]
    %v72 = vld [vmem:[%s1 + $0x188] sm:$0xff]
    %v73 = vld [vmem:[%s1 + $0x190] sm:$0xff]
    %v74 = vld [vmem:[%s1 + $0x198] sm:$0xff]
    %v75 = vld [vmem:[%s1 + $0x1a0] sm:$0xff]
    %v76 = vld [vmem:[%s1 + $0x1a8] sm:$0xff]
    %v77 = vld [vmem:[%s1 + $0x1b0] sm:$0xff]
    %v78 = vld [vmem:[%s1 + $0x1b8] sm:$0xff]
    %v79 = vld [vmem:[%s1 + $0x1c0] sm:$0xff]
    %v80 = vld [vmem:[%s1 + $0x1c8] sm:$0xff]
    %v81 = vld [vmem:[%s1 + $0x1d0] sm:$0xff]
    %v82 = vld [vmem:[%s1 + $0x1d8] sm:$0xff]
    %v83 = vld [vmem:[%s1 + $0x1e0] sm:$0xff]
    %v84 = vld [vmem:[%s1 + $0x1e8] sm:$0xff]
    %v85 = vld [vmem:[%s1 + $0x1f0] sm:$0xff]
    %v86 = vld [vmem:[%s1 + $0x1f8] sm:$0xff]
    %v87 = vld [vmem:[%s1 + $0x200] sm:$0xff]
    %v88 = vld [vmem:[%s1 + $0x208] sm:$0xff]
    %v89 = vld [vmem:[%s1 + $0x210] sm:$0xff]
    %v90 = vld [vmem:[%s1 + $0x218] sm:$0xff]
    %v91 = vld [vmem:[%s1 + $0x220] sm:$0xff]
    %v92 = vld [vmem:[%s1 + $0x228] sm:$0xff]
    %v93 = vld [vmem:[%s1 + $0x230] sm:$0xff]
    %v94 = vld [vmem:[%s1 + $0x238] sm:$0xff]
    %v95 = vld [vmem:[%s1 + $0x240] sm:$0xff]
    %v96 = vld [vmem:[%s1 + $0x248] sm:$0xff]
    %v97 = vld [vmem:[%s1 + $0x250] sm:$0xff]
    %v98 = vld [vmem:[%s1 + $0x258] sm:$0xff]
    %v99 = vld [vmem:[%s1 + $0x260] sm:$0xff]
    %v100 = vld [vmem:[%s1 + $0x268] sm:$0xff]
    %v101 = vld [vmem:[%s1 + $0x270] sm:$0xff]
    %v102 = vld [vmem:[%s1 + $0x278] sm:$0xff]
    %v103 = vld [vmem:[%s1 + $0x280] sm:$0xff]
    %v104 = vld [vmem:[%s1 + $0x288] sm:$0xff]
    %v105 = vld [vmem:[%s1 + $0x290] sm:$0xff]
    %v106 = vld [vmem:[%s1 + $0x298] sm:$0xff]
    %v107 = vld [vmem:[%s1 + $0x2a0] sm:$0xff]
    %v108 = vld [vmem:[%s1 + $0x2a8] sm:$0xff]
    %v109 = vld [vmem:[%s1 + $0x2b0] sm:$0xff]
    %v110 = vld [vmem:[%s1 + $0x2b8] sm:$0xff]
    %v111 = vld [vmem:[%s1 + $0x2c0] sm:$0xff]
    %v112 = vld [vmem:[%s1 + $0x2c8] sm:$0xff]
    %v113 = vld [vmem:[%s1 + $0x2d0] sm:$0xff]
    %v114 = vld [vmem:[%s1 + $0x2d8] sm:$0xff]
    %v115 = vld [vmem:[%s1 + $0x2e0] sm:$0xff]
    %v116 = vld [vmem:[%s1 + $0x2e8] sm:$0xff]
    %v117 = vld [vmem:[%s1 + $0x2f0] sm:$0xff]
    %v118 = vld [vmem:[%s1 + $0x2f8] sm:$0xff]
    %v119 = vld [vmem:[%s1 + $0x300] sm:$0xff]
    %v120 = vld [vmem:[%s1 + $0x308] sm:$0xff]
    %v121 = vld [vmem:[%s1 + $0x310] sm:$0xff]
    %v122 = vld [vmem:[%s1 + $0x318] sm:$0xff]
    %v123 = vld [vmem:[%s1 + $0x320] sm:$0xff]
    %v124 = vld [vmem:[%s1 + $0x328] sm:$0xff]
    %v125 = vld [vmem:[%s1 + $0x330] sm:$0xff]
    %v126 = vld [vmem:[%s1 + $0x338] sm:$0xff]
    %v127 = vld [vmem:[%s1 + $0x340] sm:$0xff]
    %v128 = vld [vmem:[%s1 + $0x348] sm:$0xff]
    %v129 = vld [vmem:[%s1 + $0x350] sm:$0xff]
    %v130 = vld [vmem:[%s1 + $0x358] sm:$0xff]
    %v131 = vld [vmem:[%s1 + $0x360] sm:$0xff]
    %v132 = vld [vmem:[%s1 + $0x368] sm:$0xff]
    %v133 = vld [vmem:[%s1 + $0x370] sm:$0xff]
    %v134 = vld [vmem:[%s1 + $0x378] sm:$0xff]
    %v135 = vld [vmem:[%s1 + $0x380] sm:$0xff]
    %v136 = vld [vmem:[%s1 + $0x388] sm:$0xff]
    %v137 = vld [vmem:[%s1 + $0x390] sm:$0xff]
    %v138 = vld [vmem:[%s1 + $0x398] sm:$0xff]
    %v139 = vld [vmem:[%s1 + $0x3a0] sm:$0xff]
    %v140 = vld [vmem:[%s1 + $0x3a8] sm:$0xff]
    %v141 = vld [vmem:[%s1 + $0x3b0] sm:$0xff]
    %v142 = vld [vmem:[%s1 + $0x3b8] sm:$0xff]
    %v143 = vld [vmem:[%s1 + $0x3c0] sm:$0xff]
    %v144 = vld [vmem:[%s1 + $0x3c8] sm:$0xff]
    %v145 = vld [vmem:[%s1 + $0x3d0] sm:$0xff]
    %v146 = vld [vmem:[%s1 + $0x3d8] sm:$0xff]
    %v147 = vld [vmem:[%s1 + $0x3e0] sm:$0xff]
    %v148 = vld [vmem:[%s1 + $0x3e8] sm:$0xff]
    %v149 = vld [vmem:[%s1 + $0x3f0] sm:$0xff]
    %v150 = vld [vmem:[%s1 + $0x3f8] sm:$0xff]
    %v151 = vld [vmem:[%s1 + $0x400] sm:$0xff]
    %v152 = vld [vmem:[%s1 + $0x408] sm:$0xff]
    %v153 = vld [vmem:[%s1 + $0x410] sm:$0xff]
    %v154 = vld [vmem:[%s1 + $0x418] sm:$0xff]
    %v155 = vld [vmem:[%s1 + $0x420] sm:$0xff]
    %v156 = vld [vmem:[%s1 + $0x428] sm:$0xff]
    %v157 = vld [vmem:[%s1 + $0x430] sm:$0xff]
    %v158 = vld [vmem:[%s1 + $0x438] sm:$0xff]
    %v159 = vld [vmem:[%s1 + $0x440] sm:$0xff]
    %v160 = vld [vmem:[%s1 + $0x448] sm:$0xff]
    %v161 = vld [vmem:[%s1 + $0x450] sm:$0xff]
    %v162 = vld [vmem:[%s1 + $0x458] sm:$0xff]
    %v163 = vld [vmem:[%s1 + $0x460] sm:$0xff]
    %v164 = vld [vmem:[%s1 + $0x468] sm:$0xff]
    %v165 = vld [vmem:[%s1 + $0x470] sm:$0xff]
    %v166 = vld [vmem:[%s1 + $0x478] sm:$0xff]
    %v167 = vld [vmem:[%s1 + $0x480] sm:$0xff]
    %v168 = vld [vmem:[%s1 + $0x488] sm:$0xff]
    %v169 = vld [vmem:[%s1 + $0x490] sm:$0xff]
    %v170 = vld [vmem:[%s1 + $0x498] sm:$0xff]
    %v171 = vld [vmem:[%s1 + $0x4a0] sm:$0xff]
    %v172 = vld [vmem:[%s1 + $0x4a8] sm:$0xff]
    %v173 = vld [vmem:[%s1 + $0x4b0] sm:$0xff]
    %v174 = vld [vmem:[%s1 + $0x4b8] sm:$0xff]
    %v175 = vld [vmem:[%s1 + $0x4c0] sm:$0xff]
    %v176 = vld [vmem:[%s1 + $0x4c8] sm:$0xff]
    %v177 = vld [vmem:[%s1 + $0x4d0] sm:$0xff]
    %v178 = vld [vmem:[%s1 + $0x4d8] sm:$0xff]
    %v179 = vld [vmem:[%s1 + $0x4e0] sm:$0xff]
    %v180 = vld [vmem:[%s1 + $0x4e8] sm:$0xff]
    %v181 = vld [vmem:[%s1 + $0x4f0] sm:$0xff]
    %v182 = vld [vmem:[%s1 + $0x4f8] sm:$0xff]
    %v183 = vld [vmem:[%s1 + $0x500] sm:$0xff]
    %v184 = vld [vmem:[%s1 + $0x508] sm:$0xff]
    %v185 = vld [vmem:[%s1 + $0x510] sm:$0xff]
    %v186 = vld [vmem:[%s1 + $0x518] sm:$0xff]
    %v187 = vld [vmem:[%s1 + $0x520] sm:$0xff]
    %v188 = vld [vmem:[%s1 + $0x528] sm:$0xff]
    %v189 = vld [vmem:[%s1 + $0x530] sm:$0xff]
    %v190 = vld [vmem:[%s1 + $0x538] sm:$0xff]
    %v191 = vld [vmem:[%s1 + $0x540] sm:$0xff]
    %v192 = vld [vmem:[%s1 + $0x548] sm:$0xff]
    %v193 = vld [vmem:[%s1 + $0x550] sm:$0xff]
    %v194 = vld [vmem:[%s1 + $0x558] sm:$0xff]
    %v195 = vld [vmem:[%s1 + $0x560] sm:$0xff]
    %v196 = vld [vmem:[%s1 + $0x568] sm:$0xff]
    %v197 = vld [vmem:[%s1 + $0x570] sm:$0xff]
    %v198 = vld [vmem:[%s1 + $0x578] sm:$0xff]
    %v199 = vld [vmem:[%s1 + $0x580] sm:$0xff]
    %v200 = vld [vmem:[%s1 + $0x588] sm:$0xff]
    %v201 = vld [vmem:[%s1 + $0x590] sm:$0xff]
    %v202 = vld [vmem:[%s1 + $0x598] sm:$0xff]
    %v203 = vld [vmem:[%s1 + $0x5a0] sm:$0xff]
    %v204 = vld [vmem:[%s1 + $0x5a8] sm:$0xff]
    %v205 = vld [vmem:[%s1 + $0x5b0] sm:$0xff]
    %v206 = vld [vmem:[%s1 + $0x5b8] sm:$0xff]
    %v207 = vld [vmem:[%s1 + $0x5c0] sm:$0xff]
    %v208 = vld [vmem:[%s1 + $0x5c8] sm:$0xff]
    %v209 = vld [vmem:[%s1 + $0x5d0] sm:$0xff]
    %v210 = vld [vmem:[%s1 + $0x5d8] sm:$0xff]
    %v211 = vld [vmem:[%s1 + $0x5e0] sm:$0xff]
    %v212 = vld [vmem:[%s1 + $0x5e8] sm:$0xff]
    %v213 = vld [vmem:[%s1 + $0x5f0] sm:$0xff]
    %v214 = vld [vmem:[%s1 + $0x5f8] sm:$0xff]
    %v215 = vld [vmem:[%s1 + $0x600] sm:$0xff]
    %v216 = vld [vmem:[%s1 + $0x608] sm:$0xff]
    %v217 = vld [vmem:[%s1 + $0x610] sm:$0xff]
    %v218 = vld [vmem:[%s1 + $0x618] sm:$0xff]
    %v219 = vld [vmem:[%s1 + $0x620] sm:$0xff]
    %v220 = vld [vmem:[%s1 + $0x628] sm:$0xff]
    %v221 = vld [vmem:[%s1 + $0x630] sm:$0xff]
    %v222 = vld [vmem:[%s1 + $0x638] sm:$0xff]
    %v223 = vld [vmem:[%s1 + $0x640] sm:$0xff]
    %v224 = vld [vmem:[%s1 + $0x648] sm:$0xff]
    %v225 = vld [vmem:[%s1 + $0x650] sm:$0xff]
    %v226 = vld [vmem:[%s1 + $0x658] sm:$0xff]
    %v227 = vld [vmem:[%s1 + $0x660] sm:$0xff]
    %v228 = vld [vmem:[%s1 + $0x668] sm:$0xff]
    %v229 = vld [vmem:[%s1 + $0x670] sm:$0xff]
    %v230 = vld [vmem:[%s1 + $0x678] sm:$0xff]
    %v231 = vld [vmem:[%s1 + $0x680] sm:$0xff]
    %v232 = vld [vmem:[%s1 + $0x688] sm:$0xff]
    %v233 = vld [vmem:[%s1 + $0x690] sm:$0xff]
    %v234 = vld [vmem:[%s1 + $0x698] sm:$0xff]
    %v235 = vld [vmem:[%s1 + $0x6a0] sm:$0xff]
    %v236 = vld [vmem:[%s1 + $0x6a8] sm:$0xff]
    %v237 = vld [vmem:[%s1 + $0x6b0] sm:$0xff]
    %v238 = vld [vmem:[%s1 + $0x6b8] sm:$0xff]
    %v239 = vld [vmem:[%s1 + $0x6c0] sm:$0xff]
    %v240 = vld [vmem:[%s1 + $0x6c8] sm:$0xff]
    %v241 = vld [vmem:[%s1 + $0x6d0] sm:$0xff]
    %v242 = vld [vmem:[%s1 + $0x6d8] sm:$0xff]
    %v243 = vld [vmem:[%s1 + $0x6e0] sm:$0xff]
    %v244 = vld [vmem:[%s1 + $0x6e8] sm:$0xff]
    %v245 = vld [vmem:[%s1 + $0x6f0] sm:$0xff]
    %v246 = vld [vmem:[%s1 + $0x6f8] sm:$0xff]
    %v247 = vld [vmem:[%s1 + $0x700] sm:$0xff]
    %v248 = vld [vmem:[%s1 + $0x708] sm:$0xff]
    %v249 = vld [vmem:[%s1 + $0x710] sm:$0xff]
    %v250 = vld [vmem:[%s1 + $0x718] sm:$0xff]
    %v251 = vld [vmem:[%s1 + $0x720] sm:$0xff]
    %v252 = vld [vmem:[%s1 + $0x728] sm:$0xff]
    %v253 = vld [vmem:[%s1 + $0x730] sm:$0xff]
    %v254 = vld [vmem:[%s1 + $0x738] sm:$0xff]
    %v255 = vld [vmem:[%s1 + $0x740] sm:$0xff]
    %v256 = vld [vmem:[%s1 + $0x748] sm:$0xff]
    %v257 = vld [vmem:[%s1 + $0x750] sm:$0xff]
    %v258 = vld [vmem:[%s1 + $0x758] sm:$0xff]
    %v259 = vld [vmem:[%s1 + $0x760] sm:$0xff]
    %v260 = vld [vmem:[%s1 + $0x768] sm:$0xff]
    %v261 = vld [vmem:[%s1 + $0x770] sm:$0xff]
    %v262 = vld [vmem:[%s1 + $0x778] sm:$0xff]
    %v263 = vld [vmem:[%s1 + $0x780] sm:$0xff]
    %v264 = vld [vmem:[%s1 + $0x788] sm:$0xff]
    %v265 = vld [vmem:[%s1 + $0x790] sm:$0xff]
    %v266 = vld [vmem:[%s1 + $0x798] sm:$0xff]
    %v267 = vld [vmem:[%s1 + $0x7a0] sm:$0xff]
    %v268 = vld [vmem:[%s1 + $0x7a8] sm:$0xff]
    %v269 = vld [vmem:[%s1 + $0x7b0] sm:$0xff]
    %v270 = vld [vmem:[%s1 + $0x7b8] sm:$0xff]
    %v271 = vld [vmem:[%s1 + $0x7c0] sm:$0xff]
    %v272 = vld [vmem:[%s1 + $0x7c8] sm:$0xff]
    %v273 = vld [vmem:[%s1 + $0x7d0] sm:$0xff]
    %v274 = vld [vmem:[%s1 + $0x7d8] sm:$0xff]
    %v275 = vld [vmem:[%s1 + $0x7e0] sm:$0xff]
    %v276 = vld [vmem:[%s1 + $0x7e8] sm:$0xff]
    %v277 = vld [vmem:[%s1 + $0x7f0] sm:$0xff]
    %v278 = vld [vmem:[%s1 + $0x7f8] sm:$0xff]
    %v279 = vld [vmem:[%s1 + $0x800] sm:$0xff]
    %v280 = vld [vmem:[%s1 + $0x808] sm:$0xff]
    %v281 = vld [vmem:[%s1 + $0x810] sm:$0xff]
    %v282 = vld [vmem:[%s1 + $0x818] sm:$0xff]
    %v283 = vld [vmem:[%s1 + $0x820] sm:$0xff]
    %v284 = vld [vmem:[%s1 + $0x828] sm:$0xff]
    %v285 = vld [vmem:[%s1 + $0x830] sm:$0xff]
    %v286 = vld [vmem:[%s1 + $0x838] sm:$0xff]
    %v287 = vld [vmem:[%s1 + $0x840] sm:$0xff]
    %v288 = vld [vmem:[%s1 + $0x848] sm:$0xff]
    %v289 = vld [vmem:[%s1 + $0x850] sm:$0xff]
    %v290 = vld [vmem:[%s1 + $0x858] sm:$0xff]
    %v291 = vld [vmem:[%s1 + $0x860] sm:$0xff]
    %v292 = vld [vmem:[%s1 + $0x868] sm:$0xff]
    %v293 = vld [vmem:[%s1 + $0x870] sm:$0xff]
    %v294 = vld [vmem:[%s1 + $0x878] sm:$0xff]
    %v295 = vld [vmem:[%s1 + $0x880] sm:$0xff]
    %v296 = vld [vmem:[%s1 + $0x888] sm:$0xff]
    %v297 = vld [vmem:[%s1 + $0x890] sm:$0xff]
    %v298 = vld [vmem:[%s1 + $0x898] sm:$0xff]
    %v299 = vld [vmem:[%s1 + $0x8a0] sm:$0xff]
    %v300 = vld [vmem:[%s1 + $0x8a8] sm:$0xff]
    %v301 = vld [vmem:[%s1 + $0x8b0] sm:$0xff]
    %v302 = vld [vmem:[%s1 + $0x8b8] sm:$0xff]
    %v303 = vld [vmem:[%s1 + $0x8c0] sm:$0xff]
    %v304 = vld [vmem:[%s1 + $0x8c8] sm:$0xff]
    %v305 = vld [vmem:[%s1 + $0x8d0] sm:$0xff]
    %v306 = vld [vmem:[%s1 + $0x8d8] sm:$0xff]
    %v307 = vld [vmem:[%s1 + $0x8e0] sm:$0xff]
    %v308 = vld [vmem:[%s1 + $0x8e8] sm:$0xff]
    %v309 = vld [vmem:[%s1 + $0x8f0] sm:$0xff]
    %v310 = vld [vmem:[%s1 + $0x8f8] sm:$0xff]
    %v311 = vld [vmem:[%s2] sm:$0x7]
    %v313 = vperm.slane %v311, 0
    %v314 = vperm.slane %v311, 1
    %v315 = vperm.slane %v311, 2
    %321 = vst [vmem:[#allocation1] ss:$4 sm:$0xff] %v21
    %s322 = scalar_lea.vmem [#allocation1], 32
    %323 = vst [vmem:[%s322] ss:$4 sm:$0xff] %v22
    %v324 = vld.sshfl [vmem:[#allocation1] sm:$0xff pattern:$0x73625140]
    %v325 = vld.sshfl [vmem:[#allocation1 + $0x8] sm:$0xff pattern:$0x73625140]
    %v326 = vld.sshfl [vmem:[#allocation1 + $0x10] sm:$0xff pattern:$0x73625140]
    %v327 = vld.sshfl [vmem:[#allocation1 + $0x18] sm:$0xff pattern:$0x73625140]
    %v328 = vld.sshfl [vmem:[#allocation1 + $0x20] sm:$0xff pattern:$0x73625140]
    %v329 = vld.sshfl [vmem:[#allocation1 + $0x28] sm:$0xff pattern:$0x73625140]
    %336 = vmatpush.msra.mxu0 %v68
    %337 = vmatpush.msra.mxu0 %v65
    %338 = vmatpush.msra.mxu0 %v62
    %339 = vmatpush.msra.mxu0 %v59
    %340 = vmatpush.msra.mxu0 %v56
    %341 = vmatpush.msra.mxu0 %v53
    %342 = vmatpush.msra.mxu0 %v50
    %343 = vmatpush.msra.mxu0 %v47
    %344 = vmatpush.msra.mxu0 %v44
    %345 = vmatpush.msra.mxu0 %v41
    %346 = vmatpush.msra.mxu0 %v38
    %347 = vmatpush.msra.mxu0 %v35
    %348 = vmatpush.msra.mxu0 %v32
    %349 = vmatpush.msra.mxu0 %v29
    %350 = vmatpush.msra.mxu0 %v26
    %351 = vmatpush.msra.mxu0 %v23
    %352 = vmatmul.f32.gmra.mxu0 %v324
    %v353 = vpop.f32.mrf.mxu0
    %v354 = vadd.f32 %v313, %v353
    %355 = vdwg.mxu0
    %356 = vmatpush.msra.mxu0 %v116
    %357 = vmatpush.msra.mxu0 %v113
    %358 = vmatpush.msra.mxu0 %v110
    %359 = vmatpush.msra.mxu0 %v107
    %360 = vmatpush.msra.mxu0 %v104
    %361 = vmatpush.msra.mxu0 %v101
    %362 = vmatpush.msra.mxu0 %v98
    %363 = vmatpush.msra.mxu0 %v95
    %364 = vmatpush.msra.mxu0 %v92
    %365 = vmatpush.msra.mxu0 %v89
    %366 = vmatpush.msra.mxu0 %v86
    %367 = vmatpush.msra.mxu0 %v83
    %368 = vmatpush.msra.mxu0 %v80
    %369 = vmatpush.msra.mxu0 %v77
    %370 = vmatpush.msra.mxu0 %v74
    %371 = vmatpush.msra.mxu0 %v71
    %372 = vmatmul.f32.gmra.mxu0 %v325
    %v373 = vpop.f32.mrf.mxu0
    %v374 = vadd.f32 %v354, %v373
    %375 = vdwg.mxu0
    %376 = vmatpush.msra.mxu0 %v164
    %377 = vmatpush.msra.mxu0 %v161
    %378 = vmatpush.msra.mxu0 %v158
    %379 = vmatpush.msra.mxu0 %v155
    %380 = vmatpush.msra.mxu0 %v152
    %381 = vmatpush.msra.mxu0 %v149
    %382 = vmatpush.msra.mxu0 %v146
    %383 = vmatpush.msra.mxu0 %v143
    %384 = vmatpush.msra.mxu0 %v140
    %385 = vmatpush.msra.mxu0 %v137
    %386 = vmatpush.msra.mxu0 %v134
    %387 = vmatpush.msra.mxu0 %v131
    %388 = vmatpush.msra.mxu0 %v128
    %389 = vmatpush.msra.mxu0 %v125
    %390 = vmatpush.msra.mxu0 %v122
    %391 = vmatpush.msra.mxu0 %v119
    %392 = vmatmul.f32.gmra.mxu0 %v326
    %v393 = vpop.f32.mrf.mxu0
    %v394 = vadd.f32 %v374, %v393
    %395 = vdwg.mxu0
    %396 = vmatpush.msra.mxu0 %v212
    %397 = vmatpush.msra.mxu0 %v209
    %398 = vmatpush.msra.mxu0 %v206
    %399 = vmatpush.msra.mxu0 %v203
    %400 = vmatpush.msra.mxu0 %v200
    %401 = vmatpush.msra.mxu0 %v197
    %402 = vmatpush.msra.mxu0 %v194
    %403 = vmatpush.msra.mxu0 %v191
    %404 = vmatpush.msra.mxu0 %v188
    %405 = vmatpush.msra.mxu0 %v185
    %406 = vmatpush.msra.mxu0 %v182
    %407 = vmatpush.msra.mxu0 %v179
    %408 = vmatpush.msra.mxu0 %v176
    %409 = vmatpush.msra.mxu0 %v173
    %410 = vmatpush.msra.mxu0 %v170
    %411 = vmatpush.msra.mxu0 %v167
    %412 = vmatmul.f32.gmra.mxu0 %v327
    %v413 = vpop.f32.mrf.mxu0
    %v414 = vadd.f32 %v394, %v413
    %415 = vdwg.mxu0
    %416 = vmatpush.msra.mxu0 %v260
    %417 = vmatpush.msra.mxu0 %v257
    %418 = vmatpush.msra.mxu0 %v254
    %419 = vmatpush.msra.mxu0 %v251
    %420 = vmatpush.msra.mxu0 %v248
    %421 = vmatpush.msra.mxu0 %v245
    %422 = vmatpush.msra.mxu0 %v242
    %423 = vmatpush.msra.mxu0 %v239
    %424 = vmatpush.msra.mxu0 %v236
    %425 = vmatpush.msra.mxu0 %v233
    %426 = vmatpush.msra.mxu0 %v230
    %427 = vmatpush.msra.mxu0 %v227
    %428 = vmatpush.msra.mxu0 %v224
    %429 = vmatpush.msra.mxu0 %v221
    %430 = vmatpush.msra.mxu0 %v218
    %431 = vmatpush.msra.mxu0 %v215
    %432 = vmatmul.f32.gmra.mxu0 %v328
    %v433 = vpop.f32.mrf.mxu0
    %v434 = vadd.f32 %v414, %v433
    %435 = vdwg.mxu0
    %436 = vmatpush.msra.mxu0 %v308
    %437 = vmatpush.msra.mxu0 %v305
    %438 = vmatpush.msra.mxu0 %v302
    %439 = vmatpush.msra.mxu0 %v299
    %440 = vmatpush.msra.mxu0 %v296
    %441 = vmatpush.msra.mxu0 %v293
    %442 = vmatpush.msra.mxu0 %v290
    %443 = vmatpush.msra.mxu0 %v287
    %444 = vmatpush.msra.mxu0 %v284
    %445 = vmatpush.msra.mxu0 %v281
    %446 = vmatpush.msra.mxu0 %v278
    %447 = vmatpush.msra.mxu0 %v275
    %448 = vmatpush.msra.mxu0 %v272
    %449 = vmatpush.msra.mxu0 %v269
    %450 = vmatpush.msra.mxu0 %v266
    %451 = vmatpush.msra.mxu0 %v263
    %452 = vmatmul.f32.gmra.mxu0 %v329
    %v453 = vpop.f32.mrf.mxu0
    %v454 = vadd.f32 %v434, %v453
    %455 = vdwg.mxu0
    %456 = vmatpush.msra.mxu0 %v69
    %457 = vmatpush.msra.mxu0 %v66
    %458 = vmatpush.msra.mxu0 %v63
    %459 = vmatpush.msra.mxu0 %v60
    %460 = vmatpush.msra.mxu0 %v57
    %461 = vmatpush.msra.mxu0 %v54
    %462 = vmatpush.msra.mxu0 %v51
    %463 = vmatpush.msra.mxu0 %v48
    %464 = vmatpush.msra.mxu0 %v45
    %465 = vmatpush.msra.mxu0 %v42
    %466 = vmatpush.msra.mxu0 %v39
    %467 = vmatpush.msra.mxu0 %v36
    %468 = vmatpush.msra.mxu0 %v33
    %469 = vmatpush.msra.mxu0 %v30
    %470 = vmatpush.msra.mxu0 %v27
    %471 = vmatpush.msra.mxu0 %v24
    %472 = vmatmul.f32.gmra.mxu0 %v324
    %v473 = vpop.f32.mrf.mxu0
    %v474 = vadd.f32 %v314, %v473
    %475 = vdwg.mxu0
    %476 = vmatpush.msra.mxu0 %v117
    %477 = vmatpush.msra.mxu0 %v114
    %478 = vmatpush.msra.mxu0 %v111
    %479 = vmatpush.msra.mxu0 %v108
    %480 = vmatpush.msra.mxu0 %v105
    %481 = vmatpush.msra.mxu0 %v102
    %482 = vmatpush.msra.mxu0 %v99
    %483 = vmatpush.msra.mxu0 %v96
    %484 = vmatpush.msra.mxu0 %v93
    %485 = vmatpush.msra.mxu0 %v90
    %486 = vmatpush.msra.mxu0 %v87
    %487 = vmatpush.msra.mxu0 %v84
    %488 = vmatpush.msra.mxu0 %v81
    %489 = vmatpush.msra.mxu0 %v78
    %490 = vmatpush.msra.mxu0 %v75
    %491 = vmatpush.msra.mxu0 %v72
    %492 = vmatmul.f32.gmra.mxu0 %v325
    %v493 = vpop.f32.mrf.mxu0
    %v494 = vadd.f32 %v474, %v493
    %495 = vdwg.mxu0
    %496 = vmatpush.msra.mxu0 %v165
    %497 = vmatpush.msra.mxu0 %v162
    %498 = vmatpush.msra.mxu0 %v159
    %499 = vmatpush.msra.mxu0 %v156
    %500 = vmatpush.msra.mxu0 %v153
    %501 = vmatpush.msra.mxu0 %v150
    %502 = vmatpush.msra.mxu0 %v147
    %503 = vmatpush.msra.mxu0 %v144
    %504 = vmatpush.msra.mxu0 %v141
    %505 = vmatpush.msra.mxu0 %v138
    %506 = vmatpush.msra.mxu0 %v135
    %507 = vmatpush.msra.mxu0 %v132
    %508 = vmatpush.msra.mxu0 %v129
    %509 = vmatpush.msra.mxu0 %v126
    %510 = vmatpush.msra.mxu0 %v123
    %511 = vmatpush.msra.mxu0 %v120
    %512 = vmatmul.f32.gmra.mxu0 %v326
    %v513 = vpop.f32.mrf.mxu0
    %v514 = vadd.f32 %v494, %v513
    %515 = vdwg.mxu0
    %516 = vmatpush.msra.mxu0 %v213
    %517 = vmatpush.msra.mxu0 %v210
    %518 = vmatpush.msra.mxu0 %v207
    %519 = vmatpush.msra.mxu0 %v204
    %520 = vmatpush.msra.mxu0 %v201
    %521 = vmatpush.msra.mxu0 %v198
    %522 = vmatpush.msra.mxu0 %v195
    %523 = vmatpush.msra.mxu0 %v192
    %524 = vmatpush.msra.mxu0 %v189
    %525 = vmatpush.msra.mxu0 %v186
    %526 = vmatpush.msra.mxu0 %v183
    %527 = vmatpush.msra.mxu0 %v180
    %528 = vmatpush.msra.mxu0 %v177
    %529 = vmatpush.msra.mxu0 %v174
    %530 = vmatpush.msra.mxu0 %v171
    %531 = vmatpush.msra.mxu0 %v168
    %532 = vmatmul.f32.gmra.mxu0 %v327
    %v533 = vpop.f32.mrf.mxu0
    %v534 = vadd.f32 %v514, %v533
    %535 = vdwg.mxu0
    %536 = vmatpush.msra.mxu0 %v261
    %537 = vmatpush.msra.mxu0 %v258
    %538 = vmatpush.msra.mxu0 %v255
    %539 = vmatpush.msra.mxu0 %v252
    %540 = vmatpush.msra.mxu0 %v249
    %541 = vmatpush.msra.mxu0 %v246
    %542 = vmatpush.msra.mxu0 %v243
    %543 = vmatpush.msra.mxu0 %v240
    %544 = vmatpush.msra.mxu0 %v237
    %545 = vmatpush.msra.mxu0 %v234
    %546 = vmatpush.msra.mxu0 %v231
    %547 = vmatpush.msra.mxu0 %v228
    %548 = vmatpush.msra.mxu0 %v225
    %549 = vmatpush.msra.mxu0 %v222
    %550 = vmatpush.msra.mxu0 %v219
    %551 = vmatpush.msra.mxu0 %v216
    %552 = vmatmul.f32.gmra.mxu0 %v328
    %v553 = vpop.f32.mrf.mxu0
    %v554 = vadd.f32 %v534, %v553
    %555 = vdwg.mxu0
    %556 = vmatpush.msra.mxu0 %v309
    %557 = vmatpush.msra.mxu0 %v306
    %558 = vmatpush.msra.mxu0 %v303
    %559 = vmatpush.msra.mxu0 %v300
    %560 = vmatpush.msra.mxu0 %v297
    %561 = vmatpush.msra.mxu0 %v294
    %562 = vmatpush.msra.mxu0 %v291
    %563 = vmatpush.msra.mxu0 %v288
    %564 = vmatpush.msra.mxu0 %v285
    %565 = vmatpush.msra.mxu0 %v282
    %566 = vmatpush.msra.mxu0 %v279
    %567 = vmatpush.msra.mxu0 %v276
    %568 = vmatpush.msra.mxu0 %v273
    %569 = vmatpush.msra.mxu0 %v270
    %570 = vmatpush.msra.mxu0 %v267
    %571 = vmatpush.msra.mxu0 %v264
    %572 = vmatmul.f32.gmra.mxu0 %v329
    %v573 = vpop.f32.mrf.mxu0
    %v574 = vadd.f32 %v554, %v573
    %575 = vdwg.mxu0
    %576 = vmatpush.msra.mxu0 %v70
    %577 = vmatpush.msra.mxu0 %v67
    %578 = vmatpush.msra.mxu0 %v64
    %579 = vmatpush.msra.mxu0 %v61
    %580 = vmatpush.msra.mxu0 %v58
    %581 = vmatpush.msra.mxu0 %v55
    %582 = vmatpush.msra.mxu0 %v52
    %583 = vmatpush.msra.mxu0 %v49
    %584 = vmatpush.msra.mxu0 %v46
    %585 = vmatpush.msra.mxu0 %v43
    %586 = vmatpush.msra.mxu0 %v40
    %587 = vmatpush.msra.mxu0 %v37
    %588 = vmatpush.msra.mxu0 %v34
    %589 = vmatpush.msra.mxu0 %v31
    %590 = vmatpush.msra.mxu0 %v28
    %591 = vmatpush.msra.mxu0 %v25
    %592 = vmatmul.f32.gmra.mxu0 %v324
    %v593 = vpop.f32.mrf.mxu0
    %v594 = vadd.f32 %v315, %v593
    %595 = vdwg.mxu0
    %596 = vmatpush.msra.mxu0 %v118
    %597 = vmatpush.msra.mxu0 %v115
    %598 = vmatpush.msra.mxu0 %v112
    %599 = vmatpush.msra.mxu0 %v109
    %600 = vmatpush.msra.mxu0 %v106
    %601 = vmatpush.msra.mxu0 %v103
    %602 = vmatpush.msra.mxu0 %v100
    %603 = vmatpush.msra.mxu0 %v97
    %604 = vmatpush.msra.mxu0 %v94
    %605 = vmatpush.msra.mxu0 %v91
    %606 = vmatpush.msra.mxu0 %v88
    %607 = vmatpush.msra.mxu0 %v85
    %608 = vmatpush.msra.mxu0 %v82
    %609 = vmatpush.msra.mxu0 %v79
    %610 = vmatpush.msra.mxu0 %v76
    %611 = vmatpush.msra.mxu0 %v73
    %612 = vmatmul.f32.gmra.mxu0 %v325
    %v613 = vpop.f32.mrf.mxu0
    %v614 = vadd.f32 %v594, %v613
    %615 = vdwg.mxu0
    %616 = vmatpush.msra.mxu0 %v166
    %617 = vmatpush.msra.mxu0 %v163
    %618 = vmatpush.msra.mxu0 %v160
    %619 = vmatpush.msra.mxu0 %v157
    %620 = vmatpush.msra.mxu0 %v154
    %621 = vmatpush.msra.mxu0 %v151
    %622 = vmatpush.msra.mxu0 %v148
    %623 = vmatpush.msra.mxu0 %v145
    %624 = vmatpush.msra.mxu0 %v142
    %625 = vmatpush.msra.mxu0 %v139
    %626 = vmatpush.msra.mxu0 %v136
    %627 = vmatpush.msra.mxu0 %v133
    %628 = vmatpush.msra.mxu0 %v130
    %629 = vmatpush.msra.mxu0 %v127
    %630 = vmatpush.msra.mxu0 %v124
    %631 = vmatpush.msra.mxu0 %v121
    %632 = vmatmul.f32.gmra.mxu0 %v326
    %v633 = vpop.f32.mrf.mxu0
    %v634 = vadd.f32 %v614, %v633
    %635 = vdwg.mxu0
    %636 = vmatpush.msra.mxu0 %v214
    %637 = vmatpush.msra.mxu0 %v211
    %638 = vmatpush.msra.mxu0 %v208
    %639 = vmatpush.msra.mxu0 %v205
    %640 = vmatpush.msra.mxu0 %v202
    %641 = vmatpush.msra.mxu0 %v199
    %642 = vmatpush.msra.mxu0 %v196
    %643 = vmatpush.msra.mxu0 %v193
    %644 = vmatpush.msra.mxu0 %v190
    %645 = vmatpush.msra.mxu0 %v187
    %646 = vmatpush.msra.mxu0 %v184
    %647 = vmatpush.msra.mxu0 %v181
    %648 = vmatpush.msra.mxu0 %v178
    %649 = vmatpush.msra.mxu0 %v175
    %650 = vmatpush.msra.mxu0 %v172
    %651 = vmatpush.msra.mxu0 %v169
    %652 = vmatmul.f32.gmra.mxu0 %v327
    %v653 = vpop.f32.mrf.mxu0
    %v654 = vadd.f32 %v634, %v653
    %655 = vdwg.mxu0
    %656 = vmatpush.msra.mxu0 %v262
    %657 = vmatpush.msra.mxu0 %v259
    %658 = vmatpush.msra.mxu0 %v256
    %659 = vmatpush.msra.mxu0 %v253
    %660 = vmatpush.msra.mxu0 %v250
    %661 = vmatpush.msra.mxu0 %v247
    %662 = vmatpush.msra.mxu0 %v244
    %663 = vmatpush.msra.mxu0 %v241
    %664 = vmatpush.msra.mxu0 %v238
    %665 = vmatpush.msra.mxu0 %v235
    %666 = vmatpush.msra.mxu0 %v232
    %667 = vmatpush.msra.mxu0 %v229
    %668 = vmatpush.msra.mxu0 %v226
    %669 = vmatpush.msra.mxu0 %v223
    %670 = vmatpush.msra.mxu0 %v220
    %671 = vmatpush.msra.mxu0 %v217
    %672 = vmatmul.f32.gmra.mxu0 %v328
    %v673 = vpop.f32.mrf.mxu0
    %v674 = vadd.f32 %v654, %v673
    %675 = vdwg.mxu0
    %676 = vmatpush.msra.mxu0 %v310
    %677 = vmatpush.msra.mxu0 %v307
    %678 = vmatpush.msra.mxu0 %v304
    %679 = vmatpush.msra.mxu0 %v301
    %680 = vmatpush.msra.mxu0 %v298
    %681 = vmatpush.msra.mxu0 %v295
    %682 = vmatpush.msra.mxu0 %v292
    %683 = vmatpush.msra.mxu0 %v289
    %684 = vmatpush.msra.mxu0 %v286
    %685 = vmatpush.msra.mxu0 %v283
    %686 = vmatpush.msra.mxu0 %v280
    %687 = vmatpush.msra.mxu0 %v277
    %688 = vmatpush.msra.mxu0 %v274
    %689 = vmatpush.msra.mxu0 %v271
    %690 = vmatpush.msra.mxu0 %v268
    %691 = vmatpush.msra.mxu0 %v265
    %692 = vmatmul.f32.gmra.mxu0 %v329
    %v693 = vpop.f32.mrf.mxu0
    %v694 = vadd.f32 %v674, %v693
    %695 = vdwg.mxu0
    %v696 = vmax.f32 %v454, 0.0
    %v697 = vmax.f32 %v574, 0.0
    %v698 = vmax.f32 %v694, 0.0
    %v699 = vld [vmem:[%s3] sm:$0xff]
    %v700 = vld [vmem:[%s3 + $0x8] sm:$0xff]
    %v701 = vld [vmem:[%s3 + $0x10] sm:$0xff]
    %v702 = vld [vmem:[%s3 + $0x18] sm:$0xff]
    %v703 = vld [vmem:[%s3 + $0x20] sm:$0xff]
    %v704 = vld [vmem:[%s3 + $0x28] sm:$0xff]
    %v705 = vld [vmem:[%s3 + $0x30] sm:$0xff]
    %v706 = vld [vmem:[%s3 + $0x38] sm:$0xff]
    %v707 = vld [vmem:[%s3 + $0x40] sm:$0xff]
    %v708 = vld [vmem:[%s3 + $0x48] sm:$0xff]
    %v709 = vld [vmem:[%s3 + $0x50] sm:$0xff]
    %v710 = vld [vmem:[%s3 + $0x58] sm:$0xff]
    %v711 = vld [vmem:[%s3 + $0x60] sm:$0xff]
    %v712 = vld [vmem:[%s3 + $0x68] sm:$0xff]
    %v713 = vld [vmem:[%s3 + $0x70] sm:$0xff]
    %v714 = vld [vmem:[%s3 + $0x78] sm:$0xff]
    %v715 = vld [vmem:[%s3 + $0x80] sm:$0xff]
    %v716 = vld [vmem:[%s3 + $0x88] sm:$0xff]
    %v717 = vld [vmem:[%s3 + $0x90] sm:$0xff]
    %v718 = vld [vmem:[%s3 + $0x98] sm:$0xff]
    %v719 = vld [vmem:[%s3 + $0xa0] sm:$0xff]
    %v720 = vld [vmem:[%s3 + $0xa8] sm:$0xff]
    %v721 = vld [vmem:[%s3 + $0xb0] sm:$0xff]
    %v722 = vld [vmem:[%s3 + $0xb8] sm:$0xff]
    %v723 = vld [vmem:[%s3 + $0xc0] sm:$0xff]
    %v724 = vld [vmem:[%s3 + $0xc8] sm:$0xff]
    %v725 = vld [vmem:[%s3 + $0xd0] sm:$0xff]
    %v726 = vld [vmem:[%s3 + $0xd8] sm:$0xff]
    %v727 = vld [vmem:[%s3 + $0xe0] sm:$0xff]
    %v728 = vld [vmem:[%s3 + $0xe8] sm:$0xff]
    %v729 = vld [vmem:[%s3 + $0xf0] sm:$0xff]
    %v730 = vld [vmem:[%s3 + $0xf8] sm:$0xff]
    %v731 = vld [vmem:[%s3 + $0x100] sm:$0xff]
    %v732 = vld [vmem:[%s3 + $0x108] sm:$0xff]
    %v733 = vld [vmem:[%s3 + $0x110] sm:$0xff]
    %v734 = vld [vmem:[%s3 + $0x118] sm:$0xff]
    %v735 = vld [vmem:[%s3 + $0x120] sm:$0xff]
    %v736 = vld [vmem:[%s3 + $0x128] sm:$0xff]
    %v737 = vld [vmem:[%s3 + $0x130] sm:$0xff]
    %v738 = vld [vmem:[%s3 + $0x138] sm:$0xff]
    %v739 = vld [vmem:[%s3 + $0x140] sm:$0xff]
    %v740 = vld [vmem:[%s3 + $0x148] sm:$0xff]
    %v741 = vld [vmem:[%s3 + $0x150] sm:$0xff]
    %v742 = vld [vmem:[%s3 + $0x158] sm:$0xff]
    %v743 = vld [vmem:[%s3 + $0x160] sm:$0xff]
    %v744 = vld [vmem:[%s3 + $0x168] sm:$0xff]
    %v745 = vld [vmem:[%s3 + $0x170] sm:$0xff]
    %v746 = vld [vmem:[%s3 + $0x178] sm:$0xff]
    %v747 = vld [vmem:[%s4] sm:$0x1]
    %v749 = vperm.slane %v747, 0
    %751 = vmatpush.msra.mxu0 %v714
    %752 = vmatpush.msra.mxu0 %v713
    %753 = vmatpush.msra.mxu0 %v712
    %754 = vmatpush.msra.mxu0 %v711
    %755 = vmatpush.msra.mxu0 %v710
    %756 = vmatpush.msra.mxu0 %v709
    %757 = vmatpush.msra.mxu0 %v708
    %758 = vmatpush.msra.mxu0 %v707
    %759 = vmatpush.msra.mxu0 %v706
    %760 = vmatpush.msra.mxu0 %v705
    %761 = vmatpush.msra.mxu0 %v704
    %762 = vmatpush.msra.mxu0 %v703
    %763 = vmatpush.msra.mxu0 %v702
    %764 = vmatpush.msra.mxu0 %v701
    %765 = vmatpush.msra.mxu0 %v700
    %766 = vmatpush.msra.mxu0 %v699
    %767 = vmatmul.f32.gmra.mxu0 %v696
    %v768 = vpop.f32.mrf.mxu0
    %v769 = vadd.f32 %v749, %v768
    %770 = vdwg.mxu0
    %771 = vmatpush.msra.mxu0 %v730
    %772 = vmatpush.msra.mxu0 %v729
    %773 = vmatpush.msra.mxu0 %v728
    %774 = vmatpush.msra.mxu0 %v727
    %775 = vmatpush.msra.mxu0 %v726
    %776 = vmatpush.msra.mxu0 %v725
    %777 = vmatpush.msra.mxu0 %v724
    %778 = vmatpush.msra.mxu0 %v723
    %779 = vmatpush.msra.mxu0 %v722
    %780 = vmatpush.msra.mxu0 %v721
    %781 = vmatpush.msra.mxu0 %v720
    %782 = vmatpush.msra.mxu0 %v719
    %783 = vmatpush.msra.mxu0 %v718
    %784 = vmatpush.msra.mxu0 %v717
    %785 = vmatpush.msra.mxu0 %v716
    %786 = vmatpush.msra.mxu0 %v715
    %787 = vmatmul.f32.gmra.mxu0 %v697
    %v788 = vpop.f32.mrf.mxu0
    %v789 = vadd.f32 %v769, %v788
    %790 = vdwg.mxu0
    %791 = vmatpush.msra.mxu0 %v746
    %792 = vmatpush.msra.mxu0 %v745
    %793 = vmatpush.msra.mxu0 %v744
    %794 = vmatpush.msra.mxu0 %v743
    %795 = vmatpush.msra.mxu0 %v742
    %796 = vmatpush.msra.mxu0 %v741
    %797 = vmatpush.msra.mxu0 %v740
    %798 = vmatpush.msra.mxu0 %v739
    %799 = vmatpush.msra.mxu0 %v738
    %800 = vmatpush.msra.mxu0 %v737
    %801 = vmatpush.msra.mxu0 %v736
    %802 = vmatpush.msra.mxu0 %v735
    %803 = vmatpush.msra.mxu0 %v734
    %804 = vmatpush.msra.mxu0 %v733
    %805 = vmatpush.msra.mxu0 %v732
    %806 = vmatpush.msra.mxu0 %v731
    %807 = vmatmul.f32.gmra.mxu0 %v698
    %v808 = vpop.f32.mrf.mxu0
    %v809 = vadd.f32 %v789, %v808
    %810 = vdwg.mxu0
    %v811 = vlaneseq
    %v812 = vand.u32 %v811, 127
    %vm813 = vcmp.lt.s32.totalorder %v812, 27
    %v814 = vsel %vm813, %v809, -1e+30
    %vm815 = vcmask 1041408
    %v816 = vsel %vm815, %v814, -inf
    %817 = vmax.xlane.f32.xlu0 %v816
    %v818 = vpop.xlane.xlu0 %817
    %v819 = vsub.f32 %v814, %v818
    %v820 = vmul.f32 %v819, 1.442695
    %v821 = vpow.pop %v820
    %v822 = vsel %vm815, %v821, 0.0
    %823 = vadd.xlane.f32.xlu0 %v822
    %v824 = vpop.xlane.xlu0 %823
    %v825 = vlog2.pop %v824
    %v826 = vmul.f32 %v825, 0.6931472
    %v827 = vsub.f32 %v819, %v826
    %v828 = vsel %vm813, %v827, 0.0
    %829 = vst [vmem:[#allocation2] sm:$0x3] %v828
    // Predicated region
    $region22: #{the_recognizer_forward.5} parent=1 // pred_check
      _
    $region23: #{the_recognizer_forward.5} parent=1 // pred_check_branch
      %831 = sbr.rel (0) target = $region25
    $region24: #{the_recognizer_forward.5} parent=1 // pred_region
      %833 = vsyncadd [#allocation3], 0
      %s835 = sshll.u32 [#allocation2], 4
      %s836 = int_to_ptr.vmem [resolvable:$true] %s835
      %s837 = sshll.u32 %s5, 4
      %s838 = int_to_ptr.hbm [resolvable:$true] %s837
      %840 = dma.vmem_to_hbm [thread:$0]  %s836, 32, %s838, [#allocation3]
    $region25: #{the_recognizer_forward.5} parent=1 // pred_fallthru
      _
    // Predicated region
    $region26: #{the_recognizer_forward.5} parent=1 // pred_check
      _
    $region27: #{the_recognizer_forward.5} parent=1 // pred_check_branch
      %842 = sbr.rel (0) target = $region29
    $region28: #{the_recognizer_forward.5} parent=1 // pred_region
      %844 = dma.done [#allocation3], 32
    $region29: #{the_recognizer_forward.5} parent=1 // pred_fallthru
      _
    %845 = vsyncpa [#allocation3], 1

</llo_original>
